<compile_context>
chip_gen: v5e
topology: v5e:2x2
jax: 0.10.0
libtpu: 0.0.40
codegen_flags: <defaults>
</compile_context>

<pallas_src>
import functools

import numpy as np
import jax
import jax.numpy as jnp
from jax.experimental import pallas as pl
from jax.experimental.pallas import tpu as pltpu


# ---------------------------------------------------------------------------
# Fused kernel: one grid step == BB images, everything stays in VMEM.
# ---------------------------------------------------------------------------
def _simple_cnn_kernel(
    x_ref,       # (1, BB*32+16, 32) f32 : SAME-padded images (32 rows/image) + 16 zero tail rows
    wbd1_ref,    # (3, 32, 512)      bf16: conv1 per-kh banded weights (kw folded)
    b1_ref,      # (1, 512)          f32 : conv1 bias tiled over output cols (pad lanes zero)
    r1_ref,      # (BB*16+16, BB*32) bf16: pool1 row select (+conv2 SAME row pad, +16 zero rows)
    c1_ref,      # (448, 256)        bf16: pool1 col compaction (+conv2 SAME col pad)
    wbd2_ref,    # (3, 256, 512)     bf16: conv2 per-kh banded weights (kw folded)
    b2_ref,      # (1, 512)          f32
    r2_ref,      # (BB*8, BB*16)     bf16: pool2 row select, rows regrouped by pooled row h
    c2_ref,      # (448, 224)        bf16: pool2 col compaction
    wfc1_ref,    # (7, 224, 128)     bf16: fc1 weights in (h, w*32+c) order
    bfc1_ref,    # (1, 128)          f32
    wfc2_ref,    # (128, 128)        f32 : fc2 weights padded to 128 output lanes
    bfc2_ref,    # (1, 128)          f32
    out_ref,     # (BB, 128)         f32
    *, bb,
):
    f32, bf16 = jnp.float32, jnp.bfloat16
    m1 = bb * 32          # conv1-domain rows (32 per image)
    m2 = bb * 16          # conv2-domain rows (16 per image)

    # ---- conv1 + bias + ReLU : 3 banded matmuls over kh-shifted rows --------
    xp = x_ref[0]                                                     # (m1+16, 32) f32
    acc1 = None
    for kh in range(3):
        lhs = xp[kh:kh + m1 + 8, :].astype(bf16)                      # (m1+8, 32)
        d = jnp.dot(lhs, wbd1_ref[kh], preferred_element_type=f32)
        acc1 = d if acc1 is None else acc1 + d
    a1 = jnp.maximum(acc1 + b1_ref[...], 0.0)                         # (m1+8, 512)

    # ---- pool1 (2x2/2): row max -> row-select matmul -> col max -> compaction
    pm1 = jnp.maximum(a1[0:m1, :], a1[1:m1 + 1, :]).astype(bf16)      # (m1, 512)
    rc1 = jnp.dot(r1_ref[...], pm1, preferred_element_type=f32)       # (m2+16, 512)
    cm1 = jnp.maximum(rc1[:, 0:448], rc1[:, 16:464]).astype(bf16)     # (m2+16, 448)
    p1 = jnp.dot(cm1, c1_ref[...], preferred_element_type=f32)        # (m2+16, 256)

    # ---- conv2 + bias + ReLU : 3 banded matmuls over kh-shifted rows --------
    acc2 = None
    for kh in range(3):
        lhs = p1[kh:kh + m2 + 8, :].astype(bf16)                      # (m2+8, 256)
        d = jnp.dot(lhs, wbd2_ref[kh], preferred_element_type=f32)
        acc2 = d if acc2 is None else acc2 + d
    a2 = jnp.maximum(acc2 + b2_ref[...], 0.0)                         # (m2+8, 512)

    # ---- pool2 (2x2/2), output rows regrouped by pooled row h for fc1 -------
    pm2 = jnp.maximum(a2[0:m2, :], a2[1:m2 + 1, :]).astype(bf16)      # (m2, 512)
    p2r = jnp.dot(r2_ref[...], pm2, preferred_element_type=f32)       # (bb*8, 512)
    cm2 = jnp.maximum(p2r[:, 0:448], p2r[:, 32:480]).astype(bf16)     # (bb*8, 448)
    p2 = jnp.dot(cm2, c2_ref[...], preferred_element_type=f32)        # (bb*8, 224)

    # ---- fc1 + ReLU : one (BB, 224) @ (224, 128) matmul per pooled row h ----
    accf = None
    for h in range(7):
        lhs = p2[h * bb:(h + 1) * bb, :].astype(bf16)                 # (bb, 224)
        d = jnp.dot(lhs, wfc1_ref[h], preferred_element_type=f32)
        accf = d if accf is None else accf + d
    h1 = jnp.maximum(accf + bfc1_ref[...], 0.0)                       # (bb, 128)

    # ---- fc2 (padded to 128 output lanes; wrapper slices to num_classes) ----
    out_ref[...] = (jnp.dot(h1, wfc2_ref[...], preferred_element_type=f32)
                    + bfc2_ref[...])


# ---------------------------------------------------------------------------
# One-time parameter packing (host side, outside the per-step hot path)
# ---------------------------------------------------------------------------
_CONST_KEYS = ("wbd1", "b1", "r1", "c1", "wbd2", "b2", "r2", "c2",
               "wfc1", "bfc1", "wfc2", "bfc2")


def pack_params(params, *, bb=8):
    """Repack torch-layout params into kernel-resident constants (done once)."""
    w1 = np.asarray(params["conv1_w"], np.float32)    # (16, 1, 3, 3)  OIHW
    b1 = np.asarray(params["conv1_b"], np.float32)
    w2 = np.asarray(params["conv2_w"], np.float32)    # (32, 16, 3, 3) OIHW
    b2 = np.asarray(params["conv2_b"], np.float32)
    fc1_w = np.asarray(params["fc1_w"], np.float32)   # (128, 1568) torch (out, in)
    fc1_b = np.asarray(params["fc1_b"], np.float32)
    fc2_w = np.asarray(params["fc2_w"], np.float32)   # (nc, 128)
    fc2_b = np.asarray(params["fc2_b"], np.float32)
    nc = fc2_w.shape[0]
    assert nc <= 128

    # conv1 banded weights: lhs lane l = padded col, out lane w*16+co (w padded to 32).
    wbd1 = np.zeros((3, 32, 512), np.float32)
    for kh in range(3):
        for w in range(28):
            for kw in range(3):
                wbd1[kh, w + kw, w * 16:(w + 1) * 16] = w1[:, 0, kh, kw]

    # conv2 banded weights: lhs lane wi*16+ci (wi padded col 0..15), out lane w*32+co.
    wbd2 = np.zeros((3, 256, 512), np.float32)
    for kh in range(3):
        for w in range(14):
            for kw in range(3):
                wi = w + kw
                for ci in range(16):
                    wbd2[kh, wi * 16 + ci, w * 32:(w + 1) * 32] = w2[:, ci, kh, kw]

    # Biases tiled over output columns; padded column blocks stay zero.
    b1t = np.zeros((1, 512), np.float32)
    b1t[0, :448] = np.tile(b1, 28)
    b2t = np.zeros((1, 512), np.float32)
    b2t[0, :448] = np.tile(b2, 14)

    # pool1 row selection: conv1-output row 2i of image b -> conv2 padded row i+1
    # of image b.  Rows b*16+0, b*16+15 (conv2 SAME row pad) and the 16 tail
    # rows (slice headroom for the conv2 kh shifts) stay zero.
    r1 = np.zeros((bb * 16 + 16, bb * 32), np.float32)
    for b in range(bb):
        for i in range(14):
            r1[b * 16 + i + 1, b * 32 + 2 * i] = 1.0

    # pool1 column compaction (+ conv2 SAME col pad): lane (2j)*16+c -> (j+1)*16+c.
    c1 = np.zeros((448, 256), np.float32)
    for j in range(14):
        for c in range(16):
            c1[(2 * j) * 16 + c, (j + 1) * 16 + c] = 1.0

    # pool2 row selection, regrouped by pooled row h:
    # conv2-output row 2h of image b -> output row h*bb + b.
    r2 = np.zeros((bb * 8, bb * 16), np.float32)
    for b in range(bb):
        for h in range(7):
            r2[h * bb + b, b * 16 + 2 * h] = 1.0

    # pool2 column compaction: lane (2j)*32+c -> j*32+c.
    c2 = np.zeros((448, 224), np.float32)
    for j in range(7):
        for c in range(32):
            c2[(2 * j) * 32 + c, j * 32 + c] = 1.0

    # fc1: torch flattens NCHW (c*49 + h*7 + w); regroup rows once to (h, w*32 + c).
    wfc1 = (fc1_w.T.reshape(32, 7, 7, 128).transpose(1, 2, 0, 3)
            .reshape(7, 224, 128))

    wfc2 = np.zeros((128, 128), np.float32)
    wfc2[:, :nc] = fc2_w.T
    bfc2 = np.zeros((1, 128), np.float32)
    bfc2[0, :nc] = fc2_b

    bf16 = jnp.bfloat16
    return dict(
        wbd1=jnp.asarray(wbd1, bf16), b1=jnp.asarray(b1t),
        r1=jnp.asarray(r1, bf16), c1=jnp.asarray(c1, bf16),
        wbd2=jnp.asarray(wbd2, bf16), b2=jnp.asarray(b2t),
        r2=jnp.asarray(r2, bf16), c2=jnp.asarray(c2, bf16),
        wfc1=jnp.asarray(wfc1, bf16), bfc1=jnp.asarray(fc1_b[None, :]),
        wfc2=jnp.asarray(wfc2), bfc2=jnp.asarray(bfc2),
    )


# ---------------------------------------------------------------------------
# Forward pass: one fused pallas_call, grid over batch (BB images per step).
# ---------------------------------------------------------------------------
def simple_cnn_forward(x_nchw, packed, *, num_classes=10, bb=8):
    B, C, H, W = x_nchw.shape
    assert (C, H, W) == (1, 28, 28), "SimpleCNN fc1 expects 1x28x28 inputs"
    nb = -(-B // bb)          # ceil(B / bb)
    Bp = nb * bb

    # SAME-pad every image to 32x32 (data at rows/cols 1..28), stack BB images
    # per grid block (32-row stride) and add 16 zero tail rows per block so the
    # in-kernel kh row shifts are plain in-bounds slices.
    ximg = jnp.zeros((Bp, 32, 32), jnp.float32)
    ximg = ximg.at[:B, 1:29, 1:29].set(x_nchw[:, 0].astype(jnp.float32))
    xblk = jnp.zeros((nb, bb * 32 + 16, 32), jnp.float32)
    xblk = xblk.at[:, :bb * 32, :].set(ximg.reshape(nb, bb * 32, 32))

    consts = [packed[k] for k in _CONST_KEYS]

    # Grid-invariant constants: constant index_map -> DMA'd once, VMEM-resident.
    def const_spec(a):
        if a.ndim == 2:
            return pl.BlockSpec(a.shape, lambda g: (0, 0))
        return pl.BlockSpec(a.shape, lambda g: (0, 0, 0))

    out = pl.pallas_call(
        functools.partial(_simple_cnn_kernel, bb=bb),
        out_shape=jax.ShapeDtypeStruct((Bp, 128), jnp.float32),
        grid=(nb,),
        in_specs=[pl.BlockSpec((1, bb * 32 + 16, 32), lambda g: (g, 0, 0))]
                 + [const_spec(a) for a in consts],
        out_specs=pl.BlockSpec((bb, 128), lambda g: (g, 0)),
        compiler_params=pltpu.CompilerParams(
            dimension_semantics=("parallel",),
            vmem_limit_bytes=32 * 1024 * 1024,
        ),
    )(xblk, *consts)
    return out[:B, :num_classes]


# ---------------------------------------------------------------------------
# Plain-JAX reference (PyTorch semantics) for a tolerance check.
# ---------------------------------------------------------------------------
def _reference_forward(x, params):
    dn = ("NCHW", "OIHW", "NCHW")
    y = jax.lax.conv_general_dilated(x, params["conv1_w"], (1, 1),
                                     ((1, 1), (1, 1)), dimension_numbers=dn)
    y = jax.nn.relu(y + params["conv1_b"][None, :, None, None])
    y = jax.lax.reduce_window(y, -jnp.inf, jax.lax.max,
                              (1, 1, 2, 2), (1, 1, 2, 2), "VALID")
    y = jax.lax.conv_general_dilated(y, params["conv2_w"], (1, 1),
                                     ((1, 1), (1, 1)), dimension_numbers=dn)
    y = jax.nn.relu(y + params["conv2_b"][None, :, None, None])
    y = jax.lax.reduce_window(y, -jnp.inf, jax.lax.max,
                              (1, 1, 2, 2), (1, 1, 2, 2), "VALID")
    y = y.reshape(y.shape[0], -1)
    y = jax.nn.relu(y @ params["fc1_w"].T + params["fc1_b"])
    return y @ params["fc2_w"].T + params["fc2_b"]


# ---------------------------------------------------------------------------
# Deterministic parameter init (PyTorch-native layouts and fan-in bounds)
# ---------------------------------------------------------------------------
def init_params(key, num_classes=10):
    ks = jax.random.split(key, 8)

    def u(k, shape, fan_in):
        bound = float(fan_in) ** -0.5
        return jax.random.uniform(k, shape, jnp.float32, -bound, bound)

    return {
        "conv1_w": u(ks[0], (16, 1, 3, 3), 9),             # OIHW
        "conv1_b": u(ks[1], (16,), 9),
        "conv2_w": u(ks[2], (32, 16, 3, 3), 144),          # OIHW
        "conv2_b": u(ks[3], (32,), 144),
        "fc1_w":   u(ks[4], (128, 32 * 7 * 7), 1568),      # (out, in) torch layout
        "fc1_b":   u(ks[5], (128,), 1568),
        "fc2_w":   u(ks[6], (num_classes, 128), 128),
        "fc2_b":   u(ks[7], (num_classes,), 128),
    }


if __name__ == "__main__":
    key = jax.random.PRNGKey(0)
    pkey, xkey = jax.random.split(key)
    params = init_params(pkey, num_classes=10)
    packed = pack_params(params, bb=8)                    # one-time repack

    x = jax.random.normal(xkey, (4, 1, 28, 28), jnp.float32)

    fwd = jax.jit(simple_cnn_forward, static_argnames=("num_classes", "bb"))
    out = jax.block_until_ready(fwd(x, packed, num_classes=10, bb=8))
    assert out.shape == (4, 10) and out.dtype == jnp.float32

    ref = jax.block_until_ready(_reference_forward(x, params))
    np.testing.assert_allclose(np.asarray(out), np.asarray(ref),
                               rtol=3e-2, atol=3e-2)

    print("KERNEL_OK")
</pallas_src>

<mosaic_0001>
module attributes {stable_mosaic.version = 11 : i64} {
  func.func @_simple_cnn_kernel(%arg0: i32, %arg1: memref<1x272x32xf32, #tpu.memory_space<vmem>>, %arg2: memref<3x32x512xbf16, #tpu.memory_space<vmem>>, %arg3: memref<1x512xf32, #tpu.memory_space<vmem>>, %arg4: memref<144x256xbf16, #tpu.memory_space<vmem>>, %arg5: memref<448x256xbf16, #tpu.memory_space<vmem>>, %arg6: memref<3x256x512xbf16, #tpu.memory_space<vmem>>, %arg7: memref<1x512xf32, #tpu.memory_space<vmem>>, %arg8: memref<64x128xbf16, #tpu.memory_space<vmem>>, %arg9: memref<448x224xbf16, #tpu.memory_space<vmem>>, %arg10: memref<7x224x128xbf16, #tpu.memory_space<vmem>>, %arg11: memref<1x128xf32, #tpu.memory_space<vmem>>, %arg12: memref<128x128xf32, #tpu.memory_space<vmem>>, %arg13: memref<1x128xf32, #tpu.memory_space<vmem>>, %arg14: memref<8x128xf32, #tpu.memory_space<vmem>>) attributes {dimension_semantics = [#tpu.dimension_semantics<parallel>], iteration_bounds = array<i64: 1>, scalar_prefetch = 0 : i64, scratch_operands = 0 : i64, tpu.core_type = #tpu.core_type<tc>, window_params = [{transform_indices = @transform_0, window_bounds = array<i64: 1, 272, 32>}, {pipeline_mode = #tpu.pipeline_mode<synchronous>, transform_indices = @transform_1, window_bounds = array<i64: 3, 32, 512>}, {pipeline_mode = #tpu.pipeline_mode<synchronous>, transform_indices = @transform_2, window_bounds = array<i64: 1, 512>}, {pipeline_mode = #tpu.pipeline_mode<synchronous>, transform_indices = @transform_3, window_bounds = array<i64: 144, 256>}, {pipeline_mode = #tpu.pipeline_mode<synchronous>, transform_indices = @transform_4, window_bounds = array<i64: 448, 256>}, {pipeline_mode = #tpu.pipeline_mode<synchronous>, transform_indices = @transform_5, window_bounds = array<i64: 3, 256, 512>}, {pipeline_mode = #tpu.pipeline_mode<synchronous>, transform_indices = @transform_6, window_bounds = array<i64: 1, 512>}, {pipeline_mode = #tpu.pipeline_mode<synchronous>, transform_indices = @transform_7, window_bounds = array<i64: 64, 128>}, {pipeline_mode = #tpu.pipeline_mode<synchronous>, transform_indices = @transform_8, window_bounds = array<i64: 448, 224>}, {pipeline_mode = #tpu.pipeline_mode<synchronous>, transform_indices = @transform_9, window_bounds = array<i64: 7, 224, 128>}, {pipeline_mode = #tpu.pipeline_mode<synchronous>, transform_indices = @transform_10, window_bounds = array<i64: 1, 128>}, {pipeline_mode = #tpu.pipeline_mode<synchronous>, transform_indices = @transform_11, window_bounds = array<i64: 128, 128>}, {pipeline_mode = #tpu.pipeline_mode<synchronous>, transform_indices = @transform_12, window_bounds = array<i64: 1, 128>}, {transform_indices = @transform_13, window_bounds = array<i64: 8, 128>}]} {
    %c0 = arith.constant 0 : index
    %c0_0 = arith.constant 0 : index
    %c0_1 = arith.constant 0 : index
    %0 = vector.load %arg1[%c0, %c0_0, %c0_1] : memref<1x272x32xf32, #tpu.memory_space<vmem>>, vector<1x272x32xf32>
    %1 = vector.shape_cast %0 : vector<1x272x32xf32> to vector<272x32xf32>
    %2 = vector.extract_strided_slice %1 {offsets = [0, 0], sizes = [264, 32], strides = [1, 1]} : vector<272x32xf32> to vector<264x32xf32>
    %3 = arith.truncf %2 : vector<264x32xf32> to vector<264x32xbf16>
    %c0_2 = arith.constant 0 : index
    %c0_3 = arith.constant 0 : index
    %c0_4 = arith.constant 0 : index
    %4 = vector.load %arg2[%c0_2, %c0_3, %c0_4] : memref<3x32x512xbf16, #tpu.memory_space<vmem>>, vector<1x32x512xbf16>
    %5 = vector.shape_cast %4 : vector<1x32x512xbf16> to vector<32x512xbf16>
    %cst = arith.constant dense<0.000000e+00> : vector<264x512xf32>
    %6 = tpu.matmul %3, %5, %cst {dimension_numbers = #tpu.dot_dimension_numbers<[1], [0], [0], [1], [0, 0, 1, 1], [], []>} : vector<264x32xbf16>, vector<32x512xbf16>, vector<264x512xf32> -> vector<264x512xf32>
    %7 = vector.extract_strided_slice %1 {offsets = [1, 0], sizes = [264, 32], strides = [1, 1]} : vector<272x32xf32> to vector<264x32xf32>
    %8 = arith.truncf %7 : vector<264x32xf32> to vector<264x32xbf16>
    %c1 = arith.constant 1 : index
    %c0_5 = arith.constant 0 : index
    %c0_6 = arith.constant 0 : index
    %9 = vector.load %arg2[%c1, %c0_5, %c0_6] : memref<3x32x512xbf16, #tpu.memory_space<vmem>>, vector<1x32x512xbf16>
    %10 = vector.shape_cast %9 : vector<1x32x512xbf16> to vector<32x512xbf16>
    %cst_7 = arith.constant dense<0.000000e+00> : vector<264x512xf32>
    %11 = tpu.matmul %8, %10, %cst_7 {dimension_numbers = #tpu.dot_dimension_numbers<[1], [0], [0], [1], [0, 0, 1, 1], [], []>} : vector<264x32xbf16>, vector<32x512xbf16>, vector<264x512xf32> -> vector<264x512xf32>
    %12 = arith.addf %6, %11 : vector<264x512xf32>
    %13 = vector.extract_strided_slice %1 {offsets = [2, 0], sizes = [264, 32], strides = [1, 1]} : vector<272x32xf32> to vector<264x32xf32>
    %14 = arith.truncf %13 : vector<264x32xf32> to vector<264x32xbf16>
    %c2 = arith.constant 2 : index
    %c0_8 = arith.constant 0 : index
    %c0_9 = arith.constant 0 : index
    %15 = vector.load %arg2[%c2, %c0_8, %c0_9] : memref<3x32x512xbf16, #tpu.memory_space<vmem>>, vector<1x32x512xbf16>
    %16 = vector.shape_cast %15 : vector<1x32x512xbf16> to vector<32x512xbf16>
    %cst_10 = arith.constant dense<0.000000e+00> : vector<264x512xf32>
    %17 = tpu.matmul %14, %16, %cst_10 {dimension_numbers = #tpu.dot_dimension_numbers<[1], [0], [0], [1], [0, 0, 1, 1], [], []>} : vector<264x32xbf16>, vector<32x512xbf16>, vector<264x512xf32> -> vector<264x512xf32>
    %18 = arith.addf %12, %17 : vector<264x512xf32>
    %c0_11 = arith.constant 0 : index
    %c0_12 = arith.constant 0 : index
    %19 = vector.load %arg3[%c0_11, %c0_12] : memref<1x512xf32, #tpu.memory_space<vmem>>, vector<1x512xf32>
    %20 = vector.broadcast %19 : vector<1x512xf32> to vector<264x512xf32>
    %21 = arith.addf %18, %20 : vector<264x512xf32>
    %cst_13 = arith.constant 0.000000e+00 : f32
    %22 = vector.broadcast %cst_13 : f32 to vector<264x512xf32>
    %23 = arith.maximumf %21, %22 : vector<264x512xf32>
    %24 = vector.extract_strided_slice %23 {offsets = [0, 0], sizes = [256, 512], strides = [1, 1]} : vector<264x512xf32> to vector<256x512xf32>
    %25 = vector.extract_strided_slice %23 {offsets = [1, 0], sizes = [256, 512], strides = [1, 1]} : vector<264x512xf32> to vector<256x512xf32>
    %26 = arith.maximumf %24, %25 : vector<256x512xf32>
    %27 = arith.truncf %26 : vector<256x512xf32> to vector<256x512xbf16>
    %c0_14 = arith.constant 0 : index
    %c0_15 = arith.constant 0 : index
    %28 = vector.load %arg4[%c0_14, %c0_15] : memref<144x256xbf16, #tpu.memory_space<vmem>>, vector<144x256xbf16>
    %cst_16 = arith.constant dense<0.000000e+00> : vector<144x512xf32>
    %29 = tpu.matmul %28, %27, %cst_16 {dimension_numbers = #tpu.dot_dimension_numbers<[1], [0], [0], [1], [0, 0, 1, 1], [], []>} : vector<144x256xbf16>, vector<256x512xbf16>, vector<144x512xf32> -> vector<144x512xf32>
    %30 = vector.extract_strided_slice %29 {offsets = [0, 0], sizes = [144, 448], strides = [1, 1]} : vector<144x512xf32> to vector<144x448xf32>
    %31 = vector.extract_strided_slice %29 {offsets = [0, 16], sizes = [144, 448], strides = [1, 1]} : vector<144x512xf32> to vector<144x448xf32>
    %32 = arith.maximumf %30, %31 : vector<144x448xf32>
    %33 = arith.truncf %32 : vector<144x448xf32> to vector<144x448xbf16>
    %c0_17 = arith.constant 0 : index
    %c0_18 = arith.constant 0 : index
    %34 = vector.load %arg5[%c0_17, %c0_18] : memref<448x256xbf16, #tpu.memory_space<vmem>>, vector<448x256xbf16>
    %cst_19 = arith.constant dense<0.000000e+00> : vector<144x256xf32>
    %35 = tpu.matmul %33, %34, %cst_19 {dimension_numbers = #tpu.dot_dimension_numbers<[1], [0], [0], [1], [0, 0, 1, 1], [], []>} : vector<144x448xbf16>, vector<448x256xbf16>, vector<144x256xf32> -> vector<144x256xf32>
    %36 = vector.extract_strided_slice %35 {offsets = [0, 0], sizes = [136, 256], strides = [1, 1]} : vector<144x256xf32> to vector<136x256xf32>
    %37 = arith.truncf %36 : vector<136x256xf32> to vector<136x256xbf16>
    %c0_20 = arith.constant 0 : index
    %c0_21 = arith.constant 0 : index
    %c0_22 = arith.constant 0 : index
    %38 = vector.load %arg6[%c0_20, %c0_21, %c0_22] : memref<3x256x512xbf16, #tpu.memory_space<vmem>>, vector<1x256x512xbf16>
    %39 = vector.shape_cast %38 : vector<1x256x512xbf16> to vector<256x512xbf16>
    %cst_23 = arith.constant dense<0.000000e+00> : vector<136x512xf32>
    %40 = tpu.matmul %37, %39, %cst_23 {dimension_numbers = #tpu.dot_dimension_numbers<[1], [0], [0], [1], [0, 0, 1, 1], [], []>} : vector<136x256xbf16>, vector<256x512xbf16>, vector<136x512xf32> -> vector<136x512xf32>
    %41 = vector.extract_strided_slice %35 {offsets = [1, 0], sizes = [136, 256], strides = [1, 1]} : vector<144x256xf32> to vector<136x256xf32>
    %42 = arith.truncf %41 : vector<136x256xf32> to vector<136x256xbf16>
    %c1_24 = arith.constant 1 : index
    %c0_25 = arith.constant 0 : index
    %c0_26 = arith.constant 0 : index
    %43 = vector.load %arg6[%c1_24, %c0_25, %c0_26] : memref<3x256x512xbf16, #tpu.memory_space<vmem>>, vector<1x256x512xbf16>
    %44 = vector.shape_cast %43 : vector<1x256x512xbf16> to vector<256x512xbf16>
    %cst_27 = arith.constant dense<0.000000e+00> : vector<136x512xf32>
    %45 = tpu.matmul %42, %44, %cst_27 {dimension_numbers = #tpu.dot_dimension_numbers<[1], [0], [0], [1], [0, 0, 1, 1], [], []>} : vector<136x256xbf16>, vector<256x512xbf16>, vector<136x512xf32> -> vector<136x512xf32>
    %46 = arith.addf %40, %45 : vector<136x512xf32>
    %47 = vector.extract_strided_slice %35 {offsets = [2, 0], sizes = [136, 256], strides = [1, 1]} : vector<144x256xf32> to vector<136x256xf32>
    %48 = arith.truncf %47 : vector<136x256xf32> to vector<136x256xbf16>
    %c2_28 = arith.constant 2 : index
    %c0_29 = arith.constant 0 : index
    %c0_30 = arith.constant 0 : index
    %49 = vector.load %arg6[%c2_28, %c0_29, %c0_30] : memref<3x256x512xbf16, #tpu.memory_space<vmem>>, vector<1x256x512xbf16>
    %50 = vector.shape_cast %49 : vector<1x256x512xbf16> to vector<256x512xbf16>
    %cst_31 = arith.constant dense<0.000000e+00> : vector<136x512xf32>
    %51 = tpu.matmul %48, %50, %cst_31 {dimension_numbers = #tpu.dot_dimension_numbers<[1], [0], [0], [1], [0, 0, 1, 1], [], []>} : vector<136x256xbf16>, vector<256x512xbf16>, vector<136x512xf32> -> vector<136x512xf32>
    %52 = arith.addf %46, %51 : vector<136x512xf32>
    %c0_32 = arith.constant 0 : index
    %c0_33 = arith.constant 0 : index
    %53 = vector.load %arg7[%c0_32, %c0_33] : memref<1x512xf32, #tpu.memory_space<vmem>>, vector<1x512xf32>
    %54 = vector.broadcast %53 : vector<1x512xf32> to vector<136x512xf32>
    %55 = arith.addf %52, %54 : vector<136x512xf32>
    %cst_34 = arith.constant 0.000000e+00 : f32
    %56 = vector.broadcast %cst_34 : f32 to vector<136x512xf32>
    %57 = arith.maximumf %55, %56 : vector<136x512xf32>
    %58 = vector.extract_strided_slice %57 {offsets = [0, 0], sizes = [128, 512], strides = [1, 1]} : vector<136x512xf32> to vector<128x512xf32>
    %59 = vector.extract_strided_slice %57 {offsets = [1, 0], sizes = [128, 512], strides = [1, 1]} : vector<136x512xf32> to vector<128x512xf32>
    %60 = arith.maximumf %58, %59 : vector<128x512xf32>
    %61 = arith.truncf %60 : vector<128x512xf32> to vector<128x512xbf16>
    %c0_35 = arith.constant 0 : index
    %c0_36 = arith.constant 0 : index
    %62 = vector.load %arg8[%c0_35, %c0_36] : memref<64x128xbf16, #tpu.memory_space<vmem>>, vector<64x128xbf16>
    %cst_37 = arith.constant dense<0.000000e+00> : vector<64x512xf32>
    %63 = tpu.matmul %62, %61, %cst_37 {dimension_numbers = #tpu.dot_dimension_numbers<[1], [0], [0], [1], [0, 0, 1, 1], [], []>} : vector<64x128xbf16>, vector<128x512xbf16>, vector<64x512xf32> -> vector<64x512xf32>
    %64 = vector.extract_strided_slice %63 {offsets = [0, 0], sizes = [64, 448], strides = [1, 1]} : vector<64x512xf32> to vector<64x448xf32>
    %65 = vector.extract_strided_slice %63 {offsets = [0, 32], sizes = [64, 448], strides = [1, 1]} : vector<64x512xf32> to vector<64x448xf32>
    %66 = arith.maximumf %64, %65 : vector<64x448xf32>
    %67 = arith.truncf %66 : vector<64x448xf32> to vector<64x448xbf16>
    %c0_38 = arith.constant 0 : index
    %c0_39 = arith.constant 0 : index
    %68 = vector.load %arg9[%c0_38, %c0_39] : memref<448x224xbf16, #tpu.memory_space<vmem>>, vector<448x224xbf16>
    %cst_40 = arith.constant dense<0.000000e+00> : vector<64x224xf32>
    %69 = tpu.matmul %67, %68, %cst_40 {dimension_numbers = #tpu.dot_dimension_numbers<[1], [0], [0], [1], [0, 0, 1, 1], [], []>} : vector<64x448xbf16>, vector<448x224xbf16>, vector<64x224xf32> -> vector<64x224xf32>
    %70 = vector.extract_strided_slice %69 {offsets = [0, 0], sizes = [8, 224], strides = [1, 1]} : vector<64x224xf32> to vector<8x224xf32>
    %71 = arith.truncf %70 : vector<8x224xf32> to vector<8x224xbf16>
    %c0_41 = arith.constant 0 : index
    %c0_42 = arith.constant 0 : index
    %c0_43 = arith.constant 0 : index
    %72 = vector.load %arg10[%c0_41, %c0_42, %c0_43] : memref<7x224x128xbf16, #tpu.memory_space<vmem>>, vector<1x224x128xbf16>
    %73 = vector.shape_cast %72 : vector<1x224x128xbf16> to vector<224x128xbf16>
    %cst_44 = arith.constant dense<0.000000e+00> : vector<8x128xf32>
    %74 = tpu.matmul %71, %73, %cst_44 {dimension_numbers = #tpu.dot_dimension_numbers<[1], [0], [0], [1], [0, 0, 1, 1], [], []>} : vector<8x224xbf16>, vector<224x128xbf16>, vector<8x128xf32> -> vector<8x128xf32>
    %75 = vector.extract_strided_slice %69 {offsets = [8, 0], sizes = [8, 224], strides = [1, 1]} : vector<64x224xf32> to vector<8x224xf32>
    %76 = arith.truncf %75 : vector<8x224xf32> to vector<8x224xbf16>
    %c1_45 = arith.constant 1 : index
    %c0_46 = arith.constant 0 : index
    %c0_47 = arith.constant 0 : index
    %77 = vector.load %arg10[%c1_45, %c0_46, %c0_47] : memref<7x224x128xbf16, #tpu.memory_space<vmem>>, vector<1x224x128xbf16>
    %78 = vector.shape_cast %77 : vector<1x224x128xbf16> to vector<224x128xbf16>
    %cst_48 = arith.constant dense<0.000000e+00> : vector<8x128xf32>
    %79 = tpu.matmul %76, %78, %cst_48 {dimension_numbers = #tpu.dot_dimension_numbers<[1], [0], [0], [1], [0, 0, 1, 1], [], []>} : vector<8x224xbf16>, vector<224x128xbf16>, vector<8x128xf32> -> vector<8x128xf32>
    %80 = arith.addf %74, %79 : vector<8x128xf32>
    %81 = vector.extract_strided_slice %69 {offsets = [16, 0], sizes = [8, 224], strides = [1, 1]} : vector<64x224xf32> to vector<8x224xf32>
    %82 = arith.truncf %81 : vector<8x224xf32> to vector<8x224xbf16>
    %c2_49 = arith.constant 2 : index
    %c0_50 = arith.constant 0 : index
    %c0_51 = arith.constant 0 : index
    %83 = vector.load %arg10[%c2_49, %c0_50, %c0_51] : memref<7x224x128xbf16, #tpu.memory_space<vmem>>, vector<1x224x128xbf16>
    %84 = vector.shape_cast %83 : vector<1x224x128xbf16> to vector<224x128xbf16>
    %cst_52 = arith.constant dense<0.000000e+00> : vector<8x128xf32>
    %85 = tpu.matmul %82, %84, %cst_52 {dimension_numbers = #tpu.dot_dimension_numbers<[1], [0], [0], [1], [0, 0, 1, 1], [], []>} : vector<8x224xbf16>, vector<224x128xbf16>, vector<8x128xf32> -> vector<8x128xf32>
    %86 = arith.addf %80, %85 : vector<8x128xf32>
    %87 = vector.extract_strided_slice %69 {offsets = [24, 0], sizes = [8, 224], strides = [1, 1]} : vector<64x224xf32> to vector<8x224xf32>
    %88 = arith.truncf %87 : vector<8x224xf32> to vector<8x224xbf16>
    %c3 = arith.constant 3 : index
    %c0_53 = arith.constant 0 : index
    %c0_54 = arith.constant 0 : index
    %89 = vector.load %arg10[%c3, %c0_53, %c0_54] : memref<7x224x128xbf16, #tpu.memory_space<vmem>>, vector<1x224x128xbf16>
    %90 = vector.shape_cast %89 : vector<1x224x128xbf16> to vector<224x128xbf16>
    %cst_55 = arith.constant dense<0.000000e+00> : vector<8x128xf32>
    %91 = tpu.matmul %88, %90, %cst_55 {dimension_numbers = #tpu.dot_dimension_numbers<[1], [0], [0], [1], [0, 0, 1, 1], [], []>} : vector<8x224xbf16>, vector<224x128xbf16>, vector<8x128xf32> -> vector<8x128xf32>
    %92 = arith.addf %86, %91 : vector<8x128xf32>
    %93 = vector.extract_strided_slice %69 {offsets = [32, 0], sizes = [8, 224], strides = [1, 1]} : vector<64x224xf32> to vector<8x224xf32>
    %94 = arith.truncf %93 : vector<8x224xf32> to vector<8x224xbf16>
    %c4 = arith.constant 4 : index
    %c0_56 = arith.constant 0 : index
    %c0_57 = arith.constant 0 : index
    %95 = vector.load %arg10[%c4, %c0_56, %c0_57] : memref<7x224x128xbf16, #tpu.memory_space<vmem>>, vector<1x224x128xbf16>
    %96 = vector.shape_cast %95 : vector<1x224x128xbf16> to vector<224x128xbf16>
    %cst_58 = arith.constant dense<0.000000e+00> : vector<8x128xf32>
    %97 = tpu.matmul %94, %96, %cst_58 {dimension_numbers = #tpu.dot_dimension_numbers<[1], [0], [0], [1], [0, 0, 1, 1], [], []>} : vector<8x224xbf16>, vector<224x128xbf16>, vector<8x128xf32> -> vector<8x128xf32>
    %98 = arith.addf %92, %97 : vector<8x128xf32>
    %99 = vector.extract_strided_slice %69 {offsets = [40, 0], sizes = [8, 224], strides = [1, 1]} : vector<64x224xf32> to vector<8x224xf32>
    %100 = arith.truncf %99 : vector<8x224xf32> to vector<8x224xbf16>
    %c5 = arith.constant 5 : index
    %c0_59 = arith.constant 0 : index
    %c0_60 = arith.constant 0 : index
    %101 = vector.load %arg10[%c5, %c0_59, %c0_60] : memref<7x224x128xbf16, #tpu.memory_space<vmem>>, vector<1x224x128xbf16>
    %102 = vector.shape_cast %101 : vector<1x224x128xbf16> to vector<224x128xbf16>
    %cst_61 = arith.constant dense<0.000000e+00> : vector<8x128xf32>
    %103 = tpu.matmul %100, %102, %cst_61 {dimension_numbers = #tpu.dot_dimension_numbers<[1], [0], [0], [1], [0, 0, 1, 1], [], []>} : vector<8x224xbf16>, vector<224x128xbf16>, vector<8x128xf32> -> vector<8x128xf32>
    %104 = arith.addf %98, %103 : vector<8x128xf32>
    %105 = vector.extract_strided_slice %69 {offsets = [48, 0], sizes = [8, 224], strides = [1, 1]} : vector<64x224xf32> to vector<8x224xf32>
    %106 = arith.truncf %105 : vector<8x224xf32> to vector<8x224xbf16>
    %c6 = arith.constant 6 : index
    %c0_62 = arith.constant 0 : index
    %c0_63 = arith.constant 0 : index
    %107 = vector.load %arg10[%c6, %c0_62, %c0_63] : memref<7x224x128xbf16, #tpu.memory_space<vmem>>, vector<1x224x128xbf16>
    %108 = vector.shape_cast %107 : vector<1x224x128xbf16> to vector<224x128xbf16>
    %cst_64 = arith.constant dense<0.000000e+00> : vector<8x128xf32>
    %109 = tpu.matmul %106, %108, %cst_64 {dimension_numbers = #tpu.dot_dimension_numbers<[1], [0], [0], [1], [0, 0, 1, 1], [], []>} : vector<8x224xbf16>, vector<224x128xbf16>, vector<8x128xf32> -> vector<8x128xf32>
    %110 = arith.addf %104, %109 : vector<8x128xf32>
    %c0_65 = arith.constant 0 : index
    %c0_66 = arith.constant 0 : index
    %111 = vector.load %arg11[%c0_65, %c0_66] : memref<1x128xf32, #tpu.memory_space<vmem>>, vector<1x128xf32>
    %112 = vector.broadcast %111 : vector<1x128xf32> to vector<8x128xf32>
    %113 = arith.addf %110, %112 : vector<8x128xf32>
    %cst_67 = arith.constant 0.000000e+00 : f32
    %114 = vector.broadcast %cst_67 : f32 to vector<8x128xf32>
    %115 = arith.maximumf %113, %114 : vector<8x128xf32>
    %c0_68 = arith.constant 0 : index
    %c0_69 = arith.constant 0 : index
    %116 = vector.load %arg12[%c0_68, %c0_69] : memref<128x128xf32, #tpu.memory_space<vmem>>, vector<128x128xf32>
    %cst_70 = arith.constant dense<0.000000e+00> : vector<8x128xf32>
    %117 = tpu.matmul %115, %116, %cst_70 {dimension_numbers = #tpu.dot_dimension_numbers<[1], [0], [0], [1], [0, 0, 1, 1], [], []>} : vector<8x128xf32>, vector<128x128xf32>, vector<8x128xf32> -> vector<8x128xf32>
    %c0_71 = arith.constant 0 : index
    %c0_72 = arith.constant 0 : index
    %118 = vector.load %arg13[%c0_71, %c0_72] : memref<1x128xf32, #tpu.memory_space<vmem>>, vector<1x128xf32>
    %119 = vector.broadcast %118 : vector<1x128xf32> to vector<8x128xf32>
    %120 = arith.addf %117, %119 : vector<8x128xf32>
    %c0_73 = arith.constant 0 : index
    %c0_74 = arith.constant 0 : index
    %121 = vector.load %arg14[%c0_73, %c0_74] : memref<8x128xf32, #tpu.memory_space<vmem>>, vector<8x128xf32>
    tpu.vector_store %arg14[%c0_73, %c0_74], %120 {strides = array<i32>} : memref<8x128xf32, #tpu.memory_space<vmem>>, vector<8x128xf32>,
    return
  }
  func.func @transform_0(%arg0: i32) -> (i32, i32, i32) {
    %c0_i32 = arith.constant 0 : i32
    %c0_i32_0 = arith.constant 0 : i32
    %c0_i32_1 = arith.constant 0 : i32
    return %arg0, %c0_i32, %c0_i32_0 : i32, i32, i32
  }
  func.func @transform_1(%arg0: i32) -> (i32, i32, i32) {
    %c0_i32 = arith.constant 0 : i32
    %c0_i32_0 = arith.constant 0 : i32
    %c0_i32_1 = arith.constant 0 : i32
    %c0_i32_2 = arith.constant 0 : i32
    return %c0_i32, %c0_i32_0, %c0_i32_1 : i32, i32, i32
  }
  func.func @transform_2(%arg0: i32) -> (i32, i32) {
    %c0_i32 = arith.constant 0 : i32
    %c0_i32_0 = arith.constant 0 : i32
    %c0_i32_1 = arith.constant 0 : i32
    return %c0_i32, %c0_i32_0 : i32, i32
  }
  func.func @transform_3(%arg0: i32) -> (i32, i32) {
    %c0_i32 = arith.constant 0 : i32
    %c0_i32_0 = arith.constant 0 : i32
    %c0_i32_1 = arith.constant 0 : i32
    return %c0_i32, %c0_i32_0 : i32, i32
  }
  func.func @transform_4(%arg0: i32) -> (i32, i32) {
    %c0_i32 = arith.constant 0 : i32
    %c0_i32_0 = arith.constant 0 : i32
    %c0_i32_1 = arith.constant 0 : i32
    return %c0_i32, %c0_i32_0 : i32, i32
  }
  func.func @transform_5(%arg0: i32) -> (i32, i32, i32) {
    %c0_i32 = arith.constant 0 : i32
    %c0_i32_0 = arith.constant 0 : i32
    %c0_i32_1 = arith.constant 0 : i32
    %c0_i32_2 = arith.constant 0 : i32
    return %c0_i32, %c0_i32_0, %c0_i32_1 : i32, i32, i32
  }
  func.func @transform_6(%arg0: i32) -> (i32, i32) {
    %c0_i32 = arith.constant 0 : i32
    %c0_i32_0 = arith.constant 0 : i32
    %c0_i32_1 = arith.constant 0 : i32
    return %c0_i32, %c0_i32_0 : i32, i32
  }
  func.func @transform_7(%arg0: i32) -> (i32, i32) {
    %c0_i32 = arith.constant 0 : i32
    %c0_i32_0 = arith.constant 0 : i32
    %c0_i32_1 = arith.constant 0 : i32
    return %c0_i32, %c0_i32_0 : i32, i32
  }
  func.func @transform_8(%arg0: i32) -> (i32, i32) {
    %c0_i32 = arith.constant 0 : i32
    %c0_i32_0 = arith.constant 0 : i32
    %c0_i32_1 = arith.constant 0 : i32
    return %c0_i32, %c0_i32_0 : i32, i32
  }
  func.func @transform_9(%arg0: i32) -> (i32, i32, i32) {
    %c0_i32 = arith.constant 0 : i32
    %c0_i32_0 = arith.constant 0 : i32
    %c0_i32_1 = arith.constant 0 : i32
    %c0_i32_2 = arith.constant 0 : i32
    return %c0_i32, %c0_i32_0, %c0_i32_1 : i32, i32, i32
  }
  func.func @transform_10(%arg0: i32) -> (i32, i32) {
    %c0_i32 = arith.constant 0 : i32
    %c0_i32_0 = arith.constant 0 : i32
    %c0_i32_1 = arith.constant 0 : i32
    return %c0_i32, %c0_i32_0 : i32, i32
  }
  func.func @transform_11(%arg0: i32) -> (i32, i32) {
    %c0_i32 = arith.constant 0 : i32
    %c0_i32_0 = arith.constant 0 : i32
    %c0_i32_1 = arith.constant 0 : i32
    return %c0_i32, %c0_i32_0 : i32, i32
  }
  func.func @transform_12(%arg0: i32) -> (i32, i32) {
    %c0_i32 = arith.constant 0 : i32
    %c0_i32_0 = arith.constant 0 : i32
    %c0_i32_1 = arith.constant 0 : i32
    return %c0_i32, %c0_i32_0 : i32, i32
  }
  func.func @transform_13(%arg0: i32) -> (i32, i32) {
    %c0_i32 = arith.constant 0 : i32
    %c0_i32_0 = arith.constant 0 : i32
    return %arg0, %c0_i32 : i32, i32
  }
}

</mosaic_0001>

<llo_original>
// kernel: simple_cnn_forward.1
$region0: #{simple_cnn_forward.1}
  #allocation0 [shape = 'u32[]', space=smem, size = 0x4, offset = 0x4, fixed_abs, tag = 'smem constant byte address 0x4 - core index']
  #allocation1 [shape = 'u32[72,128]{1,0:T(1,128)}', space=vmem, size = 0x9000, scoped, tag = 'internal scratch']
  %s0 = inlined_call_operand.vmem [shape: f32[1,272,32], index: 0, kind: input, shape index: {}]
  %s1 = inlined_call_operand.hbm [shape: bf16[3,32,512], index: 1, kind: input, shape index: {}]
  %s2 = inlined_call_operand.vmem [shape: f32[1,512], index: 2, kind: input, shape index: {}]
  %s3 = inlined_call_operand.vmem [shape: bf16[144,256], index: 3, kind: input, shape index: {}]
  %s4 = inlined_call_operand.vmem [shape: bf16[448,256], index: 4, kind: input, shape index: {}]
  %s5 = inlined_call_operand.hbm [shape: bf16[3,256,512], index: 5, kind: input, shape index: {}]
  %s6 = inlined_call_operand.vmem [shape: f32[1,512], index: 6, kind: input, shape index: {}]
  %s7 = inlined_call_operand.hbm [shape: bf16[64,128], index: 7, kind: input, shape index: {}]
  %s8 = inlined_call_operand.hbm [shape: bf16[448,224], index: 8, kind: input, shape index: {}]
  %s9 = inlined_call_operand.vmem [shape: bf16[7,224,128], index: 9, kind: input, shape index: {}]
  %s10 = inlined_call_operand.vmem [shape: f32[1,128], index: 10, kind: input, shape index: {}]
  %s11 = inlined_call_operand.hbm [shape: f32[128,128], index: 11, kind: input, shape index: {}]
  %s12 = inlined_call_operand.vmem [shape: f32[1,128], index: 12, kind: input, shape index: {}]
  %s13 = inlined_call_operand.vmem [shape: f32[8,128], index: 13, kind: output, shape index: {}]
  %s14 = sld [smem:[#allocation0]]
  $region82: #{simple_cnn_forward.1} parent=0
    _
  %s16 = ssub.s32 1, %s14
  %s17 = scalar_select 0, %s16, %s14
  $region1: #{simple_cnn_forward.1} parent=0
    #allocation2 [shape = 'u8[98304]{0}', space=vmem, size = 0x18000, scoped, tag = 'input window, operand 1, single buffered']
    #allocation3 [shape = 's32[1]{0}', space=sflag, size = 0x4, scoped, tag = 'scoped memory for simple_cnn_forward.1']
    #allocation4 [shape = 'u8[786432]{0}', space=vmem, size = 0xc0000, scoped, tag = 'input window, operand 5, single buffered']
    #allocation5 [shape = 's32[1]{0}', space=sflag, size = 0x4, scoped, tag = 'scoped memory for simple_cnn_forward.1']
    #allocation6 [shape = 'u8[16384]{0}', space=vmem, size = 0x4000, scoped, tag = 'input window, operand 7, single buffered']
    #allocation7 [shape = 'u8[229376]{0}', space=vmem, size = 0x38000, scoped, tag = 'input window, operand 8, single buffered']
    #allocation8 [shape = 's32[1]{0}', space=sflag, size = 0x4, scoped, tag = 'scoped memory for simple_cnn_forward.1']
    #allocation9 [shape = 'u8[65536]{0}', space=vmem, size = 0x10000, scoped, tag = 'input window, operand 11, single buffered']
    %18 = vsyncpa [#allocation3], 0
    %19 = vsyncpa [#allocation5], 0
    %20 = vsyncpa [#allocation8], 0
    // Predicated region
    $region2: #{simple_cnn_forward.1} parent=1 // pred_check
      _
    $region3: #{simple_cnn_forward.1} parent=1 // pred_check_branch
      %22 = sbr.rel (0) target = $region5
    $region4: #{simple_cnn_forward.1} parent=1 // pred_region
      _
    $region5: #{simple_cnn_forward.1} parent=1 // pred_fallthru
      _
    // Predicated region
    $region6: #{simple_cnn_forward.1} parent=1 // pred_check
      _
    $region7: #{simple_cnn_forward.1} parent=1 // pred_check_branch
      %24 = sbr.rel (0) target = $region9
    $region8: #{simple_cnn_forward.1} parent=1 // pred_region
      %26 = vsyncadd [#allocation3], 0
      %s27 = sshll.u32 %s1, 4
      %s28 = int_to_ptr.hbm [resolvable:$true] %s27
      %s29 = sshll.u32 [#allocation2], 4
      %s30 = int_to_ptr.vmem [resolvable:$true] %s29
      %35 = dma.hbm_to_vmem [thread:$0]  %s28, 3072, %s30, [#allocation3], 256, 256, 16
    $region9: #{simple_cnn_forward.1} parent=1 // pred_fallthru
      _
    // Predicated region
    $region10: #{simple_cnn_forward.1} parent=1 // pred_check
      _
    $region11: #{simple_cnn_forward.1} parent=1 // pred_check_branch
      %37 = sbr.rel (0) target = $region13
    $region12: #{simple_cnn_forward.1} parent=1 // pred_region
      _
    $region13: #{simple_cnn_forward.1} parent=1 // pred_fallthru
      _
    // Predicated region
    $region14: #{simple_cnn_forward.1} parent=1 // pred_check
      _
    $region15: #{simple_cnn_forward.1} parent=1 // pred_check_branch
      %39 = sbr.rel (0) target = $region17
    $region16: #{simple_cnn_forward.1} parent=1 // pred_region
      _
    $region17: #{simple_cnn_forward.1} parent=1 // pred_fallthru
      _
    // Predicated region
    $region18: #{simple_cnn_forward.1} parent=1 // pred_check
      _
    $region19: #{simple_cnn_forward.1} parent=1 // pred_check_branch
      %41 = sbr.rel (0) target = $region21
    $region20: #{simple_cnn_forward.1} parent=1 // pred_region
      _
    $region21: #{simple_cnn_forward.1} parent=1 // pred_fallthru
      _
    // Predicated region
    $region22: #{simple_cnn_forward.1} parent=1 // pred_check
      _
    $region23: #{simple_cnn_forward.1} parent=1 // pred_check_branch
      %43 = sbr.rel (0) target = $region25
    $region24: #{simple_cnn_forward.1} parent=1 // pred_region
      %45 = vsyncadd [#allocation5], 0
      %s46 = sshll.u32 %s5, 4
      %s47 = int_to_ptr.hbm [resolvable:$true] %s46
      %s48 = sshll.u32 [#allocation4], 4
      %s49 = int_to_ptr.vmem [resolvable:$true] %s48
      %54 = dma.hbm_to_vmem [thread:$0]  %s47, 24576, %s49, [#allocation5], 256, 256, 16
    $region25: #{simple_cnn_forward.1} parent=1 // pred_fallthru
      _
    // Predicated region
    $region26: #{simple_cnn_forward.1} parent=1 // pred_check
      _
    $region27: #{simple_cnn_forward.1} parent=1 // pred_check_branch
      %56 = sbr.rel (0) target = $region29
    $region28: #{simple_cnn_forward.1} parent=1 // pred_region
      _
    $region29: #{simple_cnn_forward.1} parent=1 // pred_fallthru
      _
    // Predicated region
    $region30: #{simple_cnn_forward.1} parent=1 // pred_check
      _
    $region31: #{simple_cnn_forward.1} parent=1 // pred_check_branch
      %58 = sbr.rel (0) target = $region33
    $region32: #{simple_cnn_forward.1} parent=1 // pred_region
      %60 = vsyncadd [#allocation5], 0
      %s61 = sshll.u32 %s7, 4
      %s62 = int_to_ptr.hbm [resolvable:$true] %s61
      %s63 = sshll.u32 [#allocation6], 4
      %s64 = int_to_ptr.vmem [resolvable:$true] %s63
      %69 = dma.hbm_to_vmem [thread:$0]  %s62, 512, %s64, [#allocation5], 64, 64, 4
    $region33: #{simple_cnn_forward.1} parent=1 // pred_fallthru
      _
    // Predicated region
    $region34: #{simple_cnn_forward.1} parent=1 // pred_check
      _
    $region35: #{simple_cnn_forward.1} parent=1 // pred_check_branch
      %71 = sbr.rel (0) target = $region37
    $region36: #{simple_cnn_forward.1} parent=1 // pred_region
      %73 = vsyncadd [#allocation8], 0
      %s74 = sshll.u32 %s8, 4
      %s75 = int_to_ptr.hbm [resolvable:$true] %s74
      %s76 = sshll.u32 [#allocation7], 4
      %s77 = int_to_ptr.vmem [resolvable:$true] %s76
      %82 = dma.hbm_to_vmem [thread:$0]  %s75, 7168, %s77, [#allocation8], 128, 128, 8
    $region37: #{simple_cnn_forward.1} parent=1 // pred_fallthru
      _
    // Predicated region
    $region38: #{simple_cnn_forward.1} parent=1 // pred_check
      _
    $region39: #{simple_cnn_forward.1} parent=1 // pred_check_branch
      %84 = sbr.rel (0) target = $region41
    $region40: #{simple_cnn_forward.1} parent=1 // pred_region
      _
    $region41: #{simple_cnn_forward.1} parent=1 // pred_fallthru
      _
    // Predicated region
    $region42: #{simple_cnn_forward.1} parent=1 // pred_check
      _
    $region43: #{simple_cnn_forward.1} parent=1 // pred_check_branch
      %86 = sbr.rel (0) target = $region45
    $region44: #{simple_cnn_forward.1} parent=1 // pred_region
      _
    $region45: #{simple_cnn_forward.1} parent=1 // pred_fallthru
      _
    // Predicated region
    $region46: #{simple_cnn_forward.1} parent=1 // pred_check
      _
    $region47: #{simple_cnn_forward.1} parent=1 // pred_check_branch
      %88 = sbr.rel (0) target = $region49
    $region48: #{simple_cnn_forward.1} parent=1 // pred_region
      %90 = vsyncadd [#allocation8], 0
      %s91 = sshll.u32 %s11, 4
      %s92 = int_to_ptr.hbm [resolvable:$true] %s91
      %s93 = sshll.u32 [#allocation9], 4
      %s94 = int_to_ptr.vmem [resolvable:$true] %s93
      %99 = dma.hbm_to_vmem [thread:$0]  %s92, 2048, %s94, [#allocation8], 128, 128, 8
    $region49: #{simple_cnn_forward.1} parent=1 // pred_fallthru
      _
    // Predicated region
    $region50: #{simple_cnn_forward.1} parent=1 // pred_check
      _
    $region51: #{simple_cnn_forward.1} parent=1 // pred_check_branch
      %101 = sbr.rel (0) target = $region53
    $region52: #{simple_cnn_forward.1} parent=1 // pred_region
      _
    $region53: #{simple_cnn_forward.1} parent=1 // pred_fallthru
      _
    // Predicated region
    $region54: #{simple_cnn_forward.1} parent=1 // pred_check
      _
    $region55: #{simple_cnn_forward.1} parent=1 // pred_check_branch
      %103 = sbr.rel (0) target = $region57
    $region56: #{simple_cnn_forward.1} parent=1 // pred_region
      %105 = dma.done [#allocation3], 3072
    $region57: #{simple_cnn_forward.1} parent=1 // pred_fallthru
      _
    // Predicated region
    $region58: #{simple_cnn_forward.1} parent=1 // pred_check
      _
    $region59: #{simple_cnn_forward.1} parent=1 // pred_check_branch
      %107 = sbr.rel (0) target = $region61
    $region60: #{simple_cnn_forward.1} parent=1 // pred_region
      %109 = dma.done [#allocation5], 24576
    $region61: #{simple_cnn_forward.1} parent=1 // pred_fallthru
      _
    // Predicated region
    $region62: #{simple_cnn_forward.1} parent=1 // pred_check
      _
    $region63: #{simple_cnn_forward.1} parent=1 // pred_check_branch
      %111 = sbr.rel (0) target = $region65
    $region64: #{simple_cnn_forward.1} parent=1 // pred_region
      %113 = dma.done [#allocation5], 512
    $region65: #{simple_cnn_forward.1} parent=1 // pred_fallthru
      _
    // Predicated region
    $region66: #{simple_cnn_forward.1} parent=1 // pred_check
      _
    $region67: #{simple_cnn_forward.1} parent=1 // pred_check_branch
      %115 = sbr.rel (0) target = $region69
    $region68: #{simple_cnn_forward.1} parent=1 // pred_region
      %117 = dma.done [#allocation8], 7168
    $region69: #{simple_cnn_forward.1} parent=1 // pred_fallthru
      _
    // Predicated region
    $region70: #{simple_cnn_forward.1} parent=1 // pred_check
      _
    $region71: #{simple_cnn_forward.1} parent=1 // pred_check_branch
      %119 = sbr.rel (0) target = $region73
    $region72: #{simple_cnn_forward.1} parent=1 // pred_region
      %121 = dma.done [#allocation8], 2048
    $region73: #{simple_cnn_forward.1} parent=1 // pred_fallthru
      _
    %v123 = vld [vmem:[%s0] sm:$0xff]
    %v124 = vld [vmem:[%s0 + $0x8] sm:$0xff]
    %v125 = vld [vmem:[%s0 + $0x10] sm:$0xff]
    %v126 = vld [vmem:[%s0 + $0x18] sm:$0xff]
    %v127 = vld [vmem:[%s0 + $0x20] sm:$0xff]
    %v128 = vld [vmem:[%s0 + $0x28] sm:$0xff]
    %v129 = vld [vmem:[%s0 + $0x30] sm:$0xff]
    %v130 = vld [vmem:[%s0 + $0x38] sm:$0xff]
    %v131 = vld [vmem:[%s0 + $0x40] sm:$0xff]
    %v132 = vld [vmem:[%s0 + $0x48] sm:$0xff]
    %v133 = vld [vmem:[%s0 + $0x50] sm:$0xff]
    %v134 = vld [vmem:[%s0 + $0x58] sm:$0xff]
    %v135 = vld [vmem:[%s0 + $0x60] sm:$0xff]
    %v136 = vld [vmem:[%s0 + $0x68] sm:$0xff]
    %v137 = vld [vmem:[%s0 + $0x70] sm:$0xff]
    %v138 = vld [vmem:[%s0 + $0x78] sm:$0xff]
    %v139 = vld [vmem:[%s0 + $0x80] sm:$0xff]
    %v140 = vld [vmem:[%s0 + $0x88] sm:$0xff]
    %v141 = vld [vmem:[%s0 + $0x90] sm:$0xff]
    %v142 = vld [vmem:[%s0 + $0x98] sm:$0xff]
    %v143 = vld [vmem:[%s0 + $0xa0] sm:$0xff]
    %v144 = vld [vmem:[%s0 + $0xa8] sm:$0xff]
    %v145 = vld [vmem:[%s0 + $0xb0] sm:$0xff]
    %v146 = vld [vmem:[%s0 + $0xb8] sm:$0xff]
    %v147 = vld [vmem:[%s0 + $0xc0] sm:$0xff]
    %v148 = vld [vmem:[%s0 + $0xc8] sm:$0xff]
    %v149 = vld [vmem:[%s0 + $0xd0] sm:$0xff]
    %v150 = vld [vmem:[%s0 + $0xd8] sm:$0xff]
    %v151 = vld [vmem:[%s0 + $0xe0] sm:$0xff]
    %v152 = vld [vmem:[%s0 + $0xe8] sm:$0xff]
    %v153 = vld [vmem:[%s0 + $0xf0] sm:$0xff]
    %v154 = vld [vmem:[%s0 + $0xf8] sm:$0xff]
    %v155 = vld [vmem:[%s0 + $0x100] sm:$0xff]
    %v156 = vld [vmem:[%s0 + $0x108] sm:$0xff]
    %v157 = vpack.c.bf16 %v124, %v123
    %v158 = vpack.c.bf16 %v126, %v125
    %v159 = vpack.c.bf16 %v128, %v127
    %v160 = vpack.c.bf16 %v130, %v129
    %v161 = vpack.c.bf16 %v132, %v131
    %v162 = vpack.c.bf16 %v134, %v133
    %v163 = vpack.c.bf16 %v136, %v135
    %v164 = vpack.c.bf16 %v138, %v137
    %v165 = vpack.c.bf16 %v140, %v139
    %v166 = vpack.c.bf16 %v142, %v141
    %v167 = vpack.c.bf16 %v144, %v143
    %v168 = vpack.c.bf16 %v146, %v145
    %v169 = vpack.c.bf16 %v148, %v147
    %v170 = vpack.c.bf16 %v150, %v149
    %v171 = vpack.c.bf16 %v152, %v151
    %v172 = vpack.c.bf16 %v154, %v153
    %v173 = vpack.c.bf16 %v155, %v155
    %v174 = vld [vmem:[#allocation2] sm:$0xff]
    %v175 = vld [vmem:[#allocation2 + $0x8] sm:$0xff]
    %v176 = vld [vmem:[#allocation2 + $0x10] sm:$0xff]
    %v177 = vld [vmem:[#allocation2 + $0x18] sm:$0xff]
    %v178 = vld [vmem:[#allocation2 + $0x20] sm:$0xff]
    %v179 = vld [vmem:[#allocation2 + $0x28] sm:$0xff]
    %v180 = vld [vmem:[#allocation2 + $0x30] sm:$0xff]
    %v181 = vld [vmem:[#allocation2 + $0x38] sm:$0xff]
    %v182 = vpack.c.bf16 %v156, %v155
    %s183 = scalar_lea.vmem [#allocation2], 64
    %v184 = vld [vmem:[%s183] sm:$0xff]
    %v185 = vld [vmem:[%s183 + $0x8] sm:$0xff]
    %v186 = vld [vmem:[%s183 + $0x10] sm:$0xff]
    %v187 = vld [vmem:[%s183 + $0x18] sm:$0xff]
    %v188 = vld [vmem:[%s183 + $0x20] sm:$0xff]
    %v189 = vld [vmem:[%s183 + $0x28] sm:$0xff]
    %v190 = vld [vmem:[%s183 + $0x30] sm:$0xff]
    %v191 = vld [vmem:[%s183 + $0x38] sm:$0xff]
    %vm192 = vsmask.f32 7424
    %v194 = vshrl.u32 %v157, 16
    %v196 = vshll.u32 %v157, 16
    %v198 = vrot.slane %v196, 1
    %v199 = vor.u32 %v194, %v198
    %v201 = vshll.u32 %v158, 16
    %v203 = vrot.slane %v201, 1
    %v204 = vsel %vm192, %v199, %v203
    %v205 = vshrl.u32 %v158, 16
    %v207 = vor.u32 %v205, %v203
    %v209 = vshll.u32 %v159, 16
    %v211 = vrot.slane %v209, 1
    %v212 = vsel %vm192, %v207, %v211
    %v213 = vshrl.u32 %v159, 16
    %v215 = vor.u32 %v213, %v211
    %v217 = vshll.u32 %v160, 16
    %v219 = vrot.slane %v217, 1
    %v220 = vsel %vm192, %v215, %v219
    %v221 = vshrl.u32 %v160, 16
    %v223 = vor.u32 %v221, %v219
    %v225 = vshll.u32 %v161, 16
    %v227 = vrot.slane %v225, 1
    %v228 = vsel %vm192, %v223, %v227
    %v229 = vshrl.u32 %v161, 16
    %v231 = vor.u32 %v229, %v227
    %v233 = vshll.u32 %v162, 16
    %v235 = vrot.slane %v233, 1
    %v236 = vsel %vm192, %v231, %v235
    %v237 = vshrl.u32 %v162, 16
    %v239 = vor.u32 %v237, %v235
    %v241 = vshll.u32 %v163, 16
    %v243 = vrot.slane %v241, 1
    %v244 = vsel %vm192, %v239, %v243
    %v245 = vshrl.u32 %v163, 16
    %v247 = vor.u32 %v245, %v243
    %v249 = vshll.u32 %v164, 16
    %v251 = vrot.slane %v249, 1
    %v252 = vsel %vm192, %v247, %v251
    %v253 = vshrl.u32 %v164, 16
    %v255 = vor.u32 %v253, %v251
    %v257 = vshll.u32 %v165, 16
    %v259 = vrot.slane %v257, 1
    %v260 = vsel %vm192, %v255, %v259
    %v261 = vshrl.u32 %v165, 16
    %v263 = vor.u32 %v261, %v259
    %v265 = vshll.u32 %v166, 16
    %v267 = vrot.slane %v265, 1
    %v268 = vsel %vm192, %v263, %v267
    %v269 = vshrl.u32 %v166, 16
    %v271 = vor.u32 %v269, %v267
    %v273 = vshll.u32 %v167, 16
    %v275 = vrot.slane %v273, 1
    %v276 = vsel %vm192, %v271, %v275
    %v277 = vshrl.u32 %v167, 16
    %v279 = vor.u32 %v277, %v275
    %v281 = vshll.u32 %v168, 16
    %v283 = vrot.slane %v281, 1
    %v284 = vsel %vm192, %v279, %v283
    %v285 = vshrl.u32 %v168, 16
    %v287 = vor.u32 %v285, %v283
    %v289 = vshll.u32 %v169, 16
    %v291 = vrot.slane %v289, 1
    %v292 = vsel %vm192, %v287, %v291
    %v293 = vshrl.u32 %v169, 16
    %v295 = vor.u32 %v293, %v291
    %v297 = vshll.u32 %v170, 16
    %v299 = vrot.slane %v297, 1
    %v300 = vsel %vm192, %v295, %v299
    %v301 = vshrl.u32 %v170, 16
    %v303 = vor.u32 %v301, %v299
    %v305 = vshll.u32 %v171, 16
    %v307 = vrot.slane %v305, 1
    %v308 = vsel %vm192, %v303, %v307
    %v309 = vshrl.u32 %v171, 16
    %v311 = vor.u32 %v309, %v307
    %v313 = vshll.u32 %v172, 16
    %v315 = vrot.slane %v313, 1
    %v316 = vsel %vm192, %v311, %v315
    %v317 = vshrl.u32 %v172, 16
    %v319 = vor.u32 %v317, %v315
    %v321 = vshll.u32 %v182, 16
    %v323 = vrot.slane %v321, 1
    %v324 = vsel %vm192, %v319, %v323
    %v325 = vshrl.u32 %v182, 16
    %v327 = vor.u32 %v325, %v323
    %v336 = vunpack.c.l.b16 %v184
    %v337 = vunpack.c.h.b16 %v184
    %v338 = vunpack.c.l.b16 %v185
    %v339 = vunpack.c.h.b16 %v185
    %v340 = vunpack.c.l.b16 %v186
    %v341 = vunpack.c.h.b16 %v186
    %v342 = vunpack.c.l.b16 %v187
    %v343 = vunpack.c.h.b16 %v187
    %v344 = vunpack.c.l.b16 %v188
    %v345 = vunpack.c.h.b16 %v188
    %v346 = vunpack.c.l.b16 %v189
    %v347 = vunpack.c.h.b16 %v189
    %v348 = vunpack.c.l.b16 %v190
    %v349 = vunpack.c.h.b16 %v190
    %v350 = vunpack.c.l.b16 %v191
    %v351 = vunpack.c.h.b16 %v191
    %v352 = vpack.c.b16 %v340, %v336
    %v353 = vpack.c.b16 %v341, %v337
    %v354 = vpack.c.b16 %v342, %v338
    %v355 = vpack.c.b16 %v343, %v339
    %v356 = vpack.c.b16 %v348, %v344
    %v357 = vpack.c.b16 %v349, %v345
    %v358 = vpack.c.b16 %v350, %v346
    %v359 = vpack.c.b16 %v351, %v347
    %vm368 = vcmask 261120
    %v370 = vsel %vm368, %v204, 0
    %v373 = vsel %vm368, %v212, 0
    %v376 = vsel %vm368, %v220, 0
    %v379 = vsel %vm368, %v228, 0
    %v382 = vsel %vm368, %v236, 0
    %v385 = vsel %vm368, %v244, 0
    %v388 = vsel %vm368, %v252, 0
    %v391 = vsel %vm368, %v260, 0
    %v394 = vsel %vm368, %v268, 0
    %v397 = vsel %vm368, %v276, 0
    %v400 = vsel %vm368, %v284, 0
    %v403 = vsel %vm368, %v292, 0
    %v406 = vsel %vm368, %v300, 0
    %v409 = vsel %vm368, %v308, 0
    %v412 = vsel %vm368, %v316, 0
    %v415 = vsel %vm368, %v324, 0
    %v418 = vsel %vm368, %v327, 0
    %420 = vmatpush.bf16.msra.mxu0 0
    %421 = vmatpush.bf16.msra.mxu0 0
    %422 = vmatpush.bf16.msra.mxu0 0
    %423 = vmatpush.bf16.msra.mxu0 0
    %424 = vmatpush.bf16.msra.mxu0 0
    %425 = vmatpush.bf16.msra.mxu0 0
    %426 = vmatpush.bf16.msra.mxu0 %v356
    %427 = vmatpush.bf16.msra.mxu0 %v352
    %428 = vmatmul.bf16.gmra.mxu0 %v370
    %v429 = vpop.f32.mrf.mxu0
    %v430 = vadd.f32 0.0, %v429
    %v431 = vpop.f32.mrf.mxu0
    %v432 = vadd.f32 0.0, %v431
    %433 = vmatmul.bf16.gmra.mxu0 %v373
    %v434 = vpop.f32.mrf.mxu0
    %v435 = vadd.f32 0.0, %v434
    %v436 = vpop.f32.mrf.mxu0
    %v437 = vadd.f32 0.0, %v436
    %438 = vmatmul.bf16.gmra.mxu0 %v376
    %v439 = vpop.f32.mrf.mxu0
    %v440 = vadd.f32 0.0, %v439
    %v441 = vpop.f32.mrf.mxu0
    %v442 = vadd.f32 0.0, %v441
    %443 = vmatmul.bf16.gmra.mxu0 %v379
    %v444 = vpop.f32.mrf.mxu0
    %v445 = vadd.f32 0.0, %v444
    %v446 = vpop.f32.mrf.mxu0
    %v447 = vadd.f32 0.0, %v446
    %448 = vmatmul.bf16.gmra.mxu0 %v382
    %v449 = vpop.f32.mrf.mxu0
    %v450 = vadd.f32 0.0, %v449
    %v451 = vpop.f32.mrf.mxu0
    %v452 = vadd.f32 0.0, %v451
    %453 = vmatmul.bf16.gmra.mxu0 %v385
    %v454 = vpop.f32.mrf.mxu0
    %v455 = vadd.f32 0.0, %v454
    %v456 = vpop.f32.mrf.mxu0
    %v457 = vadd.f32 0.0, %v456
    %458 = vmatmul.bf16.gmra.mxu0 %v388
    %v459 = vpop.f32.mrf.mxu0
    %v460 = vadd.f32 0.0, %v459
    %v461 = vpop.f32.mrf.mxu0
    %v462 = vadd.f32 0.0, %v461
    %463 = vmatmul.bf16.gmra.mxu0 %v391
    %v464 = vpop.f32.mrf.mxu0
    %v465 = vadd.f32 0.0, %v464
    %v466 = vpop.f32.mrf.mxu0
    %v467 = vadd.f32 0.0, %v466
    %468 = vmatmul.bf16.gmra.mxu0 %v394
    %v469 = vpop.f32.mrf.mxu0
    %v470 = vadd.f32 0.0, %v469
    %v471 = vpop.f32.mrf.mxu0
    %v472 = vadd.f32 0.0, %v471
    %473 = vmatmul.bf16.gmra.mxu0 %v397
    %v474 = vpop.f32.mrf.mxu0
    %v475 = vadd.f32 0.0, %v474
    %v476 = vpop.f32.mrf.mxu0
    %v477 = vadd.f32 0.0, %v476
    %478 = vmatmul.bf16.gmra.mxu0 %v400
    %v479 = vpop.f32.mrf.mxu0
    %v480 = vadd.f32 0.0, %v479
    %v481 = vpop.f32.mrf.mxu0
    %v482 = vadd.f32 0.0, %v481
    %483 = vmatmul.bf16.gmra.mxu0 %v403
    %v484 = vpop.f32.mrf.mxu0
    %v485 = vadd.f32 0.0, %v484
    %v486 = vpop.f32.mrf.mxu0
    %v487 = vadd.f32 0.0, %v486
    %488 = vmatmul.bf16.gmra.mxu0 %v406
    %v489 = vpop.f32.mrf.mxu0
    %v490 = vadd.f32 0.0, %v489
    %v491 = vpop.f32.mrf.mxu0
    %v492 = vadd.f32 0.0, %v491
    %493 = vmatmul.bf16.gmra.mxu0 %v409
    %v494 = vpop.f32.mrf.mxu0
    %v495 = vadd.f32 0.0, %v494
    %v496 = vpop.f32.mrf.mxu0
    %v497 = vadd.f32 0.0, %v496
    %498 = vmatmul.bf16.gmra.mxu0 %v412
    %v499 = vpop.f32.mrf.mxu0
    %v500 = vadd.f32 0.0, %v499
    %v501 = vpop.f32.mrf.mxu0
    %v502 = vadd.f32 0.0, %v501
    %503 = vmatmul.bf16.gmra.mxu0 %v415
    %v504 = vpop.f32.mrf.mxu0
    %v505 = vadd.f32 0.0, %v504
    %v506 = vpop.f32.mrf.mxu0
    %v507 = vadd.f32 0.0, %v506
    %508 = vmatmul.bf16.gmra.mxu0 %v418
    %v509 = vpop.f32.mrf.mxu0
    %v510 = vadd.f32 0.0, %v509
    %v511 = vpop.f32.mrf.mxu0
    %512 = vdwg.mxu0
    %513 = vmatpush.bf16.msra.mxu0 0
    %514 = vmatpush.bf16.msra.mxu0 0
    %515 = vmatpush.bf16.msra.mxu0 0
    %516 = vmatpush.bf16.msra.mxu0 0
    %517 = vmatpush.bf16.msra.mxu0 0
    %518 = vmatpush.bf16.msra.mxu0 0
    %519 = vmatpush.bf16.msra.mxu0 %v357
    %520 = vmatpush.bf16.msra.mxu0 %v353
    %521 = vmatmul.bf16.gmra.mxu0 %v370
    %v522 = vpop.f32.mrf.mxu0
    %v523 = vadd.f32 0.0, %v522
    %v524 = vpop.f32.mrf.mxu0
    %v525 = vadd.f32 0.0, %v524
    %526 = vmatmul.bf16.gmra.mxu0 %v373
    %v527 = vpop.f32.mrf.mxu0
    %v528 = vadd.f32 0.0, %v527
    %v529 = vpop.f32.mrf.mxu0
    %v530 = vadd.f32 0.0, %v529
    %531 = vmatmul.bf16.gmra.mxu0 %v376
    %v532 = vpop.f32.mrf.mxu0
    %v533 = vadd.f32 0.0, %v532
    %v534 = vpop.f32.mrf.mxu0
    %v535 = vadd.f32 0.0, %v534
    %536 = vmatmul.bf16.gmra.mxu0 %v379
    %v537 = vpop.f32.mrf.mxu0
    %v538 = vadd.f32 0.0, %v537
    %v539 = vpop.f32.mrf.mxu0
    %v540 = vadd.f32 0.0, %v539
    %541 = vmatmul.bf16.gmra.mxu0 %v382
    %v542 = vpop.f32.mrf.mxu0
    %v543 = vadd.f32 0.0, %v542
    %v544 = vpop.f32.mrf.mxu0
    %v545 = vadd.f32 0.0, %v544
    %546 = vmatmul.bf16.gmra.mxu0 %v385
    %v547 = vpop.f32.mrf.mxu0
    %v548 = vadd.f32 0.0, %v547
    %v549 = vpop.f32.mrf.mxu0
    %v550 = vadd.f32 0.0, %v549
    %551 = vmatmul.bf16.gmra.mxu0 %v388
    %v552 = vpop.f32.mrf.mxu0
    %v553 = vadd.f32 0.0, %v552
    %v554 = vpop.f32.mrf.mxu0
    %v555 = vadd.f32 0.0, %v554
    %556 = vmatmul.bf16.gmra.mxu0 %v391
    %v557 = vpop.f32.mrf.mxu0
    %v558 = vadd.f32 0.0, %v557
    %v559 = vpop.f32.mrf.mxu0
    %v560 = vadd.f32 0.0, %v559
    %561 = vmatmul.bf16.gmra.mxu0 %v394
    %v562 = vpop.f32.mrf.mxu0
    %v563 = vadd.f32 0.0, %v562
    %v564 = vpop.f32.mrf.mxu0
    %v565 = vadd.f32 0.0, %v564
    %566 = vmatmul.bf16.gmra.mxu0 %v397
    %v567 = vpop.f32.mrf.mxu0
    %v568 = vadd.f32 0.0, %v567
    %v569 = vpop.f32.mrf.mxu0
    %v570 = vadd.f32 0.0, %v569
    %571 = vmatmul.bf16.gmra.mxu0 %v400
    %v572 = vpop.f32.mrf.mxu0
    %v573 = vadd.f32 0.0, %v572
    %v574 = vpop.f32.mrf.mxu0
    %v575 = vadd.f32 0.0, %v574
    %576 = vmatmul.bf16.gmra.mxu0 %v403
    %v577 = vpop.f32.mrf.mxu0
    %v578 = vadd.f32 0.0, %v577
    %v579 = vpop.f32.mrf.mxu0
    %v580 = vadd.f32 0.0, %v579
    %581 = vmatmul.bf16.gmra.mxu0 %v406
    %v582 = vpop.f32.mrf.mxu0
    %v583 = vadd.f32 0.0, %v582
    %v584 = vpop.f32.mrf.mxu0
    %v585 = vadd.f32 0.0, %v584
    %586 = vmatmul.bf16.gmra.mxu0 %v409
    %v587 = vpop.f32.mrf.mxu0
    %v588 = vadd.f32 0.0, %v587
    %v589 = vpop.f32.mrf.mxu0
    %v590 = vadd.f32 0.0, %v589
    %591 = vmatmul.bf16.gmra.mxu0 %v412
    %v592 = vpop.f32.mrf.mxu0
    %v593 = vadd.f32 0.0, %v592
    %v594 = vpop.f32.mrf.mxu0
    %v595 = vadd.f32 0.0, %v594
    %596 = vmatmul.bf16.gmra.mxu0 %v415
    %v597 = vpop.f32.mrf.mxu0
    %v598 = vadd.f32 0.0, %v597
    %v599 = vpop.f32.mrf.mxu0
    %v600 = vadd.f32 0.0, %v599
    %601 = vmatmul.bf16.gmra.mxu0 %v418
    %v602 = vpop.f32.mrf.mxu0
    %v603 = vadd.f32 0.0, %v602
    %v604 = vpop.f32.mrf.mxu0
    %605 = vdwg.mxu0
    %606 = vmatpush.bf16.msra.mxu0 0
    %607 = vmatpush.bf16.msra.mxu0 0
    %608 = vmatpush.bf16.msra.mxu0 0
    %609 = vmatpush.bf16.msra.mxu0 0
    %610 = vmatpush.bf16.msra.mxu0 0
    %611 = vmatpush.bf16.msra.mxu0 0
    %612 = vmatpush.bf16.msra.mxu0 %v358
    %613 = vmatpush.bf16.msra.mxu0 %v354
    %614 = vmatmul.bf16.gmra.mxu0 %v370
    %v615 = vpop.f32.mrf.mxu0
    %v616 = vadd.f32 0.0, %v615
    %v617 = vpop.f32.mrf.mxu0
    %v618 = vadd.f32 0.0, %v617
    %619 = vmatmul.bf16.gmra.mxu0 %v373
    %v620 = vpop.f32.mrf.mxu0
    %v621 = vadd.f32 0.0, %v620
    %v622 = vpop.f32.mrf.mxu0
    %v623 = vadd.f32 0.0, %v622
    %624 = vmatmul.bf16.gmra.mxu0 %v376
    %v625 = vpop.f32.mrf.mxu0
    %v626 = vadd.f32 0.0, %v625
    %v627 = vpop.f32.mrf.mxu0
    %v628 = vadd.f32 0.0, %v627
    %629 = vmatmul.bf16.gmra.mxu0 %v379
    %v630 = vpop.f32.mrf.mxu0
    %v631 = vadd.f32 0.0, %v630
    %v632 = vpop.f32.mrf.mxu0
    %v633 = vadd.f32 0.0, %v632
    %634 = vmatmul.bf16.gmra.mxu0 %v382
    %v635 = vpop.f32.mrf.mxu0
    %v636 = vadd.f32 0.0, %v635
    %v637 = vpop.f32.mrf.mxu0
    %v638 = vadd.f32 0.0, %v637
    %639 = vmatmul.bf16.gmra.mxu0 %v385
    %v640 = vpop.f32.mrf.mxu0
    %v641 = vadd.f32 0.0, %v640
    %v642 = vpop.f32.mrf.mxu0
    %v643 = vadd.f32 0.0, %v642
    %644 = vmatmul.bf16.gmra.mxu0 %v388
    %v645 = vpop.f32.mrf.mxu0
    %v646 = vadd.f32 0.0, %v645
    %v647 = vpop.f32.mrf.mxu0
    %v648 = vadd.f32 0.0, %v647
    %649 = vmatmul.bf16.gmra.mxu0 %v391
    %v650 = vpop.f32.mrf.mxu0
    %v651 = vadd.f32 0.0, %v650
    %v652 = vpop.f32.mrf.mxu0
    %v653 = vadd.f32 0.0, %v652
    %654 = vmatmul.bf16.gmra.mxu0 %v394
    %v655 = vpop.f32.mrf.mxu0
    %v656 = vadd.f32 0.0, %v655
    %v657 = vpop.f32.mrf.mxu0
    %v658 = vadd.f32 0.0, %v657
    %659 = vmatmul.bf16.gmra.mxu0 %v397
    %v660 = vpop.f32.mrf.mxu0
    %v661 = vadd.f32 0.0, %v660
    %v662 = vpop.f32.mrf.mxu0
    %v663 = vadd.f32 0.0, %v662
    %664 = vmatmul.bf16.gmra.mxu0 %v400
    %v665 = vpop.f32.mrf.mxu0
    %v666 = vadd.f32 0.0, %v665
    %v667 = vpop.f32.mrf.mxu0
    %v668 = vadd.f32 0.0, %v667
    %669 = vmatmul.bf16.gmra.mxu0 %v403
    %v670 = vpop.f32.mrf.mxu0
    %v671 = vadd.f32 0.0, %v670
    %v672 = vpop.f32.mrf.mxu0
    %v673 = vadd.f32 0.0, %v672
    %674 = vmatmul.bf16.gmra.mxu0 %v406
    %v675 = vpop.f32.mrf.mxu0
    %v676 = vadd.f32 0.0, %v675
    %v677 = vpop.f32.mrf.mxu0
    %v678 = vadd.f32 0.0, %v677
    %679 = vmatmul.bf16.gmra.mxu0 %v409
    %v680 = vpop.f32.mrf.mxu0
    %v681 = vadd.f32 0.0, %v680
    %v682 = vpop.f32.mrf.mxu0
    %v683 = vadd.f32 0.0, %v682
    %684 = vmatmul.bf16.gmra.mxu0 %v412
    %v685 = vpop.f32.mrf.mxu0
    %v686 = vadd.f32 0.0, %v685
    %v687 = vpop.f32.mrf.mxu0
    %v688 = vadd.f32 0.0, %v687
    %689 = vmatmul.bf16.gmra.mxu0 %v415
    %v690 = vpop.f32.mrf.mxu0
    %v691 = vadd.f32 0.0, %v690
    %v692 = vpop.f32.mrf.mxu0
    %v693 = vadd.f32 0.0, %v692
    %694 = vmatmul.bf16.gmra.mxu0 %v418
    %v695 = vpop.f32.mrf.mxu0
    %v696 = vadd.f32 0.0, %v695
    %v697 = vpop.f32.mrf.mxu0
    %698 = vdwg.mxu0
    %699 = vmatpush.bf16.msra.mxu0 0
    %700 = vmatpush.bf16.msra.mxu0 0
    %701 = vmatpush.bf16.msra.mxu0 0
    %702 = vmatpush.bf16.msra.mxu0 0
    %703 = vmatpush.bf16.msra.mxu0 0
    %704 = vmatpush.bf16.msra.mxu0 0
    %705 = vmatpush.bf16.msra.mxu0 %v359
    %706 = vmatpush.bf16.msra.mxu0 %v355
    %707 = vmatmul.bf16.gmra.mxu0 %v370
    %v708 = vpop.f32.mrf.mxu0
    %v709 = vadd.f32 0.0, %v708
    %v710 = vpop.f32.mrf.mxu0
    %v711 = vadd.f32 0.0, %v710
    %712 = vmatmul.bf16.gmra.mxu0 %v373
    %v713 = vpop.f32.mrf.mxu0
    %v714 = vadd.f32 0.0, %v713
    %v715 = vpop.f32.mrf.mxu0
    %v716 = vadd.f32 0.0, %v715
    %717 = vmatmul.bf16.gmra.mxu0 %v376
    %v718 = vpop.f32.mrf.mxu0
    %v719 = vadd.f32 0.0, %v718
    %v720 = vpop.f32.mrf.mxu0
    %v721 = vadd.f32 0.0, %v720
    %722 = vmatmul.bf16.gmra.mxu0 %v379
    %v723 = vpop.f32.mrf.mxu0
    %v724 = vadd.f32 0.0, %v723
    %v725 = vpop.f32.mrf.mxu0
    %v726 = vadd.f32 0.0, %v725
    %727 = vmatmul.bf16.gmra.mxu0 %v382
    %v728 = vpop.f32.mrf.mxu0
    %v729 = vadd.f32 0.0, %v728
    %v730 = vpop.f32.mrf.mxu0
    %v731 = vadd.f32 0.0, %v730
    %732 = vmatmul.bf16.gmra.mxu0 %v385
    %v733 = vpop.f32.mrf.mxu0
    %v734 = vadd.f32 0.0, %v733
    %v735 = vpop.f32.mrf.mxu0
    %v736 = vadd.f32 0.0, %v735
    %737 = vmatmul.bf16.gmra.mxu0 %v388
    %v738 = vpop.f32.mrf.mxu0
    %v739 = vadd.f32 0.0, %v738
    %v740 = vpop.f32.mrf.mxu0
    %v741 = vadd.f32 0.0, %v740
    %742 = vmatmul.bf16.gmra.mxu0 %v391
    %v743 = vpop.f32.mrf.mxu0
    %v744 = vadd.f32 0.0, %v743
    %v745 = vpop.f32.mrf.mxu0
    %v746 = vadd.f32 0.0, %v745
    %747 = vmatmul.bf16.gmra.mxu0 %v394
    %v748 = vpop.f32.mrf.mxu0
    %v749 = vadd.f32 0.0, %v748
    %v750 = vpop.f32.mrf.mxu0
    %v751 = vadd.f32 0.0, %v750
    %752 = vmatmul.bf16.gmra.mxu0 %v397
    %v753 = vpop.f32.mrf.mxu0
    %v754 = vadd.f32 0.0, %v753
    %v755 = vpop.f32.mrf.mxu0
    %v756 = vadd.f32 0.0, %v755
    %757 = vmatmul.bf16.gmra.mxu0 %v400
    %v758 = vpop.f32.mrf.mxu0
    %v759 = vadd.f32 0.0, %v758
    %v760 = vpop.f32.mrf.mxu0
    %v761 = vadd.f32 0.0, %v760
    %762 = vmatmul.bf16.gmra.mxu0 %v403
    %v763 = vpop.f32.mrf.mxu0
    %v764 = vadd.f32 0.0, %v763
    %v765 = vpop.f32.mrf.mxu0
    %v766 = vadd.f32 0.0, %v765
    %767 = vmatmul.bf16.gmra.mxu0 %v406
    %v768 = vpop.f32.mrf.mxu0
    %v769 = vadd.f32 0.0, %v768
    %v770 = vpop.f32.mrf.mxu0
    %v771 = vadd.f32 0.0, %v770
    %772 = vmatmul.bf16.gmra.mxu0 %v409
    %v773 = vpop.f32.mrf.mxu0
    %v774 = vadd.f32 0.0, %v773
    %v775 = vpop.f32.mrf.mxu0
    %v776 = vadd.f32 0.0, %v775
    %777 = vmatmul.bf16.gmra.mxu0 %v412
    %v778 = vpop.f32.mrf.mxu0
    %v779 = vadd.f32 0.0, %v778
    %v780 = vpop.f32.mrf.mxu0
    %v781 = vadd.f32 0.0, %v780
    %782 = vmatmul.bf16.gmra.mxu0 %v415
    %v783 = vpop.f32.mrf.mxu0
    %v784 = vadd.f32 0.0, %v783
    %v785 = vpop.f32.mrf.mxu0
    %v786 = vadd.f32 0.0, %v785
    %787 = vmatmul.bf16.gmra.mxu0 %v418
    %v788 = vpop.f32.mrf.mxu0
    %v789 = vadd.f32 0.0, %v788
    %v790 = vpop.f32.mrf.mxu0
    %791 = vdwg.mxu0
    %v800 = vunpack.c.l.b16 %v174
    %v801 = vunpack.c.h.b16 %v174
    %v802 = vunpack.c.l.b16 %v175
    %v803 = vunpack.c.h.b16 %v175
    %v804 = vunpack.c.l.b16 %v176
    %v805 = vunpack.c.h.b16 %v176
    %v806 = vunpack.c.l.b16 %v177
    %v807 = vunpack.c.h.b16 %v177
    %v808 = vunpack.c.l.b16 %v178
    %v809 = vunpack.c.h.b16 %v178
    %v810 = vunpack.c.l.b16 %v179
    %v811 = vunpack.c.h.b16 %v179
    %v812 = vunpack.c.l.b16 %v180
    %v813 = vunpack.c.h.b16 %v180
    %v814 = vunpack.c.l.b16 %v181
    %v815 = vunpack.c.h.b16 %v181
    %v816 = vpack.c.b16 %v804, %v800
    %v817 = vpack.c.b16 %v805, %v801
    %v818 = vpack.c.b16 %v806, %v802
    %v819 = vpack.c.b16 %v807, %v803
    %v820 = vpack.c.b16 %v812, %v808
    %v821 = vpack.c.b16 %v813, %v809
    %v822 = vpack.c.b16 %v814, %v810
    %v823 = vpack.c.b16 %v815, %v811
    %v832 = vsel %vm368, %v157, 0
    %v834 = vsel %vm368, %v158, 0
    %v836 = vsel %vm368, %v159, 0
    %v838 = vsel %vm368, %v160, 0
    %v840 = vsel %vm368, %v161, 0
    %v842 = vsel %vm368, %v162, 0
    %v844 = vsel %vm368, %v163, 0
    %v846 = vsel %vm368, %v164, 0
    %v848 = vsel %vm368, %v165, 0
    %v850 = vsel %vm368, %v166, 0
    %v852 = vsel %vm368, %v167, 0
    %v854 = vsel %vm368, %v168, 0
    %v856 = vsel %vm368, %v169, 0
    %v858 = vsel %vm368, %v170, 0
    %v860 = vsel %vm368, %v171, 0
    %v862 = vsel %vm368, %v172, 0
    %v865 = vsel %vm368, %v173, 0
    %867 = vmatpush.bf16.msra.mxu0 0
    %868 = vmatpush.bf16.msra.mxu0 0
    %869 = vmatpush.bf16.msra.mxu0 0
    %870 = vmatpush.bf16.msra.mxu0 0
    %871 = vmatpush.bf16.msra.mxu0 0
    %872 = vmatpush.bf16.msra.mxu0 0
    %873 = vmatpush.bf16.msra.mxu0 %v820
    %874 = vmatpush.bf16.msra.mxu0 %v816
    %875 = vmatmul.bf16.gmra.mxu0 %v832
    %v876 = vpop.f32.mrf.mxu0
    %v877 = vadd.f32 %v430, %v876
    %v878 = vpop.f32.mrf.mxu0
    %v879 = vadd.f32 %v432, %v878
    %880 = vmatmul.bf16.gmra.mxu0 %v834
    %v881 = vpop.f32.mrf.mxu0
    %v882 = vadd.f32 %v435, %v881
    %v883 = vpop.f32.mrf.mxu0
    %v884 = vadd.f32 %v437, %v883
    %885 = vmatmul.bf16.gmra.mxu0 %v836
    %v886 = vpop.f32.mrf.mxu0
    %v887 = vadd.f32 %v440, %v886
    %v888 = vpop.f32.mrf.mxu0
    %v889 = vadd.f32 %v442, %v888
    %890 = vmatmul.bf16.gmra.mxu0 %v838
    %v891 = vpop.f32.mrf.mxu0
    %v892 = vadd.f32 %v445, %v891
    %v893 = vpop.f32.mrf.mxu0
    %v894 = vadd.f32 %v447, %v893
    %895 = vmatmul.bf16.gmra.mxu0 %v840
    %v896 = vpop.f32.mrf.mxu0
    %v897 = vadd.f32 %v450, %v896
    %v898 = vpop.f32.mrf.mxu0
    %v899 = vadd.f32 %v452, %v898
    %900 = vmatmul.bf16.gmra.mxu0 %v842
    %v901 = vpop.f32.mrf.mxu0
    %v902 = vadd.f32 %v455, %v901
    %v903 = vpop.f32.mrf.mxu0
    %v904 = vadd.f32 %v457, %v903
    %905 = vmatmul.bf16.gmra.mxu0 %v844
    %v906 = vpop.f32.mrf.mxu0
    %v907 = vadd.f32 %v460, %v906
    %v908 = vpop.f32.mrf.mxu0
    %v909 = vadd.f32 %v462, %v908
    %910 = vmatmul.bf16.gmra.mxu0 %v846
    %v911 = vpop.f32.mrf.mxu0
    %v912 = vadd.f32 %v465, %v911
    %v913 = vpop.f32.mrf.mxu0
    %v914 = vadd.f32 %v467, %v913
    %915 = vmatmul.bf16.gmra.mxu0 %v848
    %v916 = vpop.f32.mrf.mxu0
    %v917 = vadd.f32 %v470, %v916
    %v918 = vpop.f32.mrf.mxu0
    %v919 = vadd.f32 %v472, %v918
    %920 = vmatmul.bf16.gmra.mxu0 %v850
    %v921 = vpop.f32.mrf.mxu0
    %v922 = vadd.f32 %v475, %v921
    %v923 = vpop.f32.mrf.mxu0
    %v924 = vadd.f32 %v477, %v923
    %925 = vmatmul.bf16.gmra.mxu0 %v852
    %v926 = vpop.f32.mrf.mxu0
    %v927 = vadd.f32 %v480, %v926
    %v928 = vpop.f32.mrf.mxu0
    %v929 = vadd.f32 %v482, %v928
    %930 = vmatmul.bf16.gmra.mxu0 %v854
    %v931 = vpop.f32.mrf.mxu0
    %v932 = vadd.f32 %v485, %v931
    %v933 = vpop.f32.mrf.mxu0
    %v934 = vadd.f32 %v487, %v933
    %935 = vmatmul.bf16.gmra.mxu0 %v856
    %v936 = vpop.f32.mrf.mxu0
    %v937 = vadd.f32 %v490, %v936
    %v938 = vpop.f32.mrf.mxu0
    %v939 = vadd.f32 %v492, %v938
    %940 = vmatmul.bf16.gmra.mxu0 %v858
    %v941 = vpop.f32.mrf.mxu0
    %v942 = vadd.f32 %v495, %v941
    %v943 = vpop.f32.mrf.mxu0
    %v944 = vadd.f32 %v497, %v943
    %945 = vmatmul.bf16.gmra.mxu0 %v860
    %v946 = vpop.f32.mrf.mxu0
    %v947 = vadd.f32 %v500, %v946
    %v948 = vpop.f32.mrf.mxu0
    %v949 = vadd.f32 %v502, %v948
    %950 = vmatmul.bf16.gmra.mxu0 %v862
    %v951 = vpop.f32.mrf.mxu0
    %v952 = vadd.f32 %v505, %v951
    %v953 = vpop.f32.mrf.mxu0
    %v954 = vadd.f32 %v507, %v953
    %955 = vmatmul.bf16.gmra.mxu0 %v865
    %v956 = vpop.f32.mrf.mxu0
    %v957 = vadd.f32 %v510, %v956
    %v958 = vpop.f32.mrf.mxu0
    %959 = vdwg.mxu0
    %960 = vmatpush.bf16.msra.mxu0 0
    %961 = vmatpush.bf16.msra.mxu0 0
    %962 = vmatpush.bf16.msra.mxu0 0
    %963 = vmatpush.bf16.msra.mxu0 0
    %964 = vmatpush.bf16.msra.mxu0 0
    %965 = vmatpush.bf16.msra.mxu0 0
    %966 = vmatpush.bf16.msra.mxu0 %v821
    %967 = vmatpush.bf16.msra.mxu0 %v817
    %968 = vmatmul.bf16.gmra.mxu0 %v832
    %v969 = vpop.f32.mrf.mxu0
    %v970 = vadd.f32 %v523, %v969
    %v971 = vpop.f32.mrf.mxu0
    %v972 = vadd.f32 %v525, %v971
    %973 = vmatmul.bf16.gmra.mxu0 %v834
    %v974 = vpop.f32.mrf.mxu0
    %v975 = vadd.f32 %v528, %v974
    %v976 = vpop.f32.mrf.mxu0
    %v977 = vadd.f32 %v530, %v976
    %978 = vmatmul.bf16.gmra.mxu0 %v836
    %v979 = vpop.f32.mrf.mxu0
    %v980 = vadd.f32 %v533, %v979
    %v981 = vpop.f32.mrf.mxu0
    %v982 = vadd.f32 %v535, %v981
    %983 = vmatmul.bf16.gmra.mxu0 %v838
    %v984 = vpop.f32.mrf.mxu0
    %v985 = vadd.f32 %v538, %v984
    %v986 = vpop.f32.mrf.mxu0
    %v987 = vadd.f32 %v540, %v986
    %988 = vmatmul.bf16.gmra.mxu0 %v840
    %v989 = vpop.f32.mrf.mxu0
    %v990 = vadd.f32 %v543, %v989
    %v991 = vpop.f32.mrf.mxu0
    %v992 = vadd.f32 %v545, %v991
    %993 = vmatmul.bf16.gmra.mxu0 %v842
    %v994 = vpop.f32.mrf.mxu0
    %v995 = vadd.f32 %v548, %v994
    %v996 = vpop.f32.mrf.mxu0
    %v997 = vadd.f32 %v550, %v996
    %998 = vmatmul.bf16.gmra.mxu0 %v844
    %v999 = vpop.f32.mrf.mxu0
    %v1000 = vadd.f32 %v553, %v999
    %v1001 = vpop.f32.mrf.mxu0
    %v1002 = vadd.f32 %v555, %v1001
    %1003 = vmatmul.bf16.gmra.mxu0 %v846
    %v1004 = vpop.f32.mrf.mxu0
    %v1005 = vadd.f32 %v558, %v1004
    %v1006 = vpop.f32.mrf.mxu0
    %v1007 = vadd.f32 %v560, %v1006
    %1008 = vmatmul.bf16.gmra.mxu0 %v848
    %v1009 = vpop.f32.mrf.mxu0
    %v1010 = vadd.f32 %v563, %v1009
    %v1011 = vpop.f32.mrf.mxu0
    %v1012 = vadd.f32 %v565, %v1011
    %1013 = vmatmul.bf16.gmra.mxu0 %v850
    %v1014 = vpop.f32.mrf.mxu0
    %v1015 = vadd.f32 %v568, %v1014
    %v1016 = vpop.f32.mrf.mxu0
    %v1017 = vadd.f32 %v570, %v1016
    %1018 = vmatmul.bf16.gmra.mxu0 %v852
    %v1019 = vpop.f32.mrf.mxu0
    %v1020 = vadd.f32 %v573, %v1019
    %v1021 = vpop.f32.mrf.mxu0
    %v1022 = vadd.f32 %v575, %v1021
    %1023 = vmatmul.bf16.gmra.mxu0 %v854
    %v1024 = vpop.f32.mrf.mxu0
    %v1025 = vadd.f32 %v578, %v1024
    %v1026 = vpop.f32.mrf.mxu0
    %v1027 = vadd.f32 %v580, %v1026
    %1028 = vmatmul.bf16.gmra.mxu0 %v856
    %v1029 = vpop.f32.mrf.mxu0
    %v1030 = vadd.f32 %v583, %v1029
    %v1031 = vpop.f32.mrf.mxu0
    %v1032 = vadd.f32 %v585, %v1031
    %1033 = vmatmul.bf16.gmra.mxu0 %v858
    %v1034 = vpop.f32.mrf.mxu0
    %v1035 = vadd.f32 %v588, %v1034
    %v1036 = vpop.f32.mrf.mxu0
    %v1037 = vadd.f32 %v590, %v1036
    %1038 = vmatmul.bf16.gmra.mxu0 %v860
    %v1039 = vpop.f32.mrf.mxu0
    %v1040 = vadd.f32 %v593, %v1039
    %v1041 = vpop.f32.mrf.mxu0
    %v1042 = vadd.f32 %v595, %v1041
    %1043 = vmatmul.bf16.gmra.mxu0 %v862
    %v1044 = vpop.f32.mrf.mxu0
    %v1045 = vadd.f32 %v598, %v1044
    %v1046 = vpop.f32.mrf.mxu0
    %v1047 = vadd.f32 %v600, %v1046
    %1048 = vmatmul.bf16.gmra.mxu0 %v865
    %v1049 = vpop.f32.mrf.mxu0
    %v1050 = vadd.f32 %v603, %v1049
    %v1051 = vpop.f32.mrf.mxu0
    %1052 = vdwg.mxu0
    %1053 = vmatpush.bf16.msra.mxu0 0
    %1054 = vmatpush.bf16.msra.mxu0 0
    %1055 = vmatpush.bf16.msra.mxu0 0
    %1056 = vmatpush.bf16.msra.mxu0 0
    %1057 = vmatpush.bf16.msra.mxu0 0
    %1058 = vmatpush.bf16.msra.mxu0 0
    %1059 = vmatpush.bf16.msra.mxu0 %v822
    %1060 = vmatpush.bf16.msra.mxu0 %v818
    %1061 = vmatmul.bf16.gmra.mxu0 %v832
    %v1062 = vpop.f32.mrf.mxu0
    %v1063 = vadd.f32 %v616, %v1062
    %v1064 = vpop.f32.mrf.mxu0
    %v1065 = vadd.f32 %v618, %v1064
    %1066 = vmatmul.bf16.gmra.mxu0 %v834
    %v1067 = vpop.f32.mrf.mxu0
    %v1068 = vadd.f32 %v621, %v1067
    %v1069 = vpop.f32.mrf.mxu0
    %v1070 = vadd.f32 %v623, %v1069
    %1071 = vmatmul.bf16.gmra.mxu0 %v836
    %v1072 = vpop.f32.mrf.mxu0
    %v1073 = vadd.f32 %v626, %v1072
    %v1074 = vpop.f32.mrf.mxu0
    %v1075 = vadd.f32 %v628, %v1074
    %1076 = vmatmul.bf16.gmra.mxu0 %v838
    %v1077 = vpop.f32.mrf.mxu0
    %v1078 = vadd.f32 %v631, %v1077
    %v1079 = vpop.f32.mrf.mxu0
    %v1080 = vadd.f32 %v633, %v1079
    %1081 = vmatmul.bf16.gmra.mxu0 %v840
    %v1082 = vpop.f32.mrf.mxu0
    %v1083 = vadd.f32 %v636, %v1082
    %v1084 = vpop.f32.mrf.mxu0
    %v1085 = vadd.f32 %v638, %v1084
    %1086 = vmatmul.bf16.gmra.mxu0 %v842
    %v1087 = vpop.f32.mrf.mxu0
    %v1088 = vadd.f32 %v641, %v1087
    %v1089 = vpop.f32.mrf.mxu0
    %v1090 = vadd.f32 %v643, %v1089
    %1091 = vmatmul.bf16.gmra.mxu0 %v844
    %v1092 = vpop.f32.mrf.mxu0
    %v1093 = vadd.f32 %v646, %v1092
    %v1094 = vpop.f32.mrf.mxu0
    %v1095 = vadd.f32 %v648, %v1094
    %1096 = vmatmul.bf16.gmra.mxu0 %v846
    %v1097 = vpop.f32.mrf.mxu0
    %v1098 = vadd.f32 %v651, %v1097
    %v1099 = vpop.f32.mrf.mxu0
    %v1100 = vadd.f32 %v653, %v1099
    %1101 = vmatmul.bf16.gmra.mxu0 %v848
    %v1102 = vpop.f32.mrf.mxu0
    %v1103 = vadd.f32 %v656, %v1102
    %v1104 = vpop.f32.mrf.mxu0
    %v1105 = vadd.f32 %v658, %v1104
    %1106 = vmatmul.bf16.gmra.mxu0 %v850
    %v1107 = vpop.f32.mrf.mxu0
    %v1108 = vadd.f32 %v661, %v1107
    %v1109 = vpop.f32.mrf.mxu0
    %v1110 = vadd.f32 %v663, %v1109
    %1111 = vmatmul.bf16.gmra.mxu0 %v852
    %v1112 = vpop.f32.mrf.mxu0
    %v1113 = vadd.f32 %v666, %v1112
    %v1114 = vpop.f32.mrf.mxu0
    %v1115 = vadd.f32 %v668, %v1114
    %1116 = vmatmul.bf16.gmra.mxu0 %v854
    %v1117 = vpop.f32.mrf.mxu0
    %v1118 = vadd.f32 %v671, %v1117
    %v1119 = vpop.f32.mrf.mxu0
    %v1120 = vadd.f32 %v673, %v1119
    %1121 = vmatmul.bf16.gmra.mxu0 %v856
    %v1122 = vpop.f32.mrf.mxu0
    %v1123 = vadd.f32 %v676, %v1122
    %v1124 = vpop.f32.mrf.mxu0
    %v1125 = vadd.f32 %v678, %v1124
    %1126 = vmatmul.bf16.gmra.mxu0 %v858
    %v1127 = vpop.f32.mrf.mxu0
    %v1128 = vadd.f32 %v681, %v1127
    %v1129 = vpop.f32.mrf.mxu0
    %v1130 = vadd.f32 %v683, %v1129
    %1131 = vmatmul.bf16.gmra.mxu0 %v860
    %v1132 = vpop.f32.mrf.mxu0
    %v1133 = vadd.f32 %v686, %v1132
    %v1134 = vpop.f32.mrf.mxu0
    %v1135 = vadd.f32 %v688, %v1134
    %1136 = vmatmul.bf16.gmra.mxu0 %v862
    %v1137 = vpop.f32.mrf.mxu0
    %v1138 = vadd.f32 %v691, %v1137
    %v1139 = vpop.f32.mrf.mxu0
    %v1140 = vadd.f32 %v693, %v1139
    %1141 = vmatmul.bf16.gmra.mxu0 %v865
    %v1142 = vpop.f32.mrf.mxu0
    %v1143 = vadd.f32 %v696, %v1142
    %v1144 = vpop.f32.mrf.mxu0
    %1145 = vdwg.mxu0
    %1146 = vmatpush.bf16.msra.mxu0 0
    %1147 = vmatpush.bf16.msra.mxu0 0
    %1148 = vmatpush.bf16.msra.mxu0 0
    %1149 = vmatpush.bf16.msra.mxu0 0
    %1150 = vmatpush.bf16.msra.mxu0 0
    %1151 = vmatpush.bf16.msra.mxu0 0
    %1152 = vmatpush.bf16.msra.mxu0 %v823
    %1153 = vmatpush.bf16.msra.mxu0 %v819
    %1154 = vmatmul.bf16.gmra.mxu0 %v832
    %v1155 = vpop.f32.mrf.mxu0
    %v1156 = vadd.f32 %v709, %v1155
    %v1157 = vpop.f32.mrf.mxu0
    %v1158 = vadd.f32 %v711, %v1157
    %1159 = vmatmul.bf16.gmra.mxu0 %v834
    %v1160 = vpop.f32.mrf.mxu0
    %v1161 = vadd.f32 %v714, %v1160
    %v1162 = vpop.f32.mrf.mxu0
    %v1163 = vadd.f32 %v716, %v1162
    %1164 = vmatmul.bf16.gmra.mxu0 %v836
    %v1165 = vpop.f32.mrf.mxu0
    %v1166 = vadd.f32 %v719, %v1165
    %v1167 = vpop.f32.mrf.mxu0
    %v1168 = vadd.f32 %v721, %v1167
    %1169 = vmatmul.bf16.gmra.mxu0 %v838
    %v1170 = vpop.f32.mrf.mxu0
    %v1171 = vadd.f32 %v724, %v1170
    %v1172 = vpop.f32.mrf.mxu0
    %v1173 = vadd.f32 %v726, %v1172
    %1174 = vmatmul.bf16.gmra.mxu0 %v840
    %v1175 = vpop.f32.mrf.mxu0
    %v1176 = vadd.f32 %v729, %v1175
    %v1177 = vpop.f32.mrf.mxu0
    %v1178 = vadd.f32 %v731, %v1177
    %1179 = vmatmul.bf16.gmra.mxu0 %v842
    %v1180 = vpop.f32.mrf.mxu0
    %v1181 = vadd.f32 %v734, %v1180
    %v1182 = vpop.f32.mrf.mxu0
    %v1183 = vadd.f32 %v736, %v1182
    %1184 = vmatmul.bf16.gmra.mxu0 %v844
    %v1185 = vpop.f32.mrf.mxu0
    %v1186 = vadd.f32 %v739, %v1185
    %v1187 = vpop.f32.mrf.mxu0
    %v1188 = vadd.f32 %v741, %v1187
    %1189 = vmatmul.bf16.gmra.mxu0 %v846
    %v1190 = vpop.f32.mrf.mxu0
    %v1191 = vadd.f32 %v744, %v1190
    %v1192 = vpop.f32.mrf.mxu0
    %v1193 = vadd.f32 %v746, %v1192
    %1194 = vmatmul.bf16.gmra.mxu0 %v848
    %v1195 = vpop.f32.mrf.mxu0
    %v1196 = vadd.f32 %v749, %v1195
    %v1197 = vpop.f32.mrf.mxu0
    %v1198 = vadd.f32 %v751, %v1197
    %1199 = vmatmul.bf16.gmra.mxu0 %v850
    %v1200 = vpop.f32.mrf.mxu0
    %v1201 = vadd.f32 %v754, %v1200
    %v1202 = vpop.f32.mrf.mxu0
    %v1203 = vadd.f32 %v756, %v1202
    %1204 = vmatmul.bf16.gmra.mxu0 %v852
    %v1205 = vpop.f32.mrf.mxu0
    %v1206 = vadd.f32 %v759, %v1205
    %v1207 = vpop.f32.mrf.mxu0
    %v1208 = vadd.f32 %v761, %v1207
    %1209 = vmatmul.bf16.gmra.mxu0 %v854
    %v1210 = vpop.f32.mrf.mxu0
    %v1211 = vadd.f32 %v764, %v1210
    %v1212 = vpop.f32.mrf.mxu0
    %v1213 = vadd.f32 %v766, %v1212
    %1214 = vmatmul.bf16.gmra.mxu0 %v856
    %v1215 = vpop.f32.mrf.mxu0
    %v1216 = vadd.f32 %v769, %v1215
    %v1217 = vpop.f32.mrf.mxu0
    %v1218 = vadd.f32 %v771, %v1217
    %1219 = vmatmul.bf16.gmra.mxu0 %v858
    %v1220 = vpop.f32.mrf.mxu0
    %v1221 = vadd.f32 %v774, %v1220
    %v1222 = vpop.f32.mrf.mxu0
    %v1223 = vadd.f32 %v776, %v1222
    %1224 = vmatmul.bf16.gmra.mxu0 %v860
    %v1225 = vpop.f32.mrf.mxu0
    %v1226 = vadd.f32 %v779, %v1225
    %v1227 = vpop.f32.mrf.mxu0
    %v1228 = vadd.f32 %v781, %v1227
    %1229 = vmatmul.bf16.gmra.mxu0 %v862
    %v1230 = vpop.f32.mrf.mxu0
    %v1231 = vadd.f32 %v784, %v1230
    %v1232 = vpop.f32.mrf.mxu0
    %v1233 = vadd.f32 %v786, %v1232
    %1234 = vmatmul.bf16.gmra.mxu0 %v865
    %v1235 = vpop.f32.mrf.mxu0
    %v1236 = vadd.f32 %v789, %v1235
    %v1237 = vpop.f32.mrf.mxu0
    %1238 = vdwg.mxu0
    %s1239 = scalar_lea.vmem [#allocation2], 128
    %v1240 = vld [vmem:[%s1239] sm:$0xff]
    %v1241 = vld [vmem:[%s1239 + $0x8] sm:$0xff]
    %v1242 = vld [vmem:[%s1239 + $0x10] sm:$0xff]
    %v1243 = vld [vmem:[%s1239 + $0x18] sm:$0xff]
    %v1244 = vld [vmem:[%s1239 + $0x20] sm:$0xff]
    %v1245 = vld [vmem:[%s1239 + $0x28] sm:$0xff]
    %v1246 = vld [vmem:[%s1239 + $0x30] sm:$0xff]
    %v1247 = vld [vmem:[%s1239 + $0x38] sm:$0xff]
    %vm1265 = vcmask 1046528
    %v1266 = vrot.slane %v157, 1
    %v1267 = vrot.slane %v158, 1
    %v1268 = vsel %vm1265, %v1266, %v1267
    %v1269 = vrot.slane %v159, 1
    %v1270 = vsel %vm1265, %v1267, %v1269
    %v1271 = vrot.slane %v160, 1
    %v1272 = vsel %vm1265, %v1269, %v1271
    %v1273 = vrot.slane %v161, 1
    %v1274 = vsel %vm1265, %v1271, %v1273
    %v1275 = vrot.slane %v162, 1
    %v1276 = vsel %vm1265, %v1273, %v1275
    %v1277 = vrot.slane %v163, 1
    %v1278 = vsel %vm1265, %v1275, %v1277
    %v1279 = vrot.slane %v164, 1
    %v1280 = vsel %vm1265, %v1277, %v1279
    %v1281 = vrot.slane %v165, 1
    %v1282 = vsel %vm1265, %v1279, %v1281
    %v1283 = vrot.slane %v166, 1
    %v1284 = vsel %vm1265, %v1281, %v1283
    %v1285 = vrot.slane %v167, 1
    %v1286 = vsel %vm1265, %v1283, %v1285
    %v1287 = vrot.slane %v168, 1
    %v1288 = vsel %vm1265, %v1285, %v1287
    %v1289 = vrot.slane %v169, 1
    %v1290 = vsel %vm1265, %v1287, %v1289
    %v1291 = vrot.slane %v170, 1
    %v1292 = vsel %vm1265, %v1289, %v1291
    %v1293 = vrot.slane %v171, 1
    %v1294 = vsel %vm1265, %v1291, %v1293
    %v1295 = vrot.slane %v172, 1
    %v1296 = vsel %vm1265, %v1293, %v1295
    %v1297 = vrot.slane %v182, 1
    %v1298 = vsel %vm1265, %v1295, %v1297
    %v1307 = vunpack.c.l.b16 %v1240
    %v1308 = vunpack.c.h.b16 %v1240
    %v1309 = vunpack.c.l.b16 %v1241
    %v1310 = vunpack.c.h.b16 %v1241
    %v1311 = vunpack.c.l.b16 %v1242
    %v1312 = vunpack.c.h.b16 %v1242
    %v1313 = vunpack.c.l.b16 %v1243
    %v1314 = vunpack.c.h.b16 %v1243
    %v1315 = vunpack.c.l.b16 %v1244
    %v1316 = vunpack.c.h.b16 %v1244
    %v1317 = vunpack.c.l.b16 %v1245
    %v1318 = vunpack.c.h.b16 %v1245
    %v1319 = vunpack.c.l.b16 %v1246
    %v1320 = vunpack.c.h.b16 %v1246
    %v1321 = vunpack.c.l.b16 %v1247
    %v1322 = vunpack.c.h.b16 %v1247
    %v1323 = vpack.c.b16 %v1311, %v1307
    %v1324 = vpack.c.b16 %v1312, %v1308
    %v1325 = vpack.c.b16 %v1313, %v1309
    %v1326 = vpack.c.b16 %v1314, %v1310
    %v1327 = vpack.c.b16 %v1319, %v1315
    %v1328 = vpack.c.b16 %v1320, %v1316
    %v1329 = vpack.c.b16 %v1321, %v1317
    %v1330 = vpack.c.b16 %v1322, %v1318
    %v1340 = vsel %vm368, %v1268, 0
    %v1343 = vsel %vm368, %v1270, 0
    %v1346 = vsel %vm368, %v1272, 0
    %v1349 = vsel %vm368, %v1274, 0
    %v1352 = vsel %vm368, %v1276, 0
    %v1355 = vsel %vm368, %v1278, 0
    %v1358 = vsel %vm368, %v1280, 0
    %v1361 = vsel %vm368, %v1282, 0
    %v1364 = vsel %vm368, %v1284, 0
    %v1367 = vsel %vm368, %v1286, 0
    %v1370 = vsel %vm368, %v1288, 0
    %v1373 = vsel %vm368, %v1290, 0
    %v1376 = vsel %vm368, %v1292, 0
    %v1379 = vsel %vm368, %v1294, 0
    %v1382 = vsel %vm368, %v1296, 0
    %v1385 = vsel %vm368, %v1298, 0
    %v1388 = vsel %vm368, %v1297, 0
    %1390 = vmatpush.bf16.msra.mxu0 0
    %1391 = vmatpush.bf16.msra.mxu0 0
    %1392 = vmatpush.bf16.msra.mxu0 0
    %1393 = vmatpush.bf16.msra.mxu0 0
    %1394 = vmatpush.bf16.msra.mxu0 0
    %1395 = vmatpush.bf16.msra.mxu0 0
    %1396 = vmatpush.bf16.msra.mxu0 %v1327
    %1397 = vmatpush.bf16.msra.mxu0 %v1323
    %1398 = vmatmul.bf16.gmra.mxu0 %v1340
    %v1399 = vpop.f32.mrf.mxu0
    %v1400 = vadd.f32 0.0, %v1399
    %v1401 = vpop.f32.mrf.mxu0
    %v1402 = vadd.f32 0.0, %v1401
    %1403 = vmatmul.bf16.gmra.mxu0 %v1343
    %v1404 = vpop.f32.mrf.mxu0
    %v1405 = vadd.f32 0.0, %v1404
    %v1406 = vpop.f32.mrf.mxu0
    %v1407 = vadd.f32 0.0, %v1406
    %1408 = vmatmul.bf16.gmra.mxu0 %v1346
    %v1409 = vpop.f32.mrf.mxu0
    %v1410 = vadd.f32 0.0, %v1409
    %v1411 = vpop.f32.mrf.mxu0
    %v1412 = vadd.f32 0.0, %v1411
    %1413 = vmatmul.bf16.gmra.mxu0 %v1349
    %v1414 = vpop.f32.mrf.mxu0
    %v1415 = vadd.f32 0.0, %v1414
    %v1416 = vpop.f32.mrf.mxu0
    %v1417 = vadd.f32 0.0, %v1416
    %1418 = vmatmul.bf16.gmra.mxu0 %v1352
    %v1419 = vpop.f32.mrf.mxu0
    %v1420 = vadd.f32 0.0, %v1419
    %v1421 = vpop.f32.mrf.mxu0
    %v1422 = vadd.f32 0.0, %v1421
    %1423 = vmatmul.bf16.gmra.mxu0 %v1355
    %v1424 = vpop.f32.mrf.mxu0
    %v1425 = vadd.f32 0.0, %v1424
    %v1426 = vpop.f32.mrf.mxu0
    %v1427 = vadd.f32 0.0, %v1426
    %1428 = vmatmul.bf16.gmra.mxu0 %v1358
    %v1429 = vpop.f32.mrf.mxu0
    %v1430 = vadd.f32 0.0, %v1429
    %v1431 = vpop.f32.mrf.mxu0
    %v1432 = vadd.f32 0.0, %v1431
    %1433 = vmatmul.bf16.gmra.mxu0 %v1361
    %v1434 = vpop.f32.mrf.mxu0
    %v1435 = vadd.f32 0.0, %v1434
    %v1436 = vpop.f32.mrf.mxu0
    %v1437 = vadd.f32 0.0, %v1436
    %1438 = vmatmul.bf16.gmra.mxu0 %v1364
    %v1439 = vpop.f32.mrf.mxu0
    %v1440 = vadd.f32 0.0, %v1439
    %v1441 = vpop.f32.mrf.mxu0
    %v1442 = vadd.f32 0.0, %v1441
    %1443 = vmatmul.bf16.gmra.mxu0 %v1367
    %v1444 = vpop.f32.mrf.mxu0
    %v1445 = vadd.f32 0.0, %v1444
    %v1446 = vpop.f32.mrf.mxu0
    %v1447 = vadd.f32 0.0, %v1446
    %1448 = vmatmul.bf16.gmra.mxu0 %v1370
    %v1449 = vpop.f32.mrf.mxu0
    %v1450 = vadd.f32 0.0, %v1449
    %v1451 = vpop.f32.mrf.mxu0
    %v1452 = vadd.f32 0.0, %v1451
    %1453 = vmatmul.bf16.gmra.mxu0 %v1373
    %v1454 = vpop.f32.mrf.mxu0
    %v1455 = vadd.f32 0.0, %v1454
    %v1456 = vpop.f32.mrf.mxu0
    %v1457 = vadd.f32 0.0, %v1456
    %1458 = vmatmul.bf16.gmra.mxu0 %v1376
    %v1459 = vpop.f32.mrf.mxu0
    %v1460 = vadd.f32 0.0, %v1459
    %v1461 = vpop.f32.mrf.mxu0
    %v1462 = vadd.f32 0.0, %v1461
    %1463 = vmatmul.bf16.gmra.mxu0 %v1379
    %v1464 = vpop.f32.mrf.mxu0
    %v1465 = vadd.f32 0.0, %v1464
    %v1466 = vpop.f32.mrf.mxu0
    %v1467 = vadd.f32 0.0, %v1466
    %1468 = vmatmul.bf16.gmra.mxu0 %v1382
    %v1469 = vpop.f32.mrf.mxu0
    %v1470 = vadd.f32 0.0, %v1469
    %v1471 = vpop.f32.mrf.mxu0
    %v1472 = vadd.f32 0.0, %v1471
    %1473 = vmatmul.bf16.gmra.mxu0 %v1385
    %v1474 = vpop.f32.mrf.mxu0
    %v1475 = vadd.f32 0.0, %v1474
    %v1476 = vpop.f32.mrf.mxu0
    %v1477 = vadd.f32 0.0, %v1476
    %1478 = vmatmul.bf16.gmra.mxu0 %v1388
    %v1479 = vpop.f32.mrf.mxu0
    %v1480 = vadd.f32 0.0, %v1479
    %v1481 = vpop.f32.mrf.mxu0
    %1482 = vdwg.mxu0
    %1483 = vmatpush.bf16.msra.mxu0 0
    %1484 = vmatpush.bf16.msra.mxu0 0
    %1485 = vmatpush.bf16.msra.mxu0 0
    %1486 = vmatpush.bf16.msra.mxu0 0
    %1487 = vmatpush.bf16.msra.mxu0 0
    %1488 = vmatpush.bf16.msra.mxu0 0
    %1489 = vmatpush.bf16.msra.mxu0 %v1328
    %1490 = vmatpush.bf16.msra.mxu0 %v1324
    %1491 = vmatmul.bf16.gmra.mxu0 %v1340
    %v1492 = vpop.f32.mrf.mxu0
    %v1493 = vadd.f32 0.0, %v1492
    %v1494 = vpop.f32.mrf.mxu0
    %v1495 = vadd.f32 0.0, %v1494
    %1496 = vmatmul.bf16.gmra.mxu0 %v1343
    %v1497 = vpop.f32.mrf.mxu0
    %v1498 = vadd.f32 0.0, %v1497
    %v1499 = vpop.f32.mrf.mxu0
    %v1500 = vadd.f32 0.0, %v1499
    %1501 = vmatmul.bf16.gmra.mxu0 %v1346
    %v1502 = vpop.f32.mrf.mxu0
    %v1503 = vadd.f32 0.0, %v1502
    %v1504 = vpop.f32.mrf.mxu0
    %v1505 = vadd.f32 0.0, %v1504
    %1506 = vmatmul.bf16.gmra.mxu0 %v1349
    %v1507 = vpop.f32.mrf.mxu0
    %v1508 = vadd.f32 0.0, %v1507
    %v1509 = vpop.f32.mrf.mxu0
    %v1510 = vadd.f32 0.0, %v1509
    %1511 = vmatmul.bf16.gmra.mxu0 %v1352
    %v1512 = vpop.f32.mrf.mxu0
    %v1513 = vadd.f32 0.0, %v1512
    %v1514 = vpop.f32.mrf.mxu0
    %v1515 = vadd.f32 0.0, %v1514
    %1516 = vmatmul.bf16.gmra.mxu0 %v1355
    %v1517 = vpop.f32.mrf.mxu0
    %v1518 = vadd.f32 0.0, %v1517
    %v1519 = vpop.f32.mrf.mxu0
    %v1520 = vadd.f32 0.0, %v1519
    %1521 = vmatmul.bf16.gmra.mxu0 %v1358
    %v1522 = vpop.f32.mrf.mxu0
    %v1523 = vadd.f32 0.0, %v1522
    %v1524 = vpop.f32.mrf.mxu0
    %v1525 = vadd.f32 0.0, %v1524
    %1526 = vmatmul.bf16.gmra.mxu0 %v1361
    %v1527 = vpop.f32.mrf.mxu0
    %v1528 = vadd.f32 0.0, %v1527
    %v1529 = vpop.f32.mrf.mxu0
    %v1530 = vadd.f32 0.0, %v1529
    %1531 = vmatmul.bf16.gmra.mxu0 %v1364
    %v1532 = vpop.f32.mrf.mxu0
    %v1533 = vadd.f32 0.0, %v1532
    %v1534 = vpop.f32.mrf.mxu0
    %v1535 = vadd.f32 0.0, %v1534
    %1536 = vmatmul.bf16.gmra.mxu0 %v1367
    %v1537 = vpop.f32.mrf.mxu0
    %v1538 = vadd.f32 0.0, %v1537
    %v1539 = vpop.f32.mrf.mxu0
    %v1540 = vadd.f32 0.0, %v1539
    %1541 = vmatmul.bf16.gmra.mxu0 %v1370
    %v1542 = vpop.f32.mrf.mxu0
    %v1543 = vadd.f32 0.0, %v1542
    %v1544 = vpop.f32.mrf.mxu0
    %v1545 = vadd.f32 0.0, %v1544
    %1546 = vmatmul.bf16.gmra.mxu0 %v1373
    %v1547 = vpop.f32.mrf.mxu0
    %v1548 = vadd.f32 0.0, %v1547
    %v1549 = vpop.f32.mrf.mxu0
    %v1550 = vadd.f32 0.0, %v1549
    %1551 = vmatmul.bf16.gmra.mxu0 %v1376
    %v1552 = vpop.f32.mrf.mxu0
    %v1553 = vadd.f32 0.0, %v1552
    %v1554 = vpop.f32.mrf.mxu0
    %v1555 = vadd.f32 0.0, %v1554
    %1556 = vmatmul.bf16.gmra.mxu0 %v1379
    %v1557 = vpop.f32.mrf.mxu0
    %v1558 = vadd.f32 0.0, %v1557
    %v1559 = vpop.f32.mrf.mxu0
    %v1560 = vadd.f32 0.0, %v1559
    %1561 = vmatmul.bf16.gmra.mxu0 %v1382
    %v1562 = vpop.f32.mrf.mxu0
    %v1563 = vadd.f32 0.0, %v1562
    %v1564 = vpop.f32.mrf.mxu0
    %v1565 = vadd.f32 0.0, %v1564
    %1566 = vmatmul.bf16.gmra.mxu0 %v1385
    %v1567 = vpop.f32.mrf.mxu0
    %v1568 = vadd.f32 0.0, %v1567
    %v1569 = vpop.f32.mrf.mxu0
    %v1570 = vadd.f32 0.0, %v1569
    %1571 = vmatmul.bf16.gmra.mxu0 %v1388
    %v1572 = vpop.f32.mrf.mxu0
    %v1573 = vadd.f32 0.0, %v1572
    %v1574 = vpop.f32.mrf.mxu0
    %1575 = vdwg.mxu0
    %1576 = vmatpush.bf16.msra.mxu0 0
    %1577 = vmatpush.bf16.msra.mxu0 0
    %1578 = vmatpush.bf16.msra.mxu0 0
    %1579 = vmatpush.bf16.msra.mxu0 0
    %1580 = vmatpush.bf16.msra.mxu0 0
    %1581 = vmatpush.bf16.msra.mxu0 0
    %1582 = vmatpush.bf16.msra.mxu0 %v1329
    %1583 = vmatpush.bf16.msra.mxu0 %v1325
    %1584 = vmatmul.bf16.gmra.mxu0 %v1340
    %v1585 = vpop.f32.mrf.mxu0
    %v1586 = vadd.f32 0.0, %v1585
    %v1587 = vpop.f32.mrf.mxu0
    %v1588 = vadd.f32 0.0, %v1587
    %1589 = vmatmul.bf16.gmra.mxu0 %v1343
    %v1590 = vpop.f32.mrf.mxu0
    %v1591 = vadd.f32 0.0, %v1590
    %v1592 = vpop.f32.mrf.mxu0
    %v1593 = vadd.f32 0.0, %v1592
    %1594 = vmatmul.bf16.gmra.mxu0 %v1346
    %v1595 = vpop.f32.mrf.mxu0
    %v1596 = vadd.f32 0.0, %v1595
    %v1597 = vpop.f32.mrf.mxu0
    %v1598 = vadd.f32 0.0, %v1597
    %1599 = vmatmul.bf16.gmra.mxu0 %v1349
    %v1600 = vpop.f32.mrf.mxu0
    %v1601 = vadd.f32 0.0, %v1600
    %v1602 = vpop.f32.mrf.mxu0
    %v1603 = vadd.f32 0.0, %v1602
    %1604 = vmatmul.bf16.gmra.mxu0 %v1352
    %v1605 = vpop.f32.mrf.mxu0
    %v1606 = vadd.f32 0.0, %v1605
    %v1607 = vpop.f32.mrf.mxu0
    %v1608 = vadd.f32 0.0, %v1607
    %1609 = vmatmul.bf16.gmra.mxu0 %v1355
    %v1610 = vpop.f32.mrf.mxu0
    %v1611 = vadd.f32 0.0, %v1610
    %v1612 = vpop.f32.mrf.mxu0
    %v1613 = vadd.f32 0.0, %v1612
    %1614 = vmatmul.bf16.gmra.mxu0 %v1358
    %v1615 = vpop.f32.mrf.mxu0
    %v1616 = vadd.f32 0.0, %v1615
    %v1617 = vpop.f32.mrf.mxu0
    %v1618 = vadd.f32 0.0, %v1617
    %1619 = vmatmul.bf16.gmra.mxu0 %v1361
    %v1620 = vpop.f32.mrf.mxu0
    %v1621 = vadd.f32 0.0, %v1620
    %v1622 = vpop.f32.mrf.mxu0
    %v1623 = vadd.f32 0.0, %v1622
    %1624 = vmatmul.bf16.gmra.mxu0 %v1364
    %v1625 = vpop.f32.mrf.mxu0
    %v1626 = vadd.f32 0.0, %v1625
    %v1627 = vpop.f32.mrf.mxu0
    %v1628 = vadd.f32 0.0, %v1627
    %1629 = vmatmul.bf16.gmra.mxu0 %v1367
    %v1630 = vpop.f32.mrf.mxu0
    %v1631 = vadd.f32 0.0, %v1630
    %v1632 = vpop.f32.mrf.mxu0
    %v1633 = vadd.f32 0.0, %v1632
    %1634 = vmatmul.bf16.gmra.mxu0 %v1370
    %v1635 = vpop.f32.mrf.mxu0
    %v1636 = vadd.f32 0.0, %v1635
    %v1637 = vpop.f32.mrf.mxu0
    %v1638 = vadd.f32 0.0, %v1637
    %1639 = vmatmul.bf16.gmra.mxu0 %v1373
    %v1640 = vpop.f32.mrf.mxu0
    %v1641 = vadd.f32 0.0, %v1640
    %v1642 = vpop.f32.mrf.mxu0
    %v1643 = vadd.f32 0.0, %v1642
    %1644 = vmatmul.bf16.gmra.mxu0 %v1376
    %v1645 = vpop.f32.mrf.mxu0
    %v1646 = vadd.f32 0.0, %v1645
    %v1647 = vpop.f32.mrf.mxu0
    %v1648 = vadd.f32 0.0, %v1647
    %1649 = vmatmul.bf16.gmra.mxu0 %v1379
    %v1650 = vpop.f32.mrf.mxu0
    %v1651 = vadd.f32 0.0, %v1650
    %v1652 = vpop.f32.mrf.mxu0
    %v1653 = vadd.f32 0.0, %v1652
    %1654 = vmatmul.bf16.gmra.mxu0 %v1382
    %v1655 = vpop.f32.mrf.mxu0
    %v1656 = vadd.f32 0.0, %v1655
    %v1657 = vpop.f32.mrf.mxu0
    %v1658 = vadd.f32 0.0, %v1657
    %1659 = vmatmul.bf16.gmra.mxu0 %v1385
    %v1660 = vpop.f32.mrf.mxu0
    %v1661 = vadd.f32 0.0, %v1660
    %v1662 = vpop.f32.mrf.mxu0
    %v1663 = vadd.f32 0.0, %v1662
    %1664 = vmatmul.bf16.gmra.mxu0 %v1388
    %v1665 = vpop.f32.mrf.mxu0
    %v1666 = vadd.f32 0.0, %v1665
    %v1667 = vpop.f32.mrf.mxu0
    %1668 = vdwg.mxu0
    %1669 = vmatpush.bf16.msra.mxu0 0
    %1670 = vmatpush.bf16.msra.mxu0 0
    %1671 = vmatpush.bf16.msra.mxu0 0
    %1672 = vmatpush.bf16.msra.mxu0 0
    %1673 = vmatpush.bf16.msra.mxu0 0
    %1674 = vmatpush.bf16.msra.mxu0 0
    %1675 = vmatpush.bf16.msra.mxu0 %v1330
    %1676 = vmatpush.bf16.msra.mxu0 %v1326
    %1677 = vmatmul.bf16.gmra.mxu0 %v1340
    %v1678 = vpop.f32.mrf.mxu0
    %v1679 = vadd.f32 0.0, %v1678
    %v1680 = vpop.f32.mrf.mxu0
    %v1681 = vadd.f32 0.0, %v1680
    %1682 = vmatmul.bf16.gmra.mxu0 %v1343
    %v1683 = vpop.f32.mrf.mxu0
    %v1684 = vadd.f32 0.0, %v1683
    %v1685 = vpop.f32.mrf.mxu0
    %v1686 = vadd.f32 0.0, %v1685
    %1687 = vmatmul.bf16.gmra.mxu0 %v1346
    %v1688 = vpop.f32.mrf.mxu0
    %v1689 = vadd.f32 0.0, %v1688
    %v1690 = vpop.f32.mrf.mxu0
    %v1691 = vadd.f32 0.0, %v1690
    %1692 = vmatmul.bf16.gmra.mxu0 %v1349
    %v1693 = vpop.f32.mrf.mxu0
    %v1694 = vadd.f32 0.0, %v1693
    %v1695 = vpop.f32.mrf.mxu0
    %v1696 = vadd.f32 0.0, %v1695
    %1697 = vmatmul.bf16.gmra.mxu0 %v1352
    %v1698 = vpop.f32.mrf.mxu0
    %v1699 = vadd.f32 0.0, %v1698
    %v1700 = vpop.f32.mrf.mxu0
    %v1701 = vadd.f32 0.0, %v1700
    %1702 = vmatmul.bf16.gmra.mxu0 %v1355
    %v1703 = vpop.f32.mrf.mxu0
    %v1704 = vadd.f32 0.0, %v1703
    %v1705 = vpop.f32.mrf.mxu0
    %v1706 = vadd.f32 0.0, %v1705
    %1707 = vmatmul.bf16.gmra.mxu0 %v1358
    %v1708 = vpop.f32.mrf.mxu0
    %v1709 = vadd.f32 0.0, %v1708
    %v1710 = vpop.f32.mrf.mxu0
    %v1711 = vadd.f32 0.0, %v1710
    %1712 = vmatmul.bf16.gmra.mxu0 %v1361
    %v1713 = vpop.f32.mrf.mxu0
    %v1714 = vadd.f32 0.0, %v1713
    %v1715 = vpop.f32.mrf.mxu0
    %v1716 = vadd.f32 0.0, %v1715
    %1717 = vmatmul.bf16.gmra.mxu0 %v1364
    %v1718 = vpop.f32.mrf.mxu0
    %v1719 = vadd.f32 0.0, %v1718
    %v1720 = vpop.f32.mrf.mxu0
    %v1721 = vadd.f32 0.0, %v1720
    %1722 = vmatmul.bf16.gmra.mxu0 %v1367
    %v1723 = vpop.f32.mrf.mxu0
    %v1724 = vadd.f32 0.0, %v1723
    %v1725 = vpop.f32.mrf.mxu0
    %v1726 = vadd.f32 0.0, %v1725
    %1727 = vmatmul.bf16.gmra.mxu0 %v1370
    %v1728 = vpop.f32.mrf.mxu0
    %v1729 = vadd.f32 0.0, %v1728
    %v1730 = vpop.f32.mrf.mxu0
    %v1731 = vadd.f32 0.0, %v1730
    %1732 = vmatmul.bf16.gmra.mxu0 %v1373
    %v1733 = vpop.f32.mrf.mxu0
    %v1734 = vadd.f32 0.0, %v1733
    %v1735 = vpop.f32.mrf.mxu0
    %v1736 = vadd.f32 0.0, %v1735
    %1737 = vmatmul.bf16.gmra.mxu0 %v1376
    %v1738 = vpop.f32.mrf.mxu0
    %v1739 = vadd.f32 0.0, %v1738
    %v1740 = vpop.f32.mrf.mxu0
    %v1741 = vadd.f32 0.0, %v1740
    %1742 = vmatmul.bf16.gmra.mxu0 %v1379
    %v1743 = vpop.f32.mrf.mxu0
    %v1744 = vadd.f32 0.0, %v1743
    %v1745 = vpop.f32.mrf.mxu0
    %v1746 = vadd.f32 0.0, %v1745
    %1747 = vmatmul.bf16.gmra.mxu0 %v1382
    %v1748 = vpop.f32.mrf.mxu0
    %v1749 = vadd.f32 0.0, %v1748
    %v1750 = vpop.f32.mrf.mxu0
    %v1751 = vadd.f32 0.0, %v1750
    %1752 = vmatmul.bf16.gmra.mxu0 %v1385
    %v1753 = vpop.f32.mrf.mxu0
    %v1754 = vadd.f32 0.0, %v1753
    %v1755 = vpop.f32.mrf.mxu0
    %v1756 = vadd.f32 0.0, %v1755
    %1757 = vmatmul.bf16.gmra.mxu0 %v1388
    %v1758 = vpop.f32.mrf.mxu0
    %v1759 = vadd.f32 0.0, %v1758
    %v1760 = vpop.f32.mrf.mxu0
    %1761 = vdwg.mxu0
    %v1762 = vadd.f32 %v877, %v1400
    %v1763 = vadd.f32 %v970, %v1493
    %v1764 = vadd.f32 %v1063, %v1586
    %v1765 = vadd.f32 %v1156, %v1679
    %v1766 = vadd.f32 %v879, %v1402
    %v1767 = vadd.f32 %v972, %v1495
    %v1768 = vadd.f32 %v1065, %v1588
    %v1769 = vadd.f32 %v1158, %v1681
    %v1770 = vadd.f32 %v882, %v1405
    %v1771 = vadd.f32 %v975, %v1498
    %v1772 = vadd.f32 %v1068, %v1591
    %v1773 = vadd.f32 %v1161, %v1684
    %v1774 = vadd.f32 %v884, %v1407
    %v1775 = vadd.f32 %v977, %v1500
    %v1776 = vadd.f32 %v1070, %v1593
    %v1777 = vadd.f32 %v1163, %v1686
    %v1778 = vadd.f32 %v887, %v1410
    %v1779 = vadd.f32 %v980, %v1503
    %v1780 = vadd.f32 %v1073, %v1596
    %v1781 = vadd.f32 %v1166, %v1689
    %v1782 = vadd.f32 %v889, %v1412
    %v1783 = vadd.f32 %v982, %v1505
    %v1784 = vadd.f32 %v1075, %v1598
    %v1785 = vadd.f32 %v1168, %v1691
    %v1786 = vadd.f32 %v892, %v1415
    %v1787 = vadd.f32 %v985, %v1508
    %v1788 = vadd.f32 %v1078, %v1601
    %v1789 = vadd.f32 %v1171, %v1694
    %v1790 = vadd.f32 %v894, %v1417
    %v1791 = vadd.f32 %v987, %v1510
    %v1792 = vadd.f32 %v1080, %v1603
    %v1793 = vadd.f32 %v1173, %v1696
    %v1794 = vadd.f32 %v897, %v1420
    %v1795 = vadd.f32 %v990, %v1513
    %v1796 = vadd.f32 %v1083, %v1606
    %v1797 = vadd.f32 %v1176, %v1699
    %v1798 = vadd.f32 %v899, %v1422
    %v1799 = vadd.f32 %v992, %v1515
    %v1800 = vadd.f32 %v1085, %v1608
    %v1801 = vadd.f32 %v1178, %v1701
    %v1802 = vadd.f32 %v902, %v1425
    %v1803 = vadd.f32 %v995, %v1518
    %v1804 = vadd.f32 %v1088, %v1611
    %v1805 = vadd.f32 %v1181, %v1704
    %v1806 = vadd.f32 %v904, %v1427
    %v1807 = vadd.f32 %v997, %v1520
    %v1808 = vadd.f32 %v1090, %v1613
    %v1809 = vadd.f32 %v1183, %v1706
    %v1810 = vadd.f32 %v907, %v1430
    %v1811 = vadd.f32 %v1000, %v1523
    %v1812 = vadd.f32 %v1093, %v1616
    %v1813 = vadd.f32 %v1186, %v1709
    %v1814 = vadd.f32 %v909, %v1432
    %v1815 = vadd.f32 %v1002, %v1525
    %v1816 = vadd.f32 %v1095, %v1618
    %v1817 = vadd.f32 %v1188, %v1711
    %v1818 = vadd.f32 %v912, %v1435
    %v1819 = vadd.f32 %v1005, %v1528
    %v1820 = vadd.f32 %v1098, %v1621
    %v1821 = vadd.f32 %v1191, %v1714
    %v1822 = vadd.f32 %v914, %v1437
    %v1823 = vadd.f32 %v1007, %v1530
    %v1824 = vadd.f32 %v1100, %v1623
    %v1825 = vadd.f32 %v1193, %v1716
    %v1826 = vadd.f32 %v917, %v1440
    %v1827 = vadd.f32 %v1010, %v1533
    %v1828 = vadd.f32 %v1103, %v1626
    %v1829 = vadd.f32 %v1196, %v1719
    %v1830 = vadd.f32 %v919, %v1442
    %v1831 = vadd.f32 %v1012, %v1535
    %v1832 = vadd.f32 %v1105, %v1628
    %v1833 = vadd.f32 %v1198, %v1721
    %v1834 = vadd.f32 %v922, %v1445
    %v1835 = vadd.f32 %v1015, %v1538
    %v1836 = vadd.f32 %v1108, %v1631
    %v1837 = vadd.f32 %v1201, %v1724
    %v1838 = vadd.f32 %v924, %v1447
    %v1839 = vadd.f32 %v1017, %v1540
    %v1840 = vadd.f32 %v1110, %v1633
    %v1841 = vadd.f32 %v1203, %v1726
    %v1842 = vadd.f32 %v927, %v1450
    %v1843 = vadd.f32 %v1020, %v1543
    %v1844 = vadd.f32 %v1113, %v1636
    %v1845 = vadd.f32 %v1206, %v1729
    %v1846 = vadd.f32 %v929, %v1452
    %v1847 = vadd.f32 %v1022, %v1545
    %v1848 = vadd.f32 %v1115, %v1638
    %v1849 = vadd.f32 %v1208, %v1731
    %v1850 = vadd.f32 %v932, %v1455
    %v1851 = vadd.f32 %v1025, %v1548
    %v1852 = vadd.f32 %v1118, %v1641
    %v1853 = vadd.f32 %v1211, %v1734
    %v1854 = vadd.f32 %v934, %v1457
    %v1855 = vadd.f32 %v1027, %v1550
    %v1856 = vadd.f32 %v1120, %v1643
    %v1857 = vadd.f32 %v1213, %v1736
    %v1858 = vadd.f32 %v937, %v1460
    %v1859 = vadd.f32 %v1030, %v1553
    %v1860 = vadd.f32 %v1123, %v1646
    %v1861 = vadd.f32 %v1216, %v1739
    %v1862 = vadd.f32 %v939, %v1462
    %v1863 = vadd.f32 %v1032, %v1555
    %v1864 = vadd.f32 %v1125, %v1648
    %v1865 = vadd.f32 %v1218, %v1741
    %v1866 = vadd.f32 %v942, %v1465
    %v1867 = vadd.f32 %v1035, %v1558
    %v1868 = vadd.f32 %v1128, %v1651
    %v1869 = vadd.f32 %v1221, %v1744
    %v1870 = vadd.f32 %v944, %v1467
    %v1871 = vadd.f32 %v1037, %v1560
    %v1872 = vadd.f32 %v1130, %v1653
    %v1873 = vadd.f32 %v1223, %v1746
    %v1874 = vadd.f32 %v947, %v1470
    %v1875 = vadd.f32 %v1040, %v1563
    %v1876 = vadd.f32 %v1133, %v1656
    %v1877 = vadd.f32 %v1226, %v1749
    %v1878 = vadd.f32 %v949, %v1472
    %v1879 = vadd.f32 %v1042, %v1565
    %v1880 = vadd.f32 %v1135, %v1658
    %v1881 = vadd.f32 %v1228, %v1751
    %v1882 = vadd.f32 %v952, %v1475
    %v1883 = vadd.f32 %v1045, %v1568
    %v1884 = vadd.f32 %v1138, %v1661
    %v1885 = vadd.f32 %v1231, %v1754
    %v1886 = vadd.f32 %v954, %v1477
    %v1887 = vadd.f32 %v1047, %v1570
    %v1888 = vadd.f32 %v1140, %v1663
    %v1889 = vadd.f32 %v1233, %v1756
    %v1890 = vadd.f32 %v957, %v1480
    %v1891 = vadd.f32 %v1050, %v1573
    %v1892 = vadd.f32 %v1143, %v1666
    %v1893 = vadd.f32 %v1236, %v1759
    %v1894 = vld [vmem:[%s2] sm:$0xf]
    %v1896 = vperm.slane %v1894, 0
    %v1897 = vperm.slane %v1894, 1
    %v1898 = vperm.slane %v1894, 2
    %v1899 = vperm.slane %v1894, 3
    %v1904 = vadd.f32 %v1762, %v1896
    %v1905 = vadd.f32 %v1763, %v1897
    %v1906 = vadd.f32 %v1764, %v1898
    %v1907 = vadd.f32 %v1765, %v1899
    %v1908 = vadd.f32 %v1766, %v1896
    %v1909 = vadd.f32 %v1767, %v1897
    %v1910 = vadd.f32 %v1768, %v1898
    %v1911 = vadd.f32 %v1769, %v1899
    %v1912 = vadd.f32 %v1770, %v1896
    %v1913 = vadd.f32 %v1771, %v1897
    %v1914 = vadd.f32 %v1772, %v1898
    %v1915 = vadd.f32 %v1773, %v1899
    %v1916 = vadd.f32 %v1774, %v1896
    %v1917 = vadd.f32 %v1775, %v1897
    %v1918 = vadd.f32 %v1776, %v1898
    %v1919 = vadd.f32 %v1777, %v1899
    %v1920 = vadd.f32 %v1778, %v1896
    %v1921 = vadd.f32 %v1779, %v1897
    %v1922 = vadd.f32 %v1780, %v1898
    %v1923 = vadd.f32 %v1781, %v1899
    %v1924 = vadd.f32 %v1782, %v1896
    %v1925 = vadd.f32 %v1783, %v1897
    %v1926 = vadd.f32 %v1784, %v1898
    %v1927 = vadd.f32 %v1785, %v1899
    %v1928 = vadd.f32 %v1786, %v1896
    %v1929 = vadd.f32 %v1787, %v1897
    %v1930 = vadd.f32 %v1788, %v1898
    %v1931 = vadd.f32 %v1789, %v1899
    %v1932 = vadd.f32 %v1790, %v1896
    %v1933 = vadd.f32 %v1791, %v1897
    %v1934 = vadd.f32 %v1792, %v1898
    %v1935 = vadd.f32 %v1793, %v1899
    %v1936 = vadd.f32 %v1794, %v1896
    %v1937 = vadd.f32 %v1795, %v1897
    %v1938 = vadd.f32 %v1796, %v1898
    %v1939 = vadd.f32 %v1797, %v1899
    %v1940 = vadd.f32 %v1798, %v1896
    %v1941 = vadd.f32 %v1799, %v1897
    %v1942 = vadd.f32 %v1800, %v1898
    %v1943 = vadd.f32 %v1801, %v1899
    %v1944 = vadd.f32 %v1802, %v1896
    %v1945 = vadd.f32 %v1803, %v1897
    %v1946 = vadd.f32 %v1804, %v1898
    %v1947 = vadd.f32 %v1805, %v1899
    %v1948 = vadd.f32 %v1806, %v1896
    %v1949 = vadd.f32 %v1807, %v1897
    %v1950 = vadd.f32 %v1808, %v1898
    %v1951 = vadd.f32 %v1809, %v1899
    %v1952 = vadd.f32 %v1810, %v1896
    %v1953 = vadd.f32 %v1811, %v1897
    %v1954 = vadd.f32 %v1812, %v1898
    %v1955 = vadd.f32 %v1813, %v1899
    %v1956 = vadd.f32 %v1814, %v1896
    %v1957 = vadd.f32 %v1815, %v1897
    %v1958 = vadd.f32 %v1816, %v1898
    %v1959 = vadd.f32 %v1817, %v1899
    %v1960 = vadd.f32 %v1818, %v1896
    %v1961 = vadd.f32 %v1819, %v1897
    %v1962 = vadd.f32 %v1820, %v1898
    %v1963 = vadd.f32 %v1821, %v1899
    %v1964 = vadd.f32 %v1822, %v1896
    %v1965 = vadd.f32 %v1823, %v1897
    %v1966 = vadd.f32 %v1824, %v1898
    %v1967 = vadd.f32 %v1825, %v1899
    %v1968 = vadd.f32 %v1826, %v1896
    %v1969 = vadd.f32 %v1827, %v1897
    %v1970 = vadd.f32 %v1828, %v1898
    %v1971 = vadd.f32 %v1829, %v1899
    %v1972 = vadd.f32 %v1830, %v1896
    %v1973 = vadd.f32 %v1831, %v1897
    %v1974 = vadd.f32 %v1832, %v1898
    %v1975 = vadd.f32 %v1833, %v1899
    %v1976 = vadd.f32 %v1834, %v1896
    %v1977 = vadd.f32 %v1835, %v1897
    %v1978 = vadd.f32 %v1836, %v1898
    %v1979 = vadd.f32 %v1837, %v1899
    %v1980 = vadd.f32 %v1838, %v1896
    %v1981 = vadd.f32 %v1839, %v1897
    %v1982 = vadd.f32 %v1840, %v1898
    %v1983 = vadd.f32 %v1841, %v1899
    %v1984 = vadd.f32 %v1842, %v1896
    %v1985 = vadd.f32 %v1843, %v1897
    %v1986 = vadd.f32 %v1844, %v1898
    %v1987 = vadd.f32 %v1845, %v1899
    %v1988 = vadd.f32 %v1846, %v1896
    %v1989 = vadd.f32 %v1847, %v1897
    %v1990 = vadd.f32 %v1848, %v1898
    %v1991 = vadd.f32 %v1849, %v1899
    %v1992 = vadd.f32 %v1850, %v1896
    %v1993 = vadd.f32 %v1851, %v1897
    %v1994 = vadd.f32 %v1852, %v1898
    %v1995 = vadd.f32 %v1853, %v1899
    %v1996 = vadd.f32 %v1854, %v1896
    %v1997 = vadd.f32 %v1855, %v1897
    %v1998 = vadd.f32 %v1856, %v1898
    %v1999 = vadd.f32 %v1857, %v1899
    %v2000 = vadd.f32 %v1858, %v1896
    %v2001 = vadd.f32 %v1859, %v1897
    %v2002 = vadd.f32 %v1860, %v1898
    %v2003 = vadd.f32 %v1861, %v1899
    %v2004 = vadd.f32 %v1862, %v1896
    %v2005 = vadd.f32 %v1863, %v1897
    %v2006 = vadd.f32 %v1864, %v1898
    %v2007 = vadd.f32 %v1865, %v1899
    %v2008 = vadd.f32 %v1866, %v1896
    %v2009 = vadd.f32 %v1867, %v1897
    %v2010 = vadd.f32 %v1868, %v1898
    %v2011 = vadd.f32 %v1869, %v1899
    %v2012 = vadd.f32 %v1870, %v1896
    %v2013 = vadd.f32 %v1871, %v1897
    %v2014 = vadd.f32 %v1872, %v1898
    %v2015 = vadd.f32 %v1873, %v1899
    %v2016 = vadd.f32 %v1874, %v1896
    %v2017 = vadd.f32 %v1875, %v1897
    %v2018 = vadd.f32 %v1876, %v1898
    %v2019 = vadd.f32 %v1877, %v1899
    %v2020 = vadd.f32 %v1878, %v1896
    %v2021 = vadd.f32 %v1879, %v1897
    %v2022 = vadd.f32 %v1880, %v1898
    %v2023 = vadd.f32 %v1881, %v1899
    %v2024 = vadd.f32 %v1882, %v1896
    %v2025 = vadd.f32 %v1883, %v1897
    %v2026 = vadd.f32 %v1884, %v1898
    %v2027 = vadd.f32 %v1885, %v1899
    %v2028 = vadd.f32 %v1886, %v1896
    %v2029 = vadd.f32 %v1887, %v1897
    %v2030 = vadd.f32 %v1888, %v1898
    %v2031 = vadd.f32 %v1889, %v1899
    %v2032 = vadd.f32 %v1890, %v1896
    %v2033 = vadd.f32 %v1891, %v1897
    %v2034 = vadd.f32 %v1892, %v1898
    %v2035 = vadd.f32 %v1893, %v1899
    %v2036 = vmax.f32 %v1904, 0.0
    %v2037 = vmax.f32 %v1905, 0.0
    %v2038 = vmax.f32 %v1906, 0.0
    %v2039 = vmax.f32 %v1907, 0.0
    %v2040 = vmax.f32 %v1908, 0.0
    %v2041 = vmax.f32 %v1909, 0.0
    %v2042 = vmax.f32 %v1910, 0.0
    %v2043 = vmax.f32 %v1911, 0.0
    %v2044 = vmax.f32 %v1912, 0.0
    %v2045 = vmax.f32 %v1913, 0.0
    %v2046 = vmax.f32 %v1914, 0.0
    %v2047 = vmax.f32 %v1915, 0.0
    %v2048 = vmax.f32 %v1916, 0.0
    %v2049 = vmax.f32 %v1917, 0.0
    %v2050 = vmax.f32 %v1918, 0.0
    %v2051 = vmax.f32 %v1919, 0.0
    %v2052 = vmax.f32 %v1920, 0.0
    %v2053 = vmax.f32 %v1921, 0.0
    %v2054 = vmax.f32 %v1922, 0.0
    %v2055 = vmax.f32 %v1923, 0.0
    %v2056 = vmax.f32 %v1924, 0.0
    %v2057 = vmax.f32 %v1925, 0.0
    %v2058 = vmax.f32 %v1926, 0.0
    %v2059 = vmax.f32 %v1927, 0.0
    %v2060 = vmax.f32 %v1928, 0.0
    %v2061 = vmax.f32 %v1929, 0.0
    %v2062 = vmax.f32 %v1930, 0.0
    %v2063 = vmax.f32 %v1931, 0.0
    %v2064 = vmax.f32 %v1932, 0.0
    %v2065 = vmax.f32 %v1933, 0.0
    %v2066 = vmax.f32 %v1934, 0.0
    %v2067 = vmax.f32 %v1935, 0.0
    %v2068 = vmax.f32 %v1936, 0.0
    %v2069 = vmax.f32 %v1937, 0.0
    %v2070 = vmax.f32 %v1938, 0.0
    %v2071 = vmax.f32 %v1939, 0.0
    %v2072 = vmax.f32 %v1940, 0.0
    %v2073 = vmax.f32 %v1941, 0.0
    %v2074 = vmax.f32 %v1942, 0.0
    %v2075 = vmax.f32 %v1943, 0.0
    %v2076 = vmax.f32 %v1944, 0.0
    %v2077 = vmax.f32 %v1945, 0.0
    %v2078 = vmax.f32 %v1946, 0.0
    %v2079 = vmax.f32 %v1947, 0.0
    %v2080 = vmax.f32 %v1948, 0.0
    %v2081 = vmax.f32 %v1949, 0.0
    %v2082 = vmax.f32 %v1950, 0.0
    %v2083 = vmax.f32 %v1951, 0.0
    %v2084 = vmax.f32 %v1952, 0.0
    %v2085 = vmax.f32 %v1953, 0.0
    %v2086 = vmax.f32 %v1954, 0.0
    %v2087 = vmax.f32 %v1955, 0.0
    %v2088 = vmax.f32 %v1956, 0.0
    %v2089 = vmax.f32 %v1957, 0.0
    %v2090 = vmax.f32 %v1958, 0.0
    %v2091 = vmax.f32 %v1959, 0.0
    %v2092 = vmax.f32 %v1960, 0.0
    %v2093 = vmax.f32 %v1961, 0.0
    %v2094 = vmax.f32 %v1962, 0.0
    %v2095 = vmax.f32 %v1963, 0.0
    %v2096 = vmax.f32 %v1964, 0.0
    %v2097 = vmax.f32 %v1965, 0.0
    %v2098 = vmax.f32 %v1966, 0.0
    %v2099 = vmax.f32 %v1967, 0.0
    %v2100 = vmax.f32 %v1968, 0.0
    %v2101 = vmax.f32 %v1969, 0.0
    %v2102 = vmax.f32 %v1970, 0.0
    %v2103 = vmax.f32 %v1971, 0.0
    %v2104 = vmax.f32 %v1972, 0.0
    %v2105 = vmax.f32 %v1973, 0.0
    %v2106 = vmax.f32 %v1974, 0.0
    %v2107 = vmax.f32 %v1975, 0.0
    %v2108 = vmax.f32 %v1976, 0.0
    %v2109 = vmax.f32 %v1977, 0.0
    %v2110 = vmax.f32 %v1978, 0.0
    %v2111 = vmax.f32 %v1979, 0.0
    %v2112 = vmax.f32 %v1980, 0.0
    %v2113 = vmax.f32 %v1981, 0.0
    %v2114 = vmax.f32 %v1982, 0.0
    %v2115 = vmax.f32 %v1983, 0.0
    %v2116 = vmax.f32 %v1984, 0.0
    %v2117 = vmax.f32 %v1985, 0.0
    %v2118 = vmax.f32 %v1986, 0.0
    %v2119 = vmax.f32 %v1987, 0.0
    %v2120 = vmax.f32 %v1988, 0.0
    %v2121 = vmax.f32 %v1989, 0.0
    %v2122 = vmax.f32 %v1990, 0.0
    %v2123 = vmax.f32 %v1991, 0.0
    %v2124 = vmax.f32 %v1992, 0.0
    %v2125 = vmax.f32 %v1993, 0.0
    %v2126 = vmax.f32 %v1994, 0.0
    %v2127 = vmax.f32 %v1995, 0.0
    %v2128 = vmax.f32 %v1996, 0.0
    %v2129 = vmax.f32 %v1997, 0.0
    %v2130 = vmax.f32 %v1998, 0.0
    %v2131 = vmax.f32 %v1999, 0.0
    %v2132 = vmax.f32 %v2000, 0.0
    %v2133 = vmax.f32 %v2001, 0.0
    %v2134 = vmax.f32 %v2002, 0.0
    %v2135 = vmax.f32 %v2003, 0.0
    %v2136 = vmax.f32 %v2004, 0.0
    %v2137 = vmax.f32 %v2005, 0.0
    %v2138 = vmax.f32 %v2006, 0.0
    %v2139 = vmax.f32 %v2007, 0.0
    %v2140 = vmax.f32 %v2008, 0.0
    %v2141 = vmax.f32 %v2009, 0.0
    %v2142 = vmax.f32 %v2010, 0.0
    %v2143 = vmax.f32 %v2011, 0.0
    %v2144 = vmax.f32 %v2012, 0.0
    %v2145 = vmax.f32 %v2013, 0.0
    %v2146 = vmax.f32 %v2014, 0.0
    %v2147 = vmax.f32 %v2015, 0.0
    %v2148 = vmax.f32 %v2016, 0.0
    %v2149 = vmax.f32 %v2017, 0.0
    %v2150 = vmax.f32 %v2018, 0.0
    %v2151 = vmax.f32 %v2019, 0.0
    %v2152 = vmax.f32 %v2020, 0.0
    %v2153 = vmax.f32 %v2021, 0.0
    %v2154 = vmax.f32 %v2022, 0.0
    %v2155 = vmax.f32 %v2023, 0.0
    %v2156 = vmax.f32 %v2024, 0.0
    %v2157 = vmax.f32 %v2025, 0.0
    %v2158 = vmax.f32 %v2026, 0.0
    %v2159 = vmax.f32 %v2027, 0.0
    %v2160 = vmax.f32 %v2028, 0.0
    %v2161 = vmax.f32 %v2029, 0.0
    %v2162 = vmax.f32 %v2030, 0.0
    %v2163 = vmax.f32 %v2031, 0.0
    %v2164 = vmax.f32 %v2032, 0.0
    %v2165 = vmax.f32 %v2033, 0.0
    %v2166 = vmax.f32 %v2034, 0.0
    %v2167 = vmax.f32 %v2035, 0.0
    %vm2300 = vcmask 1046528
    %v2301 = vrot.slane %v2036, 1
    %v2302 = vrot.slane %v2040, 1
    %v2303 = vsel %vm2300, %v2301, %v2302
    %v2304 = vrot.slane %v2037, 1
    %v2305 = vrot.slane %v2041, 1
    %v2306 = vsel %vm2300, %v2304, %v2305
    %v2307 = vrot.slane %v2038, 1
    %v2308 = vrot.slane %v2042, 1
    %v2309 = vsel %vm2300, %v2307, %v2308
    %v2310 = vrot.slane %v2039, 1
    %v2311 = vrot.slane %v2043, 1
    %v2312 = vsel %vm2300, %v2310, %v2311
    %v2313 = vrot.slane %v2044, 1
    %v2314 = vsel %vm2300, %v2302, %v2313
    %v2315 = vrot.slane %v2045, 1
    %v2316 = vsel %vm2300, %v2305, %v2315
    %v2317 = vrot.slane %v2046, 1
    %v2318 = vsel %vm2300, %v2308, %v2317
    %v2319 = vrot.slane %v2047, 1
    %v2320 = vsel %vm2300, %v2311, %v2319
    %v2321 = vrot.slane %v2048, 1
    %v2322 = vsel %vm2300, %v2313, %v2321
    %v2323 = vrot.slane %v2049, 1
    %v2324 = vsel %vm2300, %v2315, %v2323
    %v2325 = vrot.slane %v2050, 1
    %v2326 = vsel %vm2300, %v2317, %v2325
    %v2327 = vrot.slane %v2051, 1
    %v2328 = vsel %vm2300, %v2319, %v2327
    %v2329 = vrot.slane %v2052, 1
    %v2330 = vsel %vm2300, %v2321, %v2329
    %v2331 = vrot.slane %v2053, 1
    %v2332 = vsel %vm2300, %v2323, %v2331
    %v2333 = vrot.slane %v2054, 1
    %v2334 = vsel %vm2300, %v2325, %v2333
    %v2335 = vrot.slane %v2055, 1
    %v2336 = vsel %vm2300, %v2327, %v2335
    %v2337 = vrot.slane %v2056, 1
    %v2338 = vsel %vm2300, %v2329, %v2337
    %v2339 = vrot.slane %v2057, 1
    %v2340 = vsel %vm2300, %v2331, %v2339
    %v2341 = vrot.slane %v2058, 1
    %v2342 = vsel %vm2300, %v2333, %v2341
    %v2343 = vrot.slane %v2059, 1
    %v2344 = vsel %vm2300, %v2335, %v2343
    %v2345 = vrot.slane %v2060, 1
    %v2346 = vsel %vm2300, %v2337, %v2345
    %v2347 = vrot.slane %v2061, 1
    %v2348 = vsel %vm2300, %v2339, %v2347
    %v2349 = vrot.slane %v2062, 1
    %v2350 = vsel %vm2300, %v2341, %v2349
    %v2351 = vrot.slane %v2063, 1
    %v2352 = vsel %vm2300, %v2343, %v2351
    %v2353 = vrot.slane %v2064, 1
    %v2354 = vsel %vm2300, %v2345, %v2353
    %v2355 = vrot.slane %v2065, 1
    %v2356 = vsel %vm2300, %v2347, %v2355
    %v2357 = vrot.slane %v2066, 1
    %v2358 = vsel %vm2300, %v2349, %v2357
    %v2359 = vrot.slane %v2067, 1
    %v2360 = vsel %vm2300, %v2351, %v2359
    %v2361 = vrot.slane %v2068, 1
    %v2362 = vsel %vm2300, %v2353, %v2361
    %v2363 = vrot.slane %v2069, 1
    %v2364 = vsel %vm2300, %v2355, %v2363
    %v2365 = vrot.slane %v2070, 1
    %v2366 = vsel %vm2300, %v2357, %v2365
    %v2367 = vrot.slane %v2071, 1
    %v2368 = vsel %vm2300, %v2359, %v2367
    %v2369 = vrot.slane %v2072, 1
    %v2370 = vsel %vm2300, %v2361, %v2369
    %v2371 = vrot.slane %v2073, 1
    %v2372 = vsel %vm2300, %v2363, %v2371
    %v2373 = vrot.slane %v2074, 1
    %v2374 = vsel %vm2300, %v2365, %v2373
    %v2375 = vrot.slane %v2075, 1
    %v2376 = vsel %vm2300, %v2367, %v2375
    %v2377 = vrot.slane %v2076, 1
    %v2378 = vsel %vm2300, %v2369, %v2377
    %v2379 = vrot.slane %v2077, 1
    %v2380 = vsel %vm2300, %v2371, %v2379
    %v2381 = vrot.slane %v2078, 1
    %v2382 = vsel %vm2300, %v2373, %v2381
    %v2383 = vrot.slane %v2079, 1
    %v2384 = vsel %vm2300, %v2375, %v2383
    %v2385 = vrot.slane %v2080, 1
    %v2386 = vsel %vm2300, %v2377, %v2385
    %v2387 = vrot.slane %v2081, 1
    %v2388 = vsel %vm2300, %v2379, %v2387
    %v2389 = vrot.slane %v2082, 1
    %v2390 = vsel %vm2300, %v2381, %v2389
    %v2391 = vrot.slane %v2083, 1
    %v2392 = vsel %vm2300, %v2383, %v2391
    %v2393 = vrot.slane %v2084, 1
    %v2394 = vsel %vm2300, %v2385, %v2393
    %v2395 = vrot.slane %v2085, 1
    %v2396 = vsel %vm2300, %v2387, %v2395
    %v2397 = vrot.slane %v2086, 1
    %v2398 = vsel %vm2300, %v2389, %v2397
    %v2399 = vrot.slane %v2087, 1
    %v2400 = vsel %vm2300, %v2391, %v2399
    %v2401 = vrot.slane %v2088, 1
    %v2402 = vsel %vm2300, %v2393, %v2401
    %v2403 = vrot.slane %v2089, 1
    %v2404 = vsel %vm2300, %v2395, %v2403
    %v2405 = vrot.slane %v2090, 1
    %v2406 = vsel %vm2300, %v2397, %v2405
    %v2407 = vrot.slane %v2091, 1
    %v2408 = vsel %vm2300, %v2399, %v2407
    %v2409 = vrot.slane %v2092, 1
    %v2410 = vsel %vm2300, %v2401, %v2409
    %v2411 = vrot.slane %v2093, 1
    %v2412 = vsel %vm2300, %v2403, %v2411
    %v2413 = vrot.slane %v2094, 1
    %v2414 = vsel %vm2300, %v2405, %v2413
    %v2415 = vrot.slane %v2095, 1
    %v2416 = vsel %vm2300, %v2407, %v2415
    %v2417 = vrot.slane %v2096, 1
    %v2418 = vsel %vm2300, %v2409, %v2417
    %v2419 = vrot.slane %v2097, 1
    %v2420 = vsel %vm2300, %v2411, %v2419
    %v2421 = vrot.slane %v2098, 1
    %v2422 = vsel %vm2300, %v2413, %v2421
    %v2423 = vrot.slane %v2099, 1
    %v2424 = vsel %vm2300, %v2415, %v2423
    %v2425 = vrot.slane %v2100, 1
    %v2426 = vsel %vm2300, %v2417, %v2425
    %v2427 = vrot.slane %v2101, 1
    %v2428 = vsel %vm2300, %v2419, %v2427
    %v2429 = vrot.slane %v2102, 1
    %v2430 = vsel %vm2300, %v2421, %v2429
    %v2431 = vrot.slane %v2103, 1
    %v2432 = vsel %vm2300, %v2423, %v2431
    %v2433 = vrot.slane %v2104, 1
    %v2434 = vsel %vm2300, %v2425, %v2433
    %v2435 = vrot.slane %v2105, 1
    %v2436 = vsel %vm2300, %v2427, %v2435
    %v2437 = vrot.slane %v2106, 1
    %v2438 = vsel %vm2300, %v2429, %v2437
    %v2439 = vrot.slane %v2107, 1
    %v2440 = vsel %vm2300, %v2431, %v2439
    %v2441 = vrot.slane %v2108, 1
    %v2442 = vsel %vm2300, %v2433, %v2441
    %v2443 = vrot.slane %v2109, 1
    %v2444 = vsel %vm2300, %v2435, %v2443
    %v2445 = vrot.slane %v2110, 1
    %v2446 = vsel %vm2300, %v2437, %v2445
    %v2447 = vrot.slane %v2111, 1
    %v2448 = vsel %vm2300, %v2439, %v2447
    %v2449 = vrot.slane %v2112, 1
    %v2450 = vsel %vm2300, %v2441, %v2449
    %v2451 = vrot.slane %v2113, 1
    %v2452 = vsel %vm2300, %v2443, %v2451
    %v2453 = vrot.slane %v2114, 1
    %v2454 = vsel %vm2300, %v2445, %v2453
    %v2455 = vrot.slane %v2115, 1
    %v2456 = vsel %vm2300, %v2447, %v2455
    %v2457 = vrot.slane %v2116, 1
    %v2458 = vsel %vm2300, %v2449, %v2457
    %v2459 = vrot.slane %v2117, 1
    %v2460 = vsel %vm2300, %v2451, %v2459
    %v2461 = vrot.slane %v2118, 1
    %v2462 = vsel %vm2300, %v2453, %v2461
    %v2463 = vrot.slane %v2119, 1
    %v2464 = vsel %vm2300, %v2455, %v2463
    %v2465 = vrot.slane %v2120, 1
    %v2466 = vsel %vm2300, %v2457, %v2465
    %v2467 = vrot.slane %v2121, 1
    %v2468 = vsel %vm2300, %v2459, %v2467
    %v2469 = vrot.slane %v2122, 1
    %v2470 = vsel %vm2300, %v2461, %v2469
    %v2471 = vrot.slane %v2123, 1
    %v2472 = vsel %vm2300, %v2463, %v2471
    %v2473 = vrot.slane %v2124, 1
    %v2474 = vsel %vm2300, %v2465, %v2473
    %v2475 = vrot.slane %v2125, 1
    %v2476 = vsel %vm2300, %v2467, %v2475
    %v2477 = vrot.slane %v2126, 1
    %v2478 = vsel %vm2300, %v2469, %v2477
    %v2479 = vrot.slane %v2127, 1
    %v2480 = vsel %vm2300, %v2471, %v2479
    %v2481 = vrot.slane %v2128, 1
    %v2482 = vsel %vm2300, %v2473, %v2481
    %v2483 = vrot.slane %v2129, 1
    %v2484 = vsel %vm2300, %v2475, %v2483
    %v2485 = vrot.slane %v2130, 1
    %v2486 = vsel %vm2300, %v2477, %v2485
    %v2487 = vrot.slane %v2131, 1
    %v2488 = vsel %vm2300, %v2479, %v2487
    %v2489 = vrot.slane %v2132, 1
    %v2490 = vsel %vm2300, %v2481, %v2489
    %v2491 = vrot.slane %v2133, 1
    %v2492 = vsel %vm2300, %v2483, %v2491
    %v2493 = vrot.slane %v2134, 1
    %v2494 = vsel %vm2300, %v2485, %v2493
    %v2495 = vrot.slane %v2135, 1
    %v2496 = vsel %vm2300, %v2487, %v2495
    %v2497 = vrot.slane %v2136, 1
    %v2498 = vsel %vm2300, %v2489, %v2497
    %v2499 = vrot.slane %v2137, 1
    %v2500 = vsel %vm2300, %v2491, %v2499
    %v2501 = vrot.slane %v2138, 1
    %v2502 = vsel %vm2300, %v2493, %v2501
    %v2503 = vrot.slane %v2139, 1
    %v2504 = vsel %vm2300, %v2495, %v2503
    %v2505 = vrot.slane %v2140, 1
    %v2506 = vsel %vm2300, %v2497, %v2505
    %v2507 = vrot.slane %v2141, 1
    %v2508 = vsel %vm2300, %v2499, %v2507
    %v2509 = vrot.slane %v2142, 1
    %v2510 = vsel %vm2300, %v2501, %v2509
    %v2511 = vrot.slane %v2143, 1
    %v2512 = vsel %vm2300, %v2503, %v2511
    %v2513 = vrot.slane %v2144, 1
    %v2514 = vsel %vm2300, %v2505, %v2513
    %v2515 = vrot.slane %v2145, 1
    %v2516 = vsel %vm2300, %v2507, %v2515
    %v2517 = vrot.slane %v2146, 1
    %v2518 = vsel %vm2300, %v2509, %v2517
    %v2519 = vrot.slane %v2147, 1
    %v2520 = vsel %vm2300, %v2511, %v2519
    %v2521 = vrot.slane %v2148, 1
    %v2522 = vsel %vm2300, %v2513, %v2521
    %v2523 = vrot.slane %v2149, 1
    %v2524 = vsel %vm2300, %v2515, %v2523
    %v2525 = vrot.slane %v2150, 1
    %v2526 = vsel %vm2300, %v2517, %v2525
    %v2527 = vrot.slane %v2151, 1
    %v2528 = vsel %vm2300, %v2519, %v2527
    %v2529 = vrot.slane %v2152, 1
    %v2530 = vsel %vm2300, %v2521, %v2529
    %v2531 = vrot.slane %v2153, 1
    %v2532 = vsel %vm2300, %v2523, %v2531
    %v2533 = vrot.slane %v2154, 1
    %v2534 = vsel %vm2300, %v2525, %v2533
    %v2535 = vrot.slane %v2155, 1
    %v2536 = vsel %vm2300, %v2527, %v2535
    %v2537 = vrot.slane %v2156, 1
    %v2538 = vsel %vm2300, %v2529, %v2537
    %v2539 = vrot.slane %v2157, 1
    %v2540 = vsel %vm2300, %v2531, %v2539
    %v2541 = vrot.slane %v2158, 1
    %v2542 = vsel %vm2300, %v2533, %v2541
    %v2543 = vrot.slane %v2159, 1
    %v2544 = vsel %vm2300, %v2535, %v2543
    %v2545 = vrot.slane %v2160, 1
    %v2546 = vsel %vm2300, %v2537, %v2545
    %v2547 = vrot.slane %v2161, 1
    %v2548 = vsel %vm2300, %v2539, %v2547
    %v2549 = vrot.slane %v2162, 1
    %v2550 = vsel %vm2300, %v2541, %v2549
    %v2551 = vrot.slane %v2163, 1
    %v2552 = vsel %vm2300, %v2543, %v2551
    %v2553 = vrot.slane %v2164, 1
    %v2554 = vsel %vm2300, %v2545, %v2553
    %v2555 = vrot.slane %v2165, 1
    %v2556 = vsel %vm2300, %v2547, %v2555
    %v2557 = vrot.slane %v2166, 1
    %v2558 = vsel %vm2300, %v2549, %v2557
    %v2559 = vrot.slane %v2167, 1
    %v2560 = vsel %vm2300, %v2551, %v2559
    %v2689 = vmax.f32 %v2036, %v2303
    %v2690 = vmax.f32 %v2037, %v2306
    %v2691 = vmax.f32 %v2038, %v2309
    %v2692 = vmax.f32 %v2039, %v2312
    %v2693 = vmax.f32 %v2040, %v2314
    %v2694 = vmax.f32 %v2041, %v2316
    %v2695 = vmax.f32 %v2042, %v2318
    %v2696 = vmax.f32 %v2043, %v2320
    %v2697 = vmax.f32 %v2044, %v2322
    %v2698 = vmax.f32 %v2045, %v2324
    %v2699 = vmax.f32 %v2046, %v2326
    %v2700 = vmax.f32 %v2047, %v2328
    %v2701 = vmax.f32 %v2048, %v2330
    %v2702 = vmax.f32 %v2049, %v2332
    %v2703 = vmax.f32 %v2050, %v2334
    %v2704 = vmax.f32 %v2051, %v2336
    %v2705 = vmax.f32 %v2052, %v2338
    %v2706 = vmax.f32 %v2053, %v2340
    %v2707 = vmax.f32 %v2054, %v2342
    %v2708 = vmax.f32 %v2055, %v2344
    %v2709 = vmax.f32 %v2056, %v2346
    %v2710 = vmax.f32 %v2057, %v2348
    %v2711 = vmax.f32 %v2058, %v2350
    %v2712 = vmax.f32 %v2059, %v2352
    %v2713 = vmax.f32 %v2060, %v2354
    %v2714 = vmax.f32 %v2061, %v2356
    %v2715 = vmax.f32 %v2062, %v2358
    %v2716 = vmax.f32 %v2063, %v2360
    %v2717 = vmax.f32 %v2064, %v2362
    %v2718 = vmax.f32 %v2065, %v2364
    %v2719 = vmax.f32 %v2066, %v2366
    %v2720 = vmax.f32 %v2067, %v2368
    %v2721 = vmax.f32 %v2068, %v2370
    %v2722 = vmax.f32 %v2069, %v2372
    %v2723 = vmax.f32 %v2070, %v2374
    %v2724 = vmax.f32 %v2071, %v2376
    %v2725 = vmax.f32 %v2072, %v2378
    %v2726 = vmax.f32 %v2073, %v2380
    %v2727 = vmax.f32 %v2074, %v2382
    %v2728 = vmax.f32 %v2075, %v2384
    %v2729 = vmax.f32 %v2076, %v2386
    %v2730 = vmax.f32 %v2077, %v2388
    %v2731 = vmax.f32 %v2078, %v2390
    %v2732 = vmax.f32 %v2079, %v2392
    %v2733 = vmax.f32 %v2080, %v2394
    %v2734 = vmax.f32 %v2081, %v2396
    %v2735 = vmax.f32 %v2082, %v2398
    %v2736 = vmax.f32 %v2083, %v2400
    %v2737 = vmax.f32 %v2084, %v2402
    %v2738 = vmax.f32 %v2085, %v2404
    %v2739 = vmax.f32 %v2086, %v2406
    %v2740 = vmax.f32 %v2087, %v2408
    %v2741 = vmax.f32 %v2088, %v2410
    %v2742 = vmax.f32 %v2089, %v2412
    %v2743 = vmax.f32 %v2090, %v2414
    %v2744 = vmax.f32 %v2091, %v2416
    %v2745 = vmax.f32 %v2092, %v2418
    %v2746 = vmax.f32 %v2093, %v2420
    %v2747 = vmax.f32 %v2094, %v2422
    %v2748 = vmax.f32 %v2095, %v2424
    %v2749 = vmax.f32 %v2096, %v2426
    %v2750 = vmax.f32 %v2097, %v2428
    %v2751 = vmax.f32 %v2098, %v2430
    %v2752 = vmax.f32 %v2099, %v2432
    %v2753 = vmax.f32 %v2100, %v2434
    %v2754 = vmax.f32 %v2101, %v2436
    %v2755 = vmax.f32 %v2102, %v2438
    %v2756 = vmax.f32 %v2103, %v2440
    %v2757 = vmax.f32 %v2104, %v2442
    %v2758 = vmax.f32 %v2105, %v2444
    %v2759 = vmax.f32 %v2106, %v2446
    %v2760 = vmax.f32 %v2107, %v2448
    %v2761 = vmax.f32 %v2108, %v2450
    %v2762 = vmax.f32 %v2109, %v2452
    %v2763 = vmax.f32 %v2110, %v2454
    %v2764 = vmax.f32 %v2111, %v2456
    %v2765 = vmax.f32 %v2112, %v2458
    %v2766 = vmax.f32 %v2113, %v2460
    %v2767 = vmax.f32 %v2114, %v2462
    %v2768 = vmax.f32 %v2115, %v2464
    %v2769 = vmax.f32 %v2116, %v2466
    %v2770 = vmax.f32 %v2117, %v2468
    %v2771 = vmax.f32 %v2118, %v2470
    %v2772 = vmax.f32 %v2119, %v2472
    %v2773 = vmax.f32 %v2120, %v2474
    %v2774 = vmax.f32 %v2121, %v2476
    %v2775 = vmax.f32 %v2122, %v2478
    %v2776 = vmax.f32 %v2123, %v2480
    %v2777 = vmax.f32 %v2124, %v2482
    %v2778 = vmax.f32 %v2125, %v2484
    %v2779 = vmax.f32 %v2126, %v2486
    %v2780 = vmax.f32 %v2127, %v2488
    %v2781 = vmax.f32 %v2128, %v2490
    %v2782 = vmax.f32 %v2129, %v2492
    %v2783 = vmax.f32 %v2130, %v2494
    %v2784 = vmax.f32 %v2131, %v2496
    %v2785 = vmax.f32 %v2132, %v2498
    %v2786 = vmax.f32 %v2133, %v2500
    %v2787 = vmax.f32 %v2134, %v2502
    %v2788 = vmax.f32 %v2135, %v2504
    %v2789 = vmax.f32 %v2136, %v2506
    %v2790 = vmax.f32 %v2137, %v2508
    %v2791 = vmax.f32 %v2138, %v2510
    %v2792 = vmax.f32 %v2139, %v2512
    %v2793 = vmax.f32 %v2140, %v2514
    %v2794 = vmax.f32 %v2141, %v2516
    %v2795 = vmax.f32 %v2142, %v2518
    %v2796 = vmax.f32 %v2143, %v2520
    %v2797 = vmax.f32 %v2144, %v2522
    %v2798 = vmax.f32 %v2145, %v2524
    %v2799 = vmax.f32 %v2146, %v2526
    %v2800 = vmax.f32 %v2147, %v2528
    %v2801 = vmax.f32 %v2148, %v2530
    %v2802 = vmax.f32 %v2149, %v2532
    %v2803 = vmax.f32 %v2150, %v2534
    %v2804 = vmax.f32 %v2151, %v2536
    %v2805 = vmax.f32 %v2152, %v2538
    %v2806 = vmax.f32 %v2153, %v2540
    %v2807 = vmax.f32 %v2154, %v2542
    %v2808 = vmax.f32 %v2155, %v2544
    %v2809 = vmax.f32 %v2156, %v2546
    %v2810 = vmax.f32 %v2157, %v2548
    %v2811 = vmax.f32 %v2158, %v2550
    %v2812 = vmax.f32 %v2159, %v2552
    %v2813 = vmax.f32 %v2160, %v2554
    %v2814 = vmax.f32 %v2161, %v2556
    %v2815 = vmax.f32 %v2162, %v2558
    %v2816 = vmax.f32 %v2163, %v2560
    %v2817 = vpack.c.bf16 %v2693, %v2689
    %v2818 = vpack.c.bf16 %v2694, %v2690
    %v2819 = vpack.c.bf16 %v2695, %v2691
    %v2820 = vpack.c.bf16 %v2696, %v2692
    %v2821 = vpack.c.bf16 %v2701, %v2697
    %v2822 = vpack.c.bf16 %v2702, %v2698
    %v2823 = vpack.c.bf16 %v2703, %v2699
    %v2824 = vpack.c.bf16 %v2704, %v2700
    %v2825 = vpack.c.bf16 %v2709, %v2705
    %v2826 = vpack.c.bf16 %v2710, %v2706
    %v2827 = vpack.c.bf16 %v2711, %v2707
    %v2828 = vpack.c.bf16 %v2712, %v2708
    %v2829 = vpack.c.bf16 %v2717, %v2713
    %v2830 = vpack.c.bf16 %v2718, %v2714
    %v2831 = vpack.c.bf16 %v2719, %v2715
    %v2832 = vpack.c.bf16 %v2720, %v2716
    %v2833 = vpack.c.bf16 %v2725, %v2721
    %v2834 = vpack.c.bf16 %v2726, %v2722
    %v2835 = vpack.c.bf16 %v2727, %v2723
    %v2836 = vpack.c.bf16 %v2728, %v2724
    %v2837 = vpack.c.bf16 %v2733, %v2729
    %v2838 = vpack.c.bf16 %v2734, %v2730
    %v2839 = vpack.c.bf16 %v2735, %v2731
    %v2840 = vpack.c.bf16 %v2736, %v2732
    %v2841 = vpack.c.bf16 %v2741, %v2737
    %v2842 = vpack.c.bf16 %v2742, %v2738
    %v2843 = vpack.c.bf16 %v2743, %v2739
    %v2844 = vpack.c.bf16 %v2744, %v2740
    %v2845 = vpack.c.bf16 %v2749, %v2745
    %v2846 = vpack.c.bf16 %v2750, %v2746
    %v2847 = vpack.c.bf16 %v2751, %v2747
    %v2848 = vpack.c.bf16 %v2752, %v2748
    %v2849 = vpack.c.bf16 %v2757, %v2753
    %v2850 = vpack.c.bf16 %v2758, %v2754
    %v2851 = vpack.c.bf16 %v2759, %v2755
    %v2852 = vpack.c.bf16 %v2760, %v2756
    %v2853 = vpack.c.bf16 %v2765, %v2761
    %v2854 = vpack.c.bf16 %v2766, %v2762
    %v2855 = vpack.c.bf16 %v2767, %v2763
    %v2856 = vpack.c.bf16 %v2768, %v2764
    %v2857 = vpack.c.bf16 %v2773, %v2769
    %v2858 = vpack.c.bf16 %v2774, %v2770
    %v2859 = vpack.c.bf16 %v2775, %v2771
    %v2860 = vpack.c.bf16 %v2776, %v2772
    %v2861 = vpack.c.bf16 %v2781, %v2777
    %v2862 = vpack.c.bf16 %v2782, %v2778
    %v2863 = vpack.c.bf16 %v2783, %v2779
    %v2864 = vpack.c.bf16 %v2784, %v2780
    %v2865 = vpack.c.bf16 %v2789, %v2785
    %v2866 = vpack.c.bf16 %v2790, %v2786
    %v2867 = vpack.c.bf16 %v2791, %v2787
    %v2868 = vpack.c.bf16 %v2792, %v2788
    %v2869 = vpack.c.bf16 %v2797, %v2793
    %v2870 = vpack.c.bf16 %v2798, %v2794
    %v2871 = vpack.c.bf16 %v2799, %v2795
    %v2872 = vpack.c.bf16 %v2800, %v2796
    %v2873 = vpack.c.bf16 %v2805, %v2801
    %v2874 = vpack.c.bf16 %v2806, %v2802
    %v2875 = vpack.c.bf16 %v2807, %v2803
    %v2876 = vpack.c.bf16 %v2808, %v2804
    %v2877 = vpack.c.bf16 %v2813, %v2809
    %v2878 = vpack.c.bf16 %v2814, %v2810
    %v2879 = vpack.c.bf16 %v2815, %v2811
    %v2880 = vpack.c.bf16 %v2816, %v2812
    %v2881 = vld [vmem:[%s3] sm:$0xff]
    %v2882 = vld [vmem:[%s3 + $0x8] sm:$0xff]
    %v2883 = vld [vmem:[%s3 + $0x10] sm:$0xff]
    %v2884 = vld [vmem:[%s3 + $0x18] sm:$0xff]
    %v2885 = vld [vmem:[%s3 + $0x20] sm:$0xff]
    %v2886 = vld [vmem:[%s3 + $0x28] sm:$0xff]
    %v2887 = vld [vmem:[%s3 + $0x30] sm:$0xff]
    %v2888 = vld [vmem:[%s3 + $0x38] sm:$0xff]
    %v2889 = vld [vmem:[%s3 + $0x40] sm:$0xff]
    %v2890 = vld [vmem:[%s3 + $0x48] sm:$0xff]
    %v2891 = vld [vmem:[%s3 + $0x50] sm:$0xff]
    %v2892 = vld [vmem:[%s3 + $0x58] sm:$0xff]
    %v2893 = vld [vmem:[%s3 + $0x60] sm:$0xff]
    %v2894 = vld [vmem:[%s3 + $0x68] sm:$0xff]
    %v2895 = vld [vmem:[%s3 + $0x70] sm:$0xff]
    %v2896 = vld [vmem:[%s3 + $0x78] sm:$0xff]
    %v2897 = vld [vmem:[%s3 + $0x80] sm:$0xff]
    %v2898 = vld [vmem:[%s3 + $0x88] sm:$0xff]
    %v2917 = vunpack.c.l.b16 %v2881
    %v2918 = vunpack.c.h.b16 %v2881
    %v2919 = vunpack.c.l.b16 %v2882
    %v2920 = vunpack.c.h.b16 %v2882
    %v2921 = vunpack.c.l.b16 %v2883
    %v2922 = vunpack.c.h.b16 %v2883
    %v2923 = vunpack.c.l.b16 %v2884
    %v2924 = vunpack.c.h.b16 %v2884
    %v2925 = vunpack.c.l.b16 %v2885
    %v2926 = vunpack.c.h.b16 %v2885
    %v2927 = vunpack.c.l.b16 %v2886
    %v2928 = vunpack.c.h.b16 %v2886
    %v2929 = vunpack.c.l.b16 %v2887
    %v2930 = vunpack.c.h.b16 %v2887
    %v2931 = vunpack.c.l.b16 %v2888
    %v2932 = vunpack.c.h.b16 %v2888
    %v2933 = vunpack.c.l.b16 %v2889
    %v2934 = vunpack.c.h.b16 %v2889
    %v2935 = vunpack.c.l.b16 %v2890
    %v2936 = vunpack.c.h.b16 %v2890
    %v2937 = vunpack.c.l.b16 %v2891
    %v2938 = vunpack.c.h.b16 %v2891
    %v2939 = vunpack.c.l.b16 %v2892
    %v2940 = vunpack.c.h.b16 %v2892
    %v2941 = vunpack.c.l.b16 %v2893
    %v2942 = vunpack.c.h.b16 %v2893
    %v2943 = vunpack.c.l.b16 %v2894
    %v2944 = vunpack.c.h.b16 %v2894
    %v2945 = vunpack.c.l.b16 %v2895
    %v2946 = vunpack.c.h.b16 %v2895
    %v2947 = vunpack.c.l.b16 %v2896
    %v2948 = vunpack.c.h.b16 %v2896
    %v2949 = vunpack.c.l.b16 %v2897
    %v2950 = vunpack.c.h.b16 %v2897
    %v2951 = vunpack.c.l.b16 %v2898
    %v2952 = vunpack.c.h.b16 %v2898
    %v2953 = vpack.c.b16 %v2919, %v2917
    %v2954 = vpack.c.b16 %v2920, %v2918
    %v2955 = vpack.c.b16 %v2923, %v2921
    %v2956 = vpack.c.b16 %v2924, %v2922
    %v2957 = vpack.c.b16 %v2927, %v2925
    %v2958 = vpack.c.b16 %v2928, %v2926
    %v2959 = vpack.c.b16 %v2931, %v2929
    %v2960 = vpack.c.b16 %v2932, %v2930
    %v2961 = vpack.c.b16 %v2935, %v2933
    %v2962 = vpack.c.b16 %v2936, %v2934
    %v2963 = vpack.c.b16 %v2939, %v2937
    %v2964 = vpack.c.b16 %v2940, %v2938
    %v2965 = vpack.c.b16 %v2943, %v2941
    %v2966 = vpack.c.b16 %v2944, %v2942
    %v2967 = vpack.c.b16 %v2947, %v2945
    %v2968 = vpack.c.b16 %v2948, %v2946
    %v2969 = vpack.c.b16 %v2951, %v2949
    %v2970 = vpack.c.b16 %v2952, %v2950
    %2989 = vmatpush.bf16.msra.mxu0 %v2845
    %2990 = vmatpush.bf16.msra.mxu0 %v2841
    %2991 = vmatpush.bf16.msra.mxu0 %v2837
    %2992 = vmatpush.bf16.msra.mxu0 %v2833
    %2993 = vmatpush.bf16.msra.mxu0 %v2829
    %2994 = vmatpush.bf16.msra.mxu0 %v2825
    %2995 = vmatpush.bf16.msra.mxu0 %v2821
    %2996 = vmatpush.bf16.msra.mxu0 %v2817
    %2997 = vmatmul.bf16.gmra.mxu0 %v2953
    %v2998 = vpop.f32.mrf.mxu0
    %v2999 = vadd.f32 0.0, %v2998
    %v3000 = vpop.f32.mrf.mxu0
    %v3001 = vadd.f32 0.0, %v3000
    %3002 = vmatmul.bf16.gmra.mxu0 %v2955
    %v3003 = vpop.f32.mrf.mxu0
    %v3004 = vadd.f32 0.0, %v3003
    %v3005 = vpop.f32.mrf.mxu0
    %v3006 = vadd.f32 0.0, %v3005
    %3007 = vmatmul.bf16.gmra.mxu0 %v2957
    %v3008 = vpop.f32.mrf.mxu0
    %v3009 = vadd.f32 0.0, %v3008
    %v3010 = vpop.f32.mrf.mxu0
    %v3011 = vadd.f32 0.0, %v3010
    %3012 = vmatmul.bf16.gmra.mxu0 %v2959
    %v3013 = vpop.f32.mrf.mxu0
    %v3014 = vadd.f32 0.0, %v3013
    %v3015 = vpop.f32.mrf.mxu0
    %v3016 = vadd.f32 0.0, %v3015
    %3017 = vmatmul.bf16.gmra.mxu0 %v2961
    %v3018 = vpop.f32.mrf.mxu0
    %v3019 = vadd.f32 0.0, %v3018
    %v3020 = vpop.f32.mrf.mxu0
    %v3021 = vadd.f32 0.0, %v3020
    %3022 = vmatmul.bf16.gmra.mxu0 %v2963
    %v3023 = vpop.f32.mrf.mxu0
    %v3024 = vadd.f32 0.0, %v3023
    %v3025 = vpop.f32.mrf.mxu0
    %v3026 = vadd.f32 0.0, %v3025
    %3027 = vmatmul.bf16.gmra.mxu0 %v2965
    %v3028 = vpop.f32.mrf.mxu0
    %v3029 = vadd.f32 0.0, %v3028
    %v3030 = vpop.f32.mrf.mxu0
    %v3031 = vadd.f32 0.0, %v3030
    %3032 = vmatmul.bf16.gmra.mxu0 %v2967
    %v3033 = vpop.f32.mrf.mxu0
    %v3034 = vadd.f32 0.0, %v3033
    %v3035 = vpop.f32.mrf.mxu0
    %v3036 = vadd.f32 0.0, %v3035
    %3037 = vmatmul.bf16.gmra.mxu0 %v2969
    %v3038 = vpop.f32.mrf.mxu0
    %v3039 = vadd.f32 0.0, %v3038
    %v3040 = vpop.f32.mrf.mxu0
    %v3041 = vadd.f32 0.0, %v3040
    %3042 = vdwg.mxu0
    %3043 = vmatpush.bf16.msra.mxu0 %v2877
    %3044 = vmatpush.bf16.msra.mxu0 %v2873
    %3045 = vmatpush.bf16.msra.mxu0 %v2869
    %3046 = vmatpush.bf16.msra.mxu0 %v2865
    %3047 = vmatpush.bf16.msra.mxu0 %v2861
    %3048 = vmatpush.bf16.msra.mxu0 %v2857
    %3049 = vmatpush.bf16.msra.mxu0 %v2853
    %3050 = vmatpush.bf16.msra.mxu0 %v2849
    %3051 = vmatmul.bf16.gmra.mxu0 %v2954
    %v3052 = vpop.f32.mrf.mxu0
    %v3053 = vadd.f32 %v2999, %v3052
    %v3054 = vpop.f32.mrf.mxu0
    %v3055 = vadd.f32 %v3001, %v3054
    %3056 = vmatmul.bf16.gmra.mxu0 %v2956
    %v3057 = vpop.f32.mrf.mxu0
    %v3058 = vadd.f32 %v3004, %v3057
    %v3059 = vpop.f32.mrf.mxu0
    %v3060 = vadd.f32 %v3006, %v3059
    %3061 = vmatmul.bf16.gmra.mxu0 %v2958
    %v3062 = vpop.f32.mrf.mxu0
    %v3063 = vadd.f32 %v3009, %v3062
    %v3064 = vpop.f32.mrf.mxu0
    %v3065 = vadd.f32 %v3011, %v3064
    %3066 = vmatmul.bf16.gmra.mxu0 %v2960
    %v3067 = vpop.f32.mrf.mxu0
    %v3068 = vadd.f32 %v3014, %v3067
    %v3069 = vpop.f32.mrf.mxu0
    %v3070 = vadd.f32 %v3016, %v3069
    %3071 = vmatmul.bf16.gmra.mxu0 %v2962
    %v3072 = vpop.f32.mrf.mxu0
    %v3073 = vadd.f32 %v3019, %v3072
    %v3074 = vpop.f32.mrf.mxu0
    %v3075 = vadd.f32 %v3021, %v3074
    %3076 = vmatmul.bf16.gmra.mxu0 %v2964
    %v3077 = vpop.f32.mrf.mxu0
    %v3078 = vadd.f32 %v3024, %v3077
    %v3079 = vpop.f32.mrf.mxu0
    %v3080 = vadd.f32 %v3026, %v3079
    %3081 = vmatmul.bf16.gmra.mxu0 %v2966
    %v3082 = vpop.f32.mrf.mxu0
    %v3083 = vadd.f32 %v3029, %v3082
    %v3084 = vpop.f32.mrf.mxu0
    %v3085 = vadd.f32 %v3031, %v3084
    %3086 = vmatmul.bf16.gmra.mxu0 %v2968
    %v3087 = vpop.f32.mrf.mxu0
    %v3088 = vadd.f32 %v3034, %v3087
    %v3089 = vpop.f32.mrf.mxu0
    %v3090 = vadd.f32 %v3036, %v3089
    %3091 = vmatmul.bf16.gmra.mxu0 %v2970
    %v3092 = vpop.f32.mrf.mxu0
    %v3093 = vadd.f32 %v3039, %v3092
    %v3094 = vpop.f32.mrf.mxu0
    %v3095 = vadd.f32 %v3041, %v3094
    %3096 = vdwg.mxu0
    %3097 = vmatpush.bf16.msra.mxu0 %v2846
    %3098 = vmatpush.bf16.msra.mxu0 %v2842
    %3099 = vmatpush.bf16.msra.mxu0 %v2838
    %3100 = vmatpush.bf16.msra.mxu0 %v2834
    %3101 = vmatpush.bf16.msra.mxu0 %v2830
    %3102 = vmatpush.bf16.msra.mxu0 %v2826
    %3103 = vmatpush.bf16.msra.mxu0 %v2822
    %3104 = vmatpush.bf16.msra.mxu0 %v2818
    %3105 = vmatmul.bf16.gmra.mxu0 %v2953
    %v3106 = vpop.f32.mrf.mxu0
    %v3107 = vadd.f32 0.0, %v3106
    %v3108 = vpop.f32.mrf.mxu0
    %v3109 = vadd.f32 0.0, %v3108
    %3110 = vmatmul.bf16.gmra.mxu0 %v2955
    %v3111 = vpop.f32.mrf.mxu0
    %v3112 = vadd.f32 0.0, %v3111
    %v3113 = vpop.f32.mrf.mxu0
    %v3114 = vadd.f32 0.0, %v3113
    %3115 = vmatmul.bf16.gmra.mxu0 %v2957
    %v3116 = vpop.f32.mrf.mxu0
    %v3117 = vadd.f32 0.0, %v3116
    %v3118 = vpop.f32.mrf.mxu0
    %v3119 = vadd.f32 0.0, %v3118
    %3120 = vmatmul.bf16.gmra.mxu0 %v2959
    %v3121 = vpop.f32.mrf.mxu0
    %v3122 = vadd.f32 0.0, %v3121
    %v3123 = vpop.f32.mrf.mxu0
    %v3124 = vadd.f32 0.0, %v3123
    %3125 = vmatmul.bf16.gmra.mxu0 %v2961
    %v3126 = vpop.f32.mrf.mxu0
    %v3127 = vadd.f32 0.0, %v3126
    %v3128 = vpop.f32.mrf.mxu0
    %v3129 = vadd.f32 0.0, %v3128
    %3130 = vmatmul.bf16.gmra.mxu0 %v2963
    %v3131 = vpop.f32.mrf.mxu0
    %v3132 = vadd.f32 0.0, %v3131
    %v3133 = vpop.f32.mrf.mxu0
    %v3134 = vadd.f32 0.0, %v3133
    %3135 = vmatmul.bf16.gmra.mxu0 %v2965
    %v3136 = vpop.f32.mrf.mxu0
    %v3137 = vadd.f32 0.0, %v3136
    %v3138 = vpop.f32.mrf.mxu0
    %v3139 = vadd.f32 0.0, %v3138
    %3140 = vmatmul.bf16.gmra.mxu0 %v2967
    %v3141 = vpop.f32.mrf.mxu0
    %v3142 = vadd.f32 0.0, %v3141
    %v3143 = vpop.f32.mrf.mxu0
    %v3144 = vadd.f32 0.0, %v3143
    %3145 = vmatmul.bf16.gmra.mxu0 %v2969
    %v3146 = vpop.f32.mrf.mxu0
    %v3147 = vadd.f32 0.0, %v3146
    %v3148 = vpop.f32.mrf.mxu0
    %v3149 = vadd.f32 0.0, %v3148
    %3150 = vdwg.mxu0
    %3151 = vmatpush.bf16.msra.mxu0 %v2878
    %3152 = vmatpush.bf16.msra.mxu0 %v2874
    %3153 = vmatpush.bf16.msra.mxu0 %v2870
    %3154 = vmatpush.bf16.msra.mxu0 %v2866
    %3155 = vmatpush.bf16.msra.mxu0 %v2862
    %3156 = vmatpush.bf16.msra.mxu0 %v2858
    %3157 = vmatpush.bf16.msra.mxu0 %v2854
    %3158 = vmatpush.bf16.msra.mxu0 %v2850
    %3159 = vmatmul.bf16.gmra.mxu0 %v2954
    %v3160 = vpop.f32.mrf.mxu0
    %v3161 = vadd.f32 %v3107, %v3160
    %v3162 = vpop.f32.mrf.mxu0
    %v3163 = vadd.f32 %v3109, %v3162
    %3164 = vmatmul.bf16.gmra.mxu0 %v2956
    %v3165 = vpop.f32.mrf.mxu0
    %v3166 = vadd.f32 %v3112, %v3165
    %v3167 = vpop.f32.mrf.mxu0
    %v3168 = vadd.f32 %v3114, %v3167
    %3169 = vmatmul.bf16.gmra.mxu0 %v2958
    %v3170 = vpop.f32.mrf.mxu0
    %v3171 = vadd.f32 %v3117, %v3170
    %v3172 = vpop.f32.mrf.mxu0
    %v3173 = vadd.f32 %v3119, %v3172
    %3174 = vmatmul.bf16.gmra.mxu0 %v2960
    %v3175 = vpop.f32.mrf.mxu0
    %v3176 = vadd.f32 %v3122, %v3175
    %v3177 = vpop.f32.mrf.mxu0
    %v3178 = vadd.f32 %v3124, %v3177
    %3179 = vmatmul.bf16.gmra.mxu0 %v2962
    %v3180 = vpop.f32.mrf.mxu0
    %v3181 = vadd.f32 %v3127, %v3180
    %v3182 = vpop.f32.mrf.mxu0
    %v3183 = vadd.f32 %v3129, %v3182
    %3184 = vmatmul.bf16.gmra.mxu0 %v2964
    %v3185 = vpop.f32.mrf.mxu0
    %v3186 = vadd.f32 %v3132, %v3185
    %v3187 = vpop.f32.mrf.mxu0
    %v3188 = vadd.f32 %v3134, %v3187
    %3189 = vmatmul.bf16.gmra.mxu0 %v2966
    %v3190 = vpop.f32.mrf.mxu0
    %v3191 = vadd.f32 %v3137, %v3190
    %v3192 = vpop.f32.mrf.mxu0
    %v3193 = vadd.f32 %v3139, %v3192
    %3194 = vmatmul.bf16.gmra.mxu0 %v2968
    %v3195 = vpop.f32.mrf.mxu0
    %v3196 = vadd.f32 %v3142, %v3195
    %v3197 = vpop.f32.mrf.mxu0
    %v3198 = vadd.f32 %v3144, %v3197
    %3199 = vmatmul.bf16.gmra.mxu0 %v2970
    %v3200 = vpop.f32.mrf.mxu0
    %v3201 = vadd.f32 %v3147, %v3200
    %v3202 = vpop.f32.mrf.mxu0
    %v3203 = vadd.f32 %v3149, %v3202
    %3204 = vdwg.mxu0
    %3205 = vmatpush.bf16.msra.mxu0 %v2847
    %3206 = vmatpush.bf16.msra.mxu0 %v2843
    %3207 = vmatpush.bf16.msra.mxu0 %v2839
    %3208 = vmatpush.bf16.msra.mxu0 %v2835
    %3209 = vmatpush.bf16.msra.mxu0 %v2831
    %3210 = vmatpush.bf16.msra.mxu0 %v2827
    %3211 = vmatpush.bf16.msra.mxu0 %v2823
    %3212 = vmatpush.bf16.msra.mxu0 %v2819
    %3213 = vmatmul.bf16.gmra.mxu0 %v2953
    %v3214 = vpop.f32.mrf.mxu0
    %v3215 = vadd.f32 0.0, %v3214
    %v3216 = vpop.f32.mrf.mxu0
    %v3217 = vadd.f32 0.0, %v3216
    %3218 = vmatmul.bf16.gmra.mxu0 %v2955
    %v3219 = vpop.f32.mrf.mxu0
    %v3220 = vadd.f32 0.0, %v3219
    %v3221 = vpop.f32.mrf.mxu0
    %v3222 = vadd.f32 0.0, %v3221
    %3223 = vmatmul.bf16.gmra.mxu0 %v2957
    %v3224 = vpop.f32.mrf.mxu0
    %v3225 = vadd.f32 0.0, %v3224
    %v3226 = vpop.f32.mrf.mxu0
    %v3227 = vadd.f32 0.0, %v3226
    %3228 = vmatmul.bf16.gmra.mxu0 %v2959
    %v3229 = vpop.f32.mrf.mxu0
    %v3230 = vadd.f32 0.0, %v3229
    %v3231 = vpop.f32.mrf.mxu0
    %v3232 = vadd.f32 0.0, %v3231
    %3233 = vmatmul.bf16.gmra.mxu0 %v2961
    %v3234 = vpop.f32.mrf.mxu0
    %v3235 = vadd.f32 0.0, %v3234
    %v3236 = vpop.f32.mrf.mxu0
    %v3237 = vadd.f32 0.0, %v3236
    %3238 = vmatmul.bf16.gmra.mxu0 %v2963
    %v3239 = vpop.f32.mrf.mxu0
    %v3240 = vadd.f32 0.0, %v3239
    %v3241 = vpop.f32.mrf.mxu0
    %v3242 = vadd.f32 0.0, %v3241
    %3243 = vmatmul.bf16.gmra.mxu0 %v2965
    %v3244 = vpop.f32.mrf.mxu0
    %v3245 = vadd.f32 0.0, %v3244
    %v3246 = vpop.f32.mrf.mxu0
    %v3247 = vadd.f32 0.0, %v3246
    %3248 = vmatmul.bf16.gmra.mxu0 %v2967
    %v3249 = vpop.f32.mrf.mxu0
    %v3250 = vadd.f32 0.0, %v3249
    %v3251 = vpop.f32.mrf.mxu0
    %v3252 = vadd.f32 0.0, %v3251
    %3253 = vmatmul.bf16.gmra.mxu0 %v2969
    %v3254 = vpop.f32.mrf.mxu0
    %v3255 = vadd.f32 0.0, %v3254
    %v3256 = vpop.f32.mrf.mxu0
    %v3257 = vadd.f32 0.0, %v3256
    %3258 = vdwg.mxu0
    %3259 = vmatpush.bf16.msra.mxu0 %v2879
    %3260 = vmatpush.bf16.msra.mxu0 %v2875
    %3261 = vmatpush.bf16.msra.mxu0 %v2871
    %3262 = vmatpush.bf16.msra.mxu0 %v2867
    %3263 = vmatpush.bf16.msra.mxu0 %v2863
    %3264 = vmatpush.bf16.msra.mxu0 %v2859
    %3265 = vmatpush.bf16.msra.mxu0 %v2855
    %3266 = vmatpush.bf16.msra.mxu0 %v2851
    %3267 = vmatmul.bf16.gmra.mxu0 %v2954
    %v3268 = vpop.f32.mrf.mxu0
    %v3269 = vadd.f32 %v3215, %v3268
    %v3270 = vpop.f32.mrf.mxu0
    %v3271 = vadd.f32 %v3217, %v3270
    %3272 = vmatmul.bf16.gmra.mxu0 %v2956
    %v3273 = vpop.f32.mrf.mxu0
    %v3274 = vadd.f32 %v3220, %v3273
    %v3275 = vpop.f32.mrf.mxu0
    %v3276 = vadd.f32 %v3222, %v3275
    %3277 = vmatmul.bf16.gmra.mxu0 %v2958
    %v3278 = vpop.f32.mrf.mxu0
    %v3279 = vadd.f32 %v3225, %v3278
    %v3280 = vpop.f32.mrf.mxu0
    %v3281 = vadd.f32 %v3227, %v3280
    %3282 = vmatmul.bf16.gmra.mxu0 %v2960
    %v3283 = vpop.f32.mrf.mxu0
    %v3284 = vadd.f32 %v3230, %v3283
    %v3285 = vpop.f32.mrf.mxu0
    %v3286 = vadd.f32 %v3232, %v3285
    %3287 = vmatmul.bf16.gmra.mxu0 %v2962
    %v3288 = vpop.f32.mrf.mxu0
    %v3289 = vadd.f32 %v3235, %v3288
    %v3290 = vpop.f32.mrf.mxu0
    %v3291 = vadd.f32 %v3237, %v3290
    %3292 = vmatmul.bf16.gmra.mxu0 %v2964
    %v3293 = vpop.f32.mrf.mxu0
    %v3294 = vadd.f32 %v3240, %v3293
    %v3295 = vpop.f32.mrf.mxu0
    %v3296 = vadd.f32 %v3242, %v3295
    %3297 = vmatmul.bf16.gmra.mxu0 %v2966
    %v3298 = vpop.f32.mrf.mxu0
    %v3299 = vadd.f32 %v3245, %v3298
    %v3300 = vpop.f32.mrf.mxu0
    %v3301 = vadd.f32 %v3247, %v3300
    %3302 = vmatmul.bf16.gmra.mxu0 %v2968
    %v3303 = vpop.f32.mrf.mxu0
    %v3304 = vadd.f32 %v3250, %v3303
    %v3305 = vpop.f32.mrf.mxu0
    %v3306 = vadd.f32 %v3252, %v3305
    %3307 = vmatmul.bf16.gmra.mxu0 %v2970
    %v3308 = vpop.f32.mrf.mxu0
    %v3309 = vadd.f32 %v3255, %v3308
    %v3310 = vpop.f32.mrf.mxu0
    %v3311 = vadd.f32 %v3257, %v3310
    %3312 = vdwg.mxu0
    %3313 = vmatpush.bf16.msra.mxu0 %v2848
    %3314 = vmatpush.bf16.msra.mxu0 %v2844
    %3315 = vmatpush.bf16.msra.mxu0 %v2840
    %3316 = vmatpush.bf16.msra.mxu0 %v2836
    %3317 = vmatpush.bf16.msra.mxu0 %v2832
    %3318 = vmatpush.bf16.msra.mxu0 %v2828
    %3319 = vmatpush.bf16.msra.mxu0 %v2824
    %3320 = vmatpush.bf16.msra.mxu0 %v2820
    %3321 = vmatmul.bf16.gmra.mxu0 %v2953
    %v3322 = vpop.f32.mrf.mxu0
    %v3323 = vadd.f32 0.0, %v3322
    %v3324 = vpop.f32.mrf.mxu0
    %v3325 = vadd.f32 0.0, %v3324
    %3326 = vmatmul.bf16.gmra.mxu0 %v2955
    %v3327 = vpop.f32.mrf.mxu0
    %v3328 = vadd.f32 0.0, %v3327
    %v3329 = vpop.f32.mrf.mxu0
    %v3330 = vadd.f32 0.0, %v3329
    %3331 = vmatmul.bf16.gmra.mxu0 %v2957
    %v3332 = vpop.f32.mrf.mxu0
    %v3333 = vadd.f32 0.0, %v3332
    %v3334 = vpop.f32.mrf.mxu0
    %v3335 = vadd.f32 0.0, %v3334
    %3336 = vmatmul.bf16.gmra.mxu0 %v2959
    %v3337 = vpop.f32.mrf.mxu0
    %v3338 = vadd.f32 0.0, %v3337
    %v3339 = vpop.f32.mrf.mxu0
    %v3340 = vadd.f32 0.0, %v3339
    %3341 = vmatmul.bf16.gmra.mxu0 %v2961
    %v3342 = vpop.f32.mrf.mxu0
    %v3343 = vadd.f32 0.0, %v3342
    %v3344 = vpop.f32.mrf.mxu0
    %v3345 = vadd.f32 0.0, %v3344
    %3346 = vmatmul.bf16.gmra.mxu0 %v2963
    %v3347 = vpop.f32.mrf.mxu0
    %v3348 = vadd.f32 0.0, %v3347
    %v3349 = vpop.f32.mrf.mxu0
    %v3350 = vadd.f32 0.0, %v3349
    %3351 = vmatmul.bf16.gmra.mxu0 %v2965
    %v3352 = vpop.f32.mrf.mxu0
    %v3353 = vadd.f32 0.0, %v3352
    %v3354 = vpop.f32.mrf.mxu0
    %v3355 = vadd.f32 0.0, %v3354
    %3356 = vmatmul.bf16.gmra.mxu0 %v2967
    %v3357 = vpop.f32.mrf.mxu0
    %v3358 = vadd.f32 0.0, %v3357
    %v3359 = vpop.f32.mrf.mxu0
    %v3360 = vadd.f32 0.0, %v3359
    %3361 = vmatmul.bf16.gmra.mxu0 %v2969
    %v3362 = vpop.f32.mrf.mxu0
    %v3363 = vadd.f32 0.0, %v3362
    %v3364 = vpop.f32.mrf.mxu0
    %v3365 = vadd.f32 0.0, %v3364
    %3366 = vdwg.mxu0
    %3367 = vmatpush.bf16.msra.mxu0 %v2880
    %3368 = vmatpush.bf16.msra.mxu0 %v2876
    %3369 = vmatpush.bf16.msra.mxu0 %v2872
    %3370 = vmatpush.bf16.msra.mxu0 %v2868
    %3371 = vmatpush.bf16.msra.mxu0 %v2864
    %3372 = vmatpush.bf16.msra.mxu0 %v2860
    %3373 = vmatpush.bf16.msra.mxu0 %v2856
    %3374 = vmatpush.bf16.msra.mxu0 %v2852
    %3375 = vmatmul.bf16.gmra.mxu0 %v2954
    %v3376 = vpop.f32.mrf.mxu0
    %v3377 = vadd.f32 %v3323, %v3376
    %v3378 = vpop.f32.mrf.mxu0
    %v3379 = vadd.f32 %v3325, %v3378
    %3380 = vmatmul.bf16.gmra.mxu0 %v2956
    %v3381 = vpop.f32.mrf.mxu0
    %v3382 = vadd.f32 %v3328, %v3381
    %v3383 = vpop.f32.mrf.mxu0
    %v3384 = vadd.f32 %v3330, %v3383
    %3385 = vmatmul.bf16.gmra.mxu0 %v2958
    %v3386 = vpop.f32.mrf.mxu0
    %v3387 = vadd.f32 %v3333, %v3386
    %v3388 = vpop.f32.mrf.mxu0
    %v3389 = vadd.f32 %v3335, %v3388
    %3390 = vmatmul.bf16.gmra.mxu0 %v2960
    %v3391 = vpop.f32.mrf.mxu0
    %v3392 = vadd.f32 %v3338, %v3391
    %v3393 = vpop.f32.mrf.mxu0
    %v3394 = vadd.f32 %v3340, %v3393
    %3395 = vmatmul.bf16.gmra.mxu0 %v2962
    %v3396 = vpop.f32.mrf.mxu0
    %v3397 = vadd.f32 %v3343, %v3396
    %v3398 = vpop.f32.mrf.mxu0
    %v3399 = vadd.f32 %v3345, %v3398
    %3400 = vmatmul.bf16.gmra.mxu0 %v2964
    %v3401 = vpop.f32.mrf.mxu0
    %v3402 = vadd.f32 %v3348, %v3401
    %v3403 = vpop.f32.mrf.mxu0
    %v3404 = vadd.f32 %v3350, %v3403
    %3405 = vmatmul.bf16.gmra.mxu0 %v2966
    %v3406 = vpop.f32.mrf.mxu0
    %v3407 = vadd.f32 %v3353, %v3406
    %v3408 = vpop.f32.mrf.mxu0
    %v3409 = vadd.f32 %v3355, %v3408
    %3410 = vmatmul.bf16.gmra.mxu0 %v2968
    %v3411 = vpop.f32.mrf.mxu0
    %v3412 = vadd.f32 %v3358, %v3411
    %v3413 = vpop.f32.mrf.mxu0
    %v3414 = vadd.f32 %v3360, %v3413
    %3415 = vmatmul.bf16.gmra.mxu0 %v2970
    %v3416 = vpop.f32.mrf.mxu0
    %v3417 = vadd.f32 %v3363, %v3416
    %v3418 = vpop.f32.mrf.mxu0
    %v3419 = vadd.f32 %v3365, %v3418
    %3420 = vdwg.mxu0
    %3493 = vrot.lane.b32.xlu0 %v3053, 112
    %v3494 = vpop.permute.xlu0 %3493
    %3495 = vrot.lane.b32.xlu0 %v3161, 112
    %v3496 = vpop.permute.xlu0 %3495
    %3497 = vrot.lane.b32.xlu0 %v3269, 112
    %v3498 = vpop.permute.xlu0 %3497
    %3499 = vrot.lane.b32.xlu0 %v3377, 112
    %v3500 = vpop.permute.xlu0 %3499
    %3501 = vrot.lane.b32.xlu0 %v3055, 112
    %v3502 = vpop.permute.xlu0 %3501
    %3503 = vrot.lane.b32.xlu0 %v3163, 112
    %v3504 = vpop.permute.xlu0 %3503
    %3505 = vrot.lane.b32.xlu0 %v3271, 112
    %v3506 = vpop.permute.xlu0 %3505
    %3507 = vrot.lane.b32.xlu0 %v3379, 112
    %v3508 = vpop.permute.xlu0 %3507
    %3509 = vrot.lane.b32.xlu0 %v3058, 112
    %v3510 = vpop.permute.xlu0 %3509
    %3511 = vrot.lane.b32.xlu0 %v3166, 112
    %v3512 = vpop.permute.xlu0 %3511
    %3513 = vrot.lane.b32.xlu0 %v3274, 112
    %v3514 = vpop.permute.xlu0 %3513
    %3515 = vrot.lane.b32.xlu0 %v3382, 112
    %v3516 = vpop.permute.xlu0 %3515
    %3517 = vrot.lane.b32.xlu0 %v3060, 112
    %v3518 = vpop.permute.xlu0 %3517
    %3519 = vrot.lane.b32.xlu0 %v3168, 112
    %v3520 = vpop.permute.xlu0 %3519
    %3521 = vrot.lane.b32.xlu0 %v3276, 112
    %v3522 = vpop.permute.xlu0 %3521
    %3523 = vrot.lane.b32.xlu0 %v3384, 112
    %v3524 = vpop.permute.xlu0 %3523
    %3525 = vrot.lane.b32.xlu0 %v3063, 112
    %v3526 = vpop.permute.xlu0 %3525
    %3527 = vrot.lane.b32.xlu0 %v3171, 112
    %v3528 = vpop.permute.xlu0 %3527
    %3529 = vrot.lane.b32.xlu0 %v3279, 112
    %v3530 = vpop.permute.xlu0 %3529
    %3531 = vrot.lane.b32.xlu0 %v3387, 112
    %v3532 = vpop.permute.xlu0 %3531
    %3533 = vrot.lane.b32.xlu0 %v3065, 112
    %v3534 = vpop.permute.xlu0 %3533
    %3535 = vrot.lane.b32.xlu0 %v3173, 112
    %v3536 = vpop.permute.xlu0 %3535
    %3537 = vrot.lane.b32.xlu0 %v3281, 112
    %v3538 = vpop.permute.xlu0 %3537
    %3539 = vrot.lane.b32.xlu0 %v3389, 112
    %v3540 = vpop.permute.xlu0 %3539
    %3541 = vrot.lane.b32.xlu0 %v3068, 112
    %v3542 = vpop.permute.xlu0 %3541
    %3543 = vrot.lane.b32.xlu0 %v3176, 112
    %v3544 = vpop.permute.xlu0 %3543
    %3545 = vrot.lane.b32.xlu0 %v3284, 112
    %v3546 = vpop.permute.xlu0 %3545
    %3547 = vrot.lane.b32.xlu0 %v3392, 112
    %v3548 = vpop.permute.xlu0 %3547
    %3549 = vrot.lane.b32.xlu0 %v3070, 112
    %v3550 = vpop.permute.xlu0 %3549
    %3551 = vrot.lane.b32.xlu0 %v3178, 112
    %v3552 = vpop.permute.xlu0 %3551
    %3553 = vrot.lane.b32.xlu0 %v3286, 112
    %v3554 = vpop.permute.xlu0 %3553
    %3555 = vrot.lane.b32.xlu0 %v3394, 112
    %v3556 = vpop.permute.xlu0 %3555
    %3557 = vrot.lane.b32.xlu0 %v3073, 112
    %v3558 = vpop.permute.xlu0 %3557
    %3559 = vrot.lane.b32.xlu0 %v3181, 112
    %v3560 = vpop.permute.xlu0 %3559
    %3561 = vrot.lane.b32.xlu0 %v3289, 112
    %v3562 = vpop.permute.xlu0 %3561
    %3563 = vrot.lane.b32.xlu0 %v3397, 112
    %v3564 = vpop.permute.xlu0 %3563
    %3565 = vrot.lane.b32.xlu0 %v3075, 112
    %v3566 = vpop.permute.xlu0 %3565
    %3567 = vrot.lane.b32.xlu0 %v3183, 112
    %v3568 = vpop.permute.xlu0 %3567
    %3569 = vrot.lane.b32.xlu0 %v3291, 112
    %v3570 = vpop.permute.xlu0 %3569
    %3571 = vrot.lane.b32.xlu0 %v3399, 112
    %v3572 = vpop.permute.xlu0 %3571
    %3573 = vrot.lane.b32.xlu0 %v3078, 112
    %v3574 = vpop.permute.xlu0 %3573
    %3575 = vrot.lane.b32.xlu0 %v3186, 112
    %v3576 = vpop.permute.xlu0 %3575
    %3577 = vrot.lane.b32.xlu0 %v3294, 112
    %v3578 = vpop.permute.xlu0 %3577
    %3579 = vrot.lane.b32.xlu0 %v3402, 112
    %v3580 = vpop.permute.xlu0 %3579
    %3581 = vrot.lane.b32.xlu0 %v3080, 112
    %v3582 = vpop.permute.xlu0 %3581
    %3583 = vrot.lane.b32.xlu0 %v3188, 112
    %v3584 = vpop.permute.xlu0 %3583
    %3585 = vrot.lane.b32.xlu0 %v3296, 112
    %v3586 = vpop.permute.xlu0 %3585
    %3587 = vrot.lane.b32.xlu0 %v3404, 112
    %v3588 = vpop.permute.xlu0 %3587
    %3589 = vrot.lane.b32.xlu0 %v3083, 112
    %v3590 = vpop.permute.xlu0 %3589
    %3591 = vrot.lane.b32.xlu0 %v3191, 112
    %v3592 = vpop.permute.xlu0 %3591
    %3593 = vrot.lane.b32.xlu0 %v3299, 112
    %v3594 = vpop.permute.xlu0 %3593
    %3595 = vrot.lane.b32.xlu0 %v3407, 112
    %v3596 = vpop.permute.xlu0 %3595
    %3597 = vrot.lane.b32.xlu0 %v3085, 112
    %v3598 = vpop.permute.xlu0 %3597
    %3599 = vrot.lane.b32.xlu0 %v3193, 112
    %v3600 = vpop.permute.xlu0 %3599
    %3601 = vrot.lane.b32.xlu0 %v3301, 112
    %v3602 = vpop.permute.xlu0 %3601
    %3603 = vrot.lane.b32.xlu0 %v3409, 112
    %v3604 = vpop.permute.xlu0 %3603
    %3605 = vrot.lane.b32.xlu0 %v3088, 112
    %v3606 = vpop.permute.xlu0 %3605
    %3607 = vrot.lane.b32.xlu0 %v3196, 112
    %v3608 = vpop.permute.xlu0 %3607
    %3609 = vrot.lane.b32.xlu0 %v3304, 112
    %v3610 = vpop.permute.xlu0 %3609
    %3611 = vrot.lane.b32.xlu0 %v3412, 112
    %v3612 = vpop.permute.xlu0 %3611
    %3613 = vrot.lane.b32.xlu0 %v3090, 112
    %v3614 = vpop.permute.xlu0 %3613
    %3615 = vrot.lane.b32.xlu0 %v3198, 112
    %v3616 = vpop.permute.xlu0 %3615
    %3617 = vrot.lane.b32.xlu0 %v3306, 112
    %v3618 = vpop.permute.xlu0 %3617
    %3619 = vrot.lane.b32.xlu0 %v3414, 112
    %v3620 = vpop.permute.xlu0 %3619
    %3621 = vrot.lane.b32.xlu0 %v3093, 112
    %v3622 = vpop.permute.xlu0 %3621
    %3623 = vrot.lane.b32.xlu0 %v3201, 112
    %v3624 = vpop.permute.xlu0 %3623
    %3625 = vrot.lane.b32.xlu0 %v3309, 112
    %v3626 = vpop.permute.xlu0 %3625
    %3627 = vrot.lane.b32.xlu0 %v3417, 112
    %v3628 = vpop.permute.xlu0 %3627
    %3629 = vrot.lane.b32.xlu0 %v3095, 112
    %v3630 = vpop.permute.xlu0 %3629
    %3631 = vrot.lane.b32.xlu0 %v3203, 112
    %v3632 = vpop.permute.xlu0 %3631
    %3633 = vrot.lane.b32.xlu0 %v3311, 112
    %v3634 = vpop.permute.xlu0 %3633
    %3635 = vrot.lane.b32.xlu0 %v3419, 112
    %v3636 = vpop.permute.xlu0 %3635
    %vm3637 = vcmask 916480
    %v3638 = vsel %vm3637, %v3494, %v3496
    %v3639 = vsel %vm3637, %v3496, %v3498
    %v3640 = vsel %vm3637, %v3498, %v3500
    %v3641 = vsel %vm3637, %v3502, %v3504
    %v3642 = vsel %vm3637, %v3504, %v3506
    %v3643 = vsel %vm3637, %v3506, %v3508
    %v3644 = vsel %vm3637, %v3510, %v3512
    %v3645 = vsel %vm3637, %v3512, %v3514
    %v3646 = vsel %vm3637, %v3514, %v3516
    %v3647 = vsel %vm3637, %v3518, %v3520
    %v3648 = vsel %vm3637, %v3520, %v3522
    %v3649 = vsel %vm3637, %v3522, %v3524
    %v3650 = vsel %vm3637, %v3526, %v3528
    %v3651 = vsel %vm3637, %v3528, %v3530
    %v3652 = vsel %vm3637, %v3530, %v3532
    %v3653 = vsel %vm3637, %v3534, %v3536
    %v3654 = vsel %vm3637, %v3536, %v3538
    %v3655 = vsel %vm3637, %v3538, %v3540
    %v3656 = vsel %vm3637, %v3542, %v3544
    %v3657 = vsel %vm3637, %v3544, %v3546
    %v3658 = vsel %vm3637, %v3546, %v3548
    %v3659 = vsel %vm3637, %v3550, %v3552
    %v3660 = vsel %vm3637, %v3552, %v3554
    %v3661 = vsel %vm3637, %v3554, %v3556
    %v3662 = vsel %vm3637, %v3558, %v3560
    %v3663 = vsel %vm3637, %v3560, %v3562
    %v3664 = vsel %vm3637, %v3562, %v3564
    %v3665 = vsel %vm3637, %v3566, %v3568
    %v3666 = vsel %vm3637, %v3568, %v3570
    %v3667 = vsel %vm3637, %v3570, %v3572
    %v3668 = vsel %vm3637, %v3574, %v3576
    %v3669 = vsel %vm3637, %v3576, %v3578
    %v3670 = vsel %vm3637, %v3578, %v3580
    %v3671 = vsel %vm3637, %v3582, %v3584
    %v3672 = vsel %vm3637, %v3584, %v3586
    %v3673 = vsel %vm3637, %v3586, %v3588
    %v3674 = vsel %vm3637, %v3590, %v3592
    %v3675 = vsel %vm3637, %v3592, %v3594
    %v3676 = vsel %vm3637, %v3594, %v3596
    %v3677 = vsel %vm3637, %v3598, %v3600
    %v3678 = vsel %vm3637, %v3600, %v3602
    %v3679 = vsel %vm3637, %v3602, %v3604
    %v3680 = vsel %vm3637, %v3606, %v3608
    %v3681 = vsel %vm3637, %v3608, %v3610
    %v3682 = vsel %vm3637, %v3610, %v3612
    %v3683 = vsel %vm3637, %v3614, %v3616
    %v3684 = vsel %vm3637, %v3616, %v3618
    %v3685 = vsel %vm3637, %v3618, %v3620
    %v3686 = vsel %vm3637, %v3622, %v3624
    %v3687 = vsel %vm3637, %v3624, %v3626
    %v3688 = vsel %vm3637, %v3626, %v3628
    %v3689 = vsel %vm3637, %v3630, %v3632
    %v3690 = vsel %vm3637, %v3632, %v3634
    %v3691 = vsel %vm3637, %v3634, %v3636
    %v3764 = vmax.f32 %v3053, %v3638
    %v3765 = vmax.f32 %v3161, %v3639
    %v3766 = vmax.f32 %v3269, %v3640
    %v3767 = vmax.f32 %v3377, %v3500
    %v3768 = vmax.f32 %v3055, %v3641
    %v3769 = vmax.f32 %v3163, %v3642
    %v3770 = vmax.f32 %v3271, %v3643
    %v3771 = vmax.f32 %v3379, %v3508
    %v3772 = vmax.f32 %v3058, %v3644
    %v3773 = vmax.f32 %v3166, %v3645
    %v3774 = vmax.f32 %v3274, %v3646
    %v3775 = vmax.f32 %v3382, %v3516
    %v3776 = vmax.f32 %v3060, %v3647
    %v3777 = vmax.f32 %v3168, %v3648
    %v3778 = vmax.f32 %v3276, %v3649
    %v3779 = vmax.f32 %v3384, %v3524
    %v3780 = vmax.f32 %v3063, %v3650
    %v3781 = vmax.f32 %v3171, %v3651
    %v3782 = vmax.f32 %v3279, %v3652
    %v3783 = vmax.f32 %v3387, %v3532
    %v3784 = vmax.f32 %v3065, %v3653
    %v3785 = vmax.f32 %v3173, %v3654
    %v3786 = vmax.f32 %v3281, %v3655
    %v3787 = vmax.f32 %v3389, %v3540
    %v3788 = vmax.f32 %v3068, %v3656
    %v3789 = vmax.f32 %v3176, %v3657
    %v3790 = vmax.f32 %v3284, %v3658
    %v3791 = vmax.f32 %v3392, %v3548
    %v3792 = vmax.f32 %v3070, %v3659
    %v3793 = vmax.f32 %v3178, %v3660
    %v3794 = vmax.f32 %v3286, %v3661
    %v3795 = vmax.f32 %v3394, %v3556
    %v3796 = vmax.f32 %v3073, %v3662
    %v3797 = vmax.f32 %v3181, %v3663
    %v3798 = vmax.f32 %v3289, %v3664
    %v3799 = vmax.f32 %v3397, %v3564
    %v3800 = vmax.f32 %v3075, %v3665
    %v3801 = vmax.f32 %v3183, %v3666
    %v3802 = vmax.f32 %v3291, %v3667
    %v3803 = vmax.f32 %v3399, %v3572
    %v3804 = vmax.f32 %v3078, %v3668
    %v3805 = vmax.f32 %v3186, %v3669
    %v3806 = vmax.f32 %v3294, %v3670
    %v3807 = vmax.f32 %v3402, %v3580
    %v3808 = vmax.f32 %v3080, %v3671
    %v3809 = vmax.f32 %v3188, %v3672
    %v3810 = vmax.f32 %v3296, %v3673
    %v3811 = vmax.f32 %v3404, %v3588
    %v3812 = vmax.f32 %v3083, %v3674
    %v3813 = vmax.f32 %v3191, %v3675
    %v3814 = vmax.f32 %v3299, %v3676
    %v3815 = vmax.f32 %v3407, %v3596
    %v3816 = vmax.f32 %v3085, %v3677
    %v3817 = vmax.f32 %v3193, %v3678
    %v3818 = vmax.f32 %v3301, %v3679
    %v3819 = vmax.f32 %v3409, %v3604
    %v3820 = vmax.f32 %v3088, %v3680
    %v3821 = vmax.f32 %v3196, %v3681
    %v3822 = vmax.f32 %v3304, %v3682
    %v3823 = vmax.f32 %v3412, %v3612
    %v3824 = vmax.f32 %v3090, %v3683
    %v3825 = vmax.f32 %v3198, %v3684
    %v3826 = vmax.f32 %v3306, %v3685
    %v3827 = vmax.f32 %v3414, %v3620
    %v3828 = vmax.f32 %v3093, %v3686
    %v3829 = vmax.f32 %v3201, %v3687
    %v3830 = vmax.f32 %v3309, %v3688
    %v3831 = vmax.f32 %v3417, %v3628
    %v3832 = vmax.f32 %v3095, %v3689
    %v3833 = vmax.f32 %v3203, %v3690
    %v3834 = vmax.f32 %v3311, %v3691
    %v3835 = vmax.f32 %v3419, %v3636
    %v3836 = vpack.c.bf16 %v3768, %v3764
    %v3837 = vpack.c.bf16 %v3769, %v3765
    %v3838 = vpack.c.bf16 %v3770, %v3766
    %v3839 = vpack.c.bf16 %v3771, %v3767
    %v3840 = vpack.c.bf16 %v3776, %v3772
    %v3841 = vpack.c.bf16 %v3777, %v3773
    %v3842 = vpack.c.bf16 %v3778, %v3774
    %v3843 = vpack.c.bf16 %v3779, %v3775
    %v3844 = vpack.c.bf16 %v3784, %v3780
    %v3845 = vpack.c.bf16 %v3785, %v3781
    %v3846 = vpack.c.bf16 %v3786, %v3782
    %v3847 = vpack.c.bf16 %v3787, %v3783
    %v3848 = vpack.c.bf16 %v3792, %v3788
    %v3849 = vpack.c.bf16 %v3793, %v3789
    %v3850 = vpack.c.bf16 %v3794, %v3790
    %v3851 = vpack.c.bf16 %v3795, %v3791
    %v3852 = vpack.c.bf16 %v3800, %v3796
    %v3853 = vpack.c.bf16 %v3801, %v3797
    %v3854 = vpack.c.bf16 %v3802, %v3798
    %v3855 = vpack.c.bf16 %v3803, %v3799
    %v3856 = vpack.c.bf16 %v3808, %v3804
    %v3857 = vpack.c.bf16 %v3809, %v3805
    %v3858 = vpack.c.bf16 %v3810, %v3806
    %v3859 = vpack.c.bf16 %v3811, %v3807
    %v3860 = vpack.c.bf16 %v3816, %v3812
    %v3861 = vpack.c.bf16 %v3817, %v3813
    %v3862 = vpack.c.bf16 %v3818, %v3814
    %v3863 = vpack.c.bf16 %v3819, %v3815
    %v3864 = vpack.c.bf16 %v3824, %v3820
    %v3865 = vpack.c.bf16 %v3825, %v3821
    %v3866 = vpack.c.bf16 %v3826, %v3822
    %v3867 = vpack.c.bf16 %v3827, %v3823
    %v3868 = vpack.c.bf16 %v3832, %v3828
    %v3869 = vpack.c.bf16 %v3833, %v3829
    %v3870 = vpack.c.bf16 %v3834, %v3830
    %v3871 = vpack.c.bf16 %v3835, %v3831
    %v3872 = vld [vmem:[%s4] sm:$0xff]
    %v3873 = vld [vmem:[%s4 + $0x8] sm:$0xff]
    %v3874 = vld [vmem:[%s4 + $0x10] sm:$0xff]
    %v3875 = vld [vmem:[%s4 + $0x18] sm:$0xff]
    %v3876 = vld [vmem:[%s4 + $0x20] sm:$0xff]
    %v3877 = vld [vmem:[%s4 + $0x28] sm:$0xff]
    %v3878 = vld [vmem:[%s4 + $0x30] sm:$0xff]
    %v3879 = vld [vmem:[%s4 + $0x38] sm:$0xff]
    %v3880 = vld [vmem:[%s4 + $0x40] sm:$0xff]
    %v3881 = vld [vmem:[%s4 + $0x48] sm:$0xff]
    %v3882 = vld [vmem:[%s4 + $0x50] sm:$0xff]
    %v3883 = vld [vmem:[%s4 + $0x58] sm:$0xff]
    %v3884 = vld [vmem:[%s4 + $0x60] sm:$0xff]
    %v3885 = vld [vmem:[%s4 + $0x68] sm:$0xff]
    %v3886 = vld [vmem:[%s4 + $0x70] sm:$0xff]
    %v3887 = vld [vmem:[%s4 + $0x78] sm:$0xff]
    %v3888 = vld [vmem:[%s4 + $0x80] sm:$0xff]
    %v3889 = vld [vmem:[%s4 + $0x88] sm:$0xff]
    %v3890 = vld [vmem:[%s4 + $0x90] sm:$0xff]
    %v3891 = vld [vmem:[%s4 + $0x98] sm:$0xff]
    %v3892 = vld [vmem:[%s4 + $0xa0] sm:$0xff]
    %v3893 = vld [vmem:[%s4 + $0xa8] sm:$0xff]
    %v3894 = vld [vmem:[%s4 + $0xb0] sm:$0xff]
    %v3895 = vld [vmem:[%s4 + $0xb8] sm:$0xff]
    %v3896 = vld [vmem:[%s4 + $0xc0] sm:$0xff]
    %v3897 = vld [vmem:[%s4 + $0xc8] sm:$0xff]
    %v3898 = vld [vmem:[%s4 + $0xd0] sm:$0xff]
    %v3899 = vld [vmem:[%s4 + $0xd8] sm:$0xff]
    %v3900 = vld [vmem:[%s4 + $0xe0] sm:$0xff]
    %v3901 = vld [vmem:[%s4 + $0xe8] sm:$0xff]
    %v3902 = vld [vmem:[%s4 + $0xf0] sm:$0xff]
    %v3903 = vld [vmem:[%s4 + $0xf8] sm:$0xff]
    %v3904 = vld [vmem:[%s4 + $0x100] sm:$0xff]
    %v3905 = vld [vmem:[%s4 + $0x108] sm:$0xff]
    %v3906 = vld [vmem:[%s4 + $0x110] sm:$0xff]
    %v3907 = vld [vmem:[%s4 + $0x118] sm:$0xff]
    %v3908 = vld [vmem:[%s4 + $0x120] sm:$0xff]
    %v3909 = vld [vmem:[%s4 + $0x128] sm:$0xff]
    %v3910 = vld [vmem:[%s4 + $0x130] sm:$0xff]
    %v3911 = vld [vmem:[%s4 + $0x138] sm:$0xff]
    %v3912 = vld [vmem:[%s4 + $0x140] sm:$0xff]
    %v3913 = vld [vmem:[%s4 + $0x148] sm:$0xff]
    %v3914 = vld [vmem:[%s4 + $0x150] sm:$0xff]
    %v3915 = vld [vmem:[%s4 + $0x158] sm:$0xff]
    %v3916 = vld [vmem:[%s4 + $0x160] sm:$0xff]
    %v3917 = vld [vmem:[%s4 + $0x168] sm:$0xff]
    %v3918 = vld [vmem:[%s4 + $0x170] sm:$0xff]
    %v3919 = vld [vmem:[%s4 + $0x178] sm:$0xff]
    %v3920 = vld [vmem:[%s4 + $0x180] sm:$0xff]
    %v3921 = vld [vmem:[%s4 + $0x188] sm:$0xff]
    %v3922 = vld [vmem:[%s4 + $0x190] sm:$0xff]
    %v3923 = vld [vmem:[%s4 + $0x198] sm:$0xff]
    %v3924 = vld [vmem:[%s4 + $0x1a0] sm:$0xff]
    %v3925 = vld [vmem:[%s4 + $0x1a8] sm:$0xff]
    %v3926 = vld [vmem:[%s4 + $0x1b0] sm:$0xff]
    %v3927 = vld [vmem:[%s4 + $0x1b8] sm:$0xff]
    %v3984 = vunpack.c.l.b16 %v3872
    %v3985 = vunpack.c.h.b16 %v3872
    %v3986 = vunpack.c.l.b16 %v3873
    %v3987 = vunpack.c.h.b16 %v3873
    %v3988 = vunpack.c.l.b16 %v3874
    %v3989 = vunpack.c.h.b16 %v3874
    %v3990 = vunpack.c.l.b16 %v3875
    %v3991 = vunpack.c.h.b16 %v3875
    %v3992 = vunpack.c.l.b16 %v3876
    %v3993 = vunpack.c.h.b16 %v3876
    %v3994 = vunpack.c.l.b16 %v3877
    %v3995 = vunpack.c.h.b16 %v3877
    %v3996 = vunpack.c.l.b16 %v3878
    %v3997 = vunpack.c.h.b16 %v3878
    %v3998 = vunpack.c.l.b16 %v3879
    %v3999 = vunpack.c.h.b16 %v3879
    %v4000 = vunpack.c.l.b16 %v3880
    %v4001 = vunpack.c.h.b16 %v3880
    %v4002 = vunpack.c.l.b16 %v3881
    %v4003 = vunpack.c.h.b16 %v3881
    %v4004 = vunpack.c.l.b16 %v3882
    %v4005 = vunpack.c.h.b16 %v3882
    %v4006 = vunpack.c.l.b16 %v3883
    %v4007 = vunpack.c.h.b16 %v3883
    %v4008 = vunpack.c.l.b16 %v3884
    %v4009 = vunpack.c.h.b16 %v3884
    %v4010 = vunpack.c.l.b16 %v3885
    %v4011 = vunpack.c.h.b16 %v3885
    %v4012 = vunpack.c.l.b16 %v3886
    %v4013 = vunpack.c.h.b16 %v3886
    %v4014 = vunpack.c.l.b16 %v3887
    %v4015 = vunpack.c.h.b16 %v3887
    %v4016 = vunpack.c.l.b16 %v3888
    %v4017 = vunpack.c.h.b16 %v3888
    %v4018 = vunpack.c.l.b16 %v3889
    %v4019 = vunpack.c.h.b16 %v3889
    %v4020 = vunpack.c.l.b16 %v3890
    %v4021 = vunpack.c.h.b16 %v3890
    %v4022 = vunpack.c.l.b16 %v3891
    %v4023 = vunpack.c.h.b16 %v3891
    %v4024 = vunpack.c.l.b16 %v3892
    %v4025 = vunpack.c.h.b16 %v3892
    %v4026 = vunpack.c.l.b16 %v3893
    %v4027 = vunpack.c.h.b16 %v3893
    %v4028 = vunpack.c.l.b16 %v3894
    %v4029 = vunpack.c.h.b16 %v3894
    %v4030 = vunpack.c.l.b16 %v3895
    %v4031 = vunpack.c.h.b16 %v3895
    %v4032 = vunpack.c.l.b16 %v3896
    %v4033 = vunpack.c.h.b16 %v3896
    %v4034 = vunpack.c.l.b16 %v3897
    %v4035 = vunpack.c.h.b16 %v3897
    %v4036 = vunpack.c.l.b16 %v3898
    %v4037 = vunpack.c.h.b16 %v3898
    %v4038 = vunpack.c.l.b16 %v3899
    %v4039 = vunpack.c.h.b16 %v3899
    %v4040 = vunpack.c.l.b16 %v3900
    %v4041 = vunpack.c.h.b16 %v3900
    %v4042 = vunpack.c.l.b16 %v3901
    %v4043 = vunpack.c.h.b16 %v3901
    %v4044 = vunpack.c.l.b16 %v3902
    %v4045 = vunpack.c.h.b16 %v3902
    %v4046 = vunpack.c.l.b16 %v3903
    %v4047 = vunpack.c.h.b16 %v3903
    %v4048 = vunpack.c.l.b16 %v3904
    %v4049 = vunpack.c.h.b16 %v3904
    %v4050 = vunpack.c.l.b16 %v3905
    %v4051 = vunpack.c.h.b16 %v3905
    %v4052 = vunpack.c.l.b16 %v3906
    %v4053 = vunpack.c.h.b16 %v3906
    %v4054 = vunpack.c.l.b16 %v3907
    %v4055 = vunpack.c.h.b16 %v3907
    %v4056 = vunpack.c.l.b16 %v3908
    %v4057 = vunpack.c.h.b16 %v3908
    %v4058 = vunpack.c.l.b16 %v3909
    %v4059 = vunpack.c.h.b16 %v3909
    %v4060 = vunpack.c.l.b16 %v3910
    %v4061 = vunpack.c.h.b16 %v3910
    %v4062 = vunpack.c.l.b16 %v3911
    %v4063 = vunpack.c.h.b16 %v3911
    %v4064 = vunpack.c.l.b16 %v3912
    %v4065 = vunpack.c.h.b16 %v3912
    %v4066 = vunpack.c.l.b16 %v3913
    %v4067 = vunpack.c.h.b16 %v3913
    %v4068 = vunpack.c.l.b16 %v3914
    %v4069 = vunpack.c.h.b16 %v3914
    %v4070 = vunpack.c.l.b16 %v3915
    %v4071 = vunpack.c.h.b16 %v3915
    %v4072 = vunpack.c.l.b16 %v3916
    %v4073 = vunpack.c.h.b16 %v3916
    %v4074 = vunpack.c.l.b16 %v3917
    %v4075 = vunpack.c.h.b16 %v3917
    %v4076 = vunpack.c.l.b16 %v3918
    %v4077 = vunpack.c.h.b16 %v3918
    %v4078 = vunpack.c.l.b16 %v3919
    %v4079 = vunpack.c.h.b16 %v3919
    %v4080 = vunpack.c.l.b16 %v3920
    %v4081 = vunpack.c.h.b16 %v3920
    %v4082 = vunpack.c.l.b16 %v3921
    %v4083 = vunpack.c.h.b16 %v3921
    %v4084 = vunpack.c.l.b16 %v3922
    %v4085 = vunpack.c.h.b16 %v3922
    %v4086 = vunpack.c.l.b16 %v3923
    %v4087 = vunpack.c.h.b16 %v3923
    %v4088 = vunpack.c.l.b16 %v3924
    %v4089 = vunpack.c.h.b16 %v3924
    %v4090 = vunpack.c.l.b16 %v3925
    %v4091 = vunpack.c.h.b16 %v3925
    %v4092 = vunpack.c.l.b16 %v3926
    %v4093 = vunpack.c.h.b16 %v3926
    %v4094 = vunpack.c.l.b16 %v3927
    %v4095 = vunpack.c.h.b16 %v3927
    %v4096 = vpack.c.b16 %v3986, %v3984
    %v4097 = vpack.c.b16 %v3987, %v3985
    %v4098 = vpack.c.b16 %v3990, %v3988
    %v4099 = vpack.c.b16 %v3991, %v3989
    %v4100 = vpack.c.b16 %v3994, %v3992
    %v4101 = vpack.c.b16 %v3995, %v3993
    %v4102 = vpack.c.b16 %v3998, %v3996
    %v4103 = vpack.c.b16 %v3999, %v3997
    %v4104 = vpack.c.b16 %v4002, %v4000
    %v4105 = vpack.c.b16 %v4003, %v4001
    %v4106 = vpack.c.b16 %v4006, %v4004
    %v4107 = vpack.c.b16 %v4007, %v4005
    %v4108 = vpack.c.b16 %v4010, %v4008
    %v4109 = vpack.c.b16 %v4011, %v4009
    %v4110 = vpack.c.b16 %v4014, %v4012
    %v4111 = vpack.c.b16 %v4015, %v4013
    %v4112 = vpack.c.b16 %v4018, %v4016
    %v4113 = vpack.c.b16 %v4019, %v4017
    %v4114 = vpack.c.b16 %v4022, %v4020
    %v4115 = vpack.c.b16 %v4023, %v4021
    %v4116 = vpack.c.b16 %v4026, %v4024
    %v4117 = vpack.c.b16 %v4027, %v4025
    %v4118 = vpack.c.b16 %v4030, %v4028
    %v4119 = vpack.c.b16 %v4031, %v4029
    %v4120 = vpack.c.b16 %v4034, %v4032
    %v4121 = vpack.c.b16 %v4035, %v4033
    %v4122 = vpack.c.b16 %v4038, %v4036
    %v4123 = vpack.c.b16 %v4039, %v4037
    %v4124 = vpack.c.b16 %v4042, %v4040
    %v4125 = vpack.c.b16 %v4043, %v4041
    %v4126 = vpack.c.b16 %v4046, %v4044
    %v4127 = vpack.c.b16 %v4047, %v4045
    %v4128 = vpack.c.b16 %v4050, %v4048
    %v4129 = vpack.c.b16 %v4051, %v4049
    %v4130 = vpack.c.b16 %v4054, %v4052
    %v4131 = vpack.c.b16 %v4055, %v4053
    %v4132 = vpack.c.b16 %v4058, %v4056
    %v4133 = vpack.c.b16 %v4059, %v4057
    %v4134 = vpack.c.b16 %v4062, %v4060
    %v4135 = vpack.c.b16 %v4063, %v4061
    %v4136 = vpack.c.b16 %v4066, %v4064
    %v4137 = vpack.c.b16 %v4067, %v4065
    %v4138 = vpack.c.b16 %v4070, %v4068
    %v4139 = vpack.c.b16 %v4071, %v4069
    %v4140 = vpack.c.b16 %v4074, %v4072
    %v4141 = vpack.c.b16 %v4075, %v4073
    %v4142 = vpack.c.b16 %v4078, %v4076
    %v4143 = vpack.c.b16 %v4079, %v4077
    %v4144 = vpack.c.b16 %v4082, %v4080
    %v4145 = vpack.c.b16 %v4083, %v4081
    %v4146 = vpack.c.b16 %v4086, %v4084
    %v4147 = vpack.c.b16 %v4087, %v4085
    %v4148 = vpack.c.b16 %v4090, %v4088
    %v4149 = vpack.c.b16 %v4091, %v4089
    %v4150 = vpack.c.b16 %v4094, %v4092
    %v4151 = vpack.c.b16 %v4095, %v4093
    %vm4208 = vcmask 523264
    %v4210 = vsel %vm4208, %v3839, 0
    %v4213 = vsel %vm4208, %v3843, 0
    %v4216 = vsel %vm4208, %v3847, 0
    %v4219 = vsel %vm4208, %v3851, 0
    %v4222 = vsel %vm4208, %v3855, 0
    %v4225 = vsel %vm4208, %v3859, 0
    %v4228 = vsel %vm4208, %v3863, 0
    %v4231 = vsel %vm4208, %v3867, 0
    %v4234 = vsel %vm4208, %v3871, 0
    %4236 = vmatpush.bf16.msra.mxu0 %v4110
    %4237 = vmatpush.bf16.msra.mxu0 %v4108
    %4238 = vmatpush.bf16.msra.mxu0 %v4106
    %4239 = vmatpush.bf16.msra.mxu0 %v4104
    %4240 = vmatpush.bf16.msra.mxu0 %v4102
    %4241 = vmatpush.bf16.msra.mxu0 %v4100
    %4242 = vmatpush.bf16.msra.mxu0 %v4098
    %4243 = vmatpush.bf16.msra.mxu0 %v4096
    %4244 = vmatmul.bf16.gmra.mxu0 %v3836
    %v4245 = vpop.f32.mrf.mxu0
    %v4246 = vadd.f32 0.0, %v4245
    %v4247 = vpop.f32.mrf.mxu0
    %v4248 = vadd.f32 0.0, %v4247
    %4249 = vmatmul.bf16.gmra.mxu0 %v3840
    %v4250 = vpop.f32.mrf.mxu0
    %v4251 = vadd.f32 0.0, %v4250
    %v4252 = vpop.f32.mrf.mxu0
    %v4253 = vadd.f32 0.0, %v4252
    %4254 = vmatmul.bf16.gmra.mxu0 %v3844
    %v4255 = vpop.f32.mrf.mxu0
    %v4256 = vadd.f32 0.0, %v4255
    %v4257 = vpop.f32.mrf.mxu0
    %v4258 = vadd.f32 0.0, %v4257
    %4259 = vmatmul.bf16.gmra.mxu0 %v3848
    %v4260 = vpop.f32.mrf.mxu0
    %v4261 = vadd.f32 0.0, %v4260
    %v4262 = vpop.f32.mrf.mxu0
    %v4263 = vadd.f32 0.0, %v4262
    %4264 = vmatmul.bf16.gmra.mxu0 %v3852
    %v4265 = vpop.f32.mrf.mxu0
    %v4266 = vadd.f32 0.0, %v4265
    %v4267 = vpop.f32.mrf.mxu0
    %v4268 = vadd.f32 0.0, %v4267
    %4269 = vmatmul.bf16.gmra.mxu0 %v3856
    %v4270 = vpop.f32.mrf.mxu0
    %v4271 = vadd.f32 0.0, %v4270
    %v4272 = vpop.f32.mrf.mxu0
    %v4273 = vadd.f32 0.0, %v4272
    %4274 = vmatmul.bf16.gmra.mxu0 %v3860
    %v4275 = vpop.f32.mrf.mxu0
    %v4276 = vadd.f32 0.0, %v4275
    %v4277 = vpop.f32.mrf.mxu0
    %v4278 = vadd.f32 0.0, %v4277
    %4279 = vmatmul.bf16.gmra.mxu0 %v3864
    %v4280 = vpop.f32.mrf.mxu0
    %v4281 = vadd.f32 0.0, %v4280
    %v4282 = vpop.f32.mrf.mxu0
    %v4283 = vadd.f32 0.0, %v4282
    %4284 = vmatmul.bf16.gmra.mxu0 %v3868
    %v4285 = vpop.f32.mrf.mxu0
    %v4286 = vadd.f32 0.0, %v4285
    %v4287 = vpop.f32.mrf.mxu0
    %v4288 = vadd.f32 0.0, %v4287
    %4289 = vdwg.mxu0
    %4290 = vmatpush.bf16.msra.mxu0 %v4126
    %4291 = vmatpush.bf16.msra.mxu0 %v4124
    %4292 = vmatpush.bf16.msra.mxu0 %v4122
    %4293 = vmatpush.bf16.msra.mxu0 %v4120
    %4294 = vmatpush.bf16.msra.mxu0 %v4118
    %4295 = vmatpush.bf16.msra.mxu0 %v4116
    %4296 = vmatpush.bf16.msra.mxu0 %v4114
    %4297 = vmatpush.bf16.msra.mxu0 %v4112
    %4298 = vmatmul.bf16.gmra.mxu0 %v3837
    %v4299 = vpop.f32.mrf.mxu0
    %v4300 = vadd.f32 %v4246, %v4299
    %v4301 = vpop.f32.mrf.mxu0
    %v4302 = vadd.f32 %v4248, %v4301
    %4303 = vmatmul.bf16.gmra.mxu0 %v3841
    %v4304 = vpop.f32.mrf.mxu0
    %v4305 = vadd.f32 %v4251, %v4304
    %v4306 = vpop.f32.mrf.mxu0
    %v4307 = vadd.f32 %v4253, %v4306
    %4308 = vmatmul.bf16.gmra.mxu0 %v3845
    %v4309 = vpop.f32.mrf.mxu0
    %v4310 = vadd.f32 %v4256, %v4309
    %v4311 = vpop.f32.mrf.mxu0
    %v4312 = vadd.f32 %v4258, %v4311
    %4313 = vmatmul.bf16.gmra.mxu0 %v3849
    %v4314 = vpop.f32.mrf.mxu0
    %v4315 = vadd.f32 %v4261, %v4314
    %v4316 = vpop.f32.mrf.mxu0
    %v4317 = vadd.f32 %v4263, %v4316
    %4318 = vmatmul.bf16.gmra.mxu0 %v3853
    %v4319 = vpop.f32.mrf.mxu0
    %v4320 = vadd.f32 %v4266, %v4319
    %v4321 = vpop.f32.mrf.mxu0
    %v4322 = vadd.f32 %v4268, %v4321
    %4323 = vmatmul.bf16.gmra.mxu0 %v3857
    %v4324 = vpop.f32.mrf.mxu0
    %v4325 = vadd.f32 %v4271, %v4324
    %v4326 = vpop.f32.mrf.mxu0
    %v4327 = vadd.f32 %v4273, %v4326
    %4328 = vmatmul.bf16.gmra.mxu0 %v3861
    %v4329 = vpop.f32.mrf.mxu0
    %v4330 = vadd.f32 %v4276, %v4329
    %v4331 = vpop.f32.mrf.mxu0
    %v4332 = vadd.f32 %v4278, %v4331
    %4333 = vmatmul.bf16.gmra.mxu0 %v3865
    %v4334 = vpop.f32.mrf.mxu0
    %v4335 = vadd.f32 %v4281, %v4334
    %v4336 = vpop.f32.mrf.mxu0
    %v4337 = vadd.f32 %v4283, %v4336
    %4338 = vmatmul.bf16.gmra.mxu0 %v3869
    %v4339 = vpop.f32.mrf.mxu0
    %v4340 = vadd.f32 %v4286, %v4339
    %v4341 = vpop.f32.mrf.mxu0
    %v4342 = vadd.f32 %v4288, %v4341
    %4343 = vdwg.mxu0
    %4344 = vmatpush.bf16.msra.mxu0 %v4142
    %4345 = vmatpush.bf16.msra.mxu0 %v4140
    %4346 = vmatpush.bf16.msra.mxu0 %v4138
    %4347 = vmatpush.bf16.msra.mxu0 %v4136
    %4348 = vmatpush.bf16.msra.mxu0 %v4134
    %4349 = vmatpush.bf16.msra.mxu0 %v4132
    %4350 = vmatpush.bf16.msra.mxu0 %v4130
    %4351 = vmatpush.bf16.msra.mxu0 %v4128
    %4352 = vmatmul.bf16.gmra.mxu0 %v3838
    %v4353 = vpop.f32.mrf.mxu0
    %v4354 = vadd.f32 %v4300, %v4353
    %v4355 = vpop.f32.mrf.mxu0
    %v4356 = vadd.f32 %v4302, %v4355
    %4357 = vmatmul.bf16.gmra.mxu0 %v3842
    %v4358 = vpop.f32.mrf.mxu0
    %v4359 = vadd.f32 %v4305, %v4358
    %v4360 = vpop.f32.mrf.mxu0
    %v4361 = vadd.f32 %v4307, %v4360
    %4362 = vmatmul.bf16.gmra.mxu0 %v3846
    %v4363 = vpop.f32.mrf.mxu0
    %v4364 = vadd.f32 %v4310, %v4363
    %v4365 = vpop.f32.mrf.mxu0
    %v4366 = vadd.f32 %v4312, %v4365
    %4367 = vmatmul.bf16.gmra.mxu0 %v3850
    %v4368 = vpop.f32.mrf.mxu0
    %v4369 = vadd.f32 %v4315, %v4368
    %v4370 = vpop.f32.mrf.mxu0
    %v4371 = vadd.f32 %v4317, %v4370
    %4372 = vmatmul.bf16.gmra.mxu0 %v3854
    %v4373 = vpop.f32.mrf.mxu0
    %v4374 = vadd.f32 %v4320, %v4373
    %v4375 = vpop.f32.mrf.mxu0
    %v4376 = vadd.f32 %v4322, %v4375
    %4377 = vmatmul.bf16.gmra.mxu0 %v3858
    %v4378 = vpop.f32.mrf.mxu0
    %v4379 = vadd.f32 %v4325, %v4378
    %v4380 = vpop.f32.mrf.mxu0
    %v4381 = vadd.f32 %v4327, %v4380
    %4382 = vmatmul.bf16.gmra.mxu0 %v3862
    %v4383 = vpop.f32.mrf.mxu0
    %v4384 = vadd.f32 %v4330, %v4383
    %v4385 = vpop.f32.mrf.mxu0
    %v4386 = vadd.f32 %v4332, %v4385
    %4387 = vmatmul.bf16.gmra.mxu0 %v3866
    %v4388 = vpop.f32.mrf.mxu0
    %v4389 = vadd.f32 %v4335, %v4388
    %v4390 = vpop.f32.mrf.mxu0
    %v4391 = vadd.f32 %v4337, %v4390
    %4392 = vmatmul.bf16.gmra.mxu0 %v3870
    %v4393 = vpop.f32.mrf.mxu0
    %v4394 = vadd.f32 %v4340, %v4393
    %v4395 = vpop.f32.mrf.mxu0
    %v4396 = vadd.f32 %v4342, %v4395
    %4397 = vdwg.mxu0
    %4398 = vmatpush.bf16.msra.mxu0 0
    %4399 = vmatpush.bf16.msra.mxu0 0
    %4400 = vmatpush.bf16.msra.mxu0 0
    %4401 = vmatpush.bf16.msra.mxu0 0
    %4402 = vmatpush.bf16.msra.mxu0 %v4150
    %4403 = vmatpush.bf16.msra.mxu0 %v4148
    %4404 = vmatpush.bf16.msra.mxu0 %v4146
    %4405 = vmatpush.bf16.msra.mxu0 %v4144
    %4406 = vmatmul.bf16.gmra.mxu0 %v4210
    %v4407 = vpop.f32.mrf.mxu0
    %v4408 = vadd.f32 %v4354, %v4407
    %v4409 = vpop.f32.mrf.mxu0
    %v4410 = vadd.f32 %v4356, %v4409
    %4411 = vmatmul.bf16.gmra.mxu0 %v4213
    %v4412 = vpop.f32.mrf.mxu0
    %v4413 = vadd.f32 %v4359, %v4412
    %v4414 = vpop.f32.mrf.mxu0
    %v4415 = vadd.f32 %v4361, %v4414
    %4416 = vmatmul.bf16.gmra.mxu0 %v4216
    %v4417 = vpop.f32.mrf.mxu0
    %v4418 = vadd.f32 %v4364, %v4417
    %v4419 = vpop.f32.mrf.mxu0
    %v4420 = vadd.f32 %v4366, %v4419
    %4421 = vmatmul.bf16.gmra.mxu0 %v4219
    %v4422 = vpop.f32.mrf.mxu0
    %v4423 = vadd.f32 %v4369, %v4422
    %v4424 = vpop.f32.mrf.mxu0
    %v4425 = vadd.f32 %v4371, %v4424
    %4426 = vmatmul.bf16.gmra.mxu0 %v4222
    %v4427 = vpop.f32.mrf.mxu0
    %v4428 = vadd.f32 %v4374, %v4427
    %v4429 = vpop.f32.mrf.mxu0
    %v4430 = vadd.f32 %v4376, %v4429
    %4431 = vmatmul.bf16.gmra.mxu0 %v4225
    %v4432 = vpop.f32.mrf.mxu0
    %v4433 = vadd.f32 %v4379, %v4432
    %v4434 = vpop.f32.mrf.mxu0
    %v4435 = vadd.f32 %v4381, %v4434
    %4436 = vmatmul.bf16.gmra.mxu0 %v4228
    %v4437 = vpop.f32.mrf.mxu0
    %v4438 = vadd.f32 %v4384, %v4437
    %v4439 = vpop.f32.mrf.mxu0
    %v4440 = vadd.f32 %v4386, %v4439
    %4441 = vmatmul.bf16.gmra.mxu0 %v4231
    %v4442 = vpop.f32.mrf.mxu0
    %v4443 = vadd.f32 %v4389, %v4442
    %v4444 = vpop.f32.mrf.mxu0
    %v4445 = vadd.f32 %v4391, %v4444
    %4446 = vmatmul.bf16.gmra.mxu0 %v4234
    %v4447 = vpop.f32.mrf.mxu0
    %v4448 = vadd.f32 %v4394, %v4447
    %v4449 = vpop.f32.mrf.mxu0
    %v4450 = vadd.f32 %v4396, %v4449
    %4451 = vdwg.mxu0
    %4452 = vmatpush.bf16.msra.mxu0 %v4111
    %4453 = vmatpush.bf16.msra.mxu0 %v4109
    %4454 = vmatpush.bf16.msra.mxu0 %v4107
    %4455 = vmatpush.bf16.msra.mxu0 %v4105
    %4456 = vmatpush.bf16.msra.mxu0 %v4103
    %4457 = vmatpush.bf16.msra.mxu0 %v4101
    %4458 = vmatpush.bf16.msra.mxu0 %v4099
    %4459 = vmatpush.bf16.msra.mxu0 %v4097
    %4460 = vmatmul.bf16.gmra.mxu0 %v3836
    %v4461 = vpop.f32.mrf.mxu0
    %v4462 = vadd.f32 0.0, %v4461
    %v4463 = vpop.f32.mrf.mxu0
    %v4464 = vadd.f32 0.0, %v4463
    %4465 = vmatmul.bf16.gmra.mxu0 %v3840
    %v4466 = vpop.f32.mrf.mxu0
    %v4467 = vadd.f32 0.0, %v4466
    %v4468 = vpop.f32.mrf.mxu0
    %v4469 = vadd.f32 0.0, %v4468
    %4470 = vmatmul.bf16.gmra.mxu0 %v3844
    %v4471 = vpop.f32.mrf.mxu0
    %v4472 = vadd.f32 0.0, %v4471
    %v4473 = vpop.f32.mrf.mxu0
    %v4474 = vadd.f32 0.0, %v4473
    %4475 = vmatmul.bf16.gmra.mxu0 %v3848
    %v4476 = vpop.f32.mrf.mxu0
    %v4477 = vadd.f32 0.0, %v4476
    %v4478 = vpop.f32.mrf.mxu0
    %v4479 = vadd.f32 0.0, %v4478
    %4480 = vmatmul.bf16.gmra.mxu0 %v3852
    %v4481 = vpop.f32.mrf.mxu0
    %v4482 = vadd.f32 0.0, %v4481
    %v4483 = vpop.f32.mrf.mxu0
    %v4484 = vadd.f32 0.0, %v4483
    %4485 = vmatmul.bf16.gmra.mxu0 %v3856
    %v4486 = vpop.f32.mrf.mxu0
    %v4487 = vadd.f32 0.0, %v4486
    %v4488 = vpop.f32.mrf.mxu0
    %v4489 = vadd.f32 0.0, %v4488
    %4490 = vmatmul.bf16.gmra.mxu0 %v3860
    %v4491 = vpop.f32.mrf.mxu0
    %v4492 = vadd.f32 0.0, %v4491
    %v4493 = vpop.f32.mrf.mxu0
    %v4494 = vadd.f32 0.0, %v4493
    %4495 = vmatmul.bf16.gmra.mxu0 %v3864
    %v4496 = vpop.f32.mrf.mxu0
    %v4497 = vadd.f32 0.0, %v4496
    %v4498 = vpop.f32.mrf.mxu0
    %v4499 = vadd.f32 0.0, %v4498
    %4500 = vmatmul.bf16.gmra.mxu0 %v3868
    %v4501 = vpop.f32.mrf.mxu0
    %v4502 = vadd.f32 0.0, %v4501
    %v4503 = vpop.f32.mrf.mxu0
    %v4504 = vadd.f32 0.0, %v4503
    %4505 = vdwg.mxu0
    %4506 = vmatpush.bf16.msra.mxu0 %v4127
    %4507 = vmatpush.bf16.msra.mxu0 %v4125
    %4508 = vmatpush.bf16.msra.mxu0 %v4123
    %4509 = vmatpush.bf16.msra.mxu0 %v4121
    %4510 = vmatpush.bf16.msra.mxu0 %v4119
    %4511 = vmatpush.bf16.msra.mxu0 %v4117
    %4512 = vmatpush.bf16.msra.mxu0 %v4115
    %4513 = vmatpush.bf16.msra.mxu0 %v4113
    %4514 = vmatmul.bf16.gmra.mxu0 %v3837
    %v4515 = vpop.f32.mrf.mxu0
    %v4516 = vadd.f32 %v4462, %v4515
    %v4517 = vpop.f32.mrf.mxu0
    %v4518 = vadd.f32 %v4464, %v4517
    %4519 = vmatmul.bf16.gmra.mxu0 %v3841
    %v4520 = vpop.f32.mrf.mxu0
    %v4521 = vadd.f32 %v4467, %v4520
    %v4522 = vpop.f32.mrf.mxu0
    %v4523 = vadd.f32 %v4469, %v4522
    %4524 = vmatmul.bf16.gmra.mxu0 %v3845
    %v4525 = vpop.f32.mrf.mxu0
    %v4526 = vadd.f32 %v4472, %v4525
    %v4527 = vpop.f32.mrf.mxu0
    %v4528 = vadd.f32 %v4474, %v4527
    %4529 = vmatmul.bf16.gmra.mxu0 %v3849
    %v4530 = vpop.f32.mrf.mxu0
    %v4531 = vadd.f32 %v4477, %v4530
    %v4532 = vpop.f32.mrf.mxu0
    %v4533 = vadd.f32 %v4479, %v4532
    %4534 = vmatmul.bf16.gmra.mxu0 %v3853
    %v4535 = vpop.f32.mrf.mxu0
    %v4536 = vadd.f32 %v4482, %v4535
    %v4537 = vpop.f32.mrf.mxu0
    %v4538 = vadd.f32 %v4484, %v4537
    %4539 = vmatmul.bf16.gmra.mxu0 %v3857
    %v4540 = vpop.f32.mrf.mxu0
    %v4541 = vadd.f32 %v4487, %v4540
    %v4542 = vpop.f32.mrf.mxu0
    %v4543 = vadd.f32 %v4489, %v4542
    %4544 = vmatmul.bf16.gmra.mxu0 %v3861
    %v4545 = vpop.f32.mrf.mxu0
    %v4546 = vadd.f32 %v4492, %v4545
    %v4547 = vpop.f32.mrf.mxu0
    %v4548 = vadd.f32 %v4494, %v4547
    %4549 = vmatmul.bf16.gmra.mxu0 %v3865
    %v4550 = vpop.f32.mrf.mxu0
    %v4551 = vadd.f32 %v4497, %v4550
    %v4552 = vpop.f32.mrf.mxu0
    %v4553 = vadd.f32 %v4499, %v4552
    %4554 = vmatmul.bf16.gmra.mxu0 %v3869
    %v4555 = vpop.f32.mrf.mxu0
    %v4556 = vadd.f32 %v4502, %v4555
    %v4557 = vpop.f32.mrf.mxu0
    %v4558 = vadd.f32 %v4504, %v4557
    %4559 = vdwg.mxu0
    %4560 = vmatpush.bf16.msra.mxu0 %v4143
    %4561 = vmatpush.bf16.msra.mxu0 %v4141
    %4562 = vmatpush.bf16.msra.mxu0 %v4139
    %4563 = vmatpush.bf16.msra.mxu0 %v4137
    %4564 = vmatpush.bf16.msra.mxu0 %v4135
    %4565 = vmatpush.bf16.msra.mxu0 %v4133
    %4566 = vmatpush.bf16.msra.mxu0 %v4131
    %4567 = vmatpush.bf16.msra.mxu0 %v4129
    %4568 = vmatmul.bf16.gmra.mxu0 %v3838
    %v4569 = vpop.f32.mrf.mxu0
    %v4570 = vadd.f32 %v4516, %v4569
    %v4571 = vpop.f32.mrf.mxu0
    %v4572 = vadd.f32 %v4518, %v4571
    %4573 = vmatmul.bf16.gmra.mxu0 %v3842
    %v4574 = vpop.f32.mrf.mxu0
    %v4575 = vadd.f32 %v4521, %v4574
    %v4576 = vpop.f32.mrf.mxu0
    %v4577 = vadd.f32 %v4523, %v4576
    %4578 = vmatmul.bf16.gmra.mxu0 %v3846
    %v4579 = vpop.f32.mrf.mxu0
    %v4580 = vadd.f32 %v4526, %v4579
    %v4581 = vpop.f32.mrf.mxu0
    %v4582 = vadd.f32 %v4528, %v4581
    %4583 = vmatmul.bf16.gmra.mxu0 %v3850
    %v4584 = vpop.f32.mrf.mxu0
    %v4585 = vadd.f32 %v4531, %v4584
    %v4586 = vpop.f32.mrf.mxu0
    %v4587 = vadd.f32 %v4533, %v4586
    %4588 = vmatmul.bf16.gmra.mxu0 %v3854
    %v4589 = vpop.f32.mrf.mxu0
    %v4590 = vadd.f32 %v4536, %v4589
    %v4591 = vpop.f32.mrf.mxu0
    %v4592 = vadd.f32 %v4538, %v4591
    %4593 = vmatmul.bf16.gmra.mxu0 %v3858
    %v4594 = vpop.f32.mrf.mxu0
    %v4595 = vadd.f32 %v4541, %v4594
    %v4596 = vpop.f32.mrf.mxu0
    %v4597 = vadd.f32 %v4543, %v4596
    %4598 = vmatmul.bf16.gmra.mxu0 %v3862
    %v4599 = vpop.f32.mrf.mxu0
    %v4600 = vadd.f32 %v4546, %v4599
    %v4601 = vpop.f32.mrf.mxu0
    %v4602 = vadd.f32 %v4548, %v4601
    %4603 = vmatmul.bf16.gmra.mxu0 %v3866
    %v4604 = vpop.f32.mrf.mxu0
    %v4605 = vadd.f32 %v4551, %v4604
    %v4606 = vpop.f32.mrf.mxu0
    %v4607 = vadd.f32 %v4553, %v4606
    %4608 = vmatmul.bf16.gmra.mxu0 %v3870
    %v4609 = vpop.f32.mrf.mxu0
    %v4610 = vadd.f32 %v4556, %v4609
    %v4611 = vpop.f32.mrf.mxu0
    %v4612 = vadd.f32 %v4558, %v4611
    %4613 = vdwg.mxu0
    %4614 = vmatpush.bf16.msra.mxu0 0
    %4615 = vmatpush.bf16.msra.mxu0 0
    %4616 = vmatpush.bf16.msra.mxu0 0
    %4617 = vmatpush.bf16.msra.mxu0 0
    %4618 = vmatpush.bf16.msra.mxu0 %v4151
    %4619 = vmatpush.bf16.msra.mxu0 %v4149
    %4620 = vmatpush.bf16.msra.mxu0 %v4147
    %4621 = vmatpush.bf16.msra.mxu0 %v4145
    %4622 = vmatmul.bf16.gmra.mxu0 %v4210
    %v4623 = vpop.f32.mrf.mxu0
    %v4624 = vadd.f32 %v4570, %v4623
    %v4625 = vpop.f32.mrf.mxu0
    %v4626 = vadd.f32 %v4572, %v4625
    %4627 = vmatmul.bf16.gmra.mxu0 %v4213
    %v4628 = vpop.f32.mrf.mxu0
    %v4629 = vadd.f32 %v4575, %v4628
    %v4630 = vpop.f32.mrf.mxu0
    %v4631 = vadd.f32 %v4577, %v4630
    %4632 = vmatmul.bf16.gmra.mxu0 %v4216
    %v4633 = vpop.f32.mrf.mxu0
    %v4634 = vadd.f32 %v4580, %v4633
    %v4635 = vpop.f32.mrf.mxu0
    %v4636 = vadd.f32 %v4582, %v4635
    %4637 = vmatmul.bf16.gmra.mxu0 %v4219
    %v4638 = vpop.f32.mrf.mxu0
    %v4639 = vadd.f32 %v4585, %v4638
    %v4640 = vpop.f32.mrf.mxu0
    %v4641 = vadd.f32 %v4587, %v4640
    %4642 = vmatmul.bf16.gmra.mxu0 %v4222
    %v4643 = vpop.f32.mrf.mxu0
    %v4644 = vadd.f32 %v4590, %v4643
    %v4645 = vpop.f32.mrf.mxu0
    %v4646 = vadd.f32 %v4592, %v4645
    %4647 = vmatmul.bf16.gmra.mxu0 %v4225
    %v4648 = vpop.f32.mrf.mxu0
    %v4649 = vadd.f32 %v4595, %v4648
    %v4650 = vpop.f32.mrf.mxu0
    %v4651 = vadd.f32 %v4597, %v4650
    %4652 = vmatmul.bf16.gmra.mxu0 %v4228
    %v4653 = vpop.f32.mrf.mxu0
    %v4654 = vadd.f32 %v4600, %v4653
    %v4655 = vpop.f32.mrf.mxu0
    %v4656 = vadd.f32 %v4602, %v4655
    %4657 = vmatmul.bf16.gmra.mxu0 %v4231
    %v4658 = vpop.f32.mrf.mxu0
    %v4659 = vadd.f32 %v4605, %v4658
    %v4660 = vpop.f32.mrf.mxu0
    %v4661 = vadd.f32 %v4607, %v4660
    %4662 = vmatmul.bf16.gmra.mxu0 %v4234
    %v4663 = vpop.f32.mrf.mxu0
    %v4664 = vadd.f32 %v4610, %v4663
    %v4665 = vpop.f32.mrf.mxu0
    %v4666 = vadd.f32 %v4612, %v4665
    %4667 = vdwg.mxu0
    %v4668 = vpack.c.bf16 %v4410, %v4408
    %v4669 = vpack.c.bf16 %v4626, %v4624
    %v4670 = vpack.c.bf16 %v4415, %v4413
    %v4671 = vpack.c.bf16 %v4631, %v4629
    %v4672 = vpack.c.bf16 %v4420, %v4418
    %v4673 = vpack.c.bf16 %v4636, %v4634
    %v4674 = vpack.c.bf16 %v4425, %v4423
    %v4675 = vpack.c.bf16 %v4641, %v4639
    %v4676 = vpack.c.bf16 %v4430, %v4428
    %v4677 = vpack.c.bf16 %v4646, %v4644
    %v4678 = vpack.c.bf16 %v4435, %v4433
    %v4679 = vpack.c.bf16 %v4651, %v4649
    %v4680 = vpack.c.bf16 %v4440, %v4438
    %v4681 = vpack.c.bf16 %v4656, %v4654
    %v4682 = vpack.c.bf16 %v4445, %v4443
    %v4683 = vpack.c.bf16 %v4661, %v4659
    %v4684 = vpack.c.bf16 %v4448, %v4448
    %v4685 = vpack.c.bf16 %v4664, %v4664
    %v4686 = vld [vmem:[#allocation4] sm:$0xff]
    %v4687 = vld [vmem:[#allocation4 + $0x8] sm:$0xff]
    %v4688 = vld [vmem:[#allocation4 + $0x10] sm:$0xff]
    %v4689 = vld [vmem:[#allocation4 + $0x18] sm:$0xff]
    %v4690 = vld [vmem:[#allocation4 + $0x20] sm:$0xff]
    %v4691 = vld [vmem:[#allocation4 + $0x28] sm:$0xff]
    %v4692 = vld [vmem:[#allocation4 + $0x30] sm:$0xff]
    %v4693 = vld [vmem:[#allocation4 + $0x38] sm:$0xff]
    %v4694 = vld [vmem:[#allocation4 + $0x40] sm:$0xff]
    %v4695 = vld [vmem:[#allocation4 + $0x48] sm:$0xff]
    %v4696 = vld [vmem:[#allocation4 + $0x50] sm:$0xff]
    %v4697 = vld [vmem:[#allocation4 + $0x58] sm:$0xff]
    %v4698 = vld [vmem:[#allocation4 + $0x60] sm:$0xff]
    %v4699 = vld [vmem:[#allocation4 + $0x68] sm:$0xff]
    %v4700 = vld [vmem:[#allocation4 + $0x70] sm:$0xff]
    %v4701 = vld [vmem:[#allocation4 + $0x78] sm:$0xff]
    %v4702 = vld [vmem:[#allocation4 + $0x80] sm:$0xff]
    %v4703 = vld [vmem:[#allocation4 + $0x88] sm:$0xff]
    %v4704 = vld [vmem:[#allocation4 + $0x90] sm:$0xff]
    %v4705 = vld [vmem:[#allocation4 + $0x98] sm:$0xff]
    %v4706 = vld [vmem:[#allocation4 + $0xa0] sm:$0xff]
    %v4707 = vld [vmem:[#allocation4 + $0xa8] sm:$0xff]
    %v4708 = vld [vmem:[#allocation4 + $0xb0] sm:$0xff]
    %v4709 = vld [vmem:[#allocation4 + $0xb8] sm:$0xff]
    %v4710 = vld [vmem:[#allocation4 + $0xc0] sm:$0xff]
    %v4711 = vld [vmem:[#allocation4 + $0xc8] sm:$0xff]
    %v4712 = vld [vmem:[#allocation4 + $0xd0] sm:$0xff]
    %v4713 = vld [vmem:[#allocation4 + $0xd8] sm:$0xff]
    %v4714 = vld [vmem:[#allocation4 + $0xe0] sm:$0xff]
    %v4715 = vld [vmem:[#allocation4 + $0xe8] sm:$0xff]
    %v4716 = vld [vmem:[#allocation4 + $0xf0] sm:$0xff]
    %v4717 = vld [vmem:[#allocation4 + $0xf8] sm:$0xff]
    %v4718 = vld [vmem:[#allocation4 + $0x100] sm:$0xff]
    %v4719 = vld [vmem:[#allocation4 + $0x108] sm:$0xff]
    %v4720 = vld [vmem:[#allocation4 + $0x110] sm:$0xff]
    %v4721 = vld [vmem:[#allocation4 + $0x118] sm:$0xff]
    %v4722 = vld [vmem:[#allocation4 + $0x120] sm:$0xff]
    %v4723 = vld [vmem:[#allocation4 + $0x128] sm:$0xff]
    %v4724 = vld [vmem:[#allocation4 + $0x130] sm:$0xff]
    %v4725 = vld [vmem:[#allocation4 + $0x138] sm:$0xff]
    %v4726 = vld [vmem:[#allocation4 + $0x140] sm:$0xff]
    %v4727 = vld [vmem:[#allocation4 + $0x148] sm:$0xff]
    %v4728 = vld [vmem:[#allocation4 + $0x150] sm:$0xff]
    %v4729 = vld [vmem:[#allocation4 + $0x158] sm:$0xff]
    %v4730 = vld [vmem:[#allocation4 + $0x160] sm:$0xff]
    %v4731 = vld [vmem:[#allocation4 + $0x168] sm:$0xff]
    %v4732 = vld [vmem:[#allocation4 + $0x170] sm:$0xff]
    %v4733 = vld [vmem:[#allocation4 + $0x178] sm:$0xff]
    %v4734 = vld [vmem:[#allocation4 + $0x180] sm:$0xff]
    %v4735 = vld [vmem:[#allocation4 + $0x188] sm:$0xff]
    %v4736 = vld [vmem:[#allocation4 + $0x190] sm:$0xff]
    %v4737 = vld [vmem:[#allocation4 + $0x198] sm:$0xff]
    %v4738 = vld [vmem:[#allocation4 + $0x1a0] sm:$0xff]
    %v4739 = vld [vmem:[#allocation4 + $0x1a8] sm:$0xff]
    %v4740 = vld [vmem:[#allocation4 + $0x1b0] sm:$0xff]
    %v4741 = vld [vmem:[#allocation4 + $0x1b8] sm:$0xff]
    %v4742 = vld [vmem:[#allocation4 + $0x1c0] sm:$0xff]
    %v4743 = vld [vmem:[#allocation4 + $0x1c8] sm:$0xff]
    %v4744 = vld [vmem:[#allocation4 + $0x1d0] sm:$0xff]
    %v4745 = vld [vmem:[#allocation4 + $0x1d8] sm:$0xff]
    %v4746 = vld [vmem:[#allocation4 + $0x1e0] sm:$0xff]
    %v4747 = vld [vmem:[#allocation4 + $0x1e8] sm:$0xff]
    %v4748 = vld [vmem:[#allocation4 + $0x1f0] sm:$0xff]
    %v4749 = vld [vmem:[#allocation4 + $0x1f8] sm:$0xff]
    %v4750 = vpack.c.bf16 %v4450, %v4448
    %v4751 = vpack.c.bf16 %v4666, %v4664
    %s4752 = scalar_lea.vmem [#allocation4], 512
    %v4753 = vld [vmem:[%s4752] sm:$0xff]
    %v4754 = vld [vmem:[%s4752 + $0x8] sm:$0xff]
    %v4755 = vld [vmem:[%s4752 + $0x10] sm:$0xff]
    %v4756 = vld [vmem:[%s4752 + $0x18] sm:$0xff]
    %v4757 = vld [vmem:[%s4752 + $0x20] sm:$0xff]
    %v4758 = vld [vmem:[%s4752 + $0x28] sm:$0xff]
    %v4759 = vld [vmem:[%s4752 + $0x30] sm:$0xff]
    %v4760 = vld [vmem:[%s4752 + $0x38] sm:$0xff]
    %v4761 = vld [vmem:[%s4752 + $0x40] sm:$0xff]
    %v4762 = vld [vmem:[%s4752 + $0x48] sm:$0xff]
    %v4763 = vld [vmem:[%s4752 + $0x50] sm:$0xff]
    %v4764 = vld [vmem:[%s4752 + $0x58] sm:$0xff]
    %v4765 = vld [vmem:[%s4752 + $0x60] sm:$0xff]
    %v4766 = vld [vmem:[%s4752 + $0x68] sm:$0xff]
    %v4767 = vld [vmem:[%s4752 + $0x70] sm:$0xff]
    %v4768 = vld [vmem:[%s4752 + $0x78] sm:$0xff]
    %v4769 = vld [vmem:[%s4752 + $0x80] sm:$0xff]
    %v4770 = vld [vmem:[%s4752 + $0x88] sm:$0xff]
    %v4771 = vld [vmem:[%s4752 + $0x90] sm:$0xff]
    %v4772 = vld [vmem:[%s4752 + $0x98] sm:$0xff]
    %v4773 = vld [vmem:[%s4752 + $0xa0] sm:$0xff]
    %v4774 = vld [vmem:[%s4752 + $0xa8] sm:$0xff]
    %v4775 = vld [vmem:[%s4752 + $0xb0] sm:$0xff]
    %v4776 = vld [vmem:[%s4752 + $0xb8] sm:$0xff]
    %v4777 = vld [vmem:[%s4752 + $0xc0] sm:$0xff]
    %v4778 = vld [vmem:[%s4752 + $0xc8] sm:$0xff]
    %v4779 = vld [vmem:[%s4752 + $0xd0] sm:$0xff]
    %v4780 = vld [vmem:[%s4752 + $0xd8] sm:$0xff]
    %v4781 = vld [vmem:[%s4752 + $0xe0] sm:$0xff]
    %v4782 = vld [vmem:[%s4752 + $0xe8] sm:$0xff]
    %v4783 = vld [vmem:[%s4752 + $0xf0] sm:$0xff]
    %v4784 = vld [vmem:[%s4752 + $0xf8] sm:$0xff]
    %v4785 = vld [vmem:[%s4752 + $0x100] sm:$0xff]
    %v4786 = vld [vmem:[%s4752 + $0x108] sm:$0xff]
    %v4787 = vld [vmem:[%s4752 + $0x110] sm:$0xff]
    %v4788 = vld [vmem:[%s4752 + $0x118] sm:$0xff]
    %v4789 = vld [vmem:[%s4752 + $0x120] sm:$0xff]
    %v4790 = vld [vmem:[%s4752 + $0x128] sm:$0xff]
    %v4791 = vld [vmem:[%s4752 + $0x130] sm:$0xff]
    %v4792 = vld [vmem:[%s4752 + $0x138] sm:$0xff]
    %v4793 = vld [vmem:[%s4752 + $0x140] sm:$0xff]
    %v4794 = vld [vmem:[%s4752 + $0x148] sm:$0xff]
    %v4795 = vld [vmem:[%s4752 + $0x150] sm:$0xff]
    %v4796 = vld [vmem:[%s4752 + $0x158] sm:$0xff]
    %v4797 = vld [vmem:[%s4752 + $0x160] sm:$0xff]
    %v4798 = vld [vmem:[%s4752 + $0x168] sm:$0xff]
    %v4799 = vld [vmem:[%s4752 + $0x170] sm:$0xff]
    %v4800 = vld [vmem:[%s4752 + $0x178] sm:$0xff]
    %v4801 = vld [vmem:[%s4752 + $0x180] sm:$0xff]
    %v4802 = vld [vmem:[%s4752 + $0x188] sm:$0xff]
    %v4803 = vld [vmem:[%s4752 + $0x190] sm:$0xff]
    %v4804 = vld [vmem:[%s4752 + $0x198] sm:$0xff]
    %v4805 = vld [vmem:[%s4752 + $0x1a0] sm:$0xff]
    %v4806 = vld [vmem:[%s4752 + $0x1a8] sm:$0xff]
    %v4807 = vld [vmem:[%s4752 + $0x1b0] sm:$0xff]
    %v4808 = vld [vmem:[%s4752 + $0x1b8] sm:$0xff]
    %v4809 = vld [vmem:[%s4752 + $0x1c0] sm:$0xff]
    %v4810 = vld [vmem:[%s4752 + $0x1c8] sm:$0xff]
    %v4811 = vld [vmem:[%s4752 + $0x1d0] sm:$0xff]
    %v4812 = vld [vmem:[%s4752 + $0x1d8] sm:$0xff]
    %v4813 = vld [vmem:[%s4752 + $0x1e0] sm:$0xff]
    %v4814 = vld [vmem:[%s4752 + $0x1e8] sm:$0xff]
    %v4815 = vld [vmem:[%s4752 + $0x1f0] sm:$0xff]
    %v4816 = vld [vmem:[%s4752 + $0x1f8] sm:$0xff]
    %v4818 = vshrl.u32 %v4668, 16
    %v4820 = vshll.u32 %v4668, 16
    %v4822 = vrot.slane %v4820, 1
    %v4823 = vor.u32 %v4818, %v4822
    %v4825 = vshll.u32 %v4670, 16
    %v4827 = vrot.slane %v4825, 1
    %v4828 = vsel %vm192, %v4823, %v4827
    %v4830 = vshrl.u32 %v4669, 16
    %v4832 = vshll.u32 %v4669, 16
    %v4834 = vrot.slane %v4832, 1
    %v4835 = vor.u32 %v4830, %v4834
    %v4837 = vshll.u32 %v4671, 16
    %v4839 = vrot.slane %v4837, 1
    %v4840 = vsel %vm192, %v4835, %v4839
    %v4841 = vshrl.u32 %v4670, 16
    %v4843 = vor.u32 %v4841, %v4827
    %v4845 = vshll.u32 %v4672, 16
    %v4847 = vrot.slane %v4845, 1
    %v4848 = vsel %vm192, %v4843, %v4847
    %v4849 = vshrl.u32 %v4671, 16
    %v4851 = vor.u32 %v4849, %v4839
    %v4853 = vshll.u32 %v4673, 16
    %v4855 = vrot.slane %v4853, 1
    %v4856 = vsel %vm192, %v4851, %v4855
    %v4857 = vshrl.u32 %v4672, 16
    %v4859 = vor.u32 %v4857, %v4847
    %v4861 = vshll.u32 %v4674, 16
    %v4863 = vrot.slane %v4861, 1
    %v4864 = vsel %vm192, %v4859, %v4863
    %v4865 = vshrl.u32 %v4673, 16
    %v4867 = vor.u32 %v4865, %v4855
    %v4869 = vshll.u32 %v4675, 16
    %v4871 = vrot.slane %v4869, 1
    %v4872 = vsel %vm192, %v4867, %v4871
    %v4873 = vshrl.u32 %v4674, 16
    %v4875 = vor.u32 %v4873, %v4863
    %v4877 = vshll.u32 %v4676, 16
    %v4879 = vrot.slane %v4877, 1
    %v4880 = vsel %vm192, %v4875, %v4879
    %v4881 = vshrl.u32 %v4675, 16
    %v4883 = vor.u32 %v4881, %v4871
    %v4885 = vshll.u32 %v4677, 16
    %v4887 = vrot.slane %v4885, 1
    %v4888 = vsel %vm192, %v4883, %v4887
    %v4889 = vshrl.u32 %v4676, 16
    %v4891 = vor.u32 %v4889, %v4879
    %v4893 = vshll.u32 %v4678, 16
    %v4895 = vrot.slane %v4893, 1
    %v4896 = vsel %vm192, %v4891, %v4895
    %v4897 = vshrl.u32 %v4677, 16
    %v4899 = vor.u32 %v4897, %v4887
    %v4901 = vshll.u32 %v4679, 16
    %v4903 = vrot.slane %v4901, 1
    %v4904 = vsel %vm192, %v4899, %v4903
    %v4905 = vshrl.u32 %v4678, 16
    %v4907 = vor.u32 %v4905, %v4895
    %v4909 = vshll.u32 %v4680, 16
    %v4911 = vrot.slane %v4909, 1
    %v4912 = vsel %vm192, %v4907, %v4911
    %v4913 = vshrl.u32 %v4679, 16
    %v4915 = vor.u32 %v4913, %v4903
    %v4917 = vshll.u32 %v4681, 16
    %v4919 = vrot.slane %v4917, 1
    %v4920 = vsel %vm192, %v4915, %v4919
    %v4921 = vshrl.u32 %v4680, 16
    %v4923 = vor.u32 %v4921, %v4911
    %v4925 = vshll.u32 %v4682, 16
    %v4927 = vrot.slane %v4925, 1
    %v4928 = vsel %vm192, %v4923, %v4927
    %v4929 = vshrl.u32 %v4681, 16
    %v4931 = vor.u32 %v4929, %v4919
    %v4933 = vshll.u32 %v4683, 16
    %v4935 = vrot.slane %v4933, 1
    %v4936 = vsel %vm192, %v4931, %v4935
    %v4937 = vshrl.u32 %v4682, 16
    %v4939 = vor.u32 %v4937, %v4927
    %v4941 = vshll.u32 %v4750, 16
    %v4943 = vrot.slane %v4941, 1
    %v4944 = vsel %vm192, %v4939, %v4943
    %v4945 = vshrl.u32 %v4683, 16
    %v4947 = vor.u32 %v4945, %v4935
    %v4949 = vshll.u32 %v4751, 16
    %v4951 = vrot.slane %v4949, 1
    %v4952 = vsel %vm192, %v4947, %v4951
    %v4953 = vshrl.u32 %v4750, 16
    %v4955 = vor.u32 %v4953, %v4943
    %v4956 = vshrl.u32 %v4751, 16
    %v4958 = vor.u32 %v4956, %v4951
    %v5041 = vunpack.c.l.b16 %v4753
    %v5042 = vunpack.c.h.b16 %v4753
    %v5043 = vunpack.c.l.b16 %v4754
    %v5044 = vunpack.c.h.b16 %v4754
    %v5045 = vunpack.c.l.b16 %v4755
    %v5046 = vunpack.c.h.b16 %v4755
    %v5047 = vunpack.c.l.b16 %v4756
    %v5048 = vunpack.c.h.b16 %v4756
    %v5049 = vunpack.c.l.b16 %v4757
    %v5050 = vunpack.c.h.b16 %v4757
    %v5051 = vunpack.c.l.b16 %v4758
    %v5052 = vunpack.c.h.b16 %v4758
    %v5053 = vunpack.c.l.b16 %v4759
    %v5054 = vunpack.c.h.b16 %v4759
    %v5055 = vunpack.c.l.b16 %v4760
    %v5056 = vunpack.c.h.b16 %v4760
    %v5057 = vunpack.c.l.b16 %v4761
    %v5058 = vunpack.c.h.b16 %v4761
    %v5059 = vunpack.c.l.b16 %v4762
    %v5060 = vunpack.c.h.b16 %v4762
    %v5061 = vunpack.c.l.b16 %v4763
    %v5062 = vunpack.c.h.b16 %v4763
    %v5063 = vunpack.c.l.b16 %v4764
    %v5064 = vunpack.c.h.b16 %v4764
    %v5065 = vunpack.c.l.b16 %v4765
    %v5066 = vunpack.c.h.b16 %v4765
    %v5067 = vunpack.c.l.b16 %v4766
    %v5068 = vunpack.c.h.b16 %v4766
    %v5069 = vunpack.c.l.b16 %v4767
    %v5070 = vunpack.c.h.b16 %v4767
    %v5071 = vunpack.c.l.b16 %v4768
    %v5072 = vunpack.c.h.b16 %v4768
    %v5073 = vunpack.c.l.b16 %v4769
    %v5074 = vunpack.c.h.b16 %v4769
    %v5075 = vunpack.c.l.b16 %v4770
    %v5076 = vunpack.c.h.b16 %v4770
    %v5077 = vunpack.c.l.b16 %v4771
    %v5078 = vunpack.c.h.b16 %v4771
    %v5079 = vunpack.c.l.b16 %v4772
    %v5080 = vunpack.c.h.b16 %v4772
    %v5081 = vunpack.c.l.b16 %v4773
    %v5082 = vunpack.c.h.b16 %v4773
    %v5083 = vunpack.c.l.b16 %v4774
    %v5084 = vunpack.c.h.b16 %v4774
    %v5085 = vunpack.c.l.b16 %v4775
    %v5086 = vunpack.c.h.b16 %v4775
    %v5087 = vunpack.c.l.b16 %v4776
    %v5088 = vunpack.c.h.b16 %v4776
    %v5089 = vunpack.c.l.b16 %v4777
    %v5090 = vunpack.c.h.b16 %v4777
    %v5091 = vunpack.c.l.b16 %v4778
    %v5092 = vunpack.c.h.b16 %v4778
    %v5093 = vunpack.c.l.b16 %v4779
    %v5094 = vunpack.c.h.b16 %v4779
    %v5095 = vunpack.c.l.b16 %v4780
    %v5096 = vunpack.c.h.b16 %v4780
    %v5097 = vunpack.c.l.b16 %v4781
    %v5098 = vunpack.c.h.b16 %v4781
    %v5099 = vunpack.c.l.b16 %v4782
    %v5100 = vunpack.c.h.b16 %v4782
    %v5101 = vunpack.c.l.b16 %v4783
    %v5102 = vunpack.c.h.b16 %v4783
    %v5103 = vunpack.c.l.b16 %v4784
    %v5104 = vunpack.c.h.b16 %v4784
    %v5105 = vunpack.c.l.b16 %v4785
    %v5106 = vunpack.c.h.b16 %v4785
    %v5107 = vunpack.c.l.b16 %v4786
    %v5108 = vunpack.c.h.b16 %v4786
    %v5109 = vunpack.c.l.b16 %v4787
    %v5110 = vunpack.c.h.b16 %v4787
    %v5111 = vunpack.c.l.b16 %v4788
    %v5112 = vunpack.c.h.b16 %v4788
    %v5113 = vunpack.c.l.b16 %v4789
    %v5114 = vunpack.c.h.b16 %v4789
    %v5115 = vunpack.c.l.b16 %v4790
    %v5116 = vunpack.c.h.b16 %v4790
    %v5117 = vunpack.c.l.b16 %v4791
    %v5118 = vunpack.c.h.b16 %v4791
    %v5119 = vunpack.c.l.b16 %v4792
    %v5120 = vunpack.c.h.b16 %v4792
    %v5121 = vunpack.c.l.b16 %v4793
    %v5122 = vunpack.c.h.b16 %v4793
    %v5123 = vunpack.c.l.b16 %v4794
    %v5124 = vunpack.c.h.b16 %v4794
    %v5125 = vunpack.c.l.b16 %v4795
    %v5126 = vunpack.c.h.b16 %v4795
    %v5127 = vunpack.c.l.b16 %v4796
    %v5128 = vunpack.c.h.b16 %v4796
    %v5129 = vunpack.c.l.b16 %v4797
    %v5130 = vunpack.c.h.b16 %v4797
    %v5131 = vunpack.c.l.b16 %v4798
    %v5132 = vunpack.c.h.b16 %v4798
    %v5133 = vunpack.c.l.b16 %v4799
    %v5134 = vunpack.c.h.b16 %v4799
    %v5135 = vunpack.c.l.b16 %v4800
    %v5136 = vunpack.c.h.b16 %v4800
    %v5137 = vunpack.c.l.b16 %v4801
    %v5138 = vunpack.c.h.b16 %v4801
    %v5139 = vunpack.c.l.b16 %v4802
    %v5140 = vunpack.c.h.b16 %v4802
    %v5141 = vunpack.c.l.b16 %v4803
    %v5142 = vunpack.c.h.b16 %v4803
    %v5143 = vunpack.c.l.b16 %v4804
    %v5144 = vunpack.c.h.b16 %v4804
    %v5145 = vunpack.c.l.b16 %v4805
    %v5146 = vunpack.c.h.b16 %v4805
    %v5147 = vunpack.c.l.b16 %v4806
    %v5148 = vunpack.c.h.b16 %v4806
    %v5149 = vunpack.c.l.b16 %v4807
    %v5150 = vunpack.c.h.b16 %v4807
    %v5151 = vunpack.c.l.b16 %v4808
    %v5152 = vunpack.c.h.b16 %v4808
    %v5153 = vunpack.c.l.b16 %v4809
    %v5154 = vunpack.c.h.b16 %v4809
    %v5155 = vunpack.c.l.b16 %v4810
    %v5156 = vunpack.c.h.b16 %v4810
    %v5157 = vunpack.c.l.b16 %v4811
    %v5158 = vunpack.c.h.b16 %v4811
    %v5159 = vunpack.c.l.b16 %v4812
    %v5160 = vunpack.c.h.b16 %v4812
    %v5161 = vunpack.c.l.b16 %v4813
    %v5162 = vunpack.c.h.b16 %v4813
    %v5163 = vunpack.c.l.b16 %v4814
    %v5164 = vunpack.c.h.b16 %v4814
    %v5165 = vunpack.c.l.b16 %v4815
    %v5166 = vunpack.c.h.b16 %v4815
    %v5167 = vunpack.c.l.b16 %v4816
    %v5168 = vunpack.c.h.b16 %v4816
    %v5169 = vpack.c.b16 %v5045, %v5041
    %v5170 = vpack.c.b16 %v5046, %v5042
    %v5171 = vpack.c.b16 %v5047, %v5043
    %v5172 = vpack.c.b16 %v5048, %v5044
    %v5173 = vpack.c.b16 %v5053, %v5049
    %v5174 = vpack.c.b16 %v5054, %v5050
    %v5175 = vpack.c.b16 %v5055, %v5051
    %v5176 = vpack.c.b16 %v5056, %v5052
    %v5177 = vpack.c.b16 %v5061, %v5057
    %v5178 = vpack.c.b16 %v5062, %v5058
    %v5179 = vpack.c.b16 %v5063, %v5059
    %v5180 = vpack.c.b16 %v5064, %v5060
    %v5181 = vpack.c.b16 %v5069, %v5065
    %v5182 = vpack.c.b16 %v5070, %v5066
    %v5183 = vpack.c.b16 %v5071, %v5067
    %v5184 = vpack.c.b16 %v5072, %v5068
    %v5185 = vpack.c.b16 %v5077, %v5073
    %v5186 = vpack.c.b16 %v5078, %v5074
    %v5187 = vpack.c.b16 %v5079, %v5075
    %v5188 = vpack.c.b16 %v5080, %v5076
    %v5189 = vpack.c.b16 %v5085, %v5081
    %v5190 = vpack.c.b16 %v5086, %v5082
    %v5191 = vpack.c.b16 %v5087, %v5083
    %v5192 = vpack.c.b16 %v5088, %v5084
    %v5193 = vpack.c.b16 %v5093, %v5089
    %v5194 = vpack.c.b16 %v5094, %v5090
    %v5195 = vpack.c.b16 %v5095, %v5091
    %v5196 = vpack.c.b16 %v5096, %v5092
    %v5197 = vpack.c.b16 %v5101, %v5097
    %v5198 = vpack.c.b16 %v5102, %v5098
    %v5199 = vpack.c.b16 %v5103, %v5099
    %v5200 = vpack.c.b16 %v5104, %v5100
    %v5201 = vpack.c.b16 %v5109, %v5105
    %v5202 = vpack.c.b16 %v5110, %v5106
    %v5203 = vpack.c.b16 %v5111, %v5107
    %v5204 = vpack.c.b16 %v5112, %v5108
    %v5205 = vpack.c.b16 %v5117, %v5113
    %v5206 = vpack.c.b16 %v5118, %v5114
    %v5207 = vpack.c.b16 %v5119, %v5115
    %v5208 = vpack.c.b16 %v5120, %v5116
    %v5209 = vpack.c.b16 %v5125, %v5121
    %v5210 = vpack.c.b16 %v5126, %v5122
    %v5211 = vpack.c.b16 %v5127, %v5123
    %v5212 = vpack.c.b16 %v5128, %v5124
    %v5213 = vpack.c.b16 %v5133, %v5129
    %v5214 = vpack.c.b16 %v5134, %v5130
    %v5215 = vpack.c.b16 %v5135, %v5131
    %v5216 = vpack.c.b16 %v5136, %v5132
    %v5217 = vpack.c.b16 %v5141, %v5137
    %v5218 = vpack.c.b16 %v5142, %v5138
    %v5219 = vpack.c.b16 %v5143, %v5139
    %v5220 = vpack.c.b16 %v5144, %v5140
    %v5221 = vpack.c.b16 %v5149, %v5145
    %v5222 = vpack.c.b16 %v5150, %v5146
    %v5223 = vpack.c.b16 %v5151, %v5147
    %v5224 = vpack.c.b16 %v5152, %v5148
    %v5225 = vpack.c.b16 %v5157, %v5153
    %v5226 = vpack.c.b16 %v5158, %v5154
    %v5227 = vpack.c.b16 %v5159, %v5155
    %v5228 = vpack.c.b16 %v5160, %v5156
    %v5229 = vpack.c.b16 %v5165, %v5161
    %v5230 = vpack.c.b16 %v5166, %v5162
    %v5231 = vpack.c.b16 %v5167, %v5163
    %v5232 = vpack.c.b16 %v5168, %v5164
    %5297 = vmatpush.bf16.msra.mxu0 %v5197
    %5298 = vmatpush.bf16.msra.mxu0 %v5193
    %5299 = vmatpush.bf16.msra.mxu0 %v5189
    %5300 = vmatpush.bf16.msra.mxu0 %v5185
    %5301 = vmatpush.bf16.msra.mxu0 %v5181
    %5302 = vmatpush.bf16.msra.mxu0 %v5177
    %5303 = vmatpush.bf16.msra.mxu0 %v5173
    %5304 = vmatpush.bf16.msra.mxu0 %v5169
    %5305 = vmatmul.bf16.gmra.mxu0 %v4828
    %v5306 = vpop.f32.mrf.mxu0
    %v5307 = vadd.f32 0.0, %v5306
    %v5308 = vpop.f32.mrf.mxu0
    %v5309 = vadd.f32 0.0, %v5308
    %5310 = vmatmul.bf16.gmra.mxu0 %v4848
    %v5311 = vpop.f32.mrf.mxu0
    %v5312 = vadd.f32 0.0, %v5311
    %v5313 = vpop.f32.mrf.mxu0
    %v5314 = vadd.f32 0.0, %v5313
    %5315 = vmatmul.bf16.gmra.mxu0 %v4864
    %v5316 = vpop.f32.mrf.mxu0
    %v5317 = vadd.f32 0.0, %v5316
    %v5318 = vpop.f32.mrf.mxu0
    %v5319 = vadd.f32 0.0, %v5318
    %5320 = vmatmul.bf16.gmra.mxu0 %v4880
    %v5321 = vpop.f32.mrf.mxu0
    %v5322 = vadd.f32 0.0, %v5321
    %v5323 = vpop.f32.mrf.mxu0
    %v5324 = vadd.f32 0.0, %v5323
    %5325 = vmatmul.bf16.gmra.mxu0 %v4896
    %v5326 = vpop.f32.mrf.mxu0
    %v5327 = vadd.f32 0.0, %v5326
    %v5328 = vpop.f32.mrf.mxu0
    %v5329 = vadd.f32 0.0, %v5328
    %5330 = vmatmul.bf16.gmra.mxu0 %v4912
    %v5331 = vpop.f32.mrf.mxu0
    %v5332 = vadd.f32 0.0, %v5331
    %v5333 = vpop.f32.mrf.mxu0
    %v5334 = vadd.f32 0.0, %v5333
    %5335 = vmatmul.bf16.gmra.mxu0 %v4928
    %v5336 = vpop.f32.mrf.mxu0
    %v5337 = vadd.f32 0.0, %v5336
    %v5338 = vpop.f32.mrf.mxu0
    %v5339 = vadd.f32 0.0, %v5338
    %5340 = vmatmul.bf16.gmra.mxu0 %v4944
    %v5341 = vpop.f32.mrf.mxu0
    %v5342 = vadd.f32 0.0, %v5341
    %v5343 = vpop.f32.mrf.mxu0
    %v5344 = vadd.f32 0.0, %v5343
    %5345 = vmatmul.bf16.gmra.mxu0 %v4955
    %v5346 = vpop.f32.mrf.mxu0
    %v5347 = vadd.f32 0.0, %v5346
    %v5348 = vpop.f32.mrf.mxu0
    %5349 = vdwg.mxu0
    %5350 = vmatpush.bf16.msra.mxu0 %v5229
    %5351 = vmatpush.bf16.msra.mxu0 %v5225
    %5352 = vmatpush.bf16.msra.mxu0 %v5221
    %5353 = vmatpush.bf16.msra.mxu0 %v5217
    %5354 = vmatpush.bf16.msra.mxu0 %v5213
    %5355 = vmatpush.bf16.msra.mxu0 %v5209
    %5356 = vmatpush.bf16.msra.mxu0 %v5205
    %5357 = vmatpush.bf16.msra.mxu0 %v5201
    %5358 = vmatmul.bf16.gmra.mxu0 %v4840
    %v5359 = vpop.f32.mrf.mxu0
    %v5360 = vadd.f32 %v5307, %v5359
    %v5361 = vpop.f32.mrf.mxu0
    %v5362 = vadd.f32 %v5309, %v5361
    %5363 = vmatmul.bf16.gmra.mxu0 %v4856
    %v5364 = vpop.f32.mrf.mxu0
    %v5365 = vadd.f32 %v5312, %v5364
    %v5366 = vpop.f32.mrf.mxu0
    %v5367 = vadd.f32 %v5314, %v5366
    %5368 = vmatmul.bf16.gmra.mxu0 %v4872
    %v5369 = vpop.f32.mrf.mxu0
    %v5370 = vadd.f32 %v5317, %v5369
    %v5371 = vpop.f32.mrf.mxu0
    %v5372 = vadd.f32 %v5319, %v5371
    %5373 = vmatmul.bf16.gmra.mxu0 %v4888
    %v5374 = vpop.f32.mrf.mxu0
    %v5375 = vadd.f32 %v5322, %v5374
    %v5376 = vpop.f32.mrf.mxu0
    %v5377 = vadd.f32 %v5324, %v5376
    %5378 = vmatmul.bf16.gmra.mxu0 %v4904
    %v5379 = vpop.f32.mrf.mxu0
    %v5380 = vadd.f32 %v5327, %v5379
    %v5381 = vpop.f32.mrf.mxu0
    %v5382 = vadd.f32 %v5329, %v5381
    %5383 = vmatmul.bf16.gmra.mxu0 %v4920
    %v5384 = vpop.f32.mrf.mxu0
    %v5385 = vadd.f32 %v5332, %v5384
    %v5386 = vpop.f32.mrf.mxu0
    %v5387 = vadd.f32 %v5334, %v5386
    %5388 = vmatmul.bf16.gmra.mxu0 %v4936
    %v5389 = vpop.f32.mrf.mxu0
    %v5390 = vadd.f32 %v5337, %v5389
    %v5391 = vpop.f32.mrf.mxu0
    %v5392 = vadd.f32 %v5339, %v5391
    %5393 = vmatmul.bf16.gmra.mxu0 %v4952
    %v5394 = vpop.f32.mrf.mxu0
    %v5395 = vadd.f32 %v5342, %v5394
    %v5396 = vpop.f32.mrf.mxu0
    %v5397 = vadd.f32 %v5344, %v5396
    %5398 = vmatmul.bf16.gmra.mxu0 %v4958
    %v5399 = vpop.f32.mrf.mxu0
    %v5400 = vadd.f32 %v5347, %v5399
    %v5401 = vpop.f32.mrf.mxu0
    %5402 = vdwg.mxu0
    %5403 = vmatpush.bf16.msra.mxu0 %v5198
    %5404 = vmatpush.bf16.msra.mxu0 %v5194
    %5405 = vmatpush.bf16.msra.mxu0 %v5190
    %5406 = vmatpush.bf16.msra.mxu0 %v5186
    %5407 = vmatpush.bf16.msra.mxu0 %v5182
    %5408 = vmatpush.bf16.msra.mxu0 %v5178
    %5409 = vmatpush.bf16.msra.mxu0 %v5174
    %5410 = vmatpush.bf16.msra.mxu0 %v5170
    %5411 = vmatmul.bf16.gmra.mxu0 %v4828
    %v5412 = vpop.f32.mrf.mxu0
    %v5413 = vadd.f32 0.0, %v5412
    %v5414 = vpop.f32.mrf.mxu0
    %v5415 = vadd.f32 0.0, %v5414
    %5416 = vmatmul.bf16.gmra.mxu0 %v4848
    %v5417 = vpop.f32.mrf.mxu0
    %v5418 = vadd.f32 0.0, %v5417
    %v5419 = vpop.f32.mrf.mxu0
    %v5420 = vadd.f32 0.0, %v5419
    %5421 = vmatmul.bf16.gmra.mxu0 %v4864
    %v5422 = vpop.f32.mrf.mxu0
    %v5423 = vadd.f32 0.0, %v5422
    %v5424 = vpop.f32.mrf.mxu0
    %v5425 = vadd.f32 0.0, %v5424
    %5426 = vmatmul.bf16.gmra.mxu0 %v4880
    %v5427 = vpop.f32.mrf.mxu0
    %v5428 = vadd.f32 0.0, %v5427
    %v5429 = vpop.f32.mrf.mxu0
    %v5430 = vadd.f32 0.0, %v5429
    %5431 = vmatmul.bf16.gmra.mxu0 %v4896
    %v5432 = vpop.f32.mrf.mxu0
    %v5433 = vadd.f32 0.0, %v5432
    %v5434 = vpop.f32.mrf.mxu0
    %v5435 = vadd.f32 0.0, %v5434
    %5436 = vmatmul.bf16.gmra.mxu0 %v4912
    %v5437 = vpop.f32.mrf.mxu0
    %v5438 = vadd.f32 0.0, %v5437
    %v5439 = vpop.f32.mrf.mxu0
    %v5440 = vadd.f32 0.0, %v5439
    %5441 = vmatmul.bf16.gmra.mxu0 %v4928
    %v5442 = vpop.f32.mrf.mxu0
    %v5443 = vadd.f32 0.0, %v5442
    %v5444 = vpop.f32.mrf.mxu0
    %v5445 = vadd.f32 0.0, %v5444
    %5446 = vmatmul.bf16.gmra.mxu0 %v4944
    %v5447 = vpop.f32.mrf.mxu0
    %v5448 = vadd.f32 0.0, %v5447
    %v5449 = vpop.f32.mrf.mxu0
    %v5450 = vadd.f32 0.0, %v5449
    %5451 = vmatmul.bf16.gmra.mxu0 %v4955
    %v5452 = vpop.f32.mrf.mxu0
    %v5453 = vadd.f32 0.0, %v5452
    %v5454 = vpop.f32.mrf.mxu0
    %5455 = vdwg.mxu0
    %5456 = vmatpush.bf16.msra.mxu0 %v5230
    %5457 = vmatpush.bf16.msra.mxu0 %v5226
    %5458 = vmatpush.bf16.msra.mxu0 %v5222
    %5459 = vmatpush.bf16.msra.mxu0 %v5218
    %5460 = vmatpush.bf16.msra.mxu0 %v5214
    %5461 = vmatpush.bf16.msra.mxu0 %v5210
    %5462 = vmatpush.bf16.msra.mxu0 %v5206
    %5463 = vmatpush.bf16.msra.mxu0 %v5202
    %5464 = vmatmul.bf16.gmra.mxu0 %v4840
    %v5465 = vpop.f32.mrf.mxu0
    %v5466 = vadd.f32 %v5413, %v5465
    %v5467 = vpop.f32.mrf.mxu0
    %v5468 = vadd.f32 %v5415, %v5467
    %5469 = vmatmul.bf16.gmra.mxu0 %v4856
    %v5470 = vpop.f32.mrf.mxu0
    %v5471 = vadd.f32 %v5418, %v5470
    %v5472 = vpop.f32.mrf.mxu0
    %v5473 = vadd.f32 %v5420, %v5472
    %5474 = vmatmul.bf16.gmra.mxu0 %v4872
    %v5475 = vpop.f32.mrf.mxu0
    %v5476 = vadd.f32 %v5423, %v5475
    %v5477 = vpop.f32.mrf.mxu0
    %v5478 = vadd.f32 %v5425, %v5477
    %5479 = vmatmul.bf16.gmra.mxu0 %v4888
    %v5480 = vpop.f32.mrf.mxu0
    %v5481 = vadd.f32 %v5428, %v5480
    %v5482 = vpop.f32.mrf.mxu0
    %v5483 = vadd.f32 %v5430, %v5482
    %5484 = vmatmul.bf16.gmra.mxu0 %v4904
    %v5485 = vpop.f32.mrf.mxu0
    %v5486 = vadd.f32 %v5433, %v5485
    %v5487 = vpop.f32.mrf.mxu0
    %v5488 = vadd.f32 %v5435, %v5487
    %5489 = vmatmul.bf16.gmra.mxu0 %v4920
    %v5490 = vpop.f32.mrf.mxu0
    %v5491 = vadd.f32 %v5438, %v5490
    %v5492 = vpop.f32.mrf.mxu0
    %v5493 = vadd.f32 %v5440, %v5492
    %5494 = vmatmul.bf16.gmra.mxu0 %v4936
    %v5495 = vpop.f32.mrf.mxu0
    %v5496 = vadd.f32 %v5443, %v5495
    %v5497 = vpop.f32.mrf.mxu0
    %v5498 = vadd.f32 %v5445, %v5497
    %5499 = vmatmul.bf16.gmra.mxu0 %v4952
    %v5500 = vpop.f32.mrf.mxu0
    %v5501 = vadd.f32 %v5448, %v5500
    %v5502 = vpop.f32.mrf.mxu0
    %v5503 = vadd.f32 %v5450, %v5502
    %5504 = vmatmul.bf16.gmra.mxu0 %v4958
    %v5505 = vpop.f32.mrf.mxu0
    %v5506 = vadd.f32 %v5453, %v5505
    %v5507 = vpop.f32.mrf.mxu0
    %5508 = vdwg.mxu0
    %5509 = vmatpush.bf16.msra.mxu0 %v5199
    %5510 = vmatpush.bf16.msra.mxu0 %v5195
    %5511 = vmatpush.bf16.msra.mxu0 %v5191
    %5512 = vmatpush.bf16.msra.mxu0 %v5187
    %5513 = vmatpush.bf16.msra.mxu0 %v5183
    %5514 = vmatpush.bf16.msra.mxu0 %v5179
    %5515 = vmatpush.bf16.msra.mxu0 %v5175
    %5516 = vmatpush.bf16.msra.mxu0 %v5171
    %5517 = vmatmul.bf16.gmra.mxu0 %v4828
    %v5518 = vpop.f32.mrf.mxu0
    %v5519 = vadd.f32 0.0, %v5518
    %v5520 = vpop.f32.mrf.mxu0
    %v5521 = vadd.f32 0.0, %v5520
    %5522 = vmatmul.bf16.gmra.mxu0 %v4848
    %v5523 = vpop.f32.mrf.mxu0
    %v5524 = vadd.f32 0.0, %v5523
    %v5525 = vpop.f32.mrf.mxu0
    %v5526 = vadd.f32 0.0, %v5525
    %5527 = vmatmul.bf16.gmra.mxu0 %v4864
    %v5528 = vpop.f32.mrf.mxu0
    %v5529 = vadd.f32 0.0, %v5528
    %v5530 = vpop.f32.mrf.mxu0
    %v5531 = vadd.f32 0.0, %v5530
    %5532 = vmatmul.bf16.gmra.mxu0 %v4880
    %v5533 = vpop.f32.mrf.mxu0
    %v5534 = vadd.f32 0.0, %v5533
    %v5535 = vpop.f32.mrf.mxu0
    %v5536 = vadd.f32 0.0, %v5535
    %5537 = vmatmul.bf16.gmra.mxu0 %v4896
    %v5538 = vpop.f32.mrf.mxu0
    %v5539 = vadd.f32 0.0, %v5538
    %v5540 = vpop.f32.mrf.mxu0
    %v5541 = vadd.f32 0.0, %v5540
    %5542 = vmatmul.bf16.gmra.mxu0 %v4912
    %v5543 = vpop.f32.mrf.mxu0
    %v5544 = vadd.f32 0.0, %v5543
    %v5545 = vpop.f32.mrf.mxu0
    %v5546 = vadd.f32 0.0, %v5545
    %5547 = vmatmul.bf16.gmra.mxu0 %v4928
    %v5548 = vpop.f32.mrf.mxu0
    %v5549 = vadd.f32 0.0, %v5548
    %v5550 = vpop.f32.mrf.mxu0
    %v5551 = vadd.f32 0.0, %v5550
    %5552 = vmatmul.bf16.gmra.mxu0 %v4944
    %v5553 = vpop.f32.mrf.mxu0
    %v5554 = vadd.f32 0.0, %v5553
    %v5555 = vpop.f32.mrf.mxu0
    %v5556 = vadd.f32 0.0, %v5555
    %5557 = vmatmul.bf16.gmra.mxu0 %v4955
    %v5558 = vpop.f32.mrf.mxu0
    %v5559 = vadd.f32 0.0, %v5558
    %v5560 = vpop.f32.mrf.mxu0
    %5561 = vdwg.mxu0
    %5562 = vmatpush.bf16.msra.mxu0 %v5231
    %5563 = vmatpush.bf16.msra.mxu0 %v5227
    %5564 = vmatpush.bf16.msra.mxu0 %v5223
    %5565 = vmatpush.bf16.msra.mxu0 %v5219
    %5566 = vmatpush.bf16.msra.mxu0 %v5215
    %5567 = vmatpush.bf16.msra.mxu0 %v5211
    %5568 = vmatpush.bf16.msra.mxu0 %v5207
    %5569 = vmatpush.bf16.msra.mxu0 %v5203
    %5570 = vmatmul.bf16.gmra.mxu0 %v4840
    %v5571 = vpop.f32.mrf.mxu0
    %v5572 = vadd.f32 %v5519, %v5571
    %v5573 = vpop.f32.mrf.mxu0
    %v5574 = vadd.f32 %v5521, %v5573
    %5575 = vmatmul.bf16.gmra.mxu0 %v4856
    %v5576 = vpop.f32.mrf.mxu0
    %v5577 = vadd.f32 %v5524, %v5576
    %v5578 = vpop.f32.mrf.mxu0
    %v5579 = vadd.f32 %v5526, %v5578
    %5580 = vmatmul.bf16.gmra.mxu0 %v4872
    %v5581 = vpop.f32.mrf.mxu0
    %v5582 = vadd.f32 %v5529, %v5581
    %v5583 = vpop.f32.mrf.mxu0
    %v5584 = vadd.f32 %v5531, %v5583
    %5585 = vmatmul.bf16.gmra.mxu0 %v4888
    %v5586 = vpop.f32.mrf.mxu0
    %v5587 = vadd.f32 %v5534, %v5586
    %v5588 = vpop.f32.mrf.mxu0
    %v5589 = vadd.f32 %v5536, %v5588
    %5590 = vmatmul.bf16.gmra.mxu0 %v4904
    %v5591 = vpop.f32.mrf.mxu0
    %v5592 = vadd.f32 %v5539, %v5591
    %v5593 = vpop.f32.mrf.mxu0
    %v5594 = vadd.f32 %v5541, %v5593
    %5595 = vmatmul.bf16.gmra.mxu0 %v4920
    %v5596 = vpop.f32.mrf.mxu0
    %v5597 = vadd.f32 %v5544, %v5596
    %v5598 = vpop.f32.mrf.mxu0
    %v5599 = vadd.f32 %v5546, %v5598
    %5600 = vmatmul.bf16.gmra.mxu0 %v4936
    %v5601 = vpop.f32.mrf.mxu0
    %v5602 = vadd.f32 %v5549, %v5601
    %v5603 = vpop.f32.mrf.mxu0
    %v5604 = vadd.f32 %v5551, %v5603
    %5605 = vmatmul.bf16.gmra.mxu0 %v4952
    %v5606 = vpop.f32.mrf.mxu0
    %v5607 = vadd.f32 %v5554, %v5606
    %v5608 = vpop.f32.mrf.mxu0
    %v5609 = vadd.f32 %v5556, %v5608
    %5610 = vmatmul.bf16.gmra.mxu0 %v4958
    %v5611 = vpop.f32.mrf.mxu0
    %v5612 = vadd.f32 %v5559, %v5611
    %v5613 = vpop.f32.mrf.mxu0
    %5614 = vdwg.mxu0
    %5615 = vmatpush.bf16.msra.mxu0 %v5200
    %5616 = vmatpush.bf16.msra.mxu0 %v5196
    %5617 = vmatpush.bf16.msra.mxu0 %v5192
    %5618 = vmatpush.bf16.msra.mxu0 %v5188
    %5619 = vmatpush.bf16.msra.mxu0 %v5184
    %5620 = vmatpush.bf16.msra.mxu0 %v5180
    %5621 = vmatpush.bf16.msra.mxu0 %v5176
    %5622 = vmatpush.bf16.msra.mxu0 %v5172
    %5623 = vmatmul.bf16.gmra.mxu0 %v4828
    %v5624 = vpop.f32.mrf.mxu0
    %v5625 = vadd.f32 0.0, %v5624
    %v5626 = vpop.f32.mrf.mxu0
    %v5627 = vadd.f32 0.0, %v5626
    %5628 = vmatmul.bf16.gmra.mxu0 %v4848
    %v5629 = vpop.f32.mrf.mxu0
    %v5630 = vadd.f32 0.0, %v5629
    %v5631 = vpop.f32.mrf.mxu0
    %v5632 = vadd.f32 0.0, %v5631
    %5633 = vmatmul.bf16.gmra.mxu0 %v4864
    %v5634 = vpop.f32.mrf.mxu0
    %v5635 = vadd.f32 0.0, %v5634
    %v5636 = vpop.f32.mrf.mxu0
    %v5637 = vadd.f32 0.0, %v5636
    %5638 = vmatmul.bf16.gmra.mxu0 %v4880
    %v5639 = vpop.f32.mrf.mxu0
    %v5640 = vadd.f32 0.0, %v5639
    %v5641 = vpop.f32.mrf.mxu0
    %v5642 = vadd.f32 0.0, %v5641
    %5643 = vmatmul.bf16.gmra.mxu0 %v4896
    %v5644 = vpop.f32.mrf.mxu0
    %v5645 = vadd.f32 0.0, %v5644
    %v5646 = vpop.f32.mrf.mxu0
    %v5647 = vadd.f32 0.0, %v5646
    %5648 = vmatmul.bf16.gmra.mxu0 %v4912
    %v5649 = vpop.f32.mrf.mxu0
    %v5650 = vadd.f32 0.0, %v5649
    %v5651 = vpop.f32.mrf.mxu0
    %v5652 = vadd.f32 0.0, %v5651
    %5653 = vmatmul.bf16.gmra.mxu0 %v4928
    %v5654 = vpop.f32.mrf.mxu0
    %v5655 = vadd.f32 0.0, %v5654
    %v5656 = vpop.f32.mrf.mxu0
    %v5657 = vadd.f32 0.0, %v5656
    %5658 = vmatmul.bf16.gmra.mxu0 %v4944
    %v5659 = vpop.f32.mrf.mxu0
    %v5660 = vadd.f32 0.0, %v5659
    %v5661 = vpop.f32.mrf.mxu0
    %v5662 = vadd.f32 0.0, %v5661
    %5663 = vmatmul.bf16.gmra.mxu0 %v4955
    %v5664 = vpop.f32.mrf.mxu0
    %v5665 = vadd.f32 0.0, %v5664
    %v5666 = vpop.f32.mrf.mxu0
    %5667 = vdwg.mxu0
    %5668 = vmatpush.bf16.msra.mxu0 %v5232
    %5669 = vmatpush.bf16.msra.mxu0 %v5228
    %5670 = vmatpush.bf16.msra.mxu0 %v5224
    %5671 = vmatpush.bf16.msra.mxu0 %v5220
    %5672 = vmatpush.bf16.msra.mxu0 %v5216
    %5673 = vmatpush.bf16.msra.mxu0 %v5212
    %5674 = vmatpush.bf16.msra.mxu0 %v5208
    %5675 = vmatpush.bf16.msra.mxu0 %v5204
    %5676 = vmatmul.bf16.gmra.mxu0 %v4840
    %v5677 = vpop.f32.mrf.mxu0
    %v5678 = vadd.f32 %v5625, %v5677
    %v5679 = vpop.f32.mrf.mxu0
    %v5680 = vadd.f32 %v5627, %v5679
    %5681 = vmatmul.bf16.gmra.mxu0 %v4856
    %v5682 = vpop.f32.mrf.mxu0
    %v5683 = vadd.f32 %v5630, %v5682
    %v5684 = vpop.f32.mrf.mxu0
    %v5685 = vadd.f32 %v5632, %v5684
    %5686 = vmatmul.bf16.gmra.mxu0 %v4872
    %v5687 = vpop.f32.mrf.mxu0
    %v5688 = vadd.f32 %v5635, %v5687
    %v5689 = vpop.f32.mrf.mxu0
    %v5690 = vadd.f32 %v5637, %v5689
    %5691 = vmatmul.bf16.gmra.mxu0 %v4888
    %v5692 = vpop.f32.mrf.mxu0
    %v5693 = vadd.f32 %v5640, %v5692
    %v5694 = vpop.f32.mrf.mxu0
    %v5695 = vadd.f32 %v5642, %v5694
    %5696 = vmatmul.bf16.gmra.mxu0 %v4904
    %v5697 = vpop.f32.mrf.mxu0
    %v5698 = vadd.f32 %v5645, %v5697
    %v5699 = vpop.f32.mrf.mxu0
    %v5700 = vadd.f32 %v5647, %v5699
    %5701 = vmatmul.bf16.gmra.mxu0 %v4920
    %v5702 = vpop.f32.mrf.mxu0
    %v5703 = vadd.f32 %v5650, %v5702
    %v5704 = vpop.f32.mrf.mxu0
    %v5705 = vadd.f32 %v5652, %v5704
    %5706 = vmatmul.bf16.gmra.mxu0 %v4936
    %v5707 = vpop.f32.mrf.mxu0
    %v5708 = vadd.f32 %v5655, %v5707
    %v5709 = vpop.f32.mrf.mxu0
    %v5710 = vadd.f32 %v5657, %v5709
    %5711 = vmatmul.bf16.gmra.mxu0 %v4952
    %v5712 = vpop.f32.mrf.mxu0
    %v5713 = vadd.f32 %v5660, %v5712
    %v5714 = vpop.f32.mrf.mxu0
    %v5715 = vadd.f32 %v5662, %v5714
    %5716 = vmatmul.bf16.gmra.mxu0 %v4958
    %v5717 = vpop.f32.mrf.mxu0
    %v5718 = vadd.f32 %v5665, %v5717
    %v5719 = vpop.f32.mrf.mxu0
    %5720 = vdwg.mxu0
    %v5785 = vunpack.c.l.b16 %v4686
    %v5786 = vunpack.c.h.b16 %v4686
    %v5787 = vunpack.c.l.b16 %v4687
    %v5788 = vunpack.c.h.b16 %v4687
    %v5789 = vunpack.c.l.b16 %v4688
    %v5790 = vunpack.c.h.b16 %v4688
    %v5791 = vunpack.c.l.b16 %v4689
    %v5792 = vunpack.c.h.b16 %v4689
    %v5793 = vunpack.c.l.b16 %v4690
    %v5794 = vunpack.c.h.b16 %v4690
    %v5795 = vunpack.c.l.b16 %v4691
    %v5796 = vunpack.c.h.b16 %v4691
    %v5797 = vunpack.c.l.b16 %v4692
    %v5798 = vunpack.c.h.b16 %v4692
    %v5799 = vunpack.c.l.b16 %v4693
    %v5800 = vunpack.c.h.b16 %v4693
    %v5801 = vunpack.c.l.b16 %v4694
    %v5802 = vunpack.c.h.b16 %v4694
    %v5803 = vunpack.c.l.b16 %v4695
    %v5804 = vunpack.c.h.b16 %v4695
    %v5805 = vunpack.c.l.b16 %v4696
    %v5806 = vunpack.c.h.b16 %v4696
    %v5807 = vunpack.c.l.b16 %v4697
    %v5808 = vunpack.c.h.b16 %v4697
    %v5809 = vunpack.c.l.b16 %v4698
    %v5810 = vunpack.c.h.b16 %v4698
    %v5811 = vunpack.c.l.b16 %v4699
    %v5812 = vunpack.c.h.b16 %v4699
    %v5813 = vunpack.c.l.b16 %v4700
    %v5814 = vunpack.c.h.b16 %v4700
    %v5815 = vunpack.c.l.b16 %v4701
    %v5816 = vunpack.c.h.b16 %v4701
    %v5817 = vunpack.c.l.b16 %v4702
    %v5818 = vunpack.c.h.b16 %v4702
    %v5819 = vunpack.c.l.b16 %v4703
    %v5820 = vunpack.c.h.b16 %v4703
    %v5821 = vunpack.c.l.b16 %v4704
    %v5822 = vunpack.c.h.b16 %v4704
    %v5823 = vunpack.c.l.b16 %v4705
    %v5824 = vunpack.c.h.b16 %v4705
    %v5825 = vunpack.c.l.b16 %v4706
    %v5826 = vunpack.c.h.b16 %v4706
    %v5827 = vunpack.c.l.b16 %v4707
    %v5828 = vunpack.c.h.b16 %v4707
    %v5829 = vunpack.c.l.b16 %v4708
    %v5830 = vunpack.c.h.b16 %v4708
    %v5831 = vunpack.c.l.b16 %v4709
    %v5832 = vunpack.c.h.b16 %v4709
    %v5833 = vunpack.c.l.b16 %v4710
    %v5834 = vunpack.c.h.b16 %v4710
    %v5835 = vunpack.c.l.b16 %v4711
    %v5836 = vunpack.c.h.b16 %v4711
    %v5837 = vunpack.c.l.b16 %v4712
    %v5838 = vunpack.c.h.b16 %v4712
    %v5839 = vunpack.c.l.b16 %v4713
    %v5840 = vunpack.c.h.b16 %v4713
    %v5841 = vunpack.c.l.b16 %v4714
    %v5842 = vunpack.c.h.b16 %v4714
    %v5843 = vunpack.c.l.b16 %v4715
    %v5844 = vunpack.c.h.b16 %v4715
    %v5845 = vunpack.c.l.b16 %v4716
    %v5846 = vunpack.c.h.b16 %v4716
    %v5847 = vunpack.c.l.b16 %v4717
    %v5848 = vunpack.c.h.b16 %v4717
    %v5849 = vunpack.c.l.b16 %v4718
    %v5850 = vunpack.c.h.b16 %v4718
    %v5851 = vunpack.c.l.b16 %v4719
    %v5852 = vunpack.c.h.b16 %v4719
    %v5853 = vunpack.c.l.b16 %v4720
    %v5854 = vunpack.c.h.b16 %v4720
    %v5855 = vunpack.c.l.b16 %v4721
    %v5856 = vunpack.c.h.b16 %v4721
    %v5857 = vunpack.c.l.b16 %v4722
    %v5858 = vunpack.c.h.b16 %v4722
    %v5859 = vunpack.c.l.b16 %v4723
    %v5860 = vunpack.c.h.b16 %v4723
    %v5861 = vunpack.c.l.b16 %v4724
    %v5862 = vunpack.c.h.b16 %v4724
    %v5863 = vunpack.c.l.b16 %v4725
    %v5864 = vunpack.c.h.b16 %v4725
    %v5865 = vunpack.c.l.b16 %v4726
    %v5866 = vunpack.c.h.b16 %v4726
    %v5867 = vunpack.c.l.b16 %v4727
    %v5868 = vunpack.c.h.b16 %v4727
    %v5869 = vunpack.c.l.b16 %v4728
    %v5870 = vunpack.c.h.b16 %v4728
    %v5871 = vunpack.c.l.b16 %v4729
    %v5872 = vunpack.c.h.b16 %v4729
    %v5873 = vunpack.c.l.b16 %v4730
    %v5874 = vunpack.c.h.b16 %v4730
    %v5875 = vunpack.c.l.b16 %v4731
    %v5876 = vunpack.c.h.b16 %v4731
    %v5877 = vunpack.c.l.b16 %v4732
    %v5878 = vunpack.c.h.b16 %v4732
    %v5879 = vunpack.c.l.b16 %v4733
    %v5880 = vunpack.c.h.b16 %v4733
    %v5881 = vunpack.c.l.b16 %v4734
    %v5882 = vunpack.c.h.b16 %v4734
    %v5883 = vunpack.c.l.b16 %v4735
    %v5884 = vunpack.c.h.b16 %v4735
    %v5885 = vunpack.c.l.b16 %v4736
    %v5886 = vunpack.c.h.b16 %v4736
    %v5887 = vunpack.c.l.b16 %v4737
    %v5888 = vunpack.c.h.b16 %v4737
    %v5889 = vunpack.c.l.b16 %v4738
    %v5890 = vunpack.c.h.b16 %v4738
    %v5891 = vunpack.c.l.b16 %v4739
    %v5892 = vunpack.c.h.b16 %v4739
    %v5893 = vunpack.c.l.b16 %v4740
    %v5894 = vunpack.c.h.b16 %v4740
    %v5895 = vunpack.c.l.b16 %v4741
    %v5896 = vunpack.c.h.b16 %v4741
    %v5897 = vunpack.c.l.b16 %v4742
    %v5898 = vunpack.c.h.b16 %v4742
    %v5899 = vunpack.c.l.b16 %v4743
    %v5900 = vunpack.c.h.b16 %v4743
    %v5901 = vunpack.c.l.b16 %v4744
    %v5902 = vunpack.c.h.b16 %v4744
    %v5903 = vunpack.c.l.b16 %v4745
    %v5904 = vunpack.c.h.b16 %v4745
    %v5905 = vunpack.c.l.b16 %v4746
    %v5906 = vunpack.c.h.b16 %v4746
    %v5907 = vunpack.c.l.b16 %v4747
    %v5908 = vunpack.c.h.b16 %v4747
    %v5909 = vunpack.c.l.b16 %v4748
    %v5910 = vunpack.c.h.b16 %v4748
    %v5911 = vunpack.c.l.b16 %v4749
    %v5912 = vunpack.c.h.b16 %v4749
    %v5913 = vpack.c.b16 %v5789, %v5785
    %v5914 = vpack.c.b16 %v5790, %v5786
    %v5915 = vpack.c.b16 %v5791, %v5787
    %v5916 = vpack.c.b16 %v5792, %v5788
    %v5917 = vpack.c.b16 %v5797, %v5793
    %v5918 = vpack.c.b16 %v5798, %v5794
    %v5919 = vpack.c.b16 %v5799, %v5795
    %v5920 = vpack.c.b16 %v5800, %v5796
    %v5921 = vpack.c.b16 %v5805, %v5801
    %v5922 = vpack.c.b16 %v5806, %v5802
    %v5923 = vpack.c.b16 %v5807, %v5803
    %v5924 = vpack.c.b16 %v5808, %v5804
    %v5925 = vpack.c.b16 %v5813, %v5809
    %v5926 = vpack.c.b16 %v5814, %v5810
    %v5927 = vpack.c.b16 %v5815, %v5811
    %v5928 = vpack.c.b16 %v5816, %v5812
    %v5929 = vpack.c.b16 %v5821, %v5817
    %v5930 = vpack.c.b16 %v5822, %v5818
    %v5931 = vpack.c.b16 %v5823, %v5819
    %v5932 = vpack.c.b16 %v5824, %v5820
    %v5933 = vpack.c.b16 %v5829, %v5825
    %v5934 = vpack.c.b16 %v5830, %v5826
    %v5935 = vpack.c.b16 %v5831, %v5827
    %v5936 = vpack.c.b16 %v5832, %v5828
    %v5937 = vpack.c.b16 %v5837, %v5833
    %v5938 = vpack.c.b16 %v5838, %v5834
    %v5939 = vpack.c.b16 %v5839, %v5835
    %v5940 = vpack.c.b16 %v5840, %v5836
    %v5941 = vpack.c.b16 %v5845, %v5841
    %v5942 = vpack.c.b16 %v5846, %v5842
    %v5943 = vpack.c.b16 %v5847, %v5843
    %v5944 = vpack.c.b16 %v5848, %v5844
    %v5945 = vpack.c.b16 %v5853, %v5849
    %v5946 = vpack.c.b16 %v5854, %v5850
    %v5947 = vpack.c.b16 %v5855, %v5851
    %v5948 = vpack.c.b16 %v5856, %v5852
    %v5949 = vpack.c.b16 %v5861, %v5857
    %v5950 = vpack.c.b16 %v5862, %v5858
    %v5951 = vpack.c.b16 %v5863, %v5859
    %v5952 = vpack.c.b16 %v5864, %v5860
    %v5953 = vpack.c.b16 %v5869, %v5865
    %v5954 = vpack.c.b16 %v5870, %v5866
    %v5955 = vpack.c.b16 %v5871, %v5867
    %v5956 = vpack.c.b16 %v5872, %v5868
    %v5957 = vpack.c.b16 %v5877, %v5873
    %v5958 = vpack.c.b16 %v5878, %v5874
    %v5959 = vpack.c.b16 %v5879, %v5875
    %v5960 = vpack.c.b16 %v5880, %v5876
    %v5961 = vpack.c.b16 %v5885, %v5881
    %v5962 = vpack.c.b16 %v5886, %v5882
    %v5963 = vpack.c.b16 %v5887, %v5883
    %v5964 = vpack.c.b16 %v5888, %v5884
    %v5965 = vpack.c.b16 %v5893, %v5889
    %v5966 = vpack.c.b16 %v5894, %v5890
    %v5967 = vpack.c.b16 %v5895, %v5891
    %v5968 = vpack.c.b16 %v5896, %v5892
    %v5969 = vpack.c.b16 %v5901, %v5897
    %v5970 = vpack.c.b16 %v5902, %v5898
    %v5971 = vpack.c.b16 %v5903, %v5899
    %v5972 = vpack.c.b16 %v5904, %v5900
    %v5973 = vpack.c.b16 %v5909, %v5905
    %v5974 = vpack.c.b16 %v5910, %v5906
    %v5975 = vpack.c.b16 %v5911, %v5907
    %v5976 = vpack.c.b16 %v5912, %v5908
    %6041 = vmatpush.bf16.msra.mxu0 %v5941
    %6042 = vmatpush.bf16.msra.mxu0 %v5937
    %6043 = vmatpush.bf16.msra.mxu0 %v5933
    %6044 = vmatpush.bf16.msra.mxu0 %v5929
    %6045 = vmatpush.bf16.msra.mxu0 %v5925
    %6046 = vmatpush.bf16.msra.mxu0 %v5921
    %6047 = vmatpush.bf16.msra.mxu0 %v5917
    %6048 = vmatpush.bf16.msra.mxu0 %v5913
    %6049 = vmatmul.bf16.gmra.mxu0 %v4668
    %v6050 = vpop.f32.mrf.mxu0
    %v6051 = vadd.f32 %v5360, %v6050
    %v6052 = vpop.f32.mrf.mxu0
    %v6053 = vadd.f32 %v5362, %v6052
    %6054 = vmatmul.bf16.gmra.mxu0 %v4670
    %v6055 = vpop.f32.mrf.mxu0
    %v6056 = vadd.f32 %v5365, %v6055
    %v6057 = vpop.f32.mrf.mxu0
    %v6058 = vadd.f32 %v5367, %v6057
    %6059 = vmatmul.bf16.gmra.mxu0 %v4672
    %v6060 = vpop.f32.mrf.mxu0
    %v6061 = vadd.f32 %v5370, %v6060
    %v6062 = vpop.f32.mrf.mxu0
    %v6063 = vadd.f32 %v5372, %v6062
    %6064 = vmatmul.bf16.gmra.mxu0 %v4674
    %v6065 = vpop.f32.mrf.mxu0
    %v6066 = vadd.f32 %v5375, %v6065
    %v6067 = vpop.f32.mrf.mxu0
    %v6068 = vadd.f32 %v5377, %v6067
    %6069 = vmatmul.bf16.gmra.mxu0 %v4676
    %v6070 = vpop.f32.mrf.mxu0
    %v6071 = vadd.f32 %v5380, %v6070
    %v6072 = vpop.f32.mrf.mxu0
    %v6073 = vadd.f32 %v5382, %v6072
    %6074 = vmatmul.bf16.gmra.mxu0 %v4678
    %v6075 = vpop.f32.mrf.mxu0
    %v6076 = vadd.f32 %v5385, %v6075
    %v6077 = vpop.f32.mrf.mxu0
    %v6078 = vadd.f32 %v5387, %v6077
    %6079 = vmatmul.bf16.gmra.mxu0 %v4680
    %v6080 = vpop.f32.mrf.mxu0
    %v6081 = vadd.f32 %v5390, %v6080
    %v6082 = vpop.f32.mrf.mxu0
    %v6083 = vadd.f32 %v5392, %v6082
    %6084 = vmatmul.bf16.gmra.mxu0 %v4682
    %v6085 = vpop.f32.mrf.mxu0
    %v6086 = vadd.f32 %v5395, %v6085
    %v6087 = vpop.f32.mrf.mxu0
    %v6088 = vadd.f32 %v5397, %v6087
    %6089 = vmatmul.bf16.gmra.mxu0 %v4684
    %v6090 = vpop.f32.mrf.mxu0
    %v6091 = vadd.f32 %v5400, %v6090
    %v6092 = vpop.f32.mrf.mxu0
    %6093 = vdwg.mxu0
    %6094 = vmatpush.bf16.msra.mxu0 %v5973
    %6095 = vmatpush.bf16.msra.mxu0 %v5969
    %6096 = vmatpush.bf16.msra.mxu0 %v5965
    %6097 = vmatpush.bf16.msra.mxu0 %v5961
    %6098 = vmatpush.bf16.msra.mxu0 %v5957
    %6099 = vmatpush.bf16.msra.mxu0 %v5953
    %6100 = vmatpush.bf16.msra.mxu0 %v5949
    %6101 = vmatpush.bf16.msra.mxu0 %v5945
    %6102 = vmatmul.bf16.gmra.mxu0 %v4669
    %v6103 = vpop.f32.mrf.mxu0
    %v6104 = vadd.f32 %v6051, %v6103
    %v6105 = vpop.f32.mrf.mxu0
    %v6106 = vadd.f32 %v6053, %v6105
    %6107 = vmatmul.bf16.gmra.mxu0 %v4671
    %v6108 = vpop.f32.mrf.mxu0
    %v6109 = vadd.f32 %v6056, %v6108
    %v6110 = vpop.f32.mrf.mxu0
    %v6111 = vadd.f32 %v6058, %v6110
    %6112 = vmatmul.bf16.gmra.mxu0 %v4673
    %v6113 = vpop.f32.mrf.mxu0
    %v6114 = vadd.f32 %v6061, %v6113
    %v6115 = vpop.f32.mrf.mxu0
    %v6116 = vadd.f32 %v6063, %v6115
    %6117 = vmatmul.bf16.gmra.mxu0 %v4675
    %v6118 = vpop.f32.mrf.mxu0
    %v6119 = vadd.f32 %v6066, %v6118
    %v6120 = vpop.f32.mrf.mxu0
    %v6121 = vadd.f32 %v6068, %v6120
    %6122 = vmatmul.bf16.gmra.mxu0 %v4677
    %v6123 = vpop.f32.mrf.mxu0
    %v6124 = vadd.f32 %v6071, %v6123
    %v6125 = vpop.f32.mrf.mxu0
    %v6126 = vadd.f32 %v6073, %v6125
    %6127 = vmatmul.bf16.gmra.mxu0 %v4679
    %v6128 = vpop.f32.mrf.mxu0
    %v6129 = vadd.f32 %v6076, %v6128
    %v6130 = vpop.f32.mrf.mxu0
    %v6131 = vadd.f32 %v6078, %v6130
    %6132 = vmatmul.bf16.gmra.mxu0 %v4681
    %v6133 = vpop.f32.mrf.mxu0
    %v6134 = vadd.f32 %v6081, %v6133
    %v6135 = vpop.f32.mrf.mxu0
    %v6136 = vadd.f32 %v6083, %v6135
    %6137 = vmatmul.bf16.gmra.mxu0 %v4683
    %v6138 = vpop.f32.mrf.mxu0
    %v6139 = vadd.f32 %v6086, %v6138
    %v6140 = vpop.f32.mrf.mxu0
    %v6141 = vadd.f32 %v6088, %v6140
    %6142 = vmatmul.bf16.gmra.mxu0 %v4685
    %v6143 = vpop.f32.mrf.mxu0
    %v6144 = vadd.f32 %v6091, %v6143
    %v6145 = vpop.f32.mrf.mxu0
    %6146 = vdwg.mxu0
    %6147 = vmatpush.bf16.msra.mxu0 %v5942
    %6148 = vmatpush.bf16.msra.mxu0 %v5938
    %6149 = vmatpush.bf16.msra.mxu0 %v5934
    %6150 = vmatpush.bf16.msra.mxu0 %v5930
    %6151 = vmatpush.bf16.msra.mxu0 %v5926
    %6152 = vmatpush.bf16.msra.mxu0 %v5922
    %6153 = vmatpush.bf16.msra.mxu0 %v5918
    %6154 = vmatpush.bf16.msra.mxu0 %v5914
    %6155 = vmatmul.bf16.gmra.mxu0 %v4668
    %v6156 = vpop.f32.mrf.mxu0
    %v6157 = vadd.f32 %v5466, %v6156
    %v6158 = vpop.f32.mrf.mxu0
    %v6159 = vadd.f32 %v5468, %v6158
    %6160 = vmatmul.bf16.gmra.mxu0 %v4670
    %v6161 = vpop.f32.mrf.mxu0
    %v6162 = vadd.f32 %v5471, %v6161
    %v6163 = vpop.f32.mrf.mxu0
    %v6164 = vadd.f32 %v5473, %v6163
    %6165 = vmatmul.bf16.gmra.mxu0 %v4672
    %v6166 = vpop.f32.mrf.mxu0
    %v6167 = vadd.f32 %v5476, %v6166
    %v6168 = vpop.f32.mrf.mxu0
    %v6169 = vadd.f32 %v5478, %v6168
    %6170 = vmatmul.bf16.gmra.mxu0 %v4674
    %v6171 = vpop.f32.mrf.mxu0
    %v6172 = vadd.f32 %v5481, %v6171
    %v6173 = vpop.f32.mrf.mxu0
    %v6174 = vadd.f32 %v5483, %v6173
    %6175 = vmatmul.bf16.gmra.mxu0 %v4676
    %v6176 = vpop.f32.mrf.mxu0
    %v6177 = vadd.f32 %v5486, %v6176
    %v6178 = vpop.f32.mrf.mxu0
    %v6179 = vadd.f32 %v5488, %v6178
    %6180 = vmatmul.bf16.gmra.mxu0 %v4678
    %v6181 = vpop.f32.mrf.mxu0
    %v6182 = vadd.f32 %v5491, %v6181
    %v6183 = vpop.f32.mrf.mxu0
    %v6184 = vadd.f32 %v5493, %v6183
    %6185 = vmatmul.bf16.gmra.mxu0 %v4680
    %v6186 = vpop.f32.mrf.mxu0
    %v6187 = vadd.f32 %v5496, %v6186
    %v6188 = vpop.f32.mrf.mxu0
    %v6189 = vadd.f32 %v5498, %v6188
    %6190 = vmatmul.bf16.gmra.mxu0 %v4682
    %v6191 = vpop.f32.mrf.mxu0
    %v6192 = vadd.f32 %v5501, %v6191
    %v6193 = vpop.f32.mrf.mxu0
    %v6194 = vadd.f32 %v5503, %v6193
    %6195 = vmatmul.bf16.gmra.mxu0 %v4684
    %v6196 = vpop.f32.mrf.mxu0
    %v6197 = vadd.f32 %v5506, %v6196
    %v6198 = vpop.f32.mrf.mxu0
    %6199 = vdwg.mxu0
    %6200 = vmatpush.bf16.msra.mxu0 %v5974
    %6201 = vmatpush.bf16.msra.mxu0 %v5970
    %6202 = vmatpush.bf16.msra.mxu0 %v5966
    %6203 = vmatpush.bf16.msra.mxu0 %v5962
    %6204 = vmatpush.bf16.msra.mxu0 %v5958
    %6205 = vmatpush.bf16.msra.mxu0 %v5954
    %6206 = vmatpush.bf16.msra.mxu0 %v5950
    %6207 = vmatpush.bf16.msra.mxu0 %v5946
    %6208 = vmatmul.bf16.gmra.mxu0 %v4669
    %v6209 = vpop.f32.mrf.mxu0
    %v6210 = vadd.f32 %v6157, %v6209
    %v6211 = vpop.f32.mrf.mxu0
    %v6212 = vadd.f32 %v6159, %v6211
    %6213 = vmatmul.bf16.gmra.mxu0 %v4671
    %v6214 = vpop.f32.mrf.mxu0
    %v6215 = vadd.f32 %v6162, %v6214
    %v6216 = vpop.f32.mrf.mxu0
    %v6217 = vadd.f32 %v6164, %v6216
    %6218 = vmatmul.bf16.gmra.mxu0 %v4673
    %v6219 = vpop.f32.mrf.mxu0
    %v6220 = vadd.f32 %v6167, %v6219
    %v6221 = vpop.f32.mrf.mxu0
    %v6222 = vadd.f32 %v6169, %v6221
    %6223 = vmatmul.bf16.gmra.mxu0 %v4675
    %v6224 = vpop.f32.mrf.mxu0
    %v6225 = vadd.f32 %v6172, %v6224
    %v6226 = vpop.f32.mrf.mxu0
    %v6227 = vadd.f32 %v6174, %v6226
    %6228 = vmatmul.bf16.gmra.mxu0 %v4677
    %v6229 = vpop.f32.mrf.mxu0
    %v6230 = vadd.f32 %v6177, %v6229
    %v6231 = vpop.f32.mrf.mxu0
    %v6232 = vadd.f32 %v6179, %v6231
    %6233 = vmatmul.bf16.gmra.mxu0 %v4679
    %v6234 = vpop.f32.mrf.mxu0
    %v6235 = vadd.f32 %v6182, %v6234
    %v6236 = vpop.f32.mrf.mxu0
    %v6237 = vadd.f32 %v6184, %v6236
    %6238 = vmatmul.bf16.gmra.mxu0 %v4681
    %v6239 = vpop.f32.mrf.mxu0
    %v6240 = vadd.f32 %v6187, %v6239
    %v6241 = vpop.f32.mrf.mxu0
    %v6242 = vadd.f32 %v6189, %v6241
    %6243 = vmatmul.bf16.gmra.mxu0 %v4683
    %v6244 = vpop.f32.mrf.mxu0
    %v6245 = vadd.f32 %v6192, %v6244
    %v6246 = vpop.f32.mrf.mxu0
    %v6247 = vadd.f32 %v6194, %v6246
    %6248 = vmatmul.bf16.gmra.mxu0 %v4685
    %v6249 = vpop.f32.mrf.mxu0
    %v6250 = vadd.f32 %v6197, %v6249
    %v6251 = vpop.f32.mrf.mxu0
    %6252 = vdwg.mxu0
    %6253 = vmatpush.bf16.msra.mxu0 %v5943
    %6254 = vmatpush.bf16.msra.mxu0 %v5939
    %6255 = vmatpush.bf16.msra.mxu0 %v5935
    %6256 = vmatpush.bf16.msra.mxu0 %v5931
    %6257 = vmatpush.bf16.msra.mxu0 %v5927
    %6258 = vmatpush.bf16.msra.mxu0 %v5923
    %6259 = vmatpush.bf16.msra.mxu0 %v5919
    %6260 = vmatpush.bf16.msra.mxu0 %v5915
    %6261 = vmatmul.bf16.gmra.mxu0 %v4668
    %v6262 = vpop.f32.mrf.mxu0
    %v6263 = vadd.f32 %v5572, %v6262
    %v6264 = vpop.f32.mrf.mxu0
    %v6265 = vadd.f32 %v5574, %v6264
    %6266 = vmatmul.bf16.gmra.mxu0 %v4670
    %v6267 = vpop.f32.mrf.mxu0
    %v6268 = vadd.f32 %v5577, %v6267
    %v6269 = vpop.f32.mrf.mxu0
    %v6270 = vadd.f32 %v5579, %v6269
    %6271 = vmatmul.bf16.gmra.mxu0 %v4672
    %v6272 = vpop.f32.mrf.mxu0
    %v6273 = vadd.f32 %v5582, %v6272
    %v6274 = vpop.f32.mrf.mxu0
    %v6275 = vadd.f32 %v5584, %v6274
    %6276 = vmatmul.bf16.gmra.mxu0 %v4674
    %v6277 = vpop.f32.mrf.mxu0
    %v6278 = vadd.f32 %v5587, %v6277
    %v6279 = vpop.f32.mrf.mxu0
    %v6280 = vadd.f32 %v5589, %v6279
    %6281 = vmatmul.bf16.gmra.mxu0 %v4676
    %v6282 = vpop.f32.mrf.mxu0
    %v6283 = vadd.f32 %v5592, %v6282
    %v6284 = vpop.f32.mrf.mxu0
    %v6285 = vadd.f32 %v5594, %v6284
    %6286 = vmatmul.bf16.gmra.mxu0 %v4678
    %v6287 = vpop.f32.mrf.mxu0
    %v6288 = vadd.f32 %v5597, %v6287
    %v6289 = vpop.f32.mrf.mxu0
    %v6290 = vadd.f32 %v5599, %v6289
    %6291 = vmatmul.bf16.gmra.mxu0 %v4680
    %v6292 = vpop.f32.mrf.mxu0
    %v6293 = vadd.f32 %v5602, %v6292
    %v6294 = vpop.f32.mrf.mxu0
    %v6295 = vadd.f32 %v5604, %v6294
    %6296 = vmatmul.bf16.gmra.mxu0 %v4682
    %v6297 = vpop.f32.mrf.mxu0
    %v6298 = vadd.f32 %v5607, %v6297
    %v6299 = vpop.f32.mrf.mxu0
    %v6300 = vadd.f32 %v5609, %v6299
    %6301 = vmatmul.bf16.gmra.mxu0 %v4684
    %v6302 = vpop.f32.mrf.mxu0
    %v6303 = vadd.f32 %v5612, %v6302
    %v6304 = vpop.f32.mrf.mxu0
    %6305 = vdwg.mxu0
    %6306 = vmatpush.bf16.msra.mxu0 %v5975
    %6307 = vmatpush.bf16.msra.mxu0 %v5971
    %6308 = vmatpush.bf16.msra.mxu0 %v5967
    %6309 = vmatpush.bf16.msra.mxu0 %v5963
    %6310 = vmatpush.bf16.msra.mxu0 %v5959
    %6311 = vmatpush.bf16.msra.mxu0 %v5955
    %6312 = vmatpush.bf16.msra.mxu0 %v5951
    %6313 = vmatpush.bf16.msra.mxu0 %v5947
    %6314 = vmatmul.bf16.gmra.mxu0 %v4669
    %v6315 = vpop.f32.mrf.mxu0
    %v6316 = vadd.f32 %v6263, %v6315
    %v6317 = vpop.f32.mrf.mxu0
    %v6318 = vadd.f32 %v6265, %v6317
    %6319 = vmatmul.bf16.gmra.mxu0 %v4671
    %v6320 = vpop.f32.mrf.mxu0
    %v6321 = vadd.f32 %v6268, %v6320
    %v6322 = vpop.f32.mrf.mxu0
    %v6323 = vadd.f32 %v6270, %v6322
    %6324 = vmatmul.bf16.gmra.mxu0 %v4673
    %v6325 = vpop.f32.mrf.mxu0
    %v6326 = vadd.f32 %v6273, %v6325
    %v6327 = vpop.f32.mrf.mxu0
    %v6328 = vadd.f32 %v6275, %v6327
    %6329 = vmatmul.bf16.gmra.mxu0 %v4675
    %v6330 = vpop.f32.mrf.mxu0
    %v6331 = vadd.f32 %v6278, %v6330
    %v6332 = vpop.f32.mrf.mxu0
    %v6333 = vadd.f32 %v6280, %v6332
    %6334 = vmatmul.bf16.gmra.mxu0 %v4677
    %v6335 = vpop.f32.mrf.mxu0
    %v6336 = vadd.f32 %v6283, %v6335
    %v6337 = vpop.f32.mrf.mxu0
    %v6338 = vadd.f32 %v6285, %v6337
    %6339 = vmatmul.bf16.gmra.mxu0 %v4679
    %v6340 = vpop.f32.mrf.mxu0
    %v6341 = vadd.f32 %v6288, %v6340
    %v6342 = vpop.f32.mrf.mxu0
    %v6343 = vadd.f32 %v6290, %v6342
    %6344 = vmatmul.bf16.gmra.mxu0 %v4681
    %v6345 = vpop.f32.mrf.mxu0
    %v6346 = vadd.f32 %v6293, %v6345
    %v6347 = vpop.f32.mrf.mxu0
    %v6348 = vadd.f32 %v6295, %v6347
    %6349 = vmatmul.bf16.gmra.mxu0 %v4683
    %v6350 = vpop.f32.mrf.mxu0
    %v6351 = vadd.f32 %v6298, %v6350
    %v6352 = vpop.f32.mrf.mxu0
    %v6353 = vadd.f32 %v6300, %v6352
    %6354 = vmatmul.bf16.gmra.mxu0 %v4685
    %v6355 = vpop.f32.mrf.mxu0
    %v6356 = vadd.f32 %v6303, %v6355
    %v6357 = vpop.f32.mrf.mxu0
    %6358 = vdwg.mxu0
    %6359 = vmatpush.bf16.msra.mxu0 %v5944
    %6360 = vmatpush.bf16.msra.mxu0 %v5940
    %6361 = vmatpush.bf16.msra.mxu0 %v5936
    %6362 = vmatpush.bf16.msra.mxu0 %v5932
    %6363 = vmatpush.bf16.msra.mxu0 %v5928
    %6364 = vmatpush.bf16.msra.mxu0 %v5924
    %6365 = vmatpush.bf16.msra.mxu0 %v5920
    %6366 = vmatpush.bf16.msra.mxu0 %v5916
    %6367 = vmatmul.bf16.gmra.mxu0 %v4668
    %v6368 = vpop.f32.mrf.mxu0
    %v6369 = vadd.f32 %v5678, %v6368
    %v6370 = vpop.f32.mrf.mxu0
    %v6371 = vadd.f32 %v5680, %v6370
    %6372 = vmatmul.bf16.gmra.mxu0 %v4670
    %v6373 = vpop.f32.mrf.mxu0
    %v6374 = vadd.f32 %v5683, %v6373
    %v6375 = vpop.f32.mrf.mxu0
    %v6376 = vadd.f32 %v5685, %v6375
    %6377 = vmatmul.bf16.gmra.mxu0 %v4672
    %v6378 = vpop.f32.mrf.mxu0
    %v6379 = vadd.f32 %v5688, %v6378
    %v6380 = vpop.f32.mrf.mxu0
    %v6381 = vadd.f32 %v5690, %v6380
    %6382 = vmatmul.bf16.gmra.mxu0 %v4674
    %v6383 = vpop.f32.mrf.mxu0
    %v6384 = vadd.f32 %v5693, %v6383
    %v6385 = vpop.f32.mrf.mxu0
    %v6386 = vadd.f32 %v5695, %v6385
    %6387 = vmatmul.bf16.gmra.mxu0 %v4676
    %v6388 = vpop.f32.mrf.mxu0
    %v6389 = vadd.f32 %v5698, %v6388
    %v6390 = vpop.f32.mrf.mxu0
    %v6391 = vadd.f32 %v5700, %v6390
    %6392 = vmatmul.bf16.gmra.mxu0 %v4678
    %v6393 = vpop.f32.mrf.mxu0
    %v6394 = vadd.f32 %v5703, %v6393
    %v6395 = vpop.f32.mrf.mxu0
    %v6396 = vadd.f32 %v5705, %v6395
    %6397 = vmatmul.bf16.gmra.mxu0 %v4680
    %v6398 = vpop.f32.mrf.mxu0
    %v6399 = vadd.f32 %v5708, %v6398
    %v6400 = vpop.f32.mrf.mxu0
    %v6401 = vadd.f32 %v5710, %v6400
    %6402 = vmatmul.bf16.gmra.mxu0 %v4682
    %v6403 = vpop.f32.mrf.mxu0
    %v6404 = vadd.f32 %v5713, %v6403
    %v6405 = vpop.f32.mrf.mxu0
    %v6406 = vadd.f32 %v5715, %v6405
    %6407 = vmatmul.bf16.gmra.mxu0 %v4684
    %v6408 = vpop.f32.mrf.mxu0
    %v6409 = vadd.f32 %v5718, %v6408
    %v6410 = vpop.f32.mrf.mxu0
    %6411 = vdwg.mxu0
    %6412 = vmatpush.bf16.msra.mxu0 %v5976
    %6413 = vmatpush.bf16.msra.mxu0 %v5972
    %6414 = vmatpush.bf16.msra.mxu0 %v5968
    %6415 = vmatpush.bf16.msra.mxu0 %v5964
    %6416 = vmatpush.bf16.msra.mxu0 %v5960
    %6417 = vmatpush.bf16.msra.mxu0 %v5956
    %6418 = vmatpush.bf16.msra.mxu0 %v5952
    %6419 = vmatpush.bf16.msra.mxu0 %v5948
    %6420 = vmatmul.bf16.gmra.mxu0 %v4669
    %v6421 = vpop.f32.mrf.mxu0
    %v6422 = vadd.f32 %v6369, %v6421
    %v6423 = vpop.f32.mrf.mxu0
    %v6424 = vadd.f32 %v6371, %v6423
    %6425 = vmatmul.bf16.gmra.mxu0 %v4671
    %v6426 = vpop.f32.mrf.mxu0
    %v6427 = vadd.f32 %v6374, %v6426
    %v6428 = vpop.f32.mrf.mxu0
    %v6429 = vadd.f32 %v6376, %v6428
    %6430 = vmatmul.bf16.gmra.mxu0 %v4673
    %v6431 = vpop.f32.mrf.mxu0
    %v6432 = vadd.f32 %v6379, %v6431
    %v6433 = vpop.f32.mrf.mxu0
    %v6434 = vadd.f32 %v6381, %v6433
    %6435 = vmatmul.bf16.gmra.mxu0 %v4675
    %v6436 = vpop.f32.mrf.mxu0
    %v6437 = vadd.f32 %v6384, %v6436
    %v6438 = vpop.f32.mrf.mxu0
    %v6439 = vadd.f32 %v6386, %v6438
    %6440 = vmatmul.bf16.gmra.mxu0 %v4677
    %v6441 = vpop.f32.mrf.mxu0
    %v6442 = vadd.f32 %v6389, %v6441
    %v6443 = vpop.f32.mrf.mxu0
    %v6444 = vadd.f32 %v6391, %v6443
    %6445 = vmatmul.bf16.gmra.mxu0 %v4679
    %v6446 = vpop.f32.mrf.mxu0
    %v6447 = vadd.f32 %v6394, %v6446
    %v6448 = vpop.f32.mrf.mxu0
    %v6449 = vadd.f32 %v6396, %v6448
    %6450 = vmatmul.bf16.gmra.mxu0 %v4681
    %v6451 = vpop.f32.mrf.mxu0
    %v6452 = vadd.f32 %v6399, %v6451
    %v6453 = vpop.f32.mrf.mxu0
    %v6454 = vadd.f32 %v6401, %v6453
    %6455 = vmatmul.bf16.gmra.mxu0 %v4683
    %v6456 = vpop.f32.mrf.mxu0
    %v6457 = vadd.f32 %v6404, %v6456
    %v6458 = vpop.f32.mrf.mxu0
    %v6459 = vadd.f32 %v6406, %v6458
    %6460 = vmatmul.bf16.gmra.mxu0 %v4685
    %v6461 = vpop.f32.mrf.mxu0
    %v6462 = vadd.f32 %v6409, %v6461
    %v6463 = vpop.f32.mrf.mxu0
    %6464 = vdwg.mxu0
    %s6465 = scalar_lea.vmem [#allocation4], 1024
    %v6466 = vld [vmem:[%s6465] sm:$0xff]
    %v6467 = vld [vmem:[%s6465 + $0x8] sm:$0xff]
    %v6468 = vld [vmem:[%s6465 + $0x10] sm:$0xff]
    %v6469 = vld [vmem:[%s6465 + $0x18] sm:$0xff]
    %v6470 = vld [vmem:[%s6465 + $0x20] sm:$0xff]
    %v6471 = vld [vmem:[%s6465 + $0x28] sm:$0xff]
    %v6472 = vld [vmem:[%s6465 + $0x30] sm:$0xff]
    %v6473 = vld [vmem:[%s6465 + $0x38] sm:$0xff]
    %v6474 = vld [vmem:[%s6465 + $0x40] sm:$0xff]
    %v6475 = vld [vmem:[%s6465 + $0x48] sm:$0xff]
    %v6476 = vld [vmem:[%s6465 + $0x50] sm:$0xff]
    %v6477 = vld [vmem:[%s6465 + $0x58] sm:$0xff]
    %v6478 = vld [vmem:[%s6465 + $0x60] sm:$0xff]
    %v6479 = vld [vmem:[%s6465 + $0x68] sm:$0xff]
    %v6480 = vld [vmem:[%s6465 + $0x70] sm:$0xff]
    %v6481 = vld [vmem:[%s6465 + $0x78] sm:$0xff]
    %v6482 = vld [vmem:[%s6465 + $0x80] sm:$0xff]
    %v6483 = vld [vmem:[%s6465 + $0x88] sm:$0xff]
    %v6484 = vld [vmem:[%s6465 + $0x90] sm:$0xff]
    %v6485 = vld [vmem:[%s6465 + $0x98] sm:$0xff]
    %v6486 = vld [vmem:[%s6465 + $0xa0] sm:$0xff]
    %v6487 = vld [vmem:[%s6465 + $0xa8] sm:$0xff]
    %v6488 = vld [vmem:[%s6465 + $0xb0] sm:$0xff]
    %v6489 = vld [vmem:[%s6465 + $0xb8] sm:$0xff]
    %v6490 = vld [vmem:[%s6465 + $0xc0] sm:$0xff]
    %v6491 = vld [vmem:[%s6465 + $0xc8] sm:$0xff]
    %v6492 = vld [vmem:[%s6465 + $0xd0] sm:$0xff]
    %v6493 = vld [vmem:[%s6465 + $0xd8] sm:$0xff]
    %v6494 = vld [vmem:[%s6465 + $0xe0] sm:$0xff]
    %v6495 = vld [vmem:[%s6465 + $0xe8] sm:$0xff]
    %v6496 = vld [vmem:[%s6465 + $0xf0] sm:$0xff]
    %v6497 = vld [vmem:[%s6465 + $0xf8] sm:$0xff]
    %v6498 = vld [vmem:[%s6465 + $0x100] sm:$0xff]
    %v6499 = vld [vmem:[%s6465 + $0x108] sm:$0xff]
    %v6500 = vld [vmem:[%s6465 + $0x110] sm:$0xff]
    %v6501 = vld [vmem:[%s6465 + $0x118] sm:$0xff]
    %v6502 = vld [vmem:[%s6465 + $0x120] sm:$0xff]
    %v6503 = vld [vmem:[%s6465 + $0x128] sm:$0xff]
    %v6504 = vld [vmem:[%s6465 + $0x130] sm:$0xff]
    %v6505 = vld [vmem:[%s6465 + $0x138] sm:$0xff]
    %v6506 = vld [vmem:[%s6465 + $0x140] sm:$0xff]
    %v6507 = vld [vmem:[%s6465 + $0x148] sm:$0xff]
    %v6508 = vld [vmem:[%s6465 + $0x150] sm:$0xff]
    %v6509 = vld [vmem:[%s6465 + $0x158] sm:$0xff]
    %v6510 = vld [vmem:[%s6465 + $0x160] sm:$0xff]
    %v6511 = vld [vmem:[%s6465 + $0x168] sm:$0xff]
    %v6512 = vld [vmem:[%s6465 + $0x170] sm:$0xff]
    %v6513 = vld [vmem:[%s6465 + $0x178] sm:$0xff]
    %v6514 = vld [vmem:[%s6465 + $0x180] sm:$0xff]
    %v6515 = vld [vmem:[%s6465 + $0x188] sm:$0xff]
    %v6516 = vld [vmem:[%s6465 + $0x190] sm:$0xff]
    %v6517 = vld [vmem:[%s6465 + $0x198] sm:$0xff]
    %v6518 = vld [vmem:[%s6465 + $0x1a0] sm:$0xff]
    %v6519 = vld [vmem:[%s6465 + $0x1a8] sm:$0xff]
    %v6520 = vld [vmem:[%s6465 + $0x1b0] sm:$0xff]
    %v6521 = vld [vmem:[%s6465 + $0x1b8] sm:$0xff]
    %v6522 = vld [vmem:[%s6465 + $0x1c0] sm:$0xff]
    %v6523 = vld [vmem:[%s6465 + $0x1c8] sm:$0xff]
    %v6524 = vld [vmem:[%s6465 + $0x1d0] sm:$0xff]
    %v6525 = vld [vmem:[%s6465 + $0x1d8] sm:$0xff]
    %v6526 = vld [vmem:[%s6465 + $0x1e0] sm:$0xff]
    %v6527 = vld [vmem:[%s6465 + $0x1e8] sm:$0xff]
    %v6528 = vld [vmem:[%s6465 + $0x1f0] sm:$0xff]
    %v6529 = vld [vmem:[%s6465 + $0x1f8] sm:$0xff]
    %v6548 = vrot.slane %v4668, 1
    %v6549 = vrot.slane %v4670, 1
    %v6550 = vsel %vm1265, %v6548, %v6549
    %v6551 = vrot.slane %v4669, 1
    %v6552 = vrot.slane %v4671, 1
    %v6553 = vsel %vm1265, %v6551, %v6552
    %v6554 = vrot.slane %v4672, 1
    %v6555 = vsel %vm1265, %v6549, %v6554
    %v6556 = vrot.slane %v4673, 1
    %v6557 = vsel %vm1265, %v6552, %v6556
    %v6558 = vrot.slane %v4674, 1
    %v6559 = vsel %vm1265, %v6554, %v6558
    %v6560 = vrot.slane %v4675, 1
    %v6561 = vsel %vm1265, %v6556, %v6560
    %v6562 = vrot.slane %v4676, 1
    %v6563 = vsel %vm1265, %v6558, %v6562
    %v6564 = vrot.slane %v4677, 1
    %v6565 = vsel %vm1265, %v6560, %v6564
    %v6566 = vrot.slane %v4678, 1
    %v6567 = vsel %vm1265, %v6562, %v6566
    %v6568 = vrot.slane %v4679, 1
    %v6569 = vsel %vm1265, %v6564, %v6568
    %v6570 = vrot.slane %v4680, 1
    %v6571 = vsel %vm1265, %v6566, %v6570
    %v6572 = vrot.slane %v4681, 1
    %v6573 = vsel %vm1265, %v6568, %v6572
    %v6574 = vrot.slane %v4682, 1
    %v6575 = vsel %vm1265, %v6570, %v6574
    %v6576 = vrot.slane %v4683, 1
    %v6577 = vsel %vm1265, %v6572, %v6576
    %v6578 = vrot.slane %v4750, 1
    %v6579 = vsel %vm1265, %v6574, %v6578
    %v6580 = vrot.slane %v4751, 1
    %v6581 = vsel %vm1265, %v6576, %v6580
    %v6664 = vunpack.c.l.b16 %v6466
    %v6665 = vunpack.c.h.b16 %v6466
    %v6666 = vunpack.c.l.b16 %v6467
    %v6667 = vunpack.c.h.b16 %v6467
    %v6668 = vunpack.c.l.b16 %v6468
    %v6669 = vunpack.c.h.b16 %v6468
    %v6670 = vunpack.c.l.b16 %v6469
    %v6671 = vunpack.c.h.b16 %v6469
    %v6672 = vunpack.c.l.b16 %v6470
    %v6673 = vunpack.c.h.b16 %v6470
    %v6674 = vunpack.c.l.b16 %v6471
    %v6675 = vunpack.c.h.b16 %v6471
    %v6676 = vunpack.c.l.b16 %v6472
    %v6677 = vunpack.c.h.b16 %v6472
    %v6678 = vunpack.c.l.b16 %v6473
    %v6679 = vunpack.c.h.b16 %v6473
    %v6680 = vunpack.c.l.b16 %v6474
    %v6681 = vunpack.c.h.b16 %v6474
    %v6682 = vunpack.c.l.b16 %v6475
    %v6683 = vunpack.c.h.b16 %v6475
    %v6684 = vunpack.c.l.b16 %v6476
    %v6685 = vunpack.c.h.b16 %v6476
    %v6686 = vunpack.c.l.b16 %v6477
    %v6687 = vunpack.c.h.b16 %v6477
    %v6688 = vunpack.c.l.b16 %v6478
    %v6689 = vunpack.c.h.b16 %v6478
    %v6690 = vunpack.c.l.b16 %v6479
    %v6691 = vunpack.c.h.b16 %v6479
    %v6692 = vunpack.c.l.b16 %v6480
    %v6693 = vunpack.c.h.b16 %v6480
    %v6694 = vunpack.c.l.b16 %v6481
    %v6695 = vunpack.c.h.b16 %v6481
    %v6696 = vunpack.c.l.b16 %v6482
    %v6697 = vunpack.c.h.b16 %v6482
    %v6698 = vunpack.c.l.b16 %v6483
    %v6699 = vunpack.c.h.b16 %v6483
    %v6700 = vunpack.c.l.b16 %v6484
    %v6701 = vunpack.c.h.b16 %v6484
    %v6702 = vunpack.c.l.b16 %v6485
    %v6703 = vunpack.c.h.b16 %v6485
    %v6704 = vunpack.c.l.b16 %v6486
    %v6705 = vunpack.c.h.b16 %v6486
    %v6706 = vunpack.c.l.b16 %v6487
    %v6707 = vunpack.c.h.b16 %v6487
    %v6708 = vunpack.c.l.b16 %v6488
    %v6709 = vunpack.c.h.b16 %v6488
    %v6710 = vunpack.c.l.b16 %v6489
    %v6711 = vunpack.c.h.b16 %v6489
    %v6712 = vunpack.c.l.b16 %v6490
    %v6713 = vunpack.c.h.b16 %v6490
    %v6714 = vunpack.c.l.b16 %v6491
    %v6715 = vunpack.c.h.b16 %v6491
    %v6716 = vunpack.c.l.b16 %v6492
    %v6717 = vunpack.c.h.b16 %v6492
    %v6718 = vunpack.c.l.b16 %v6493
    %v6719 = vunpack.c.h.b16 %v6493
    %v6720 = vunpack.c.l.b16 %v6494
    %v6721 = vunpack.c.h.b16 %v6494
    %v6722 = vunpack.c.l.b16 %v6495
    %v6723 = vunpack.c.h.b16 %v6495
    %v6724 = vunpack.c.l.b16 %v6496
    %v6725 = vunpack.c.h.b16 %v6496
    %v6726 = vunpack.c.l.b16 %v6497
    %v6727 = vunpack.c.h.b16 %v6497
    %v6728 = vunpack.c.l.b16 %v6498
    %v6729 = vunpack.c.h.b16 %v6498
    %v6730 = vunpack.c.l.b16 %v6499
    %v6731 = vunpack.c.h.b16 %v6499
    %v6732 = vunpack.c.l.b16 %v6500
    %v6733 = vunpack.c.h.b16 %v6500
    %v6734 = vunpack.c.l.b16 %v6501
    %v6735 = vunpack.c.h.b16 %v6501
    %v6736 = vunpack.c.l.b16 %v6502
    %v6737 = vunpack.c.h.b16 %v6502
    %v6738 = vunpack.c.l.b16 %v6503
    %v6739 = vunpack.c.h.b16 %v6503
    %v6740 = vunpack.c.l.b16 %v6504
    %v6741 = vunpack.c.h.b16 %v6504
    %v6742 = vunpack.c.l.b16 %v6505
    %v6743 = vunpack.c.h.b16 %v6505
    %v6744 = vunpack.c.l.b16 %v6506
    %v6745 = vunpack.c.h.b16 %v6506
    %v6746 = vunpack.c.l.b16 %v6507
    %v6747 = vunpack.c.h.b16 %v6507
    %v6748 = vunpack.c.l.b16 %v6508
    %v6749 = vunpack.c.h.b16 %v6508
    %v6750 = vunpack.c.l.b16 %v6509
    %v6751 = vunpack.c.h.b16 %v6509
    %v6752 = vunpack.c.l.b16 %v6510
    %v6753 = vunpack.c.h.b16 %v6510
    %v6754 = vunpack.c.l.b16 %v6511
    %v6755 = vunpack.c.h.b16 %v6511
    %v6756 = vunpack.c.l.b16 %v6512
    %v6757 = vunpack.c.h.b16 %v6512
    %v6758 = vunpack.c.l.b16 %v6513
    %v6759 = vunpack.c.h.b16 %v6513
    %v6760 = vunpack.c.l.b16 %v6514
    %v6761 = vunpack.c.h.b16 %v6514
    %v6762 = vunpack.c.l.b16 %v6515
    %v6763 = vunpack.c.h.b16 %v6515
    %v6764 = vunpack.c.l.b16 %v6516
    %v6765 = vunpack.c.h.b16 %v6516
    %v6766 = vunpack.c.l.b16 %v6517
    %v6767 = vunpack.c.h.b16 %v6517
    %v6768 = vunpack.c.l.b16 %v6518
    %v6769 = vunpack.c.h.b16 %v6518
    %v6770 = vunpack.c.l.b16 %v6519
    %v6771 = vunpack.c.h.b16 %v6519
    %v6772 = vunpack.c.l.b16 %v6520
    %v6773 = vunpack.c.h.b16 %v6520
    %v6774 = vunpack.c.l.b16 %v6521
    %v6775 = vunpack.c.h.b16 %v6521
    %v6776 = vunpack.c.l.b16 %v6522
    %v6777 = vunpack.c.h.b16 %v6522
    %v6778 = vunpack.c.l.b16 %v6523
    %v6779 = vunpack.c.h.b16 %v6523
    %v6780 = vunpack.c.l.b16 %v6524
    %v6781 = vunpack.c.h.b16 %v6524
    %v6782 = vunpack.c.l.b16 %v6525
    %v6783 = vunpack.c.h.b16 %v6525
    %v6784 = vunpack.c.l.b16 %v6526
    %v6785 = vunpack.c.h.b16 %v6526
    %v6786 = vunpack.c.l.b16 %v6527
    %v6787 = vunpack.c.h.b16 %v6527
    %v6788 = vunpack.c.l.b16 %v6528
    %v6789 = vunpack.c.h.b16 %v6528
    %v6790 = vunpack.c.l.b16 %v6529
    %v6791 = vunpack.c.h.b16 %v6529
    %v6792 = vpack.c.b16 %v6668, %v6664
    %v6793 = vpack.c.b16 %v6669, %v6665
    %v6794 = vpack.c.b16 %v6670, %v6666
    %v6795 = vpack.c.b16 %v6671, %v6667
    %v6796 = vpack.c.b16 %v6676, %v6672
    %v6797 = vpack.c.b16 %v6677, %v6673
    %v6798 = vpack.c.b16 %v6678, %v6674
    %v6799 = vpack.c.b16 %v6679, %v6675
    %v6800 = vpack.c.b16 %v6684, %v6680
    %v6801 = vpack.c.b16 %v6685, %v6681
    %v6802 = vpack.c.b16 %v6686, %v6682
    %v6803 = vpack.c.b16 %v6687, %v6683
    %v6804 = vpack.c.b16 %v6692, %v6688
    %v6805 = vpack.c.b16 %v6693, %v6689
    %v6806 = vpack.c.b16 %v6694, %v6690
    %v6807 = vpack.c.b16 %v6695, %v6691
    %v6808 = vpack.c.b16 %v6700, %v6696
    %v6809 = vpack.c.b16 %v6701, %v6697
    %v6810 = vpack.c.b16 %v6702, %v6698
    %v6811 = vpack.c.b16 %v6703, %v6699
    %v6812 = vpack.c.b16 %v6708, %v6704
    %v6813 = vpack.c.b16 %v6709, %v6705
    %v6814 = vpack.c.b16 %v6710, %v6706
    %v6815 = vpack.c.b16 %v6711, %v6707
    %v6816 = vpack.c.b16 %v6716, %v6712
    %v6817 = vpack.c.b16 %v6717, %v6713
    %v6818 = vpack.c.b16 %v6718, %v6714
    %v6819 = vpack.c.b16 %v6719, %v6715
    %v6820 = vpack.c.b16 %v6724, %v6720
    %v6821 = vpack.c.b16 %v6725, %v6721
    %v6822 = vpack.c.b16 %v6726, %v6722
    %v6823 = vpack.c.b16 %v6727, %v6723
    %v6824 = vpack.c.b16 %v6732, %v6728
    %v6825 = vpack.c.b16 %v6733, %v6729
    %v6826 = vpack.c.b16 %v6734, %v6730
    %v6827 = vpack.c.b16 %v6735, %v6731
    %v6828 = vpack.c.b16 %v6740, %v6736
    %v6829 = vpack.c.b16 %v6741, %v6737
    %v6830 = vpack.c.b16 %v6742, %v6738
    %v6831 = vpack.c.b16 %v6743, %v6739
    %v6832 = vpack.c.b16 %v6748, %v6744
    %v6833 = vpack.c.b16 %v6749, %v6745
    %v6834 = vpack.c.b16 %v6750, %v6746
    %v6835 = vpack.c.b16 %v6751, %v6747
    %v6836 = vpack.c.b16 %v6756, %v6752
    %v6837 = vpack.c.b16 %v6757, %v6753
    %v6838 = vpack.c.b16 %v6758, %v6754
    %v6839 = vpack.c.b16 %v6759, %v6755
    %v6840 = vpack.c.b16 %v6764, %v6760
    %v6841 = vpack.c.b16 %v6765, %v6761
    %v6842 = vpack.c.b16 %v6766, %v6762
    %v6843 = vpack.c.b16 %v6767, %v6763
    %v6844 = vpack.c.b16 %v6772, %v6768
    %v6845 = vpack.c.b16 %v6773, %v6769
    %v6846 = vpack.c.b16 %v6774, %v6770
    %v6847 = vpack.c.b16 %v6775, %v6771
    %v6848 = vpack.c.b16 %v6780, %v6776
    %v6849 = vpack.c.b16 %v6781, %v6777
    %v6850 = vpack.c.b16 %v6782, %v6778
    %v6851 = vpack.c.b16 %v6783, %v6779
    %v6852 = vpack.c.b16 %v6788, %v6784
    %v6853 = vpack.c.b16 %v6789, %v6785
    %v6854 = vpack.c.b16 %v6790, %v6786
    %v6855 = vpack.c.b16 %v6791, %v6787
    %6920 = vmatpush.bf16.msra.mxu0 %v6820
    %6921 = vmatpush.bf16.msra.mxu0 %v6816
    %6922 = vmatpush.bf16.msra.mxu0 %v6812
    %6923 = vmatpush.bf16.msra.mxu0 %v6808
    %6924 = vmatpush.bf16.msra.mxu0 %v6804
    %6925 = vmatpush.bf16.msra.mxu0 %v6800
    %6926 = vmatpush.bf16.msra.mxu0 %v6796
    %6927 = vmatpush.bf16.msra.mxu0 %v6792
    %6928 = vmatmul.bf16.gmra.mxu0 %v6550
    %v6929 = vpop.f32.mrf.mxu0
    %v6930 = vadd.f32 0.0, %v6929
    %v6931 = vpop.f32.mrf.mxu0
    %v6932 = vadd.f32 0.0, %v6931
    %6933 = vmatmul.bf16.gmra.mxu0 %v6555
    %v6934 = vpop.f32.mrf.mxu0
    %v6935 = vadd.f32 0.0, %v6934
    %v6936 = vpop.f32.mrf.mxu0
    %v6937 = vadd.f32 0.0, %v6936
    %6938 = vmatmul.bf16.gmra.mxu0 %v6559
    %v6939 = vpop.f32.mrf.mxu0
    %v6940 = vadd.f32 0.0, %v6939
    %v6941 = vpop.f32.mrf.mxu0
    %v6942 = vadd.f32 0.0, %v6941
    %6943 = vmatmul.bf16.gmra.mxu0 %v6563
    %v6944 = vpop.f32.mrf.mxu0
    %v6945 = vadd.f32 0.0, %v6944
    %v6946 = vpop.f32.mrf.mxu0
    %v6947 = vadd.f32 0.0, %v6946
    %6948 = vmatmul.bf16.gmra.mxu0 %v6567
    %v6949 = vpop.f32.mrf.mxu0
    %v6950 = vadd.f32 0.0, %v6949
    %v6951 = vpop.f32.mrf.mxu0
    %v6952 = vadd.f32 0.0, %v6951
    %6953 = vmatmul.bf16.gmra.mxu0 %v6571
    %v6954 = vpop.f32.mrf.mxu0
    %v6955 = vadd.f32 0.0, %v6954
    %v6956 = vpop.f32.mrf.mxu0
    %v6957 = vadd.f32 0.0, %v6956
    %6958 = vmatmul.bf16.gmra.mxu0 %v6575
    %v6959 = vpop.f32.mrf.mxu0
    %v6960 = vadd.f32 0.0, %v6959
    %v6961 = vpop.f32.mrf.mxu0
    %v6962 = vadd.f32 0.0, %v6961
    %6963 = vmatmul.bf16.gmra.mxu0 %v6579
    %v6964 = vpop.f32.mrf.mxu0
    %v6965 = vadd.f32 0.0, %v6964
    %v6966 = vpop.f32.mrf.mxu0
    %v6967 = vadd.f32 0.0, %v6966
    %6968 = vmatmul.bf16.gmra.mxu0 %v6578
    %v6969 = vpop.f32.mrf.mxu0
    %v6970 = vadd.f32 0.0, %v6969
    %v6971 = vpop.f32.mrf.mxu0
    %6972 = vdwg.mxu0
    %6973 = vmatpush.bf16.msra.mxu0 %v6852
    %6974 = vmatpush.bf16.msra.mxu0 %v6848
    %6975 = vmatpush.bf16.msra.mxu0 %v6844
    %6976 = vmatpush.bf16.msra.mxu0 %v6840
    %6977 = vmatpush.bf16.msra.mxu0 %v6836
    %6978 = vmatpush.bf16.msra.mxu0 %v6832
    %6979 = vmatpush.bf16.msra.mxu0 %v6828
    %6980 = vmatpush.bf16.msra.mxu0 %v6824
    %6981 = vmatmul.bf16.gmra.mxu0 %v6553
    %v6982 = vpop.f32.mrf.mxu0
    %v6983 = vadd.f32 %v6930, %v6982
    %v6984 = vpop.f32.mrf.mxu0
    %v6985 = vadd.f32 %v6932, %v6984
    %6986 = vmatmul.bf16.gmra.mxu0 %v6557
    %v6987 = vpop.f32.mrf.mxu0
    %v6988 = vadd.f32 %v6935, %v6987
    %v6989 = vpop.f32.mrf.mxu0
    %v6990 = vadd.f32 %v6937, %v6989
    %6991 = vmatmul.bf16.gmra.mxu0 %v6561
    %v6992 = vpop.f32.mrf.mxu0
    %v6993 = vadd.f32 %v6940, %v6992
    %v6994 = vpop.f32.mrf.mxu0
    %v6995 = vadd.f32 %v6942, %v6994
    %6996 = vmatmul.bf16.gmra.mxu0 %v6565
    %v6997 = vpop.f32.mrf.mxu0
    %v6998 = vadd.f32 %v6945, %v6997
    %v6999 = vpop.f32.mrf.mxu0
    %v7000 = vadd.f32 %v6947, %v6999
    %7001 = vmatmul.bf16.gmra.mxu0 %v6569
    %v7002 = vpop.f32.mrf.mxu0
    %v7003 = vadd.f32 %v6950, %v7002
    %v7004 = vpop.f32.mrf.mxu0
    %v7005 = vadd.f32 %v6952, %v7004
    %7006 = vmatmul.bf16.gmra.mxu0 %v6573
    %v7007 = vpop.f32.mrf.mxu0
    %v7008 = vadd.f32 %v6955, %v7007
    %v7009 = vpop.f32.mrf.mxu0
    %v7010 = vadd.f32 %v6957, %v7009
    %7011 = vmatmul.bf16.gmra.mxu0 %v6577
    %v7012 = vpop.f32.mrf.mxu0
    %v7013 = vadd.f32 %v6960, %v7012
    %v7014 = vpop.f32.mrf.mxu0
    %v7015 = vadd.f32 %v6962, %v7014
    %7016 = vmatmul.bf16.gmra.mxu0 %v6581
    %v7017 = vpop.f32.mrf.mxu0
    %v7018 = vadd.f32 %v6965, %v7017
    %v7019 = vpop.f32.mrf.mxu0
    %v7020 = vadd.f32 %v6967, %v7019
    %7021 = vmatmul.bf16.gmra.mxu0 %v6580
    %v7022 = vpop.f32.mrf.mxu0
    %v7023 = vadd.f32 %v6970, %v7022
    %v7024 = vpop.f32.mrf.mxu0
    %7025 = vdwg.mxu0
    %7026 = vmatpush.bf16.msra.mxu0 %v6821
    %7027 = vmatpush.bf16.msra.mxu0 %v6817
    %7028 = vmatpush.bf16.msra.mxu0 %v6813
    %7029 = vmatpush.bf16.msra.mxu0 %v6809
    %7030 = vmatpush.bf16.msra.mxu0 %v6805
    %7031 = vmatpush.bf16.msra.mxu0 %v6801
    %7032 = vmatpush.bf16.msra.mxu0 %v6797
    %7033 = vmatpush.bf16.msra.mxu0 %v6793
    %7034 = vmatmul.bf16.gmra.mxu0 %v6550
    %v7035 = vpop.f32.mrf.mxu0
    %v7036 = vadd.f32 0.0, %v7035
    %v7037 = vpop.f32.mrf.mxu0
    %v7038 = vadd.f32 0.0, %v7037
    %7039 = vmatmul.bf16.gmra.mxu0 %v6555
    %v7040 = vpop.f32.mrf.mxu0
    %v7041 = vadd.f32 0.0, %v7040
    %v7042 = vpop.f32.mrf.mxu0
    %v7043 = vadd.f32 0.0, %v7042
    %7044 = vmatmul.bf16.gmra.mxu0 %v6559
    %v7045 = vpop.f32.mrf.mxu0
    %v7046 = vadd.f32 0.0, %v7045
    %v7047 = vpop.f32.mrf.mxu0
    %v7048 = vadd.f32 0.0, %v7047
    %7049 = vmatmul.bf16.gmra.mxu0 %v6563
    %v7050 = vpop.f32.mrf.mxu0
    %v7051 = vadd.f32 0.0, %v7050
    %v7052 = vpop.f32.mrf.mxu0
    %v7053 = vadd.f32 0.0, %v7052
    %7054 = vmatmul.bf16.gmra.mxu0 %v6567
    %v7055 = vpop.f32.mrf.mxu0
    %v7056 = vadd.f32 0.0, %v7055
    %v7057 = vpop.f32.mrf.mxu0
    %v7058 = vadd.f32 0.0, %v7057
    %7059 = vmatmul.bf16.gmra.mxu0 %v6571
    %v7060 = vpop.f32.mrf.mxu0
    %v7061 = vadd.f32 0.0, %v7060
    %v7062 = vpop.f32.mrf.mxu0
    %v7063 = vadd.f32 0.0, %v7062
    %7064 = vmatmul.bf16.gmra.mxu0 %v6575
    %v7065 = vpop.f32.mrf.mxu0
    %v7066 = vadd.f32 0.0, %v7065
    %v7067 = vpop.f32.mrf.mxu0
    %v7068 = vadd.f32 0.0, %v7067
    %7069 = vmatmul.bf16.gmra.mxu0 %v6579
    %v7070 = vpop.f32.mrf.mxu0
    %v7071 = vadd.f32 0.0, %v7070
    %v7072 = vpop.f32.mrf.mxu0
    %v7073 = vadd.f32 0.0, %v7072
    %7074 = vmatmul.bf16.gmra.mxu0 %v6578
    %v7075 = vpop.f32.mrf.mxu0
    %v7076 = vadd.f32 0.0, %v7075
    %v7077 = vpop.f32.mrf.mxu0
    %7078 = vdwg.mxu0
    %7079 = vmatpush.bf16.msra.mxu0 %v6853
    %7080 = vmatpush.bf16.msra.mxu0 %v6849
    %7081 = vmatpush.bf16.msra.mxu0 %v6845
    %7082 = vmatpush.bf16.msra.mxu0 %v6841
    %7083 = vmatpush.bf16.msra.mxu0 %v6837
    %7084 = vmatpush.bf16.msra.mxu0 %v6833
    %7085 = vmatpush.bf16.msra.mxu0 %v6829
    %7086 = vmatpush.bf16.msra.mxu0 %v6825
    %7087 = vmatmul.bf16.gmra.mxu0 %v6553
    %v7088 = vpop.f32.mrf.mxu0
    %v7089 = vadd.f32 %v7036, %v7088
    %v7090 = vpop.f32.mrf.mxu0
    %v7091 = vadd.f32 %v7038, %v7090
    %7092 = vmatmul.bf16.gmra.mxu0 %v6557
    %v7093 = vpop.f32.mrf.mxu0
    %v7094 = vadd.f32 %v7041, %v7093
    %v7095 = vpop.f32.mrf.mxu0
    %v7096 = vadd.f32 %v7043, %v7095
    %7097 = vmatmul.bf16.gmra.mxu0 %v6561
    %v7098 = vpop.f32.mrf.mxu0
    %v7099 = vadd.f32 %v7046, %v7098
    %v7100 = vpop.f32.mrf.mxu0
    %v7101 = vadd.f32 %v7048, %v7100
    %7102 = vmatmul.bf16.gmra.mxu0 %v6565
    %v7103 = vpop.f32.mrf.mxu0
    %v7104 = vadd.f32 %v7051, %v7103
    %v7105 = vpop.f32.mrf.mxu0
    %v7106 = vadd.f32 %v7053, %v7105
    %7107 = vmatmul.bf16.gmra.mxu0 %v6569
    %v7108 = vpop.f32.mrf.mxu0
    %v7109 = vadd.f32 %v7056, %v7108
    %v7110 = vpop.f32.mrf.mxu0
    %v7111 = vadd.f32 %v7058, %v7110
    %7112 = vmatmul.bf16.gmra.mxu0 %v6573
    %v7113 = vpop.f32.mrf.mxu0
    %v7114 = vadd.f32 %v7061, %v7113
    %v7115 = vpop.f32.mrf.mxu0
    %v7116 = vadd.f32 %v7063, %v7115
    %7117 = vmatmul.bf16.gmra.mxu0 %v6577
    %v7118 = vpop.f32.mrf.mxu0
    %v7119 = vadd.f32 %v7066, %v7118
    %v7120 = vpop.f32.mrf.mxu0
    %v7121 = vadd.f32 %v7068, %v7120
    %7122 = vmatmul.bf16.gmra.mxu0 %v6581
    %v7123 = vpop.f32.mrf.mxu0
    %v7124 = vadd.f32 %v7071, %v7123
    %v7125 = vpop.f32.mrf.mxu0
    %v7126 = vadd.f32 %v7073, %v7125
    %7127 = vmatmul.bf16.gmra.mxu0 %v6580
    %v7128 = vpop.f32.mrf.mxu0
    %v7129 = vadd.f32 %v7076, %v7128
    %v7130 = vpop.f32.mrf.mxu0
    %7131 = vdwg.mxu0
    %7132 = vmatpush.bf16.msra.mxu0 %v6822
    %7133 = vmatpush.bf16.msra.mxu0 %v6818
    %7134 = vmatpush.bf16.msra.mxu0 %v6814
    %7135 = vmatpush.bf16.msra.mxu0 %v6810
    %7136 = vmatpush.bf16.msra.mxu0 %v6806
    %7137 = vmatpush.bf16.msra.mxu0 %v6802
    %7138 = vmatpush.bf16.msra.mxu0 %v6798
    %7139 = vmatpush.bf16.msra.mxu0 %v6794
    %7140 = vmatmul.bf16.gmra.mxu0 %v6550
    %v7141 = vpop.f32.mrf.mxu0
    %v7142 = vadd.f32 0.0, %v7141
    %v7143 = vpop.f32.mrf.mxu0
    %v7144 = vadd.f32 0.0, %v7143
    %7145 = vmatmul.bf16.gmra.mxu0 %v6555
    %v7146 = vpop.f32.mrf.mxu0
    %v7147 = vadd.f32 0.0, %v7146
    %v7148 = vpop.f32.mrf.mxu0
    %v7149 = vadd.f32 0.0, %v7148
    %7150 = vmatmul.bf16.gmra.mxu0 %v6559
    %v7151 = vpop.f32.mrf.mxu0
    %v7152 = vadd.f32 0.0, %v7151
    %v7153 = vpop.f32.mrf.mxu0
    %v7154 = vadd.f32 0.0, %v7153
    %7155 = vmatmul.bf16.gmra.mxu0 %v6563
    %v7156 = vpop.f32.mrf.mxu0
    %v7157 = vadd.f32 0.0, %v7156
    %v7158 = vpop.f32.mrf.mxu0
    %v7159 = vadd.f32 0.0, %v7158
    %7160 = vmatmul.bf16.gmra.mxu0 %v6567
    %v7161 = vpop.f32.mrf.mxu0
    %v7162 = vadd.f32 0.0, %v7161
    %v7163 = vpop.f32.mrf.mxu0
    %v7164 = vadd.f32 0.0, %v7163
    %7165 = vmatmul.bf16.gmra.mxu0 %v6571
    %v7166 = vpop.f32.mrf.mxu0
    %v7167 = vadd.f32 0.0, %v7166
    %v7168 = vpop.f32.mrf.mxu0
    %v7169 = vadd.f32 0.0, %v7168
    %7170 = vmatmul.bf16.gmra.mxu0 %v6575
    %v7171 = vpop.f32.mrf.mxu0
    %v7172 = vadd.f32 0.0, %v7171
    %v7173 = vpop.f32.mrf.mxu0
    %v7174 = vadd.f32 0.0, %v7173
    %7175 = vmatmul.bf16.gmra.mxu0 %v6579
    %v7176 = vpop.f32.mrf.mxu0
    %v7177 = vadd.f32 0.0, %v7176
    %v7178 = vpop.f32.mrf.mxu0
    %v7179 = vadd.f32 0.0, %v7178
    %7180 = vmatmul.bf16.gmra.mxu0 %v6578
    %v7181 = vpop.f32.mrf.mxu0
    %v7182 = vadd.f32 0.0, %v7181
    %v7183 = vpop.f32.mrf.mxu0
    %7184 = vdwg.mxu0
    %7185 = vmatpush.bf16.msra.mxu0 %v6854
    %7186 = vmatpush.bf16.msra.mxu0 %v6850
    %7187 = vmatpush.bf16.msra.mxu0 %v6846
    %7188 = vmatpush.bf16.msra.mxu0 %v6842
    %7189 = vmatpush.bf16.msra.mxu0 %v6838
    %7190 = vmatpush.bf16.msra.mxu0 %v6834
    %7191 = vmatpush.bf16.msra.mxu0 %v6830
    %7192 = vmatpush.bf16.msra.mxu0 %v6826
    %7193 = vmatmul.bf16.gmra.mxu0 %v6553
    %v7194 = vpop.f32.mrf.mxu0
    %v7195 = vadd.f32 %v7142, %v7194
    %v7196 = vpop.f32.mrf.mxu0
    %v7197 = vadd.f32 %v7144, %v7196
    %7198 = vmatmul.bf16.gmra.mxu0 %v6557
    %v7199 = vpop.f32.mrf.mxu0
    %v7200 = vadd.f32 %v7147, %v7199
    %v7201 = vpop.f32.mrf.mxu0
    %v7202 = vadd.f32 %v7149, %v7201
    %7203 = vmatmul.bf16.gmra.mxu0 %v6561
    %v7204 = vpop.f32.mrf.mxu0
    %v7205 = vadd.f32 %v7152, %v7204
    %v7206 = vpop.f32.mrf.mxu0
    %v7207 = vadd.f32 %v7154, %v7206
    %7208 = vmatmul.bf16.gmra.mxu0 %v6565
    %v7209 = vpop.f32.mrf.mxu0
    %v7210 = vadd.f32 %v7157, %v7209
    %v7211 = vpop.f32.mrf.mxu0
    %v7212 = vadd.f32 %v7159, %v7211
    %7213 = vmatmul.bf16.gmra.mxu0 %v6569
    %v7214 = vpop.f32.mrf.mxu0
    %v7215 = vadd.f32 %v7162, %v7214
    %v7216 = vpop.f32.mrf.mxu0
    %v7217 = vadd.f32 %v7164, %v7216
    %7218 = vmatmul.bf16.gmra.mxu0 %v6573
    %v7219 = vpop.f32.mrf.mxu0
    %v7220 = vadd.f32 %v7167, %v7219
    %v7221 = vpop.f32.mrf.mxu0
    %v7222 = vadd.f32 %v7169, %v7221
    %7223 = vmatmul.bf16.gmra.mxu0 %v6577
    %v7224 = vpop.f32.mrf.mxu0
    %v7225 = vadd.f32 %v7172, %v7224
    %v7226 = vpop.f32.mrf.mxu0
    %v7227 = vadd.f32 %v7174, %v7226
    %7228 = vmatmul.bf16.gmra.mxu0 %v6581
    %v7229 = vpop.f32.mrf.mxu0
    %v7230 = vadd.f32 %v7177, %v7229
    %v7231 = vpop.f32.mrf.mxu0
    %v7232 = vadd.f32 %v7179, %v7231
    %7233 = vmatmul.bf16.gmra.mxu0 %v6580
    %v7234 = vpop.f32.mrf.mxu0
    %v7235 = vadd.f32 %v7182, %v7234
    %v7236 = vpop.f32.mrf.mxu0
    %7237 = vdwg.mxu0
    %7238 = vmatpush.bf16.msra.mxu0 %v6823
    %7239 = vmatpush.bf16.msra.mxu0 %v6819
    %7240 = vmatpush.bf16.msra.mxu0 %v6815
    %7241 = vmatpush.bf16.msra.mxu0 %v6811
    %7242 = vmatpush.bf16.msra.mxu0 %v6807
    %7243 = vmatpush.bf16.msra.mxu0 %v6803
    %7244 = vmatpush.bf16.msra.mxu0 %v6799
    %7245 = vmatpush.bf16.msra.mxu0 %v6795
    %7246 = vmatmul.bf16.gmra.mxu0 %v6550
    %v7247 = vpop.f32.mrf.mxu0
    %v7248 = vadd.f32 0.0, %v7247
    %v7249 = vpop.f32.mrf.mxu0
    %v7250 = vadd.f32 0.0, %v7249
    %7251 = vmatmul.bf16.gmra.mxu0 %v6555
    %v7252 = vpop.f32.mrf.mxu0
    %v7253 = vadd.f32 0.0, %v7252
    %v7254 = vpop.f32.mrf.mxu0
    %v7255 = vadd.f32 0.0, %v7254
    %7256 = vmatmul.bf16.gmra.mxu0 %v6559
    %v7257 = vpop.f32.mrf.mxu0
    %v7258 = vadd.f32 0.0, %v7257
    %v7259 = vpop.f32.mrf.mxu0
    %v7260 = vadd.f32 0.0, %v7259
    %7261 = vmatmul.bf16.gmra.mxu0 %v6563
    %v7262 = vpop.f32.mrf.mxu0
    %v7263 = vadd.f32 0.0, %v7262
    %v7264 = vpop.f32.mrf.mxu0
    %v7265 = vadd.f32 0.0, %v7264
    %7266 = vmatmul.bf16.gmra.mxu0 %v6567
    %v7267 = vpop.f32.mrf.mxu0
    %v7268 = vadd.f32 0.0, %v7267
    %v7269 = vpop.f32.mrf.mxu0
    %v7270 = vadd.f32 0.0, %v7269
    %7271 = vmatmul.bf16.gmra.mxu0 %v6571
    %v7272 = vpop.f32.mrf.mxu0
    %v7273 = vadd.f32 0.0, %v7272
    %v7274 = vpop.f32.mrf.mxu0
    %v7275 = vadd.f32 0.0, %v7274
    %7276 = vmatmul.bf16.gmra.mxu0 %v6575
    %v7277 = vpop.f32.mrf.mxu0
    %v7278 = vadd.f32 0.0, %v7277
    %v7279 = vpop.f32.mrf.mxu0
    %v7280 = vadd.f32 0.0, %v7279
    %7281 = vmatmul.bf16.gmra.mxu0 %v6579
    %v7282 = vpop.f32.mrf.mxu0
    %v7283 = vadd.f32 0.0, %v7282
    %v7284 = vpop.f32.mrf.mxu0
    %v7285 = vadd.f32 0.0, %v7284
    %7286 = vmatmul.bf16.gmra.mxu0 %v6578
    %v7287 = vpop.f32.mrf.mxu0
    %v7288 = vadd.f32 0.0, %v7287
    %v7289 = vpop.f32.mrf.mxu0
    %7290 = vdwg.mxu0
    %7291 = vmatpush.bf16.msra.mxu0 %v6855
    %7292 = vmatpush.bf16.msra.mxu0 %v6851
    %7293 = vmatpush.bf16.msra.mxu0 %v6847
    %7294 = vmatpush.bf16.msra.mxu0 %v6843
    %7295 = vmatpush.bf16.msra.mxu0 %v6839
    %7296 = vmatpush.bf16.msra.mxu0 %v6835
    %7297 = vmatpush.bf16.msra.mxu0 %v6831
    %7298 = vmatpush.bf16.msra.mxu0 %v6827
    %7299 = vmatmul.bf16.gmra.mxu0 %v6553
    %v7300 = vpop.f32.mrf.mxu0
    %v7301 = vadd.f32 %v7248, %v7300
    %v7302 = vpop.f32.mrf.mxu0
    %v7303 = vadd.f32 %v7250, %v7302
    %7304 = vmatmul.bf16.gmra.mxu0 %v6557
    %v7305 = vpop.f32.mrf.mxu0
    %v7306 = vadd.f32 %v7253, %v7305
    %v7307 = vpop.f32.mrf.mxu0
    %v7308 = vadd.f32 %v7255, %v7307
    %7309 = vmatmul.bf16.gmra.mxu0 %v6561
    %v7310 = vpop.f32.mrf.mxu0
    %v7311 = vadd.f32 %v7258, %v7310
    %v7312 = vpop.f32.mrf.mxu0
    %v7313 = vadd.f32 %v7260, %v7312
    %7314 = vmatmul.bf16.gmra.mxu0 %v6565
    %v7315 = vpop.f32.mrf.mxu0
    %v7316 = vadd.f32 %v7263, %v7315
    %v7317 = vpop.f32.mrf.mxu0
    %v7318 = vadd.f32 %v7265, %v7317
    %7319 = vmatmul.bf16.gmra.mxu0 %v6569
    %v7320 = vpop.f32.mrf.mxu0
    %v7321 = vadd.f32 %v7268, %v7320
    %v7322 = vpop.f32.mrf.mxu0
    %v7323 = vadd.f32 %v7270, %v7322
    %7324 = vmatmul.bf16.gmra.mxu0 %v6573
    %v7325 = vpop.f32.mrf.mxu0
    %v7326 = vadd.f32 %v7273, %v7325
    %v7327 = vpop.f32.mrf.mxu0
    %v7328 = vadd.f32 %v7275, %v7327
    %7329 = vmatmul.bf16.gmra.mxu0 %v6577
    %v7330 = vpop.f32.mrf.mxu0
    %v7331 = vadd.f32 %v7278, %v7330
    %v7332 = vpop.f32.mrf.mxu0
    %v7333 = vadd.f32 %v7280, %v7332
    %7334 = vmatmul.bf16.gmra.mxu0 %v6581
    %v7335 = vpop.f32.mrf.mxu0
    %v7336 = vadd.f32 %v7283, %v7335
    %v7337 = vpop.f32.mrf.mxu0
    %v7338 = vadd.f32 %v7285, %v7337
    %7339 = vmatmul.bf16.gmra.mxu0 %v6580
    %v7340 = vpop.f32.mrf.mxu0
    %v7341 = vadd.f32 %v7288, %v7340
    %v7342 = vpop.f32.mrf.mxu0
    %7343 = vdwg.mxu0
    %v7344 = vadd.f32 %v6104, %v6983
    %v7345 = vadd.f32 %v6210, %v7089
    %v7346 = vadd.f32 %v6316, %v7195
    %v7347 = vadd.f32 %v6422, %v7301
    %v7348 = vadd.f32 %v6106, %v6985
    %v7349 = vadd.f32 %v6212, %v7091
    %v7350 = vadd.f32 %v6318, %v7197
    %v7351 = vadd.f32 %v6424, %v7303
    %v7352 = vadd.f32 %v6109, %v6988
    %v7353 = vadd.f32 %v6215, %v7094
    %v7354 = vadd.f32 %v6321, %v7200
    %v7355 = vadd.f32 %v6427, %v7306
    %v7356 = vadd.f32 %v6111, %v6990
    %v7357 = vadd.f32 %v6217, %v7096
    %v7358 = vadd.f32 %v6323, %v7202
    %v7359 = vadd.f32 %v6429, %v7308
    %v7360 = vadd.f32 %v6114, %v6993
    %v7361 = vadd.f32 %v6220, %v7099
    %v7362 = vadd.f32 %v6326, %v7205
    %v7363 = vadd.f32 %v6432, %v7311
    %v7364 = vadd.f32 %v6116, %v6995
    %v7365 = vadd.f32 %v6222, %v7101
    %v7366 = vadd.f32 %v6328, %v7207
    %v7367 = vadd.f32 %v6434, %v7313
    %v7368 = vadd.f32 %v6119, %v6998
    %v7369 = vadd.f32 %v6225, %v7104
    %v7370 = vadd.f32 %v6331, %v7210
    %v7371 = vadd.f32 %v6437, %v7316
    %v7372 = vadd.f32 %v6121, %v7000
    %v7373 = vadd.f32 %v6227, %v7106
    %v7374 = vadd.f32 %v6333, %v7212
    %v7375 = vadd.f32 %v6439, %v7318
    %v7376 = vadd.f32 %v6124, %v7003
    %v7377 = vadd.f32 %v6230, %v7109
    %v7378 = vadd.f32 %v6336, %v7215
    %v7379 = vadd.f32 %v6442, %v7321
    %v7380 = vadd.f32 %v6126, %v7005
    %v7381 = vadd.f32 %v6232, %v7111
    %v7382 = vadd.f32 %v6338, %v7217
    %v7383 = vadd.f32 %v6444, %v7323
    %v7384 = vadd.f32 %v6129, %v7008
    %v7385 = vadd.f32 %v6235, %v7114
    %v7386 = vadd.f32 %v6341, %v7220
    %v7387 = vadd.f32 %v6447, %v7326
    %v7388 = vadd.f32 %v6131, %v7010
    %v7389 = vadd.f32 %v6237, %v7116
    %v7390 = vadd.f32 %v6343, %v7222
    %v7391 = vadd.f32 %v6449, %v7328
    %v7392 = vadd.f32 %v6134, %v7013
    %v7393 = vadd.f32 %v6240, %v7119
    %v7394 = vadd.f32 %v6346, %v7225
    %v7395 = vadd.f32 %v6452, %v7331
    %v7396 = vadd.f32 %v6136, %v7015
    %v7397 = vadd.f32 %v6242, %v7121
    %v7398 = vadd.f32 %v6348, %v7227
    %v7399 = vadd.f32 %v6454, %v7333
    %v7400 = vadd.f32 %v6139, %v7018
    %v7401 = vadd.f32 %v6245, %v7124
    %v7402 = vadd.f32 %v6351, %v7230
    %v7403 = vadd.f32 %v6457, %v7336
    %v7404 = vadd.f32 %v6141, %v7020
    %v7405 = vadd.f32 %v6247, %v7126
    %v7406 = vadd.f32 %v6353, %v7232
    %v7407 = vadd.f32 %v6459, %v7338
    %v7408 = vadd.f32 %v6144, %v7023
    %v7409 = vadd.f32 %v6250, %v7129
    %v7410 = vadd.f32 %v6356, %v7235
    %v7411 = vadd.f32 %v6462, %v7341
    %v7412 = vld [vmem:[%s6] sm:$0xf]
    %v7414 = vperm.slane %v7412, 0
    %v7415 = vperm.slane %v7412, 1
    %v7416 = vperm.slane %v7412, 2
    %v7417 = vperm.slane %v7412, 3
    %v7422 = vadd.f32 %v7344, %v7414
    %v7423 = vadd.f32 %v7345, %v7415
    %v7424 = vadd.f32 %v7346, %v7416
    %v7425 = vadd.f32 %v7347, %v7417
    %v7426 = vadd.f32 %v7348, %v7414
    %v7427 = vadd.f32 %v7349, %v7415
    %v7428 = vadd.f32 %v7350, %v7416
    %v7429 = vadd.f32 %v7351, %v7417
    %v7430 = vadd.f32 %v7352, %v7414
    %v7431 = vadd.f32 %v7353, %v7415
    %v7432 = vadd.f32 %v7354, %v7416
    %v7433 = vadd.f32 %v7355, %v7417
    %v7434 = vadd.f32 %v7356, %v7414
    %v7435 = vadd.f32 %v7357, %v7415
    %v7436 = vadd.f32 %v7358, %v7416
    %v7437 = vadd.f32 %v7359, %v7417
    %v7438 = vadd.f32 %v7360, %v7414
    %v7439 = vadd.f32 %v7361, %v7415
    %v7440 = vadd.f32 %v7362, %v7416
    %v7441 = vadd.f32 %v7363, %v7417
    %v7442 = vadd.f32 %v7364, %v7414
    %v7443 = vadd.f32 %v7365, %v7415
    %v7444 = vadd.f32 %v7366, %v7416
    %v7445 = vadd.f32 %v7367, %v7417
    %v7446 = vadd.f32 %v7368, %v7414
    %v7447 = vadd.f32 %v7369, %v7415
    %v7448 = vadd.f32 %v7370, %v7416
    %v7449 = vadd.f32 %v7371, %v7417
    %v7450 = vadd.f32 %v7372, %v7414
    %v7451 = vadd.f32 %v7373, %v7415
    %v7452 = vadd.f32 %v7374, %v7416
    %v7453 = vadd.f32 %v7375, %v7417
    %v7454 = vadd.f32 %v7376, %v7414
    %v7455 = vadd.f32 %v7377, %v7415
    %v7456 = vadd.f32 %v7378, %v7416
    %v7457 = vadd.f32 %v7379, %v7417
    %v7458 = vadd.f32 %v7380, %v7414
    %v7459 = vadd.f32 %v7381, %v7415
    %v7460 = vadd.f32 %v7382, %v7416
    %v7461 = vadd.f32 %v7383, %v7417
    %v7462 = vadd.f32 %v7384, %v7414
    %v7463 = vadd.f32 %v7385, %v7415
    %v7464 = vadd.f32 %v7386, %v7416
    %v7465 = vadd.f32 %v7387, %v7417
    %v7466 = vadd.f32 %v7388, %v7414
    %v7467 = vadd.f32 %v7389, %v7415
    %v7468 = vadd.f32 %v7390, %v7416
    %v7469 = vadd.f32 %v7391, %v7417
    %v7470 = vadd.f32 %v7392, %v7414
    %v7471 = vadd.f32 %v7393, %v7415
    %v7472 = vadd.f32 %v7394, %v7416
    %v7473 = vadd.f32 %v7395, %v7417
    %v7474 = vadd.f32 %v7396, %v7414
    %v7475 = vadd.f32 %v7397, %v7415
    %v7476 = vadd.f32 %v7398, %v7416
    %v7477 = vadd.f32 %v7399, %v7417
    %v7478 = vadd.f32 %v7400, %v7414
    %v7479 = vadd.f32 %v7401, %v7415
    %v7480 = vadd.f32 %v7402, %v7416
    %v7481 = vadd.f32 %v7403, %v7417
    %v7482 = vadd.f32 %v7404, %v7414
    %v7483 = vadd.f32 %v7405, %v7415
    %v7484 = vadd.f32 %v7406, %v7416
    %v7485 = vadd.f32 %v7407, %v7417
    %v7486 = vadd.f32 %v7408, %v7414
    %v7487 = vadd.f32 %v7409, %v7415
    %v7488 = vadd.f32 %v7410, %v7416
    %v7489 = vadd.f32 %v7411, %v7417
    %v7490 = vmax.f32 %v7422, 0.0
    %v7491 = vmax.f32 %v7423, 0.0
    %v7492 = vmax.f32 %v7424, 0.0
    %v7493 = vmax.f32 %v7425, 0.0
    %v7494 = vmax.f32 %v7426, 0.0
    %v7495 = vmax.f32 %v7427, 0.0
    %v7496 = vmax.f32 %v7428, 0.0
    %v7497 = vmax.f32 %v7429, 0.0
    %v7498 = vmax.f32 %v7430, 0.0
    %v7499 = vmax.f32 %v7431, 0.0
    %v7500 = vmax.f32 %v7432, 0.0
    %v7501 = vmax.f32 %v7433, 0.0
    %v7502 = vmax.f32 %v7434, 0.0
    %v7503 = vmax.f32 %v7435, 0.0
    %v7504 = vmax.f32 %v7436, 0.0
    %v7505 = vmax.f32 %v7437, 0.0
    %v7506 = vmax.f32 %v7438, 0.0
    %v7507 = vmax.f32 %v7439, 0.0
    %v7508 = vmax.f32 %v7440, 0.0
    %v7509 = vmax.f32 %v7441, 0.0
    %v7510 = vmax.f32 %v7442, 0.0
    %v7511 = vmax.f32 %v7443, 0.0
    %v7512 = vmax.f32 %v7444, 0.0
    %v7513 = vmax.f32 %v7445, 0.0
    %v7514 = vmax.f32 %v7446, 0.0
    %v7515 = vmax.f32 %v7447, 0.0
    %v7516 = vmax.f32 %v7448, 0.0
    %v7517 = vmax.f32 %v7449, 0.0
    %v7518 = vmax.f32 %v7450, 0.0
    %v7519 = vmax.f32 %v7451, 0.0
    %v7520 = vmax.f32 %v7452, 0.0
    %v7521 = vmax.f32 %v7453, 0.0
    %v7522 = vmax.f32 %v7454, 0.0
    %v7523 = vmax.f32 %v7455, 0.0
    %v7524 = vmax.f32 %v7456, 0.0
    %v7525 = vmax.f32 %v7457, 0.0
    %v7526 = vmax.f32 %v7458, 0.0
    %v7527 = vmax.f32 %v7459, 0.0
    %v7528 = vmax.f32 %v7460, 0.0
    %v7529 = vmax.f32 %v7461, 0.0
    %v7530 = vmax.f32 %v7462, 0.0
    %v7531 = vmax.f32 %v7463, 0.0
    %v7532 = vmax.f32 %v7464, 0.0
    %v7533 = vmax.f32 %v7465, 0.0
    %v7534 = vmax.f32 %v7466, 0.0
    %v7535 = vmax.f32 %v7467, 0.0
    %v7536 = vmax.f32 %v7468, 0.0
    %v7537 = vmax.f32 %v7469, 0.0
    %v7538 = vmax.f32 %v7470, 0.0
    %v7539 = vmax.f32 %v7471, 0.0
    %v7540 = vmax.f32 %v7472, 0.0
    %v7541 = vmax.f32 %v7473, 0.0
    %v7542 = vmax.f32 %v7474, 0.0
    %v7543 = vmax.f32 %v7475, 0.0
    %v7544 = vmax.f32 %v7476, 0.0
    %v7545 = vmax.f32 %v7477, 0.0
    %v7546 = vmax.f32 %v7478, 0.0
    %v7547 = vmax.f32 %v7479, 0.0
    %v7548 = vmax.f32 %v7480, 0.0
    %v7549 = vmax.f32 %v7481, 0.0
    %v7550 = vmax.f32 %v7482, 0.0
    %v7551 = vmax.f32 %v7483, 0.0
    %v7552 = vmax.f32 %v7484, 0.0
    %v7553 = vmax.f32 %v7485, 0.0
    %v7554 = vmax.f32 %v7486, 0.0
    %v7555 = vmax.f32 %v7487, 0.0
    %v7556 = vmax.f32 %v7488, 0.0
    %v7557 = vmax.f32 %v7489, 0.0
    %v7626 = vrot.slane %v7490, 1
    %v7627 = vrot.slane %v7494, 1
    %v7628 = vsel %vm2300, %v7626, %v7627
    %v7629 = vrot.slane %v7491, 1
    %v7630 = vrot.slane %v7495, 1
    %v7631 = vsel %vm2300, %v7629, %v7630
    %v7632 = vrot.slane %v7492, 1
    %v7633 = vrot.slane %v7496, 1
    %v7634 = vsel %vm2300, %v7632, %v7633
    %v7635 = vrot.slane %v7493, 1
    %v7636 = vrot.slane %v7497, 1
    %v7637 = vsel %vm2300, %v7635, %v7636
    %v7638 = vrot.slane %v7498, 1
    %v7639 = vsel %vm2300, %v7627, %v7638
    %v7640 = vrot.slane %v7499, 1
    %v7641 = vsel %vm2300, %v7630, %v7640
    %v7642 = vrot.slane %v7500, 1
    %v7643 = vsel %vm2300, %v7633, %v7642
    %v7644 = vrot.slane %v7501, 1
    %v7645 = vsel %vm2300, %v7636, %v7644
    %v7646 = vrot.slane %v7502, 1
    %v7647 = vsel %vm2300, %v7638, %v7646
    %v7648 = vrot.slane %v7503, 1
    %v7649 = vsel %vm2300, %v7640, %v7648
    %v7650 = vrot.slane %v7504, 1
    %v7651 = vsel %vm2300, %v7642, %v7650
    %v7652 = vrot.slane %v7505, 1
    %v7653 = vsel %vm2300, %v7644, %v7652
    %v7654 = vrot.slane %v7506, 1
    %v7655 = vsel %vm2300, %v7646, %v7654
    %v7656 = vrot.slane %v7507, 1
    %v7657 = vsel %vm2300, %v7648, %v7656
    %v7658 = vrot.slane %v7508, 1
    %v7659 = vsel %vm2300, %v7650, %v7658
    %v7660 = vrot.slane %v7509, 1
    %v7661 = vsel %vm2300, %v7652, %v7660
    %v7662 = vrot.slane %v7510, 1
    %v7663 = vsel %vm2300, %v7654, %v7662
    %v7664 = vrot.slane %v7511, 1
    %v7665 = vsel %vm2300, %v7656, %v7664
    %v7666 = vrot.slane %v7512, 1
    %v7667 = vsel %vm2300, %v7658, %v7666
    %v7668 = vrot.slane %v7513, 1
    %v7669 = vsel %vm2300, %v7660, %v7668
    %v7670 = vrot.slane %v7514, 1
    %v7671 = vsel %vm2300, %v7662, %v7670
    %v7672 = vrot.slane %v7515, 1
    %v7673 = vsel %vm2300, %v7664, %v7672
    %v7674 = vrot.slane %v7516, 1
    %v7675 = vsel %vm2300, %v7666, %v7674
    %v7676 = vrot.slane %v7517, 1
    %v7677 = vsel %vm2300, %v7668, %v7676
    %v7678 = vrot.slane %v7518, 1
    %v7679 = vsel %vm2300, %v7670, %v7678
    %v7680 = vrot.slane %v7519, 1
    %v7681 = vsel %vm2300, %v7672, %v7680
    %v7682 = vrot.slane %v7520, 1
    %v7683 = vsel %vm2300, %v7674, %v7682
    %v7684 = vrot.slane %v7521, 1
    %v7685 = vsel %vm2300, %v7676, %v7684
    %v7686 = vrot.slane %v7522, 1
    %v7687 = vsel %vm2300, %v7678, %v7686
    %v7688 = vrot.slane %v7523, 1
    %v7689 = vsel %vm2300, %v7680, %v7688
    %v7690 = vrot.slane %v7524, 1
    %v7691 = vsel %vm2300, %v7682, %v7690
    %v7692 = vrot.slane %v7525, 1
    %v7693 = vsel %vm2300, %v7684, %v7692
    %v7694 = vrot.slane %v7526, 1
    %v7695 = vsel %vm2300, %v7686, %v7694
    %v7696 = vrot.slane %v7527, 1
    %v7697 = vsel %vm2300, %v7688, %v7696
    %v7698 = vrot.slane %v7528, 1
    %v7699 = vsel %vm2300, %v7690, %v7698
    %v7700 = vrot.slane %v7529, 1
    %v7701 = vsel %vm2300, %v7692, %v7700
    %v7702 = vrot.slane %v7530, 1
    %v7703 = vsel %vm2300, %v7694, %v7702
    %v7704 = vrot.slane %v7531, 1
    %v7705 = vsel %vm2300, %v7696, %v7704
    %v7706 = vrot.slane %v7532, 1
    %v7707 = vsel %vm2300, %v7698, %v7706
    %v7708 = vrot.slane %v7533, 1
    %v7709 = vsel %vm2300, %v7700, %v7708
    %v7710 = vrot.slane %v7534, 1
    %v7711 = vsel %vm2300, %v7702, %v7710
    %v7712 = vrot.slane %v7535, 1
    %v7713 = vsel %vm2300, %v7704, %v7712
    %v7714 = vrot.slane %v7536, 1
    %v7715 = vsel %vm2300, %v7706, %v7714
    %v7716 = vrot.slane %v7537, 1
    %v7717 = vsel %vm2300, %v7708, %v7716
    %v7718 = vrot.slane %v7538, 1
    %v7719 = vsel %vm2300, %v7710, %v7718
    %v7720 = vrot.slane %v7539, 1
    %v7721 = vsel %vm2300, %v7712, %v7720
    %v7722 = vrot.slane %v7540, 1
    %v7723 = vsel %vm2300, %v7714, %v7722
    %v7724 = vrot.slane %v7541, 1
    %v7725 = vsel %vm2300, %v7716, %v7724
    %v7726 = vrot.slane %v7542, 1
    %v7727 = vsel %vm2300, %v7718, %v7726
    %v7728 = vrot.slane %v7543, 1
    %v7729 = vsel %vm2300, %v7720, %v7728
    %v7730 = vrot.slane %v7544, 1
    %v7731 = vsel %vm2300, %v7722, %v7730
    %v7732 = vrot.slane %v7545, 1
    %v7733 = vsel %vm2300, %v7724, %v7732
    %v7734 = vrot.slane %v7546, 1
    %v7735 = vsel %vm2300, %v7726, %v7734
    %v7736 = vrot.slane %v7547, 1
    %v7737 = vsel %vm2300, %v7728, %v7736
    %v7738 = vrot.slane %v7548, 1
    %v7739 = vsel %vm2300, %v7730, %v7738
    %v7740 = vrot.slane %v7549, 1
    %v7741 = vsel %vm2300, %v7732, %v7740
    %v7742 = vrot.slane %v7550, 1
    %v7743 = vsel %vm2300, %v7734, %v7742
    %v7744 = vrot.slane %v7551, 1
    %v7745 = vsel %vm2300, %v7736, %v7744
    %v7746 = vrot.slane %v7552, 1
    %v7747 = vsel %vm2300, %v7738, %v7746
    %v7748 = vrot.slane %v7553, 1
    %v7749 = vsel %vm2300, %v7740, %v7748
    %v7750 = vrot.slane %v7554, 1
    %v7751 = vsel %vm2300, %v7742, %v7750
    %v7752 = vrot.slane %v7555, 1
    %v7753 = vsel %vm2300, %v7744, %v7752
    %v7754 = vrot.slane %v7556, 1
    %v7755 = vsel %vm2300, %v7746, %v7754
    %v7756 = vrot.slane %v7557, 1
    %v7757 = vsel %vm2300, %v7748, %v7756
    %v7822 = vmax.f32 %v7490, %v7628
    %v7823 = vmax.f32 %v7491, %v7631
    %v7824 = vmax.f32 %v7492, %v7634
    %v7825 = vmax.f32 %v7493, %v7637
    %v7826 = vmax.f32 %v7494, %v7639
    %v7827 = vmax.f32 %v7495, %v7641
    %v7828 = vmax.f32 %v7496, %v7643
    %v7829 = vmax.f32 %v7497, %v7645
    %v7830 = vmax.f32 %v7498, %v7647
    %v7831 = vmax.f32 %v7499, %v7649
    %v7832 = vmax.f32 %v7500, %v7651
    %v7833 = vmax.f32 %v7501, %v7653
    %v7834 = vmax.f32 %v7502, %v7655
    %v7835 = vmax.f32 %v7503, %v7657
    %v7836 = vmax.f32 %v7504, %v7659
    %v7837 = vmax.f32 %v7505, %v7661
    %v7838 = vmax.f32 %v7506, %v7663
    %v7839 = vmax.f32 %v7507, %v7665
    %v7840 = vmax.f32 %v7508, %v7667
    %v7841 = vmax.f32 %v7509, %v7669
    %v7842 = vmax.f32 %v7510, %v7671
    %v7843 = vmax.f32 %v7511, %v7673
    %v7844 = vmax.f32 %v7512, %v7675
    %v7845 = vmax.f32 %v7513, %v7677
    %v7846 = vmax.f32 %v7514, %v7679
    %v7847 = vmax.f32 %v7515, %v7681
    %v7848 = vmax.f32 %v7516, %v7683
    %v7849 = vmax.f32 %v7517, %v7685
    %v7850 = vmax.f32 %v7518, %v7687
    %v7851 = vmax.f32 %v7519, %v7689
    %v7852 = vmax.f32 %v7520, %v7691
    %v7853 = vmax.f32 %v7521, %v7693
    %v7854 = vmax.f32 %v7522, %v7695
    %v7855 = vmax.f32 %v7523, %v7697
    %v7856 = vmax.f32 %v7524, %v7699
    %v7857 = vmax.f32 %v7525, %v7701
    %v7858 = vmax.f32 %v7526, %v7703
    %v7859 = vmax.f32 %v7527, %v7705
    %v7860 = vmax.f32 %v7528, %v7707
    %v7861 = vmax.f32 %v7529, %v7709
    %v7862 = vmax.f32 %v7530, %v7711
    %v7863 = vmax.f32 %v7531, %v7713
    %v7864 = vmax.f32 %v7532, %v7715
    %v7865 = vmax.f32 %v7533, %v7717
    %v7866 = vmax.f32 %v7534, %v7719
    %v7867 = vmax.f32 %v7535, %v7721
    %v7868 = vmax.f32 %v7536, %v7723
    %v7869 = vmax.f32 %v7537, %v7725
    %v7870 = vmax.f32 %v7538, %v7727
    %v7871 = vmax.f32 %v7539, %v7729
    %v7872 = vmax.f32 %v7540, %v7731
    %v7873 = vmax.f32 %v7541, %v7733
    %v7874 = vmax.f32 %v7542, %v7735
    %v7875 = vmax.f32 %v7543, %v7737
    %v7876 = vmax.f32 %v7544, %v7739
    %v7877 = vmax.f32 %v7545, %v7741
    %v7878 = vmax.f32 %v7546, %v7743
    %v7879 = vmax.f32 %v7547, %v7745
    %v7880 = vmax.f32 %v7548, %v7747
    %v7881 = vmax.f32 %v7549, %v7749
    %v7882 = vmax.f32 %v7550, %v7751
    %v7883 = vmax.f32 %v7551, %v7753
    %v7884 = vmax.f32 %v7552, %v7755
    %v7885 = vmax.f32 %v7553, %v7757
    %v7886 = vpack.c.bf16 %v7826, %v7822
    %v7887 = vpack.c.bf16 %v7827, %v7823
    %v7888 = vpack.c.bf16 %v7828, %v7824
    %v7889 = vpack.c.bf16 %v7829, %v7825
    %v7890 = vpack.c.bf16 %v7834, %v7830
    %v7891 = vpack.c.bf16 %v7835, %v7831
    %v7892 = vpack.c.bf16 %v7836, %v7832
    %v7893 = vpack.c.bf16 %v7837, %v7833
    %v7894 = vpack.c.bf16 %v7842, %v7838
    %v7895 = vpack.c.bf16 %v7843, %v7839
    %v7896 = vpack.c.bf16 %v7844, %v7840
    %v7897 = vpack.c.bf16 %v7845, %v7841
    %v7898 = vpack.c.bf16 %v7850, %v7846
    %v7899 = vpack.c.bf16 %v7851, %v7847
    %v7900 = vpack.c.bf16 %v7852, %v7848
    %v7901 = vpack.c.bf16 %v7853, %v7849
    %v7902 = vpack.c.bf16 %v7858, %v7854
    %v7903 = vpack.c.bf16 %v7859, %v7855
    %v7904 = vpack.c.bf16 %v7860, %v7856
    %v7905 = vpack.c.bf16 %v7861, %v7857
    %v7906 = vpack.c.bf16 %v7866, %v7862
    %v7907 = vpack.c.bf16 %v7867, %v7863
    %v7908 = vpack.c.bf16 %v7868, %v7864
    %v7909 = vpack.c.bf16 %v7869, %v7865
    %v7910 = vpack.c.bf16 %v7874, %v7870
    %v7911 = vpack.c.bf16 %v7875, %v7871
    %v7912 = vpack.c.bf16 %v7876, %v7872
    %v7913 = vpack.c.bf16 %v7877, %v7873
    %v7914 = vpack.c.bf16 %v7882, %v7878
    %v7915 = vpack.c.bf16 %v7883, %v7879
    %v7916 = vpack.c.bf16 %v7884, %v7880
    %v7917 = vpack.c.bf16 %v7885, %v7881
    %v7918 = vld [vmem:[#allocation6] sm:$0xf]
    %v7919 = vld [vmem:[#allocation6 + $0x4] sm:$0xf]
    %v7920 = vld [vmem:[#allocation6 + $0x8] sm:$0xf]
    %v7921 = vld [vmem:[#allocation6 + $0xc] sm:$0xf]
    %v7922 = vld [vmem:[#allocation6 + $0x10] sm:$0xf]
    %v7923 = vld [vmem:[#allocation6 + $0x14] sm:$0xf]
    %v7924 = vld [vmem:[#allocation6 + $0x18] sm:$0xf]
    %v7925 = vld [vmem:[#allocation6 + $0x1c] sm:$0xf]
    %v7934 = vunpack.c.l.b16 %v7918
    %v7935 = vunpack.c.l.b16 %v7919
    %v7936 = vunpack.c.l.b16 %v7920
    %v7937 = vunpack.c.l.b16 %v7921
    %v7938 = vunpack.c.l.b16 %v7922
    %v7939 = vunpack.c.l.b16 %v7923
    %v7940 = vunpack.c.l.b16 %v7924
    %v7941 = vunpack.c.l.b16 %v7925
    %v7942 = vpack.c.b16 %v7935, %v7934
    %v7943 = vpack.c.b16 %v7937, %v7936
    %v7944 = vpack.c.b16 %v7939, %v7938
    %v7945 = vpack.c.b16 %v7941, %v7940
    %7950 = vmatpush.bf16.msra.mxu0 %v7914
    %7951 = vmatpush.bf16.msra.mxu0 %v7910
    %7952 = vmatpush.bf16.msra.mxu0 %v7906
    %7953 = vmatpush.bf16.msra.mxu0 %v7902
    %7954 = vmatpush.bf16.msra.mxu0 %v7898
    %7955 = vmatpush.bf16.msra.mxu0 %v7894
    %7956 = vmatpush.bf16.msra.mxu0 %v7890
    %7957 = vmatpush.bf16.msra.mxu0 %v7886
    %7958 = vmatmul.bf16.gmra.mxu0 %v7942
    %v7959 = vpop.f32.mrf.mxu0
    %v7960 = vadd.f32 0.0, %v7959
    %v7961 = vpop.f32.mrf.mxu0
    %v7962 = vadd.f32 0.0, %v7961
    %7963 = vmatmul.bf16.gmra.mxu0 %v7943
    %v7964 = vpop.f32.mrf.mxu0
    %v7965 = vadd.f32 0.0, %v7964
    %v7966 = vpop.f32.mrf.mxu0
    %v7967 = vadd.f32 0.0, %v7966
    %7968 = vmatmul.bf16.gmra.mxu0 %v7944
    %v7969 = vpop.f32.mrf.mxu0
    %v7970 = vadd.f32 0.0, %v7969
    %v7971 = vpop.f32.mrf.mxu0
    %v7972 = vadd.f32 0.0, %v7971
    %7973 = vmatmul.bf16.gmra.mxu0 %v7945
    %v7974 = vpop.f32.mrf.mxu0
    %v7975 = vadd.f32 0.0, %v7974
    %v7976 = vpop.f32.mrf.mxu0
    %v7977 = vadd.f32 0.0, %v7976
    %7978 = vdwg.mxu0
    %7979 = vmatpush.bf16.msra.mxu0 %v7915
    %7980 = vmatpush.bf16.msra.mxu0 %v7911
    %7981 = vmatpush.bf16.msra.mxu0 %v7907
    %7982 = vmatpush.bf16.msra.mxu0 %v7903
    %7983 = vmatpush.bf16.msra.mxu0 %v7899
    %7984 = vmatpush.bf16.msra.mxu0 %v7895
    %7985 = vmatpush.bf16.msra.mxu0 %v7891
    %7986 = vmatpush.bf16.msra.mxu0 %v7887
    %7987 = vmatmul.bf16.gmra.mxu0 %v7942
    %v7988 = vpop.f32.mrf.mxu0
    %v7989 = vadd.f32 0.0, %v7988
    %v7990 = vpop.f32.mrf.mxu0
    %v7991 = vadd.f32 0.0, %v7990
    %7992 = vmatmul.bf16.gmra.mxu0 %v7943
    %v7993 = vpop.f32.mrf.mxu0
    %v7994 = vadd.f32 0.0, %v7993
    %v7995 = vpop.f32.mrf.mxu0
    %v7996 = vadd.f32 0.0, %v7995
    %7997 = vmatmul.bf16.gmra.mxu0 %v7944
    %v7998 = vpop.f32.mrf.mxu0
    %v7999 = vadd.f32 0.0, %v7998
    %v8000 = vpop.f32.mrf.mxu0
    %v8001 = vadd.f32 0.0, %v8000
    %8002 = vmatmul.bf16.gmra.mxu0 %v7945
    %v8003 = vpop.f32.mrf.mxu0
    %v8004 = vadd.f32 0.0, %v8003
    %v8005 = vpop.f32.mrf.mxu0
    %v8006 = vadd.f32 0.0, %v8005
    %8007 = vdwg.mxu0
    %8008 = vmatpush.bf16.msra.mxu0 %v7916
    %8009 = vmatpush.bf16.msra.mxu0 %v7912
    %8010 = vmatpush.bf16.msra.mxu0 %v7908
    %8011 = vmatpush.bf16.msra.mxu0 %v7904
    %8012 = vmatpush.bf16.msra.mxu0 %v7900
    %8013 = vmatpush.bf16.msra.mxu0 %v7896
    %8014 = vmatpush.bf16.msra.mxu0 %v7892
    %8015 = vmatpush.bf16.msra.mxu0 %v7888
    %8016 = vmatmul.bf16.gmra.mxu0 %v7942
    %v8017 = vpop.f32.mrf.mxu0
    %v8018 = vadd.f32 0.0, %v8017
    %v8019 = vpop.f32.mrf.mxu0
    %v8020 = vadd.f32 0.0, %v8019
    %8021 = vmatmul.bf16.gmra.mxu0 %v7943
    %v8022 = vpop.f32.mrf.mxu0
    %v8023 = vadd.f32 0.0, %v8022
    %v8024 = vpop.f32.mrf.mxu0
    %v8025 = vadd.f32 0.0, %v8024
    %8026 = vmatmul.bf16.gmra.mxu0 %v7944
    %v8027 = vpop.f32.mrf.mxu0
    %v8028 = vadd.f32 0.0, %v8027
    %v8029 = vpop.f32.mrf.mxu0
    %v8030 = vadd.f32 0.0, %v8029
    %8031 = vmatmul.bf16.gmra.mxu0 %v7945
    %v8032 = vpop.f32.mrf.mxu0
    %v8033 = vadd.f32 0.0, %v8032
    %v8034 = vpop.f32.mrf.mxu0
    %v8035 = vadd.f32 0.0, %v8034
    %8036 = vdwg.mxu0
    %8037 = vmatpush.bf16.msra.mxu0 %v7917
    %8038 = vmatpush.bf16.msra.mxu0 %v7913
    %8039 = vmatpush.bf16.msra.mxu0 %v7909
    %8040 = vmatpush.bf16.msra.mxu0 %v7905
    %8041 = vmatpush.bf16.msra.mxu0 %v7901
    %8042 = vmatpush.bf16.msra.mxu0 %v7897
    %8043 = vmatpush.bf16.msra.mxu0 %v7893
    %8044 = vmatpush.bf16.msra.mxu0 %v7889
    %8045 = vmatmul.bf16.gmra.mxu0 %v7942
    %v8046 = vpop.f32.mrf.mxu0
    %v8047 = vadd.f32 0.0, %v8046
    %v8048 = vpop.f32.mrf.mxu0
    %v8049 = vadd.f32 0.0, %v8048
    %8050 = vmatmul.bf16.gmra.mxu0 %v7943
    %v8051 = vpop.f32.mrf.mxu0
    %v8052 = vadd.f32 0.0, %v8051
    %v8053 = vpop.f32.mrf.mxu0
    %v8054 = vadd.f32 0.0, %v8053
    %8055 = vmatmul.bf16.gmra.mxu0 %v7944
    %v8056 = vpop.f32.mrf.mxu0
    %v8057 = vadd.f32 0.0, %v8056
    %v8058 = vpop.f32.mrf.mxu0
    %v8059 = vadd.f32 0.0, %v8058
    %8060 = vmatmul.bf16.gmra.mxu0 %v7945
    %v8061 = vpop.f32.mrf.mxu0
    %v8062 = vadd.f32 0.0, %v8061
    %v8063 = vpop.f32.mrf.mxu0
    %v8064 = vadd.f32 0.0, %v8063
    %8065 = vdwg.mxu0
    %8098 = vrot.lane.b32.xlu0 %v7960, 96
    %v8099 = vpop.permute.xlu0 %8098
    %8100 = vrot.lane.b32.xlu0 %v7989, 96
    %v8101 = vpop.permute.xlu0 %8100
    %8102 = vrot.lane.b32.xlu0 %v8018, 96
    %v8103 = vpop.permute.xlu0 %8102
    %8104 = vrot.lane.b32.xlu0 %v8047, 96
    %v8105 = vpop.permute.xlu0 %8104
    %8106 = vrot.lane.b32.xlu0 %v7962, 96
    %v8107 = vpop.permute.xlu0 %8106
    %8108 = vrot.lane.b32.xlu0 %v7991, 96
    %v8109 = vpop.permute.xlu0 %8108
    %8110 = vrot.lane.b32.xlu0 %v8020, 96
    %v8111 = vpop.permute.xlu0 %8110
    %8112 = vrot.lane.b32.xlu0 %v8049, 96
    %v8113 = vpop.permute.xlu0 %8112
    %8114 = vrot.lane.b32.xlu0 %v7965, 96
    %v8115 = vpop.permute.xlu0 %8114
    %8116 = vrot.lane.b32.xlu0 %v7994, 96
    %v8117 = vpop.permute.xlu0 %8116
    %8118 = vrot.lane.b32.xlu0 %v8023, 96
    %v8119 = vpop.permute.xlu0 %8118
    %8120 = vrot.lane.b32.xlu0 %v8052, 96
    %v8121 = vpop.permute.xlu0 %8120
    %8122 = vrot.lane.b32.xlu0 %v7967, 96
    %v8123 = vpop.permute.xlu0 %8122
    %8124 = vrot.lane.b32.xlu0 %v7996, 96
    %v8125 = vpop.permute.xlu0 %8124
    %8126 = vrot.lane.b32.xlu0 %v8025, 96
    %v8127 = vpop.permute.xlu0 %8126
    %8128 = vrot.lane.b32.xlu0 %v8054, 96
    %v8129 = vpop.permute.xlu0 %8128
    %8130 = vrot.lane.b32.xlu0 %v7970, 96
    %v8131 = vpop.permute.xlu0 %8130
    %8132 = vrot.lane.b32.xlu0 %v7999, 96
    %v8133 = vpop.permute.xlu0 %8132
    %8134 = vrot.lane.b32.xlu0 %v8028, 96
    %v8135 = vpop.permute.xlu0 %8134
    %8136 = vrot.lane.b32.xlu0 %v8057, 96
    %v8137 = vpop.permute.xlu0 %8136
    %8138 = vrot.lane.b32.xlu0 %v7972, 96
    %v8139 = vpop.permute.xlu0 %8138
    %8140 = vrot.lane.b32.xlu0 %v8001, 96
    %v8141 = vpop.permute.xlu0 %8140
    %8142 = vrot.lane.b32.xlu0 %v8030, 96
    %v8143 = vpop.permute.xlu0 %8142
    %8144 = vrot.lane.b32.xlu0 %v8059, 96
    %v8145 = vpop.permute.xlu0 %8144
    %8146 = vrot.lane.b32.xlu0 %v7975, 96
    %v8147 = vpop.permute.xlu0 %8146
    %8148 = vrot.lane.b32.xlu0 %v8004, 96
    %v8149 = vpop.permute.xlu0 %8148
    %8150 = vrot.lane.b32.xlu0 %v8033, 96
    %v8151 = vpop.permute.xlu0 %8150
    %8152 = vrot.lane.b32.xlu0 %v8062, 96
    %v8153 = vpop.permute.xlu0 %8152
    %8154 = vrot.lane.b32.xlu0 %v7977, 96
    %v8155 = vpop.permute.xlu0 %8154
    %8156 = vrot.lane.b32.xlu0 %v8006, 96
    %v8157 = vpop.permute.xlu0 %8156
    %8158 = vrot.lane.b32.xlu0 %v8035, 96
    %v8159 = vpop.permute.xlu0 %8158
    %8160 = vrot.lane.b32.xlu0 %v8064, 96
    %v8161 = vpop.permute.xlu0 %8160
    %vm8162 = vcmask 785408
    %v8163 = vsel %vm8162, %v8099, %v8101
    %v8164 = vsel %vm8162, %v8101, %v8103
    %v8165 = vsel %vm8162, %v8103, %v8105
    %v8166 = vsel %vm8162, %v8107, %v8109
    %v8167 = vsel %vm8162, %v8109, %v8111
    %v8168 = vsel %vm8162, %v8111, %v8113
    %v8169 = vsel %vm8162, %v8115, %v8117
    %v8170 = vsel %vm8162, %v8117, %v8119
    %v8171 = vsel %vm8162, %v8119, %v8121
    %v8172 = vsel %vm8162, %v8123, %v8125
    %v8173 = vsel %vm8162, %v8125, %v8127
    %v8174 = vsel %vm8162, %v8127, %v8129
    %v8175 = vsel %vm8162, %v8131, %v8133
    %v8176 = vsel %vm8162, %v8133, %v8135
    %v8177 = vsel %vm8162, %v8135, %v8137
    %v8178 = vsel %vm8162, %v8139, %v8141
    %v8179 = vsel %vm8162, %v8141, %v8143
    %v8180 = vsel %vm8162, %v8143, %v8145
    %v8181 = vsel %vm8162, %v8147, %v8149
    %v8182 = vsel %vm8162, %v8149, %v8151
    %v8183 = vsel %vm8162, %v8151, %v8153
    %v8184 = vsel %vm8162, %v8155, %v8157
    %v8185 = vsel %vm8162, %v8157, %v8159
    %v8186 = vsel %vm8162, %v8159, %v8161
    %v8219 = vmax.f32 %v7960, %v8163
    %v8220 = vmax.f32 %v7989, %v8164
    %v8221 = vmax.f32 %v8018, %v8165
    %v8222 = vmax.f32 %v8047, %v8105
    %v8223 = vmax.f32 %v7962, %v8166
    %v8224 = vmax.f32 %v7991, %v8167
    %v8225 = vmax.f32 %v8020, %v8168
    %v8226 = vmax.f32 %v8049, %v8113
    %v8227 = vmax.f32 %v7965, %v8169
    %v8228 = vmax.f32 %v7994, %v8170
    %v8229 = vmax.f32 %v8023, %v8171
    %v8230 = vmax.f32 %v8052, %v8121
    %v8231 = vmax.f32 %v7967, %v8172
    %v8232 = vmax.f32 %v7996, %v8173
    %v8233 = vmax.f32 %v8025, %v8174
    %v8234 = vmax.f32 %v8054, %v8129
    %v8235 = vmax.f32 %v7970, %v8175
    %v8236 = vmax.f32 %v7999, %v8176
    %v8237 = vmax.f32 %v8028, %v8177
    %v8238 = vmax.f32 %v8057, %v8137
    %v8239 = vmax.f32 %v7972, %v8178
    %v8240 = vmax.f32 %v8001, %v8179
    %v8241 = vmax.f32 %v8030, %v8180
    %v8242 = vmax.f32 %v8059, %v8145
    %v8243 = vmax.f32 %v7975, %v8181
    %v8244 = vmax.f32 %v8004, %v8182
    %v8245 = vmax.f32 %v8033, %v8183
    %v8246 = vmax.f32 %v8062, %v8153
    %v8247 = vmax.f32 %v7977, %v8184
    %v8248 = vmax.f32 %v8006, %v8185
    %v8249 = vmax.f32 %v8035, %v8186
    %v8250 = vmax.f32 %v8064, %v8161
    %v8251 = vpack.c.bf16 %v8223, %v8219
    %v8252 = vpack.c.bf16 %v8224, %v8220
    %v8253 = vpack.c.bf16 %v8225, %v8221
    %v8254 = vpack.c.bf16 %v8226, %v8222
    %v8255 = vpack.c.bf16 %v8231, %v8227
    %v8256 = vpack.c.bf16 %v8232, %v8228
    %v8257 = vpack.c.bf16 %v8233, %v8229
    %v8258 = vpack.c.bf16 %v8234, %v8230
    %v8259 = vpack.c.bf16 %v8239, %v8235
    %v8260 = vpack.c.bf16 %v8240, %v8236
    %v8261 = vpack.c.bf16 %v8241, %v8237
    %v8262 = vpack.c.bf16 %v8242, %v8238
    %v8263 = vpack.c.bf16 %v8247, %v8243
    %v8264 = vpack.c.bf16 %v8248, %v8244
    %v8265 = vpack.c.bf16 %v8249, %v8245
    %v8266 = vpack.c.bf16 %v8250, %v8246
    %v8267 = vld [vmem:[#allocation7] sm:$0xff]
    %v8268 = vld [vmem:[#allocation7 + $0x8] sm:$0xff]
    %v8269 = vld [vmem:[#allocation7 + $0x10] sm:$0xff]
    %v8270 = vld [vmem:[#allocation7 + $0x18] sm:$0xff]
    %v8271 = vld [vmem:[#allocation7 + $0x20] sm:$0xff]
    %v8272 = vld [vmem:[#allocation7 + $0x28] sm:$0xff]
    %v8273 = vld [vmem:[#allocation7 + $0x30] sm:$0xff]
    %v8274 = vld [vmem:[#allocation7 + $0x38] sm:$0xff]
    %v8275 = vld [vmem:[#allocation7 + $0x40] sm:$0xff]
    %v8276 = vld [vmem:[#allocation7 + $0x48] sm:$0xff]
    %v8277 = vld [vmem:[#allocation7 + $0x50] sm:$0xff]
    %v8278 = vld [vmem:[#allocation7 + $0x58] sm:$0xff]
    %v8279 = vld [vmem:[#allocation7 + $0x60] sm:$0xff]
    %v8280 = vld [vmem:[#allocation7 + $0x68] sm:$0xff]
    %v8281 = vld [vmem:[#allocation7 + $0x70] sm:$0xff]
    %v8282 = vld [vmem:[#allocation7 + $0x78] sm:$0xff]
    %v8283 = vld [vmem:[#allocation7 + $0x80] sm:$0xff]
    %v8284 = vld [vmem:[#allocation7 + $0x88] sm:$0xff]
    %v8285 = vld [vmem:[#allocation7 + $0x90] sm:$0xff]
    %v8286 = vld [vmem:[#allocation7 + $0x98] sm:$0xff]
    %v8287 = vld [vmem:[#allocation7 + $0xa0] sm:$0xff]
    %v8288 = vld [vmem:[#allocation7 + $0xa8] sm:$0xff]
    %v8289 = vld [vmem:[#allocation7 + $0xb0] sm:$0xff]
    %v8290 = vld [vmem:[#allocation7 + $0xb8] sm:$0xff]
    %v8291 = vld [vmem:[#allocation7 + $0xc0] sm:$0xff]
    %v8292 = vld [vmem:[#allocation7 + $0xc8] sm:$0xff]
    %v8293 = vld [vmem:[#allocation7 + $0xd0] sm:$0xff]
    %v8294 = vld [vmem:[#allocation7 + $0xd8] sm:$0xff]
    %v8295 = vld [vmem:[#allocation7 + $0xe0] sm:$0xff]
    %v8296 = vld [vmem:[#allocation7 + $0xe8] sm:$0xff]
    %v8297 = vld [vmem:[#allocation7 + $0xf0] sm:$0xff]
    %v8298 = vld [vmem:[#allocation7 + $0xf8] sm:$0xff]
    %v8299 = vld [vmem:[#allocation7 + $0x100] sm:$0xff]
    %v8300 = vld [vmem:[#allocation7 + $0x108] sm:$0xff]
    %v8301 = vld [vmem:[#allocation7 + $0x110] sm:$0xff]
    %v8302 = vld [vmem:[#allocation7 + $0x118] sm:$0xff]
    %v8303 = vld [vmem:[#allocation7 + $0x120] sm:$0xff]
    %v8304 = vld [vmem:[#allocation7 + $0x128] sm:$0xff]
    %v8305 = vld [vmem:[#allocation7 + $0x130] sm:$0xff]
    %v8306 = vld [vmem:[#allocation7 + $0x138] sm:$0xff]
    %v8307 = vld [vmem:[#allocation7 + $0x140] sm:$0xff]
    %v8308 = vld [vmem:[#allocation7 + $0x148] sm:$0xff]
    %v8309 = vld [vmem:[#allocation7 + $0x150] sm:$0xff]
    %v8310 = vld [vmem:[#allocation7 + $0x158] sm:$0xff]
    %v8311 = vld [vmem:[#allocation7 + $0x160] sm:$0xff]
    %v8312 = vld [vmem:[#allocation7 + $0x168] sm:$0xff]
    %v8313 = vld [vmem:[#allocation7 + $0x170] sm:$0xff]
    %v8314 = vld [vmem:[#allocation7 + $0x178] sm:$0xff]
    %v8315 = vld [vmem:[#allocation7 + $0x180] sm:$0xff]
    %v8316 = vld [vmem:[#allocation7 + $0x188] sm:$0xff]
    %v8317 = vld [vmem:[#allocation7 + $0x190] sm:$0xff]
    %v8318 = vld [vmem:[#allocation7 + $0x198] sm:$0xff]
    %v8319 = vld [vmem:[#allocation7 + $0x1a0] sm:$0xff]
    %v8320 = vld [vmem:[#allocation7 + $0x1a8] sm:$0xff]
    %v8321 = vld [vmem:[#allocation7 + $0x1b0] sm:$0xff]
    %v8322 = vld [vmem:[#allocation7 + $0x1b8] sm:$0xff]
    %v8379 = vunpack.c.l.b16 %v8267
    %v8380 = vunpack.c.h.b16 %v8267
    %v8381 = vunpack.c.l.b16 %v8268
    %v8382 = vunpack.c.h.b16 %v8268
    %v8383 = vunpack.c.l.b16 %v8269
    %v8384 = vunpack.c.h.b16 %v8269
    %v8385 = vunpack.c.l.b16 %v8270
    %v8386 = vunpack.c.h.b16 %v8270
    %v8387 = vunpack.c.l.b16 %v8271
    %v8388 = vunpack.c.h.b16 %v8271
    %v8389 = vunpack.c.l.b16 %v8272
    %v8390 = vunpack.c.h.b16 %v8272
    %v8391 = vunpack.c.l.b16 %v8273
    %v8392 = vunpack.c.h.b16 %v8273
    %v8393 = vunpack.c.l.b16 %v8274
    %v8394 = vunpack.c.h.b16 %v8274
    %v8395 = vunpack.c.l.b16 %v8275
    %v8396 = vunpack.c.h.b16 %v8275
    %v8397 = vunpack.c.l.b16 %v8276
    %v8398 = vunpack.c.h.b16 %v8276
    %v8399 = vunpack.c.l.b16 %v8277
    %v8400 = vunpack.c.h.b16 %v8277
    %v8401 = vunpack.c.l.b16 %v8278
    %v8402 = vunpack.c.h.b16 %v8278
    %v8403 = vunpack.c.l.b16 %v8279
    %v8404 = vunpack.c.h.b16 %v8279
    %v8405 = vunpack.c.l.b16 %v8280
    %v8406 = vunpack.c.h.b16 %v8280
    %v8407 = vunpack.c.l.b16 %v8281
    %v8408 = vunpack.c.h.b16 %v8281
    %v8409 = vunpack.c.l.b16 %v8282
    %v8410 = vunpack.c.h.b16 %v8282
    %v8411 = vunpack.c.l.b16 %v8283
    %v8412 = vunpack.c.h.b16 %v8283
    %v8413 = vunpack.c.l.b16 %v8284
    %v8414 = vunpack.c.h.b16 %v8284
    %v8415 = vunpack.c.l.b16 %v8285
    %v8416 = vunpack.c.h.b16 %v8285
    %v8417 = vunpack.c.l.b16 %v8286
    %v8418 = vunpack.c.h.b16 %v8286
    %v8419 = vunpack.c.l.b16 %v8287
    %v8420 = vunpack.c.h.b16 %v8287
    %v8421 = vunpack.c.l.b16 %v8288
    %v8422 = vunpack.c.h.b16 %v8288
    %v8423 = vunpack.c.l.b16 %v8289
    %v8424 = vunpack.c.h.b16 %v8289
    %v8425 = vunpack.c.l.b16 %v8290
    %v8426 = vunpack.c.h.b16 %v8290
    %v8427 = vunpack.c.l.b16 %v8291
    %v8428 = vunpack.c.h.b16 %v8291
    %v8429 = vunpack.c.l.b16 %v8292
    %v8430 = vunpack.c.h.b16 %v8292
    %v8431 = vunpack.c.l.b16 %v8293
    %v8432 = vunpack.c.h.b16 %v8293
    %v8433 = vunpack.c.l.b16 %v8294
    %v8434 = vunpack.c.h.b16 %v8294
    %v8435 = vunpack.c.l.b16 %v8295
    %v8436 = vunpack.c.h.b16 %v8295
    %v8437 = vunpack.c.l.b16 %v8296
    %v8438 = vunpack.c.h.b16 %v8296
    %v8439 = vunpack.c.l.b16 %v8297
    %v8440 = vunpack.c.h.b16 %v8297
    %v8441 = vunpack.c.l.b16 %v8298
    %v8442 = vunpack.c.h.b16 %v8298
    %v8443 = vunpack.c.l.b16 %v8299
    %v8444 = vunpack.c.h.b16 %v8299
    %v8445 = vunpack.c.l.b16 %v8300
    %v8446 = vunpack.c.h.b16 %v8300
    %v8447 = vunpack.c.l.b16 %v8301
    %v8448 = vunpack.c.h.b16 %v8301
    %v8449 = vunpack.c.l.b16 %v8302
    %v8450 = vunpack.c.h.b16 %v8302
    %v8451 = vunpack.c.l.b16 %v8303
    %v8452 = vunpack.c.h.b16 %v8303
    %v8453 = vunpack.c.l.b16 %v8304
    %v8454 = vunpack.c.h.b16 %v8304
    %v8455 = vunpack.c.l.b16 %v8305
    %v8456 = vunpack.c.h.b16 %v8305
    %v8457 = vunpack.c.l.b16 %v8306
    %v8458 = vunpack.c.h.b16 %v8306
    %v8459 = vunpack.c.l.b16 %v8307
    %v8460 = vunpack.c.h.b16 %v8307
    %v8461 = vunpack.c.l.b16 %v8308
    %v8462 = vunpack.c.h.b16 %v8308
    %v8463 = vunpack.c.l.b16 %v8309
    %v8464 = vunpack.c.h.b16 %v8309
    %v8465 = vunpack.c.l.b16 %v8310
    %v8466 = vunpack.c.h.b16 %v8310
    %v8467 = vunpack.c.l.b16 %v8311
    %v8468 = vunpack.c.h.b16 %v8311
    %v8469 = vunpack.c.l.b16 %v8312
    %v8470 = vunpack.c.h.b16 %v8312
    %v8471 = vunpack.c.l.b16 %v8313
    %v8472 = vunpack.c.h.b16 %v8313
    %v8473 = vunpack.c.l.b16 %v8314
    %v8474 = vunpack.c.h.b16 %v8314
    %v8475 = vunpack.c.l.b16 %v8315
    %v8476 = vunpack.c.h.b16 %v8315
    %v8477 = vunpack.c.l.b16 %v8316
    %v8478 = vunpack.c.h.b16 %v8316
    %v8479 = vunpack.c.l.b16 %v8317
    %v8480 = vunpack.c.h.b16 %v8317
    %v8481 = vunpack.c.l.b16 %v8318
    %v8482 = vunpack.c.h.b16 %v8318
    %v8483 = vunpack.c.l.b16 %v8319
    %v8484 = vunpack.c.h.b16 %v8319
    %v8485 = vunpack.c.l.b16 %v8320
    %v8486 = vunpack.c.h.b16 %v8320
    %v8487 = vunpack.c.l.b16 %v8321
    %v8488 = vunpack.c.h.b16 %v8321
    %v8489 = vunpack.c.l.b16 %v8322
    %v8490 = vunpack.c.h.b16 %v8322
    %v8491 = vpack.c.b16 %v8381, %v8379
    %v8492 = vpack.c.b16 %v8382, %v8380
    %v8493 = vpack.c.b16 %v8385, %v8383
    %v8494 = vpack.c.b16 %v8386, %v8384
    %v8495 = vpack.c.b16 %v8389, %v8387
    %v8496 = vpack.c.b16 %v8390, %v8388
    %v8497 = vpack.c.b16 %v8393, %v8391
    %v8498 = vpack.c.b16 %v8394, %v8392
    %v8499 = vpack.c.b16 %v8397, %v8395
    %v8500 = vpack.c.b16 %v8398, %v8396
    %v8501 = vpack.c.b16 %v8401, %v8399
    %v8502 = vpack.c.b16 %v8402, %v8400
    %v8503 = vpack.c.b16 %v8405, %v8403
    %v8504 = vpack.c.b16 %v8406, %v8404
    %v8505 = vpack.c.b16 %v8409, %v8407
    %v8506 = vpack.c.b16 %v8410, %v8408
    %v8507 = vpack.c.b16 %v8413, %v8411
    %v8508 = vpack.c.b16 %v8414, %v8412
    %v8509 = vpack.c.b16 %v8417, %v8415
    %v8510 = vpack.c.b16 %v8418, %v8416
    %v8511 = vpack.c.b16 %v8421, %v8419
    %v8512 = vpack.c.b16 %v8422, %v8420
    %v8513 = vpack.c.b16 %v8425, %v8423
    %v8514 = vpack.c.b16 %v8426, %v8424
    %v8515 = vpack.c.b16 %v8429, %v8427
    %v8516 = vpack.c.b16 %v8430, %v8428
    %v8517 = vpack.c.b16 %v8433, %v8431
    %v8518 = vpack.c.b16 %v8434, %v8432
    %v8519 = vpack.c.b16 %v8437, %v8435
    %v8520 = vpack.c.b16 %v8438, %v8436
    %v8521 = vpack.c.b16 %v8441, %v8439
    %v8522 = vpack.c.b16 %v8442, %v8440
    %v8523 = vpack.c.b16 %v8445, %v8443
    %v8524 = vpack.c.b16 %v8446, %v8444
    %v8525 = vpack.c.b16 %v8449, %v8447
    %v8526 = vpack.c.b16 %v8450, %v8448
    %v8527 = vpack.c.b16 %v8453, %v8451
    %v8528 = vpack.c.b16 %v8454, %v8452
    %v8529 = vpack.c.b16 %v8457, %v8455
    %v8530 = vpack.c.b16 %v8458, %v8456
    %v8531 = vpack.c.b16 %v8461, %v8459
    %v8532 = vpack.c.b16 %v8462, %v8460
    %v8533 = vpack.c.b16 %v8465, %v8463
    %v8534 = vpack.c.b16 %v8466, %v8464
    %v8535 = vpack.c.b16 %v8469, %v8467
    %v8536 = vpack.c.b16 %v8470, %v8468
    %v8537 = vpack.c.b16 %v8473, %v8471
    %v8538 = vpack.c.b16 %v8474, %v8472
    %v8539 = vpack.c.b16 %v8477, %v8475
    %v8540 = vpack.c.b16 %v8478, %v8476
    %v8541 = vpack.c.b16 %v8481, %v8479
    %v8542 = vpack.c.b16 %v8482, %v8480
    %v8543 = vpack.c.b16 %v8485, %v8483
    %v8544 = vpack.c.b16 %v8486, %v8484
    %v8545 = vpack.c.b16 %v8489, %v8487
    %v8546 = vpack.c.b16 %v8490, %v8488
    %v8604 = vsel %vm4208, %v8254, 0
    %v8607 = vsel %vm4208, %v8258, 0
    %v8610 = vsel %vm4208, %v8262, 0
    %v8613 = vsel %vm4208, %v8266, 0
    %8615 = vmatpush.bf16.msra.mxu0 %v8505
    %8616 = vmatpush.bf16.msra.mxu0 %v8503
    %8617 = vmatpush.bf16.msra.mxu0 %v8501
    %8618 = vmatpush.bf16.msra.mxu0 %v8499
    %8619 = vmatpush.bf16.msra.mxu0 %v8497
    %8620 = vmatpush.bf16.msra.mxu0 %v8495
    %8621 = vmatpush.bf16.msra.mxu0 %v8493
    %8622 = vmatpush.bf16.msra.mxu0 %v8491
    %8623 = vmatmul.bf16.gmra.mxu0 %v8251
    %v8624 = vpop.f32.mrf.mxu0
    %v8625 = vadd.f32 0.0, %v8624
    %v8626 = vpop.f32.mrf.mxu0
    %v8627 = vadd.f32 0.0, %v8626
    %8628 = vmatmul.bf16.gmra.mxu0 %v8255
    %v8629 = vpop.f32.mrf.mxu0
    %v8630 = vadd.f32 0.0, %v8629
    %v8631 = vpop.f32.mrf.mxu0
    %v8632 = vadd.f32 0.0, %v8631
    %8633 = vmatmul.bf16.gmra.mxu0 %v8259
    %v8634 = vpop.f32.mrf.mxu0
    %v8635 = vadd.f32 0.0, %v8634
    %v8636 = vpop.f32.mrf.mxu0
    %v8637 = vadd.f32 0.0, %v8636
    %8638 = vmatmul.bf16.gmra.mxu0 %v8263
    %v8639 = vpop.f32.mrf.mxu0
    %v8640 = vadd.f32 0.0, %v8639
    %v8641 = vpop.f32.mrf.mxu0
    %8642 = vdwg.mxu0
    %8643 = vmatpush.bf16.msra.mxu0 %v8521
    %8644 = vmatpush.bf16.msra.mxu0 %v8519
    %8645 = vmatpush.bf16.msra.mxu0 %v8517
    %8646 = vmatpush.bf16.msra.mxu0 %v8515
    %8647 = vmatpush.bf16.msra.mxu0 %v8513
    %8648 = vmatpush.bf16.msra.mxu0 %v8511
    %8649 = vmatpush.bf16.msra.mxu0 %v8509
    %8650 = vmatpush.bf16.msra.mxu0 %v8507
    %8651 = vmatmul.bf16.gmra.mxu0 %v8252
    %v8652 = vpop.f32.mrf.mxu0
    %v8653 = vadd.f32 %v8625, %v8652
    %v8654 = vpop.f32.mrf.mxu0
    %v8655 = vadd.f32 %v8627, %v8654
    %8656 = vmatmul.bf16.gmra.mxu0 %v8256
    %v8657 = vpop.f32.mrf.mxu0
    %v8658 = vadd.f32 %v8630, %v8657
    %v8659 = vpop.f32.mrf.mxu0
    %v8660 = vadd.f32 %v8632, %v8659
    %8661 = vmatmul.bf16.gmra.mxu0 %v8260
    %v8662 = vpop.f32.mrf.mxu0
    %v8663 = vadd.f32 %v8635, %v8662
    %v8664 = vpop.f32.mrf.mxu0
    %v8665 = vadd.f32 %v8637, %v8664
    %8666 = vmatmul.bf16.gmra.mxu0 %v8264
    %v8667 = vpop.f32.mrf.mxu0
    %v8668 = vadd.f32 %v8640, %v8667
    %v8669 = vpop.f32.mrf.mxu0
    %8670 = vdwg.mxu0
    %8671 = vmatpush.bf16.msra.mxu0 %v8537
    %8672 = vmatpush.bf16.msra.mxu0 %v8535
    %8673 = vmatpush.bf16.msra.mxu0 %v8533
    %8674 = vmatpush.bf16.msra.mxu0 %v8531
    %8675 = vmatpush.bf16.msra.mxu0 %v8529
    %8676 = vmatpush.bf16.msra.mxu0 %v8527
    %8677 = vmatpush.bf16.msra.mxu0 %v8525
    %8678 = vmatpush.bf16.msra.mxu0 %v8523
    %8679 = vmatmul.bf16.gmra.mxu0 %v8253
    %v8680 = vpop.f32.mrf.mxu0
    %v8681 = vadd.f32 %v8653, %v8680
    %v8682 = vpop.f32.mrf.mxu0
    %v8683 = vadd.f32 %v8655, %v8682
    %8684 = vmatmul.bf16.gmra.mxu0 %v8257
    %v8685 = vpop.f32.mrf.mxu0
    %v8686 = vadd.f32 %v8658, %v8685
    %v8687 = vpop.f32.mrf.mxu0
    %v8688 = vadd.f32 %v8660, %v8687
    %8689 = vmatmul.bf16.gmra.mxu0 %v8261
    %v8690 = vpop.f32.mrf.mxu0
    %v8691 = vadd.f32 %v8663, %v8690
    %v8692 = vpop.f32.mrf.mxu0
    %v8693 = vadd.f32 %v8665, %v8692
    %8694 = vmatmul.bf16.gmra.mxu0 %v8265
    %v8695 = vpop.f32.mrf.mxu0
    %v8696 = vadd.f32 %v8668, %v8695
    %v8697 = vpop.f32.mrf.mxu0
    %8698 = vdwg.mxu0
    %8699 = vmatpush.bf16.msra.mxu0 0
    %8700 = vmatpush.bf16.msra.mxu0 0
    %8701 = vmatpush.bf16.msra.mxu0 0
    %8702 = vmatpush.bf16.msra.mxu0 0
    %8703 = vmatpush.bf16.msra.mxu0 %v8545
    %8704 = vmatpush.bf16.msra.mxu0 %v8543
    %8705 = vmatpush.bf16.msra.mxu0 %v8541
    %8706 = vmatpush.bf16.msra.mxu0 %v8539
    %8707 = vmatmul.bf16.gmra.mxu0 %v8604
    %v8708 = vpop.f32.mrf.mxu0
    %v8709 = vadd.f32 %v8681, %v8708
    %v8710 = vpop.f32.mrf.mxu0
    %v8711 = vadd.f32 %v8683, %v8710
    %8712 = vmatmul.bf16.gmra.mxu0 %v8607
    %v8713 = vpop.f32.mrf.mxu0
    %v8714 = vadd.f32 %v8686, %v8713
    %v8715 = vpop.f32.mrf.mxu0
    %v8716 = vadd.f32 %v8688, %v8715
    %8717 = vmatmul.bf16.gmra.mxu0 %v8610
    %v8718 = vpop.f32.mrf.mxu0
    %v8719 = vadd.f32 %v8691, %v8718
    %v8720 = vpop.f32.mrf.mxu0
    %v8721 = vadd.f32 %v8693, %v8720
    %8722 = vmatmul.bf16.gmra.mxu0 %v8613
    %v8723 = vpop.f32.mrf.mxu0
    %v8724 = vadd.f32 %v8696, %v8723
    %v8725 = vpop.f32.mrf.mxu0
    %8726 = vdwg.mxu0
    %8727 = vmatpush.bf16.msra.mxu0 %v8506
    %8728 = vmatpush.bf16.msra.mxu0 %v8504
    %8729 = vmatpush.bf16.msra.mxu0 %v8502
    %8730 = vmatpush.bf16.msra.mxu0 %v8500
    %8731 = vmatpush.bf16.msra.mxu0 %v8498
    %8732 = vmatpush.bf16.msra.mxu0 %v8496
    %8733 = vmatpush.bf16.msra.mxu0 %v8494
    %8734 = vmatpush.bf16.msra.mxu0 %v8492
    %8735 = vmatmul.bf16.gmra.mxu0 %v8251
    %v8736 = vpop.f32.mrf.mxu0
    %v8737 = vadd.f32 0.0, %v8736
    %v8738 = vpop.f32.mrf.mxu0
    %v8739 = vadd.f32 0.0, %v8738
    %8740 = vmatmul.bf16.gmra.mxu0 %v8255
    %v8741 = vpop.f32.mrf.mxu0
    %v8742 = vadd.f32 0.0, %v8741
    %v8743 = vpop.f32.mrf.mxu0
    %v8744 = vadd.f32 0.0, %v8743
    %8745 = vmatmul.bf16.gmra.mxu0 %v8259
    %v8746 = vpop.f32.mrf.mxu0
    %v8747 = vadd.f32 0.0, %v8746
    %v8748 = vpop.f32.mrf.mxu0
    %v8749 = vadd.f32 0.0, %v8748
    %8750 = vmatmul.bf16.gmra.mxu0 %v8263
    %v8751 = vpop.f32.mrf.mxu0
    %v8752 = vadd.f32 0.0, %v8751
    %v8753 = vpop.f32.mrf.mxu0
    %8754 = vdwg.mxu0
    %8755 = vmatpush.bf16.msra.mxu0 %v8522
    %8756 = vmatpush.bf16.msra.mxu0 %v8520
    %8757 = vmatpush.bf16.msra.mxu0 %v8518
    %8758 = vmatpush.bf16.msra.mxu0 %v8516
    %8759 = vmatpush.bf16.msra.mxu0 %v8514
    %8760 = vmatpush.bf16.msra.mxu0 %v8512
    %8761 = vmatpush.bf16.msra.mxu0 %v8510
    %8762 = vmatpush.bf16.msra.mxu0 %v8508
    %8763 = vmatmul.bf16.gmra.mxu0 %v8252
    %v8764 = vpop.f32.mrf.mxu0
    %v8765 = vadd.f32 %v8737, %v8764
    %v8766 = vpop.f32.mrf.mxu0
    %v8767 = vadd.f32 %v8739, %v8766
    %8768 = vmatmul.bf16.gmra.mxu0 %v8256
    %v8769 = vpop.f32.mrf.mxu0
    %v8770 = vadd.f32 %v8742, %v8769
    %v8771 = vpop.f32.mrf.mxu0
    %v8772 = vadd.f32 %v8744, %v8771
    %8773 = vmatmul.bf16.gmra.mxu0 %v8260
    %v8774 = vpop.f32.mrf.mxu0
    %v8775 = vadd.f32 %v8747, %v8774
    %v8776 = vpop.f32.mrf.mxu0
    %v8777 = vadd.f32 %v8749, %v8776
    %8778 = vmatmul.bf16.gmra.mxu0 %v8264
    %v8779 = vpop.f32.mrf.mxu0
    %v8780 = vadd.f32 %v8752, %v8779
    %v8781 = vpop.f32.mrf.mxu0
    %8782 = vdwg.mxu0
    %8783 = vmatpush.bf16.msra.mxu0 %v8538
    %8784 = vmatpush.bf16.msra.mxu0 %v8536
    %8785 = vmatpush.bf16.msra.mxu0 %v8534
    %8786 = vmatpush.bf16.msra.mxu0 %v8532
    %8787 = vmatpush.bf16.msra.mxu0 %v8530
    %8788 = vmatpush.bf16.msra.mxu0 %v8528
    %8789 = vmatpush.bf16.msra.mxu0 %v8526
    %8790 = vmatpush.bf16.msra.mxu0 %v8524
    %8791 = vmatmul.bf16.gmra.mxu0 %v8253
    %v8792 = vpop.f32.mrf.mxu0
    %v8793 = vadd.f32 %v8765, %v8792
    %v8794 = vpop.f32.mrf.mxu0
    %v8795 = vadd.f32 %v8767, %v8794
    %8796 = vmatmul.bf16.gmra.mxu0 %v8257
    %v8797 = vpop.f32.mrf.mxu0
    %v8798 = vadd.f32 %v8770, %v8797
    %v8799 = vpop.f32.mrf.mxu0
    %v8800 = vadd.f32 %v8772, %v8799
    %8801 = vmatmul.bf16.gmra.mxu0 %v8261
    %v8802 = vpop.f32.mrf.mxu0
    %v8803 = vadd.f32 %v8775, %v8802
    %v8804 = vpop.f32.mrf.mxu0
    %v8805 = vadd.f32 %v8777, %v8804
    %8806 = vmatmul.bf16.gmra.mxu0 %v8265
    %v8807 = vpop.f32.mrf.mxu0
    %v8808 = vadd.f32 %v8780, %v8807
    %v8809 = vpop.f32.mrf.mxu0
    %8810 = vdwg.mxu0
    %8811 = vmatpush.bf16.msra.mxu0 0
    %8812 = vmatpush.bf16.msra.mxu0 0
    %8813 = vmatpush.bf16.msra.mxu0 0
    %8814 = vmatpush.bf16.msra.mxu0 0
    %8815 = vmatpush.bf16.msra.mxu0 %v8546
    %8816 = vmatpush.bf16.msra.mxu0 %v8544
    %8817 = vmatpush.bf16.msra.mxu0 %v8542
    %8818 = vmatpush.bf16.msra.mxu0 %v8540
    %8819 = vmatmul.bf16.gmra.mxu0 %v8604
    %v8820 = vpop.f32.mrf.mxu0
    %v8821 = vadd.f32 %v8793, %v8820
    %v8822 = vpop.f32.mrf.mxu0
    %v8823 = vadd.f32 %v8795, %v8822
    %8824 = vmatmul.bf16.gmra.mxu0 %v8607
    %v8825 = vpop.f32.mrf.mxu0
    %v8826 = vadd.f32 %v8798, %v8825
    %v8827 = vpop.f32.mrf.mxu0
    %v8828 = vadd.f32 %v8800, %v8827
    %8829 = vmatmul.bf16.gmra.mxu0 %v8610
    %v8830 = vpop.f32.mrf.mxu0
    %v8831 = vadd.f32 %v8803, %v8830
    %v8832 = vpop.f32.mrf.mxu0
    %v8833 = vadd.f32 %v8805, %v8832
    %8834 = vmatmul.bf16.gmra.mxu0 %v8613
    %v8835 = vpop.f32.mrf.mxu0
    %v8836 = vadd.f32 %v8808, %v8835
    %v8837 = vpop.f32.mrf.mxu0
    %8838 = vdwg.mxu0
    %v8839 = vpack.c.bf16 %v8709, %v8709
    %v8840 = vpack.c.bf16 %v8821, %v8821
    %v8841 = vld [vmem:[%s9] sm:$0xf]
    %v8842 = vld [vmem:[%s9 + $0x4] sm:$0xf]
    %v8843 = vld [vmem:[%s9 + $0x8] sm:$0xf]
    %v8844 = vld [vmem:[%s9 + $0xc] sm:$0xf]
    %v8845 = vld [vmem:[%s9 + $0x10] sm:$0xf]
    %v8846 = vld [vmem:[%s9 + $0x14] sm:$0xf]
    %v8847 = vld [vmem:[%s9 + $0x18] sm:$0xf]
    %v8848 = vld [vmem:[%s9 + $0x1c] sm:$0xf]
    %v8849 = vld [vmem:[%s9 + $0x20] sm:$0xf]
    %v8850 = vld [vmem:[%s9 + $0x24] sm:$0xf]
    %v8851 = vld [vmem:[%s9 + $0x28] sm:$0xf]
    %v8852 = vld [vmem:[%s9 + $0x2c] sm:$0xf]
    %v8853 = vld [vmem:[%s9 + $0x30] sm:$0xf]
    %v8854 = vld [vmem:[%s9 + $0x34] sm:$0xf]
    %v8855 = vld [vmem:[%s9 + $0x38] sm:$0xf]
    %v8856 = vld [vmem:[%s9 + $0x3c] sm:$0xf]
    %v8857 = vld [vmem:[%s9 + $0x40] sm:$0xf]
    %v8858 = vld [vmem:[%s9 + $0x44] sm:$0xf]
    %v8859 = vld [vmem:[%s9 + $0x48] sm:$0xf]
    %v8860 = vld [vmem:[%s9 + $0x4c] sm:$0xf]
    %v8861 = vld [vmem:[%s9 + $0x50] sm:$0xf]
    %v8862 = vld [vmem:[%s9 + $0x54] sm:$0xf]
    %v8863 = vld [vmem:[%s9 + $0x58] sm:$0xf]
    %v8864 = vld [vmem:[%s9 + $0x5c] sm:$0xf]
    %v8865 = vld [vmem:[%s9 + $0x60] sm:$0xf]
    %v8866 = vld [vmem:[%s9 + $0x64] sm:$0xf]
    %v8867 = vld [vmem:[%s9 + $0x68] sm:$0xf]
    %v8868 = vld [vmem:[%s9 + $0x6c] sm:$0xf]
    %v8869 = vpack.c.bf16 %v8711, %v8711
    %v8870 = vpack.c.bf16 %v8823, %v8823
    %s8871 = scalar_lea.vmem %s9, 112
    %v8872 = vld [vmem:[%s8871] sm:$0xf]
    %v8873 = vld [vmem:[%s8871 + $0x4] sm:$0xf]
    %v8874 = vld [vmem:[%s8871 + $0x8] sm:$0xf]
    %v8875 = vld [vmem:[%s8871 + $0xc] sm:$0xf]
    %v8876 = vld [vmem:[%s8871 + $0x10] sm:$0xf]
    %v8877 = vld [vmem:[%s8871 + $0x14] sm:$0xf]
    %v8878 = vld [vmem:[%s8871 + $0x18] sm:$0xf]
    %v8879 = vld [vmem:[%s8871 + $0x1c] sm:$0xf]
    %v8880 = vld [vmem:[%s8871 + $0x20] sm:$0xf]
    %v8881 = vld [vmem:[%s8871 + $0x24] sm:$0xf]
    %v8882 = vld [vmem:[%s8871 + $0x28] sm:$0xf]
    %v8883 = vld [vmem:[%s8871 + $0x2c] sm:$0xf]
    %v8884 = vld [vmem:[%s8871 + $0x30] sm:$0xf]
    %v8885 = vld [vmem:[%s8871 + $0x34] sm:$0xf]
    %v8886 = vld [vmem:[%s8871 + $0x38] sm:$0xf]
    %v8887 = vld [vmem:[%s8871 + $0x3c] sm:$0xf]
    %v8888 = vld [vmem:[%s8871 + $0x40] sm:$0xf]
    %v8889 = vld [vmem:[%s8871 + $0x44] sm:$0xf]
    %v8890 = vld [vmem:[%s8871 + $0x48] sm:$0xf]
    %v8891 = vld [vmem:[%s8871 + $0x4c] sm:$0xf]
    %v8892 = vld [vmem:[%s8871 + $0x50] sm:$0xf]
    %v8893 = vld [vmem:[%s8871 + $0x54] sm:$0xf]
    %v8894 = vld [vmem:[%s8871 + $0x58] sm:$0xf]
    %v8895 = vld [vmem:[%s8871 + $0x5c] sm:$0xf]
    %v8896 = vld [vmem:[%s8871 + $0x60] sm:$0xf]
    %v8897 = vld [vmem:[%s8871 + $0x64] sm:$0xf]
    %v8898 = vld [vmem:[%s8871 + $0x68] sm:$0xf]
    %v8899 = vld [vmem:[%s8871 + $0x6c] sm:$0xf]
    %v8928 = vunpack.c.l.b16 %v8872
    %v8929 = vunpack.c.l.b16 %v8873
    %v8930 = vunpack.c.l.b16 %v8874
    %v8931 = vunpack.c.l.b16 %v8875
    %v8932 = vunpack.c.l.b16 %v8876
    %v8933 = vunpack.c.l.b16 %v8877
    %v8934 = vunpack.c.l.b16 %v8878
    %v8935 = vunpack.c.l.b16 %v8879
    %v8936 = vunpack.c.l.b16 %v8880
    %v8937 = vunpack.c.l.b16 %v8881
    %v8938 = vunpack.c.l.b16 %v8882
    %v8939 = vunpack.c.l.b16 %v8883
    %v8940 = vunpack.c.l.b16 %v8884
    %v8941 = vunpack.c.l.b16 %v8885
    %v8942 = vunpack.c.l.b16 %v8886
    %v8943 = vunpack.c.l.b16 %v8887
    %v8944 = vunpack.c.l.b16 %v8888
    %v8945 = vunpack.c.l.b16 %v8889
    %v8946 = vunpack.c.l.b16 %v8890
    %v8947 = vunpack.c.l.b16 %v8891
    %v8948 = vunpack.c.l.b16 %v8892
    %v8949 = vunpack.c.l.b16 %v8893
    %v8950 = vunpack.c.l.b16 %v8894
    %v8951 = vunpack.c.l.b16 %v8895
    %v8952 = vunpack.c.l.b16 %v8896
    %v8953 = vunpack.c.l.b16 %v8897
    %v8954 = vunpack.c.l.b16 %v8898
    %v8955 = vunpack.c.l.b16 %v8899
    %v8956 = vpack.c.b16 %v8929, %v8928
    %v8957 = vpack.c.b16 %v8931, %v8930
    %v8958 = vpack.c.b16 %v8933, %v8932
    %v8959 = vpack.c.b16 %v8935, %v8934
    %v8960 = vpack.c.b16 %v8937, %v8936
    %v8961 = vpack.c.b16 %v8939, %v8938
    %v8962 = vpack.c.b16 %v8941, %v8940
    %v8963 = vpack.c.b16 %v8943, %v8942
    %v8964 = vpack.c.b16 %v8945, %v8944
    %v8965 = vpack.c.b16 %v8947, %v8946
    %v8966 = vpack.c.b16 %v8949, %v8948
    %v8967 = vpack.c.b16 %v8951, %v8950
    %v8968 = vpack.c.b16 %v8953, %v8952
    %v8969 = vpack.c.b16 %v8955, %v8954
    %v8985 = vsel %vm8162, %v8870, 0
    %8987 = vmatpush.bf16.msra.mxu0 %v8963
    %8988 = vmatpush.bf16.msra.mxu0 %v8962
    %8989 = vmatpush.bf16.msra.mxu0 %v8961
    %8990 = vmatpush.bf16.msra.mxu0 %v8960
    %8991 = vmatpush.bf16.msra.mxu0 %v8959
    %8992 = vmatpush.bf16.msra.mxu0 %v8958
    %8993 = vmatpush.bf16.msra.mxu0 %v8957
    %8994 = vmatpush.bf16.msra.mxu0 %v8956
    %8995 = vmatmul.bf16.gmra.mxu0 %v8869
    %v8996 = vpop.f32.mrf.mxu0
    %v8997 = vadd.f32 0.0, %v8996
    %v8998 = vpop.f32.mrf.mxu0
    %8999 = vdwg.mxu0
    %9000 = vmatpush.bf16.msra.mxu0 0
    %9001 = vmatpush.bf16.msra.mxu0 0
    %9002 = vmatpush.bf16.msra.mxu0 %v8969
    %9003 = vmatpush.bf16.msra.mxu0 %v8968
    %9004 = vmatpush.bf16.msra.mxu0 %v8967
    %9005 = vmatpush.bf16.msra.mxu0 %v8966
    %9006 = vmatpush.bf16.msra.mxu0 %v8965
    %9007 = vmatpush.bf16.msra.mxu0 %v8964
    %9008 = vmatmul.bf16.gmra.mxu0 %v8985
    %v9009 = vpop.f32.mrf.mxu0
    %v9010 = vadd.f32 %v8997, %v9009
    %v9011 = vpop.f32.mrf.mxu0
    %9012 = vdwg.mxu0
    %v9041 = vunpack.c.l.b16 %v8841
    %v9042 = vunpack.c.l.b16 %v8842
    %v9043 = vunpack.c.l.b16 %v8843
    %v9044 = vunpack.c.l.b16 %v8844
    %v9045 = vunpack.c.l.b16 %v8845
    %v9046 = vunpack.c.l.b16 %v8846
    %v9047 = vunpack.c.l.b16 %v8847
    %v9048 = vunpack.c.l.b16 %v8848
    %v9049 = vunpack.c.l.b16 %v8849
    %v9050 = vunpack.c.l.b16 %v8850
    %v9051 = vunpack.c.l.b16 %v8851
    %v9052 = vunpack.c.l.b16 %v8852
    %v9053 = vunpack.c.l.b16 %v8853
    %v9054 = vunpack.c.l.b16 %v8854
    %v9055 = vunpack.c.l.b16 %v8855
    %v9056 = vunpack.c.l.b16 %v8856
    %v9057 = vunpack.c.l.b16 %v8857
    %v9058 = vunpack.c.l.b16 %v8858
    %v9059 = vunpack.c.l.b16 %v8859
    %v9060 = vunpack.c.l.b16 %v8860
    %v9061 = vunpack.c.l.b16 %v8861
    %v9062 = vunpack.c.l.b16 %v8862
    %v9063 = vunpack.c.l.b16 %v8863
    %v9064 = vunpack.c.l.b16 %v8864
    %v9065 = vunpack.c.l.b16 %v8865
    %v9066 = vunpack.c.l.b16 %v8866
    %v9067 = vunpack.c.l.b16 %v8867
    %v9068 = vunpack.c.l.b16 %v8868
    %v9069 = vpack.c.b16 %v9042, %v9041
    %v9070 = vpack.c.b16 %v9044, %v9043
    %v9071 = vpack.c.b16 %v9046, %v9045
    %v9072 = vpack.c.b16 %v9048, %v9047
    %v9073 = vpack.c.b16 %v9050, %v9049
    %v9074 = vpack.c.b16 %v9052, %v9051
    %v9075 = vpack.c.b16 %v9054, %v9053
    %v9076 = vpack.c.b16 %v9056, %v9055
    %v9077 = vpack.c.b16 %v9058, %v9057
    %v9078 = vpack.c.b16 %v9060, %v9059
    %v9079 = vpack.c.b16 %v9062, %v9061
    %v9080 = vpack.c.b16 %v9064, %v9063
    %v9081 = vpack.c.b16 %v9066, %v9065
    %v9082 = vpack.c.b16 %v9068, %v9067
    %v9098 = vsel %vm8162, %v8840, 0
    %9100 = vmatpush.bf16.msra.mxu0 %v9076
    %9101 = vmatpush.bf16.msra.mxu0 %v9075
    %9102 = vmatpush.bf16.msra.mxu0 %v9074
    %9103 = vmatpush.bf16.msra.mxu0 %v9073
    %9104 = vmatpush.bf16.msra.mxu0 %v9072
    %9105 = vmatpush.bf16.msra.mxu0 %v9071
    %9106 = vmatpush.bf16.msra.mxu0 %v9070
    %9107 = vmatpush.bf16.msra.mxu0 %v9069
    %9108 = vmatmul.bf16.gmra.mxu0 %v8839
    %v9109 = vpop.f32.mrf.mxu0
    %v9110 = vadd.f32 %v9010, %v9109
    %v9111 = vpop.f32.mrf.mxu0
    %9112 = vdwg.mxu0
    %9113 = vmatpush.bf16.msra.mxu0 0
    %9114 = vmatpush.bf16.msra.mxu0 0
    %9115 = vmatpush.bf16.msra.mxu0 %v9082
    %9116 = vmatpush.bf16.msra.mxu0 %v9081
    %9117 = vmatpush.bf16.msra.mxu0 %v9080
    %9118 = vmatpush.bf16.msra.mxu0 %v9079
    %9119 = vmatpush.bf16.msra.mxu0 %v9078
    %9120 = vmatpush.bf16.msra.mxu0 %v9077
    %9121 = vmatmul.bf16.gmra.mxu0 %v9098
    %v9122 = vpop.f32.mrf.mxu0
    %v9123 = vadd.f32 %v9110, %v9122
    %v9124 = vpop.f32.mrf.mxu0
    %9125 = vdwg.mxu0
    %v9126 = vpack.c.bf16 %v8714, %v8714
    %v9127 = vpack.c.bf16 %v8826, %v8826
    %s9128 = scalar_lea.vmem %s9, 224
    %v9129 = vld [vmem:[%s9128] sm:$0xf]
    %v9130 = vld [vmem:[%s9128 + $0x4] sm:$0xf]
    %v9131 = vld [vmem:[%s9128 + $0x8] sm:$0xf]
    %v9132 = vld [vmem:[%s9128 + $0xc] sm:$0xf]
    %v9133 = vld [vmem:[%s9128 + $0x10] sm:$0xf]
    %v9134 = vld [vmem:[%s9128 + $0x14] sm:$0xf]
    %v9135 = vld [vmem:[%s9128 + $0x18] sm:$0xf]
    %v9136 = vld [vmem:[%s9128 + $0x1c] sm:$0xf]
    %v9137 = vld [vmem:[%s9128 + $0x20] sm:$0xf]
    %v9138 = vld [vmem:[%s9128 + $0x24] sm:$0xf]
    %v9139 = vld [vmem:[%s9128 + $0x28] sm:$0xf]
    %v9140 = vld [vmem:[%s9128 + $0x2c] sm:$0xf]
    %v9141 = vld [vmem:[%s9128 + $0x30] sm:$0xf]
    %v9142 = vld [vmem:[%s9128 + $0x34] sm:$0xf]
    %v9143 = vld [vmem:[%s9128 + $0x38] sm:$0xf]
    %v9144 = vld [vmem:[%s9128 + $0x3c] sm:$0xf]
    %v9145 = vld [vmem:[%s9128 + $0x40] sm:$0xf]
    %v9146 = vld [vmem:[%s9128 + $0x44] sm:$0xf]
    %v9147 = vld [vmem:[%s9128 + $0x48] sm:$0xf]
    %v9148 = vld [vmem:[%s9128 + $0x4c] sm:$0xf]
    %v9149 = vld [vmem:[%s9128 + $0x50] sm:$0xf]
    %v9150 = vld [vmem:[%s9128 + $0x54] sm:$0xf]
    %v9151 = vld [vmem:[%s9128 + $0x58] sm:$0xf]
    %v9152 = vld [vmem:[%s9128 + $0x5c] sm:$0xf]
    %v9153 = vld [vmem:[%s9128 + $0x60] sm:$0xf]
    %v9154 = vld [vmem:[%s9128 + $0x64] sm:$0xf]
    %v9155 = vld [vmem:[%s9128 + $0x68] sm:$0xf]
    %v9156 = vld [vmem:[%s9128 + $0x6c] sm:$0xf]
    %v9185 = vunpack.c.l.b16 %v9129
    %v9186 = vunpack.c.l.b16 %v9130
    %v9187 = vunpack.c.l.b16 %v9131
    %v9188 = vunpack.c.l.b16 %v9132
    %v9189 = vunpack.c.l.b16 %v9133
    %v9190 = vunpack.c.l.b16 %v9134
    %v9191 = vunpack.c.l.b16 %v9135
    %v9192 = vunpack.c.l.b16 %v9136
    %v9193 = vunpack.c.l.b16 %v9137
    %v9194 = vunpack.c.l.b16 %v9138
    %v9195 = vunpack.c.l.b16 %v9139
    %v9196 = vunpack.c.l.b16 %v9140
    %v9197 = vunpack.c.l.b16 %v9141
    %v9198 = vunpack.c.l.b16 %v9142
    %v9199 = vunpack.c.l.b16 %v9143
    %v9200 = vunpack.c.l.b16 %v9144
    %v9201 = vunpack.c.l.b16 %v9145
    %v9202 = vunpack.c.l.b16 %v9146
    %v9203 = vunpack.c.l.b16 %v9147
    %v9204 = vunpack.c.l.b16 %v9148
    %v9205 = vunpack.c.l.b16 %v9149
    %v9206 = vunpack.c.l.b16 %v9150
    %v9207 = vunpack.c.l.b16 %v9151
    %v9208 = vunpack.c.l.b16 %v9152
    %v9209 = vunpack.c.l.b16 %v9153
    %v9210 = vunpack.c.l.b16 %v9154
    %v9211 = vunpack.c.l.b16 %v9155
    %v9212 = vunpack.c.l.b16 %v9156
    %v9213 = vpack.c.b16 %v9186, %v9185
    %v9214 = vpack.c.b16 %v9188, %v9187
    %v9215 = vpack.c.b16 %v9190, %v9189
    %v9216 = vpack.c.b16 %v9192, %v9191
    %v9217 = vpack.c.b16 %v9194, %v9193
    %v9218 = vpack.c.b16 %v9196, %v9195
    %v9219 = vpack.c.b16 %v9198, %v9197
    %v9220 = vpack.c.b16 %v9200, %v9199
    %v9221 = vpack.c.b16 %v9202, %v9201
    %v9222 = vpack.c.b16 %v9204, %v9203
    %v9223 = vpack.c.b16 %v9206, %v9205
    %v9224 = vpack.c.b16 %v9208, %v9207
    %v9225 = vpack.c.b16 %v9210, %v9209
    %v9226 = vpack.c.b16 %v9212, %v9211
    %v9242 = vsel %vm8162, %v9127, 0
    %9244 = vmatpush.bf16.msra.mxu0 %v9220
    %9245 = vmatpush.bf16.msra.mxu0 %v9219
    %9246 = vmatpush.bf16.msra.mxu0 %v9218
    %9247 = vmatpush.bf16.msra.mxu0 %v9217
    %9248 = vmatpush.bf16.msra.mxu0 %v9216
    %9249 = vmatpush.bf16.msra.mxu0 %v9215
    %9250 = vmatpush.bf16.msra.mxu0 %v9214
    %9251 = vmatpush.bf16.msra.mxu0 %v9213
    %9252 = vmatmul.bf16.gmra.mxu0 %v9126
    %v9253 = vpop.f32.mrf.mxu0
    %v9254 = vadd.f32 0.0, %v9253
    %v9255 = vpop.f32.mrf.mxu0
    %9256 = vdwg.mxu0
    %9257 = vmatpush.bf16.msra.mxu0 0
    %9258 = vmatpush.bf16.msra.mxu0 0
    %9259 = vmatpush.bf16.msra.mxu0 %v9226
    %9260 = vmatpush.bf16.msra.mxu0 %v9225
    %9261 = vmatpush.bf16.msra.mxu0 %v9224
    %9262 = vmatpush.bf16.msra.mxu0 %v9223
    %9263 = vmatpush.bf16.msra.mxu0 %v9222
    %9264 = vmatpush.bf16.msra.mxu0 %v9221
    %9265 = vmatmul.bf16.gmra.mxu0 %v9242
    %v9266 = vpop.f32.mrf.mxu0
    %v9267 = vadd.f32 %v9254, %v9266
    %v9268 = vpop.f32.mrf.mxu0
    %9269 = vdwg.mxu0
    %v9270 = vadd.f32 %v9123, %v9267
    %v9271 = vpack.c.bf16 %v8716, %v8716
    %v9272 = vpack.c.bf16 %v8828, %v8828
    %s9273 = scalar_lea.vmem %s9, 336
    %v9274 = vld [vmem:[%s9273] sm:$0xf]
    %v9275 = vld [vmem:[%s9273 + $0x4] sm:$0xf]
    %v9276 = vld [vmem:[%s9273 + $0x8] sm:$0xf]
    %v9277 = vld [vmem:[%s9273 + $0xc] sm:$0xf]
    %v9278 = vld [vmem:[%s9273 + $0x10] sm:$0xf]
    %v9279 = vld [vmem:[%s9273 + $0x14] sm:$0xf]
    %v9280 = vld [vmem:[%s9273 + $0x18] sm:$0xf]
    %v9281 = vld [vmem:[%s9273 + $0x1c] sm:$0xf]
    %v9282 = vld [vmem:[%s9273 + $0x20] sm:$0xf]
    %v9283 = vld [vmem:[%s9273 + $0x24] sm:$0xf]
    %v9284 = vld [vmem:[%s9273 + $0x28] sm:$0xf]
    %v9285 = vld [vmem:[%s9273 + $0x2c] sm:$0xf]
    %v9286 = vld [vmem:[%s9273 + $0x30] sm:$0xf]
    %v9287 = vld [vmem:[%s9273 + $0x34] sm:$0xf]
    %v9288 = vld [vmem:[%s9273 + $0x38] sm:$0xf]
    %v9289 = vld [vmem:[%s9273 + $0x3c] sm:$0xf]
    %v9290 = vld [vmem:[%s9273 + $0x40] sm:$0xf]
    %v9291 = vld [vmem:[%s9273 + $0x44] sm:$0xf]
    %v9292 = vld [vmem:[%s9273 + $0x48] sm:$0xf]
    %v9293 = vld [vmem:[%s9273 + $0x4c] sm:$0xf]
    %v9294 = vld [vmem:[%s9273 + $0x50] sm:$0xf]
    %v9295 = vld [vmem:[%s9273 + $0x54] sm:$0xf]
    %v9296 = vld [vmem:[%s9273 + $0x58] sm:$0xf]
    %v9297 = vld [vmem:[%s9273 + $0x5c] sm:$0xf]
    %v9298 = vld [vmem:[%s9273 + $0x60] sm:$0xf]
    %v9299 = vld [vmem:[%s9273 + $0x64] sm:$0xf]
    %v9300 = vld [vmem:[%s9273 + $0x68] sm:$0xf]
    %v9301 = vld [vmem:[%s9273 + $0x6c] sm:$0xf]
    %v9330 = vunpack.c.l.b16 %v9274
    %v9331 = vunpack.c.l.b16 %v9275
    %v9332 = vunpack.c.l.b16 %v9276
    %v9333 = vunpack.c.l.b16 %v9277
    %v9334 = vunpack.c.l.b16 %v9278
    %v9335 = vunpack.c.l.b16 %v9279
    %v9336 = vunpack.c.l.b16 %v9280
    %v9337 = vunpack.c.l.b16 %v9281
    %v9338 = vunpack.c.l.b16 %v9282
    %v9339 = vunpack.c.l.b16 %v9283
    %v9340 = vunpack.c.l.b16 %v9284
    %v9341 = vunpack.c.l.b16 %v9285
    %v9342 = vunpack.c.l.b16 %v9286
    %v9343 = vunpack.c.l.b16 %v9287
    %v9344 = vunpack.c.l.b16 %v9288
    %v9345 = vunpack.c.l.b16 %v9289
    %v9346 = vunpack.c.l.b16 %v9290
    %v9347 = vunpack.c.l.b16 %v9291
    %v9348 = vunpack.c.l.b16 %v9292
    %v9349 = vunpack.c.l.b16 %v9293
    %v9350 = vunpack.c.l.b16 %v9294
    %v9351 = vunpack.c.l.b16 %v9295
    %v9352 = vunpack.c.l.b16 %v9296
    %v9353 = vunpack.c.l.b16 %v9297
    %v9354 = vunpack.c.l.b16 %v9298
    %v9355 = vunpack.c.l.b16 %v9299
    %v9356 = vunpack.c.l.b16 %v9300
    %v9357 = vunpack.c.l.b16 %v9301
    %v9358 = vpack.c.b16 %v9331, %v9330
    %v9359 = vpack.c.b16 %v9333, %v9332
    %v9360 = vpack.c.b16 %v9335, %v9334
    %v9361 = vpack.c.b16 %v9337, %v9336
    %v9362 = vpack.c.b16 %v9339, %v9338
    %v9363 = vpack.c.b16 %v9341, %v9340
    %v9364 = vpack.c.b16 %v9343, %v9342
    %v9365 = vpack.c.b16 %v9345, %v9344
    %v9366 = vpack.c.b16 %v9347, %v9346
    %v9367 = vpack.c.b16 %v9349, %v9348
    %v9368 = vpack.c.b16 %v9351, %v9350
    %v9369 = vpack.c.b16 %v9353, %v9352
    %v9370 = vpack.c.b16 %v9355, %v9354
    %v9371 = vpack.c.b16 %v9357, %v9356
    %v9387 = vsel %vm8162, %v9272, 0
    %9389 = vmatpush.bf16.msra.mxu0 %v9365
    %9390 = vmatpush.bf16.msra.mxu0 %v9364
    %9391 = vmatpush.bf16.msra.mxu0 %v9363
    %9392 = vmatpush.bf16.msra.mxu0 %v9362
    %9393 = vmatpush.bf16.msra.mxu0 %v9361
    %9394 = vmatpush.bf16.msra.mxu0 %v9360
    %9395 = vmatpush.bf16.msra.mxu0 %v9359
    %9396 = vmatpush.bf16.msra.mxu0 %v9358
    %9397 = vmatmul.bf16.gmra.mxu0 %v9271
    %v9398 = vpop.f32.mrf.mxu0
    %v9399 = vadd.f32 0.0, %v9398
    %v9400 = vpop.f32.mrf.mxu0
    %9401 = vdwg.mxu0
    %9402 = vmatpush.bf16.msra.mxu0 0
    %9403 = vmatpush.bf16.msra.mxu0 0
    %9404 = vmatpush.bf16.msra.mxu0 %v9371
    %9405 = vmatpush.bf16.msra.mxu0 %v9370
    %9406 = vmatpush.bf16.msra.mxu0 %v9369
    %9407 = vmatpush.bf16.msra.mxu0 %v9368
    %9408 = vmatpush.bf16.msra.mxu0 %v9367
    %9409 = vmatpush.bf16.msra.mxu0 %v9366
    %9410 = vmatmul.bf16.gmra.mxu0 %v9387
    %v9411 = vpop.f32.mrf.mxu0
    %v9412 = vadd.f32 %v9399, %v9411
    %v9413 = vpop.f32.mrf.mxu0
    %9414 = vdwg.mxu0
    %v9415 = vadd.f32 %v9270, %v9412
    %v9416 = vpack.c.bf16 %v8719, %v8719
    %v9417 = vpack.c.bf16 %v8831, %v8831
    %s9418 = scalar_lea.vmem %s9, 448
    %v9419 = vld [vmem:[%s9418] sm:$0xf]
    %v9420 = vld [vmem:[%s9418 + $0x4] sm:$0xf]
    %v9421 = vld [vmem:[%s9418 + $0x8] sm:$0xf]
    %v9422 = vld [vmem:[%s9418 + $0xc] sm:$0xf]
    %v9423 = vld [vmem:[%s9418 + $0x10] sm:$0xf]
    %v9424 = vld [vmem:[%s9418 + $0x14] sm:$0xf]
    %v9425 = vld [vmem:[%s9418 + $0x18] sm:$0xf]
    %v9426 = vld [vmem:[%s9418 + $0x1c] sm:$0xf]
    %v9427 = vld [vmem:[%s9418 + $0x20] sm:$0xf]
    %v9428 = vld [vmem:[%s9418 + $0x24] sm:$0xf]
    %v9429 = vld [vmem:[%s9418 + $0x28] sm:$0xf]
    %v9430 = vld [vmem:[%s9418 + $0x2c] sm:$0xf]
    %v9431 = vld [vmem:[%s9418 + $0x30] sm:$0xf]
    %v9432 = vld [vmem:[%s9418 + $0x34] sm:$0xf]
    %v9433 = vld [vmem:[%s9418 + $0x38] sm:$0xf]
    %v9434 = vld [vmem:[%s9418 + $0x3c] sm:$0xf]
    %v9435 = vld [vmem:[%s9418 + $0x40] sm:$0xf]
    %v9436 = vld [vmem:[%s9418 + $0x44] sm:$0xf]
    %v9437 = vld [vmem:[%s9418 + $0x48] sm:$0xf]
    %v9438 = vld [vmem:[%s9418 + $0x4c] sm:$0xf]
    %v9439 = vld [vmem:[%s9418 + $0x50] sm:$0xf]
    %v9440 = vld [vmem:[%s9418 + $0x54] sm:$0xf]
    %v9441 = vld [vmem:[%s9418 + $0x58] sm:$0xf]
    %v9442 = vld [vmem:[%s9418 + $0x5c] sm:$0xf]
    %v9443 = vld [vmem:[%s9418 + $0x60] sm:$0xf]
    %v9444 = vld [vmem:[%s9418 + $0x64] sm:$0xf]
    %v9445 = vld [vmem:[%s9418 + $0x68] sm:$0xf]
    %v9446 = vld [vmem:[%s9418 + $0x6c] sm:$0xf]
    %v9475 = vunpack.c.l.b16 %v9419
    %v9476 = vunpack.c.l.b16 %v9420
    %v9477 = vunpack.c.l.b16 %v9421
    %v9478 = vunpack.c.l.b16 %v9422
    %v9479 = vunpack.c.l.b16 %v9423
    %v9480 = vunpack.c.l.b16 %v9424
    %v9481 = vunpack.c.l.b16 %v9425
    %v9482 = vunpack.c.l.b16 %v9426
    %v9483 = vunpack.c.l.b16 %v9427
    %v9484 = vunpack.c.l.b16 %v9428
    %v9485 = vunpack.c.l.b16 %v9429
    %v9486 = vunpack.c.l.b16 %v9430
    %v9487 = vunpack.c.l.b16 %v9431
    %v9488 = vunpack.c.l.b16 %v9432
    %v9489 = vunpack.c.l.b16 %v9433
    %v9490 = vunpack.c.l.b16 %v9434
    %v9491 = vunpack.c.l.b16 %v9435
    %v9492 = vunpack.c.l.b16 %v9436
    %v9493 = vunpack.c.l.b16 %v9437
    %v9494 = vunpack.c.l.b16 %v9438
    %v9495 = vunpack.c.l.b16 %v9439
    %v9496 = vunpack.c.l.b16 %v9440
    %v9497 = vunpack.c.l.b16 %v9441
    %v9498 = vunpack.c.l.b16 %v9442
    %v9499 = vunpack.c.l.b16 %v9443
    %v9500 = vunpack.c.l.b16 %v9444
    %v9501 = vunpack.c.l.b16 %v9445
    %v9502 = vunpack.c.l.b16 %v9446
    %v9503 = vpack.c.b16 %v9476, %v9475
    %v9504 = vpack.c.b16 %v9478, %v9477
    %v9505 = vpack.c.b16 %v9480, %v9479
    %v9506 = vpack.c.b16 %v9482, %v9481
    %v9507 = vpack.c.b16 %v9484, %v9483
    %v9508 = vpack.c.b16 %v9486, %v9485
    %v9509 = vpack.c.b16 %v9488, %v9487
    %v9510 = vpack.c.b16 %v9490, %v9489
    %v9511 = vpack.c.b16 %v9492, %v9491
    %v9512 = vpack.c.b16 %v9494, %v9493
    %v9513 = vpack.c.b16 %v9496, %v9495
    %v9514 = vpack.c.b16 %v9498, %v9497
    %v9515 = vpack.c.b16 %v9500, %v9499
    %v9516 = vpack.c.b16 %v9502, %v9501
    %v9532 = vsel %vm8162, %v9417, 0
    %9534 = vmatpush.bf16.msra.mxu0 %v9510
    %9535 = vmatpush.bf16.msra.mxu0 %v9509
    %9536 = vmatpush.bf16.msra.mxu0 %v9508
    %9537 = vmatpush.bf16.msra.mxu0 %v9507
    %9538 = vmatpush.bf16.msra.mxu0 %v9506
    %9539 = vmatpush.bf16.msra.mxu0 %v9505
    %9540 = vmatpush.bf16.msra.mxu0 %v9504
    %9541 = vmatpush.bf16.msra.mxu0 %v9503
    %9542 = vmatmul.bf16.gmra.mxu0 %v9416
    %v9543 = vpop.f32.mrf.mxu0
    %v9544 = vadd.f32 0.0, %v9543
    %v9545 = vpop.f32.mrf.mxu0
    %9546 = vdwg.mxu0
    %9547 = vmatpush.bf16.msra.mxu0 0
    %9548 = vmatpush.bf16.msra.mxu0 0
    %9549 = vmatpush.bf16.msra.mxu0 %v9516
    %9550 = vmatpush.bf16.msra.mxu0 %v9515
    %9551 = vmatpush.bf16.msra.mxu0 %v9514
    %9552 = vmatpush.bf16.msra.mxu0 %v9513
    %9553 = vmatpush.bf16.msra.mxu0 %v9512
    %9554 = vmatpush.bf16.msra.mxu0 %v9511
    %9555 = vmatmul.bf16.gmra.mxu0 %v9532
    %v9556 = vpop.f32.mrf.mxu0
    %v9557 = vadd.f32 %v9544, %v9556
    %v9558 = vpop.f32.mrf.mxu0
    %9559 = vdwg.mxu0
    %v9560 = vadd.f32 %v9415, %v9557
    %v9561 = vpack.c.bf16 %v8721, %v8721
    %v9562 = vpack.c.bf16 %v8833, %v8833
    %s9563 = scalar_lea.vmem %s9, 560
    %v9564 = vld [vmem:[%s9563] sm:$0xf]
    %v9565 = vld [vmem:[%s9563 + $0x4] sm:$0xf]
    %v9566 = vld [vmem:[%s9563 + $0x8] sm:$0xf]
    %v9567 = vld [vmem:[%s9563 + $0xc] sm:$0xf]
    %v9568 = vld [vmem:[%s9563 + $0x10] sm:$0xf]
    %v9569 = vld [vmem:[%s9563 + $0x14] sm:$0xf]
    %v9570 = vld [vmem:[%s9563 + $0x18] sm:$0xf]
    %v9571 = vld [vmem:[%s9563 + $0x1c] sm:$0xf]
    %v9572 = vld [vmem:[%s9563 + $0x20] sm:$0xf]
    %v9573 = vld [vmem:[%s9563 + $0x24] sm:$0xf]
    %v9574 = vld [vmem:[%s9563 + $0x28] sm:$0xf]
    %v9575 = vld [vmem:[%s9563 + $0x2c] sm:$0xf]
    %v9576 = vld [vmem:[%s9563 + $0x30] sm:$0xf]
    %v9577 = vld [vmem:[%s9563 + $0x34] sm:$0xf]
    %v9578 = vld [vmem:[%s9563 + $0x38] sm:$0xf]
    %v9579 = vld [vmem:[%s9563 + $0x3c] sm:$0xf]
    %v9580 = vld [vmem:[%s9563 + $0x40] sm:$0xf]
    %v9581 = vld [vmem:[%s9563 + $0x44] sm:$0xf]
    %v9582 = vld [vmem:[%s9563 + $0x48] sm:$0xf]
    %v9583 = vld [vmem:[%s9563 + $0x4c] sm:$0xf]
    %v9584 = vld [vmem:[%s9563 + $0x50] sm:$0xf]
    %v9585 = vld [vmem:[%s9563 + $0x54] sm:$0xf]
    %v9586 = vld [vmem:[%s9563 + $0x58] sm:$0xf]
    %v9587 = vld [vmem:[%s9563 + $0x5c] sm:$0xf]
    %v9588 = vld [vmem:[%s9563 + $0x60] sm:$0xf]
    %v9589 = vld [vmem:[%s9563 + $0x64] sm:$0xf]
    %v9590 = vld [vmem:[%s9563 + $0x68] sm:$0xf]
    %v9591 = vld [vmem:[%s9563 + $0x6c] sm:$0xf]
    %v9620 = vunpack.c.l.b16 %v9564
    %v9621 = vunpack.c.l.b16 %v9565
    %v9622 = vunpack.c.l.b16 %v9566
    %v9623 = vunpack.c.l.b16 %v9567
    %v9624 = vunpack.c.l.b16 %v9568
    %v9625 = vunpack.c.l.b16 %v9569
    %v9626 = vunpack.c.l.b16 %v9570
    %v9627 = vunpack.c.l.b16 %v9571
    %v9628 = vunpack.c.l.b16 %v9572
    %v9629 = vunpack.c.l.b16 %v9573
    %v9630 = vunpack.c.l.b16 %v9574
    %v9631 = vunpack.c.l.b16 %v9575
    %v9632 = vunpack.c.l.b16 %v9576
    %v9633 = vunpack.c.l.b16 %v9577
    %v9634 = vunpack.c.l.b16 %v9578
    %v9635 = vunpack.c.l.b16 %v9579
    %v9636 = vunpack.c.l.b16 %v9580
    %v9637 = vunpack.c.l.b16 %v9581
    %v9638 = vunpack.c.l.b16 %v9582
    %v9639 = vunpack.c.l.b16 %v9583
    %v9640 = vunpack.c.l.b16 %v9584
    %v9641 = vunpack.c.l.b16 %v9585
    %v9642 = vunpack.c.l.b16 %v9586
    %v9643 = vunpack.c.l.b16 %v9587
    %v9644 = vunpack.c.l.b16 %v9588
    %v9645 = vunpack.c.l.b16 %v9589
    %v9646 = vunpack.c.l.b16 %v9590
    %v9647 = vunpack.c.l.b16 %v9591
    %v9648 = vpack.c.b16 %v9621, %v9620
    %v9649 = vpack.c.b16 %v9623, %v9622
    %v9650 = vpack.c.b16 %v9625, %v9624
    %v9651 = vpack.c.b16 %v9627, %v9626
    %v9652 = vpack.c.b16 %v9629, %v9628
    %v9653 = vpack.c.b16 %v9631, %v9630
    %v9654 = vpack.c.b16 %v9633, %v9632
    %v9655 = vpack.c.b16 %v9635, %v9634
    %v9656 = vpack.c.b16 %v9637, %v9636
    %v9657 = vpack.c.b16 %v9639, %v9638
    %v9658 = vpack.c.b16 %v9641, %v9640
    %v9659 = vpack.c.b16 %v9643, %v9642
    %v9660 = vpack.c.b16 %v9645, %v9644
    %v9661 = vpack.c.b16 %v9647, %v9646
    %v9677 = vsel %vm8162, %v9562, 0
    %9679 = vmatpush.bf16.msra.mxu0 %v9655
    %9680 = vmatpush.bf16.msra.mxu0 %v9654
    %9681 = vmatpush.bf16.msra.mxu0 %v9653
    %9682 = vmatpush.bf16.msra.mxu0 %v9652
    %9683 = vmatpush.bf16.msra.mxu0 %v9651
    %9684 = vmatpush.bf16.msra.mxu0 %v9650
    %9685 = vmatpush.bf16.msra.mxu0 %v9649
    %9686 = vmatpush.bf16.msra.mxu0 %v9648
    %9687 = vmatmul.bf16.gmra.mxu0 %v9561
    %v9688 = vpop.f32.mrf.mxu0
    %v9689 = vadd.f32 0.0, %v9688
    %v9690 = vpop.f32.mrf.mxu0
    %9691 = vdwg.mxu0
    %9692 = vmatpush.bf16.msra.mxu0 0
    %9693 = vmatpush.bf16.msra.mxu0 0
    %9694 = vmatpush.bf16.msra.mxu0 %v9661
    %9695 = vmatpush.bf16.msra.mxu0 %v9660
    %9696 = vmatpush.bf16.msra.mxu0 %v9659
    %9697 = vmatpush.bf16.msra.mxu0 %v9658
    %9698 = vmatpush.bf16.msra.mxu0 %v9657
    %9699 = vmatpush.bf16.msra.mxu0 %v9656
    %9700 = vmatmul.bf16.gmra.mxu0 %v9677
    %v9701 = vpop.f32.mrf.mxu0
    %v9702 = vadd.f32 %v9689, %v9701
    %v9703 = vpop.f32.mrf.mxu0
    %9704 = vdwg.mxu0
    %v9705 = vadd.f32 %v9560, %v9702
    %v9706 = vpack.c.bf16 %v8724, %v8724
    %v9707 = vpack.c.bf16 %v8836, %v8836
    %s9708 = scalar_lea.vmem %s9, 672
    %v9709 = vld [vmem:[%s9708] sm:$0xf]
    %v9710 = vld [vmem:[%s9708 + $0x4] sm:$0xf]
    %v9711 = vld [vmem:[%s9708 + $0x8] sm:$0xf]
    %v9712 = vld [vmem:[%s9708 + $0xc] sm:$0xf]
    %v9713 = vld [vmem:[%s9708 + $0x10] sm:$0xf]
    %v9714 = vld [vmem:[%s9708 + $0x14] sm:$0xf]
    %v9715 = vld [vmem:[%s9708 + $0x18] sm:$0xf]
    %v9716 = vld [vmem:[%s9708 + $0x1c] sm:$0xf]
    %v9717 = vld [vmem:[%s9708 + $0x20] sm:$0xf]
    %v9718 = vld [vmem:[%s9708 + $0x24] sm:$0xf]
    %v9719 = vld [vmem:[%s9708 + $0x28] sm:$0xf]
    %v9720 = vld [vmem:[%s9708 + $0x2c] sm:$0xf]
    %v9721 = vld [vmem:[%s9708 + $0x30] sm:$0xf]
    %v9722 = vld [vmem:[%s9708 + $0x34] sm:$0xf]
    %v9723 = vld [vmem:[%s9708 + $0x38] sm:$0xf]
    %v9724 = vld [vmem:[%s9708 + $0x3c] sm:$0xf]
    %v9725 = vld [vmem:[%s9708 + $0x40] sm:$0xf]
    %v9726 = vld [vmem:[%s9708 + $0x44] sm:$0xf]
    %v9727 = vld [vmem:[%s9708 + $0x48] sm:$0xf]
    %v9728 = vld [vmem:[%s9708 + $0x4c] sm:$0xf]
    %v9729 = vld [vmem:[%s9708 + $0x50] sm:$0xf]
    %v9730 = vld [vmem:[%s9708 + $0x54] sm:$0xf]
    %v9731 = vld [vmem:[%s9708 + $0x58] sm:$0xf]
    %v9732 = vld [vmem:[%s9708 + $0x5c] sm:$0xf]
    %v9733 = vld [vmem:[%s9708 + $0x60] sm:$0xf]
    %v9734 = vld [vmem:[%s9708 + $0x64] sm:$0xf]
    %v9735 = vld [vmem:[%s9708 + $0x68] sm:$0xf]
    %v9736 = vld [vmem:[%s9708 + $0x6c] sm:$0xf]
    %v9765 = vunpack.c.l.b16 %v9709
    %v9766 = vunpack.c.l.b16 %v9710
    %v9767 = vunpack.c.l.b16 %v9711
    %v9768 = vunpack.c.l.b16 %v9712
    %v9769 = vunpack.c.l.b16 %v9713
    %v9770 = vunpack.c.l.b16 %v9714
    %v9771 = vunpack.c.l.b16 %v9715
    %v9772 = vunpack.c.l.b16 %v9716
    %v9773 = vunpack.c.l.b16 %v9717
    %v9774 = vunpack.c.l.b16 %v9718
    %v9775 = vunpack.c.l.b16 %v9719
    %v9776 = vunpack.c.l.b16 %v9720
    %v9777 = vunpack.c.l.b16 %v9721
    %v9778 = vunpack.c.l.b16 %v9722
    %v9779 = vunpack.c.l.b16 %v9723
    %v9780 = vunpack.c.l.b16 %v9724
    %v9781 = vunpack.c.l.b16 %v9725
    %v9782 = vunpack.c.l.b16 %v9726
    %v9783 = vunpack.c.l.b16 %v9727
    %v9784 = vunpack.c.l.b16 %v9728
    %v9785 = vunpack.c.l.b16 %v9729
    %v9786 = vunpack.c.l.b16 %v9730
    %v9787 = vunpack.c.l.b16 %v9731
    %v9788 = vunpack.c.l.b16 %v9732
    %v9789 = vunpack.c.l.b16 %v9733
    %v9790 = vunpack.c.l.b16 %v9734
    %v9791 = vunpack.c.l.b16 %v9735
    %v9792 = vunpack.c.l.b16 %v9736
    %v9793 = vpack.c.b16 %v9766, %v9765
    %v9794 = vpack.c.b16 %v9768, %v9767
    %v9795 = vpack.c.b16 %v9770, %v9769
    %v9796 = vpack.c.b16 %v9772, %v9771
    %v9797 = vpack.c.b16 %v9774, %v9773
    %v9798 = vpack.c.b16 %v9776, %v9775
    %v9799 = vpack.c.b16 %v9778, %v9777
    %v9800 = vpack.c.b16 %v9780, %v9779
    %v9801 = vpack.c.b16 %v9782, %v9781
    %v9802 = vpack.c.b16 %v9784, %v9783
    %v9803 = vpack.c.b16 %v9786, %v9785
    %v9804 = vpack.c.b16 %v9788, %v9787
    %v9805 = vpack.c.b16 %v9790, %v9789
    %v9806 = vpack.c.b16 %v9792, %v9791
    %v9822 = vsel %vm8162, %v9707, 0
    %9824 = vmatpush.bf16.msra.mxu0 %v9800
    %9825 = vmatpush.bf16.msra.mxu0 %v9799
    %9826 = vmatpush.bf16.msra.mxu0 %v9798
    %9827 = vmatpush.bf16.msra.mxu0 %v9797
    %9828 = vmatpush.bf16.msra.mxu0 %v9796
    %9829 = vmatpush.bf16.msra.mxu0 %v9795
    %9830 = vmatpush.bf16.msra.mxu0 %v9794
    %9831 = vmatpush.bf16.msra.mxu0 %v9793
    %9832 = vmatmul.bf16.gmra.mxu0 %v9706
    %v9833 = vpop.f32.mrf.mxu0
    %v9834 = vadd.f32 0.0, %v9833
    %v9835 = vpop.f32.mrf.mxu0
    %9836 = vdwg.mxu0
    %9837 = vmatpush.bf16.msra.mxu0 0
    %9838 = vmatpush.bf16.msra.mxu0 0
    %9839 = vmatpush.bf16.msra.mxu0 %v9806
    %9840 = vmatpush.bf16.msra.mxu0 %v9805
    %9841 = vmatpush.bf16.msra.mxu0 %v9804
    %9842 = vmatpush.bf16.msra.mxu0 %v9803
    %9843 = vmatpush.bf16.msra.mxu0 %v9802
    %9844 = vmatpush.bf16.msra.mxu0 %v9801
    %9845 = vmatmul.bf16.gmra.mxu0 %v9822
    %v9846 = vpop.f32.mrf.mxu0
    %v9847 = vadd.f32 %v9834, %v9846
    %v9848 = vpop.f32.mrf.mxu0
    %9849 = vdwg.mxu0
    %v9850 = vadd.f32 %v9705, %v9847
    %v9851 = vld [vmem:[%s10] sm:$0x1]
    %v9853 = vperm.slane %v9851, 0
    %v9855 = vadd.f32 %v9850, %v9853
    %v9856 = vmax.f32 %v9855, 0.0
    %v9857 = vld [vmem:[#allocation9] sm:$0xff]
    %v9858 = vld [vmem:[#allocation9 + $0x8] sm:$0xff]
    %v9859 = vld [vmem:[#allocation9 + $0x10] sm:$0xff]
    %v9860 = vld [vmem:[#allocation9 + $0x18] sm:$0xff]
    %v9861 = vld [vmem:[#allocation9 + $0x20] sm:$0xff]
    %v9862 = vld [vmem:[#allocation9 + $0x28] sm:$0xff]
    %v9863 = vld [vmem:[#allocation9 + $0x30] sm:$0xff]
    %v9864 = vld [vmem:[#allocation9 + $0x38] sm:$0xff]
    %v9865 = vld [vmem:[#allocation9 + $0x40] sm:$0xff]
    %v9866 = vld [vmem:[#allocation9 + $0x48] sm:$0xff]
    %v9867 = vld [vmem:[#allocation9 + $0x50] sm:$0xff]
    %v9868 = vld [vmem:[#allocation9 + $0x58] sm:$0xff]
    %v9869 = vld [vmem:[#allocation9 + $0x60] sm:$0xff]
    %v9870 = vld [vmem:[#allocation9 + $0x68] sm:$0xff]
    %v9871 = vld [vmem:[#allocation9 + $0x70] sm:$0xff]
    %v9872 = vld [vmem:[#allocation9 + $0x78] sm:$0xff]
    %v9873 = vld [vmem:[%s12] sm:$0x1]
    %v9875 = vperm.slane %v9873, 0
    %9877 = vmatpush.msra.mxu0 %v9872
    %9878 = vmatpush.msra.mxu0 %v9871
    %9879 = vmatpush.msra.mxu0 %v9870
    %9880 = vmatpush.msra.mxu0 %v9869
    %9881 = vmatpush.msra.mxu0 %v9868
    %9882 = vmatpush.msra.mxu0 %v9867
    %9883 = vmatpush.msra.mxu0 %v9866
    %9884 = vmatpush.msra.mxu0 %v9865
    %9885 = vmatpush.msra.mxu0 %v9864
    %9886 = vmatpush.msra.mxu0 %v9863
    %9887 = vmatpush.msra.mxu0 %v9862
    %9888 = vmatpush.msra.mxu0 %v9861
    %9889 = vmatpush.msra.mxu0 %v9860
    %9890 = vmatpush.msra.mxu0 %v9859
    %9891 = vmatpush.msra.mxu0 %v9858
    %9892 = vmatpush.msra.mxu0 %v9857
    %9893 = vmatmul.f32.gmra.mxu0 %v9856
    %v9894 = vpop.f32.mrf.mxu0
    %v9895 = vadd.f32 %v9875, %v9894
    %9896 = vdwg.mxu0
    %9897 = vst [vmem:[%s13] sm:$0xff] %v9895
    // Predicated region
    $region74: #{simple_cnn_forward.1} parent=1 // pred_check
      _
    $region75: #{simple_cnn_forward.1} parent=1 // pred_check_branch
      %9899 = sbr.rel (0) target = $region77
    $region76: #{simple_cnn_forward.1} parent=1 // pred_region
      _
    $region77: #{simple_cnn_forward.1} parent=1 // pred_fallthru
      _
    // Predicated region
    $region78: #{simple_cnn_forward.1} parent=1 // pred_check
      _
    $region79: #{simple_cnn_forward.1} parent=1 // pred_check_branch
      %9901 = sbr.rel (0) target = $region81
    $region80: #{simple_cnn_forward.1} parent=1 // pred_region
      _
    $region81: #{simple_cnn_forward.1} parent=1 // pred_fallthru
      _
    %9902 = vsyncpa [#allocation3], 1
    %9903 = vsyncpa [#allocation5], 1
    %9904 = vsyncpa [#allocation8], 1

</llo_original>
